<compile_context>
chip_gen: v5e
topology: v5e:2x2
jax: 0.10.0
libtpu: 0.0.40
codegen_flags: <defaults>
</compile_context>

<pallas_src>
import functools
import math

import jax
import jax.numpy as jnp
from jax.experimental import pallas as pl
from jax.experimental.pallas import tpu as pltpu

LN_EPS = 1e-5


# ----------------------------------------------------------------------------
# in-kernel helpers (run on traced VMEM values)
# ----------------------------------------------------------------------------
def _layernorm(y, gamma, beta):
    # y: [S, E] f32; gamma/beta: [1, E] f32
    mu = jnp.mean(y, axis=-1, keepdims=True)
    var = jnp.mean((y - mu) * (y - mu), axis=-1, keepdims=True)
    yn = (y - mu) * jax.lax.rsqrt(var + LN_EPS)
    return yn * gamma + beta


def _mha(q, k, v, num_heads, scale):
    """q:[Sq,E], k/v:[Sk,E] (f32) -> [Sq,E] f32.  Head split done in-kernel;
    E stays the lane dimension for all HBM-visible tensors."""
    Sq, E = q.shape
    Dh = E // num_heads
    ctx_parts = []
    for h in range(num_heads):            # static unroll (num_heads small)
        lo, hi = h * Dh, (h + 1) * Dh
        qh = q[:, lo:hi].astype(jnp.bfloat16)
        kh = k[:, lo:hi].astype(jnp.bfloat16)
        vh = v[:, lo:hi].astype(jnp.bfloat16)
        s = jax.lax.dot_general(
            qh, kh, (((1,), (1,)), ((), ())),
            preferred_element_type=jnp.float32) * scale          # [Sq, Sk] f32
        s = s - jnp.max(s, axis=-1, keepdims=True)
        e = jnp.exp(s)
        p = e / jnp.sum(e, axis=-1, keepdims=True)               # exact division
        ctx_parts.append(
            jnp.dot(p.astype(jnp.bfloat16), vh,
                    preferred_element_type=jnp.float32))          # [Sq, Dh]
    return jnp.concatenate(ctx_parts, axis=-1)                    # [Sq, E]


# ----------------------------------------------------------------------------
# Pallas kernels (one per fused block)
# ----------------------------------------------------------------------------
def _self_attn_block_kernel(x_ref, wqkv_ref, bqkv_ref, wo_ref, bo_ref,
                            g_ref, beta_ref, o_ref, *, num_heads, scale):
    # Per-batch block: x_ref [S, E] bf16.  Everything below stays in VMEM.
    x = x_ref[...]                                    # bf16
    x_f32 = x.astype(jnp.float32)
    S, E = x.shape

    qkv = jnp.dot(x, wqkv_ref[...],
                  preferred_element_type=jnp.float32) + bqkv_ref[...]  # [S,3E]
    q, k, v = qkv[:, :E], qkv[:, E:2 * E], qkv[:, 2 * E:]

    ctx = _mha(q, k, v, num_heads, scale)                                # [S,E]

    y = jnp.dot(ctx.astype(jnp.bfloat16), wo_ref[...],
                preferred_element_type=jnp.float32) + bo_ref[...]
    y = y + x_f32
    o_ref[...] = _layernorm(y, g_ref[...], beta_ref[...]).astype(o_ref.dtype)


def _cross_attn_block_kernel(x_ref, mem_ref, wq_ref, bq_ref, wkv_ref, bkv_ref,
                             wo_ref, bo_ref, g_ref, beta_ref, o_ref,
                             *, num_heads, scale):
    x = x_ref[...]                                    # [S,  E] bf16
    m = mem_ref[...]                                  # [Sm, E] bf16
    x_f32 = x.astype(jnp.float32)
    E = x.shape[1]

    q = jnp.dot(x, wq_ref[...],
                preferred_element_type=jnp.float32) + bq_ref[...]        # [S, E]
    kv = jnp.dot(m, wkv_ref[...],
                 preferred_element_type=jnp.float32) + bkv_ref[...]      # [Sm,2E]
    k, v = kv[:, :E], kv[:, E:]

    ctx = _mha(q, k, v, num_heads, scale)                                # [S, E]

    y = jnp.dot(ctx.astype(jnp.bfloat16), wo_ref[...],
                preferred_element_type=jnp.float32) + bo_ref[...]
    y = y + x_f32
    o_ref[...] = _layernorm(y, g_ref[...], beta_ref[...]).astype(o_ref.dtype)


def _ffn_block_kernel(x_ref, w1_ref, b1_ref, w2_ref, b2_ref, g_ref, beta_ref,
                      o_ref):
    x = x_ref[...]                                    # [S, E] bf16
    x_f32 = x.astype(jnp.float32)
    h = jnp.dot(x, w1_ref[...],
                preferred_element_type=jnp.float32) + b1_ref[...]        # [S, F]
    h = jnp.maximum(h, 0.0)
    y = jnp.dot(h.astype(jnp.bfloat16), w2_ref[...],
                preferred_element_type=jnp.float32) + b2_ref[...]        # [S, E]
    y = y + x_f32
    o_ref[...] = _layernorm(y, g_ref[...], beta_ref[...]).astype(o_ref.dtype)


def _matmul_bias_kernel(x_ref, w_ref, b_ref, o_ref):
    acc = jnp.dot(x_ref[...], w_ref[...], preferred_element_type=jnp.float32)
    o_ref[...] = (acc + b_ref[...]).astype(o_ref.dtype)


# ----------------------------------------------------------------------------
# pallas_call wrappers
# ----------------------------------------------------------------------------
def _w2d(K, N):
    # weight / bias spec: full block, constant index map over the batch grid
    return pl.BlockSpec((K, N), lambda b: (0, 0))


def self_attn_block(x, p, num_heads):
    B, S, E = x.shape
    scale = 1.0 / math.sqrt(E // num_heads)
    return pl.pallas_call(
        functools.partial(_self_attn_block_kernel,
                          num_heads=num_heads, scale=scale),
        out_shape=jax.ShapeDtypeStruct((B, S, E), jnp.bfloat16),
        grid=(B,),
        in_specs=[
            pl.BlockSpec((None, S, E), lambda b: (b, 0, 0)),
            _w2d(E, 3 * E), _w2d(1, 3 * E),
            _w2d(E, E), _w2d(1, E),
            _w2d(1, E), _w2d(1, E),
        ],
        out_specs=pl.BlockSpec((None, S, E), lambda b: (b, 0, 0)),
        compiler_params=pltpu.CompilerParams(
            dimension_semantics=("parallel",)),
    )(x, p["sa_wqkv"], p["sa_bqkv"], p["sa_wo"], p["sa_bo"],
      p["norm1_w"], p["norm1_b"])


def cross_attn_block(x, mem, p, num_heads):
    B, S, E = x.shape
    Sm = mem.shape[1]
    scale = 1.0 / math.sqrt(E // num_heads)
    return pl.pallas_call(
        functools.partial(_cross_attn_block_kernel,
                          num_heads=num_heads, scale=scale),
        out_shape=jax.ShapeDtypeStruct((B, S, E), jnp.bfloat16),
        grid=(B,),
        in_specs=[
            pl.BlockSpec((None, S, E), lambda b: (b, 0, 0)),
            pl.BlockSpec((None, Sm, E), lambda b: (b, 0, 0)),
            _w2d(E, E), _w2d(1, E),
            _w2d(E, 2 * E), _w2d(1, 2 * E),
            _w2d(E, E), _w2d(1, E),
            _w2d(1, E), _w2d(1, E),
        ],
        out_specs=pl.BlockSpec((None, S, E), lambda b: (b, 0, 0)),
        compiler_params=pltpu.CompilerParams(
            dimension_semantics=("parallel",)),
    )(x, mem, p["ca_wq"], p["ca_bq"], p["ca_wkv"], p["ca_bkv"],
      p["ca_wo"], p["ca_bo"], p["norm2_w"], p["norm2_b"])


def ffn_block(x, p):
    B, S, E = x.shape
    F = p["ffn_w1"].shape[1]
    return pl.pallas_call(
        _ffn_block_kernel,
        out_shape=jax.ShapeDtypeStruct((B, S, E), jnp.bfloat16),
        grid=(B,),
        in_specs=[
            pl.BlockSpec((None, S, E), lambda b: (b, 0, 0)),
            _w2d(E, F), _w2d(1, F),
            _w2d(F, E), _w2d(1, E),
            _w2d(1, E), _w2d(1, E),
        ],
        out_specs=pl.BlockSpec((None, S, E), lambda b: (b, 0, 0)),
        compiler_params=pltpu.CompilerParams(
            dimension_semantics=("parallel",)),
    )(x, p["ffn_w1"], p["ffn_b1"], p["ffn_w2"], p["ffn_b2"],
      p["norm3_w"], p["norm3_b"])


def matmul_bias_tiled(x, w, b, *, tn=512):
    """Vocab projection: x:[M,K] bf16 @ w:[K,N] bf16 + b -> [M,N] f32,
    tiled over N with a pipelined 'parallel' grid.  For large-vocab configs
    raise tn further and/or add pipeline_mode=pl.Buffered(3) on the weight."""
    M, K = x.shape
    N = w.shape[1]
    tn = min(tn, N)
    grid_n = pl.cdiv(N, tn)
    return pl.pallas_call(
        _matmul_bias_kernel,
        out_shape=jax.ShapeDtypeStruct((M, N), jnp.float32),
        grid=(grid_n,),
        in_specs=[
            pl.BlockSpec((M, K), lambda j: (0, 0)),
            pl.BlockSpec((K, tn), lambda j: (0, j)),
            pl.BlockSpec((1, tn), lambda j: (0, j)),
        ],
        out_specs=pl.BlockSpec((M, tn), lambda j: (0, j)),
        compiler_params=pltpu.CompilerParams(
            dimension_semantics=("parallel",)),
    )(x, w, b)


# ----------------------------------------------------------------------------
# Model (glue around the kernels)
# ----------------------------------------------------------------------------
def text_decoder_forward(decoder_input_ids, memory, params, num_heads):
    B, S = decoder_input_ids.shape
    tok = jnp.take(params["token_embeddings"], decoder_input_ids, axis=0)  # (B,S,E)
    x = (tok + params["position_embeddings"][:, :S, :]).astype(jnp.bfloat16)
    mem = memory.astype(jnp.bfloat16)

    for p in params["layers"]:
        x = self_attn_block(x, p, num_heads)       # fused QKV+attn+proj+LN
        x = cross_attn_block(x, mem, p, num_heads)  # fused Q/KV+attn+proj+LN
        x = ffn_block(x, p)                         # fused FFN+residual+LN

    E = x.shape[-1]
    logits = matmul_bias_tiled(x.reshape(B * S, E),
                               params["out_proj_w"], params["out_proj_b"])
    return logits.reshape(B, S, -1)


# ----------------------------------------------------------------------------
# Deterministic parameter init
# (PyTorch layouts are (out, in); we store pre-transposed (in, out) bf16
#  weights and (1, out) f32 biases so the forward pass never transposes.)
# ----------------------------------------------------------------------------
def init_params(key, vocab_size, embed_dim, max_seq_len, num_layers, ffn_dim):
    ks = iter(jax.random.split(key, 8 + num_layers * 24))

    def w(shape, scale=0.02):           # weight: bf16, already (K, N)
        return (scale * jax.random.normal(next(ks), shape)).astype(jnp.bfloat16)

    def b(n, scale=0.02):               # bias: f32, (1, N)
        return (scale * jax.random.normal(next(ks), (1, n))).astype(jnp.float32)

    layers = []
    for _ in range(num_layers):
        layers.append({
            # self-attention: fused QKV proj weight (E, 3E) == in_proj_weight.T
            "sa_wqkv": w((embed_dim, 3 * embed_dim)),
            "sa_bqkv": b(3 * embed_dim),
            "sa_wo": w((embed_dim, embed_dim)),
            "sa_bo": b(embed_dim),
            # cross-attention: Q proj (E,E) and fused KV proj (E, 2E)
            "ca_wq": w((embed_dim, embed_dim)),
            "ca_bq": b(embed_dim),
            "ca_wkv": w((embed_dim, 2 * embed_dim)),
            "ca_bkv": b(2 * embed_dim),
            "ca_wo": w((embed_dim, embed_dim)),
            "ca_bo": b(embed_dim),
            # FFN
            "ffn_w1": w((embed_dim, ffn_dim)),
            "ffn_b1": b(ffn_dim),
            "ffn_w2": w((ffn_dim, embed_dim)),
            "ffn_b2": b(embed_dim),
            # LayerNorms
            "norm1_w": jnp.ones((1, embed_dim), jnp.float32),
            "norm1_b": jnp.zeros((1, embed_dim), jnp.float32),
            "norm2_w": jnp.ones((1, embed_dim), jnp.float32),
            "norm2_b": jnp.zeros((1, embed_dim), jnp.float32),
            "norm3_w": jnp.ones((1, embed_dim), jnp.float32),
            "norm3_b": jnp.zeros((1, embed_dim), jnp.float32),
        })

    return {
        "token_embeddings":
            (0.02 * jax.random.normal(next(ks), (vocab_size, embed_dim))
             ).astype(jnp.float32),
        "position_embeddings":
            jax.random.normal(next(ks), (1, max_seq_len, embed_dim)
                              ).astype(jnp.float32),
        "layers": layers,
        "out_proj_w": w((embed_dim, vocab_size)),
        "out_proj_b": b(vocab_size),
    }


# ----------------------------------------------------------------------------
if __name__ == "__main__":
    # Model hyper-params (TransformerDecoderLayer defaults: ffn_dim=2048, relu,
    # post-norm) at small, TPU-friendly sizes.
    vocab_size = 512
    embed_dim = 256
    max_seq_len = 32
    num_layers = 2
    num_heads = 4
    ffn_dim = 2048

    batch, seq, mem_len = 2, 8, 8

    key = jax.random.PRNGKey(0)
    k_par, k_ids, k_mem = jax.random.split(key, 3)

    params = init_params(k_par, vocab_size, embed_dim, max_seq_len,
                         num_layers, ffn_dim)
    decoder_input_ids = jax.random.randint(k_ids, (batch, seq), 0, vocab_size,
                                           dtype=jnp.int32)
    memory = jax.random.normal(k_mem, (batch, mem_len, embed_dim),
                               dtype=jnp.float32)

    fwd = jax.jit(functools.partial(text_decoder_forward, num_heads=num_heads))
    logits = fwd(decoder_input_ids, memory, params)
    jax.block_until_ready(logits)

    assert logits.shape == (batch, seq, vocab_size), logits.shape
    assert logits.dtype == jnp.float32
    assert bool(jnp.all(jnp.isfinite(logits)))
    print("KERNEL_OK")
</pallas_src>

<mosaic_0001>
module attributes {stable_mosaic.version = 11 : i64} {
  func.func @_self_attn_block_kernel(%arg0: i32, %arg1: memref<1x8x256xbf16, #tpu.memory_space<vmem>>, %arg2: memref<256x768xbf16, #tpu.memory_space<vmem>>, %arg3: memref<1x768xf32, #tpu.memory_space<vmem>>, %arg4: memref<256x256xbf16, #tpu.memory_space<vmem>>, %arg5: memref<1x256xf32, #tpu.memory_space<vmem>>, %arg6: memref<1x256xf32, #tpu.memory_space<vmem>>, %arg7: memref<1x256xf32, #tpu.memory_space<vmem>>, %arg8: memref<1x8x256xbf16, #tpu.memory_space<vmem>>) attributes {dimension_semantics = [#tpu.dimension_semantics<parallel>], iteration_bounds = array<i64: 2>, scalar_prefetch = 0 : i64, scratch_operands = 0 : i64, tpu.core_type = #tpu.core_type<tc>, window_params = [{transform_indices = @transform_0, window_bounds = array<i64: 1, 8, 256>}, {pipeline_mode = #tpu.pipeline_mode<synchronous>, transform_indices = @transform_1, window_bounds = array<i64: 256, 768>}, {pipeline_mode = #tpu.pipeline_mode<synchronous>, transform_indices = @transform_2, window_bounds = array<i64: 1, 768>}, {pipeline_mode = #tpu.pipeline_mode<synchronous>, transform_indices = @transform_3, window_bounds = array<i64: 256, 256>}, {pipeline_mode = #tpu.pipeline_mode<synchronous>, transform_indices = @transform_4, window_bounds = array<i64: 1, 256>}, {pipeline_mode = #tpu.pipeline_mode<synchronous>, transform_indices = @transform_5, window_bounds = array<i64: 1, 256>}, {pipeline_mode = #tpu.pipeline_mode<synchronous>, transform_indices = @transform_6, window_bounds = array<i64: 1, 256>}, {transform_indices = @transform_7, window_bounds = array<i64: 1, 8, 256>}]} {
    %c0 = arith.constant 0 : index
    %c0_0 = arith.constant 0 : index
    %c0_1 = arith.constant 0 : index
    %0 = vector.load %arg1[%c0, %c0_0, %c0_1] : memref<1x8x256xbf16, #tpu.memory_space<vmem>>, vector<1x8x256xbf16>
    %1 = vector.shape_cast %0 : vector<1x8x256xbf16> to vector<8x256xbf16>
    %2 = arith.extf %1 : vector<8x256xbf16> to vector<8x256xf32>
    %c0_2 = arith.constant 0 : index
    %c0_3 = arith.constant 0 : index
    %3 = vector.load %arg2[%c0_2, %c0_3] : memref<256x768xbf16, #tpu.memory_space<vmem>>, vector<256x768xbf16>
    %cst = arith.constant dense<0.000000e+00> : vector<8x768xf32>
    %4 = tpu.matmul %1, %3, %cst {dimension_numbers = #tpu.dot_dimension_numbers<[1], [0], [0], [1], [0, 0, 1, 1], [], []>} : vector<8x256xbf16>, vector<256x768xbf16>, vector<8x768xf32> -> vector<8x768xf32>
    %c0_4 = arith.constant 0 : index
    %c0_5 = arith.constant 0 : index
    %5 = vector.load %arg3[%c0_4, %c0_5] : memref<1x768xf32, #tpu.memory_space<vmem>>, vector<1x768xf32>
    %6 = vector.broadcast %5 : vector<1x768xf32> to vector<8x768xf32>
    %7 = arith.addf %4, %6 : vector<8x768xf32>
    %8 = vector.extract_strided_slice %7 {offsets = [0, 0], sizes = [8, 256], strides = [1, 1]} : vector<8x768xf32> to vector<8x256xf32>
    %9 = vector.extract_strided_slice %7 {offsets = [0, 256], sizes = [8, 256], strides = [1, 1]} : vector<8x768xf32> to vector<8x256xf32>
    %10 = vector.extract_strided_slice %7 {offsets = [0, 512], sizes = [8, 256], strides = [1, 1]} : vector<8x768xf32> to vector<8x256xf32>
    %11 = vector.extract_strided_slice %8 {offsets = [0, 0], sizes = [8, 64], strides = [1, 1]} : vector<8x256xf32> to vector<8x64xf32>
    %12 = arith.truncf %11 : vector<8x64xf32> to vector<8x64xbf16>
    %13 = vector.extract_strided_slice %9 {offsets = [0, 0], sizes = [8, 64], strides = [1, 1]} : vector<8x256xf32> to vector<8x64xf32>
    %14 = arith.truncf %13 : vector<8x64xf32> to vector<8x64xbf16>
    %15 = vector.extract_strided_slice %10 {offsets = [0, 0], sizes = [8, 64], strides = [1, 1]} : vector<8x256xf32> to vector<8x64xf32>
    %16 = arith.truncf %15 : vector<8x64xf32> to vector<8x64xbf16>
    %cst_6 = arith.constant dense<0.000000e+00> : vector<8x8xf32>
    %17 = tpu.matmul %12, %14, %cst_6 {dimension_numbers = #tpu.dot_dimension_numbers<[1], [1], [0], [0], [0, 0, 1, 0], [], []>} : vector<8x64xbf16>, vector<8x64xbf16>, vector<8x8xf32> -> vector<8x8xf32>
    %cst_7 = arith.constant 1.250000e-01 : f32
    %18 = vector.broadcast %cst_7 : f32 to vector<8x8xf32>
    %19 = arith.mulf %17, %18 : vector<8x8xf32>
    %cst_8 = arith.constant dense<0xFF800000> : vector<8xf32>
    %20 = vector.multi_reduction <maximumf>, %19, %cst_8 [1] : vector<8x8xf32> to vector<8xf32>
    %21 = vector.shape_cast %20 : vector<8xf32> to vector<8x1xf32>
    %22 = vector.broadcast %21 : vector<8x1xf32> to vector<8x8xf32>
    %23 = arith.subf %19, %22 : vector<8x8xf32>
    %24 = math.exp %23 : vector<8x8xf32>
    %cst_9 = arith.constant dense<0.000000e+00> : vector<8xf32>
    %25 = vector.multi_reduction <add>, %24, %cst_9 [1] : vector<8x8xf32> to vector<8xf32>
    %26 = vector.shape_cast %25 : vector<8xf32> to vector<8x1xf32>
    %27 = vector.broadcast %26 : vector<8x1xf32> to vector<8x8xf32>
    %28 = arith.divf %24, %27 : vector<8x8xf32>
    %29 = arith.truncf %28 : vector<8x8xf32> to vector<8x8xbf16>
    %cst_10 = arith.constant dense<0.000000e+00> : vector<8x64xf32>
    %30 = tpu.matmul %29, %16, %cst_10 {dimension_numbers = #tpu.dot_dimension_numbers<[1], [0], [0], [1], [0, 0, 1, 1], [], []>} : vector<8x8xbf16>, vector<8x64xbf16>, vector<8x64xf32> -> vector<8x64xf32>
    %31 = vector.extract_strided_slice %8 {offsets = [0, 64], sizes = [8, 64], strides = [1, 1]} : vector<8x256xf32> to vector<8x64xf32>
    %32 = arith.truncf %31 : vector<8x64xf32> to vector<8x64xbf16>
    %33 = vector.extract_strided_slice %9 {offsets = [0, 64], sizes = [8, 64], strides = [1, 1]} : vector<8x256xf32> to vector<8x64xf32>
    %34 = arith.truncf %33 : vector<8x64xf32> to vector<8x64xbf16>
    %35 = vector.extract_strided_slice %10 {offsets = [0, 64], sizes = [8, 64], strides = [1, 1]} : vector<8x256xf32> to vector<8x64xf32>
    %36 = arith.truncf %35 : vector<8x64xf32> to vector<8x64xbf16>
    %cst_11 = arith.constant dense<0.000000e+00> : vector<8x8xf32>
    %37 = tpu.matmul %32, %34, %cst_11 {dimension_numbers = #tpu.dot_dimension_numbers<[1], [1], [0], [0], [0, 0, 1, 0], [], []>} : vector<8x64xbf16>, vector<8x64xbf16>, vector<8x8xf32> -> vector<8x8xf32>
    %cst_12 = arith.constant 1.250000e-01 : f32
    %38 = vector.broadcast %cst_12 : f32 to vector<8x8xf32>
    %39 = arith.mulf %37, %38 : vector<8x8xf32>
    %cst_13 = arith.constant dense<0xFF800000> : vector<8xf32>
    %40 = vector.multi_reduction <maximumf>, %39, %cst_13 [1] : vector<8x8xf32> to vector<8xf32>
    %41 = vector.shape_cast %40 : vector<8xf32> to vector<8x1xf32>
    %42 = vector.broadcast %41 : vector<8x1xf32> to vector<8x8xf32>
    %43 = arith.subf %39, %42 : vector<8x8xf32>
    %44 = math.exp %43 : vector<8x8xf32>
    %cst_14 = arith.constant dense<0.000000e+00> : vector<8xf32>
    %45 = vector.multi_reduction <add>, %44, %cst_14 [1] : vector<8x8xf32> to vector<8xf32>
    %46 = vector.shape_cast %45 : vector<8xf32> to vector<8x1xf32>
    %47 = vector.broadcast %46 : vector<8x1xf32> to vector<8x8xf32>
    %48 = arith.divf %44, %47 : vector<8x8xf32>
    %49 = arith.truncf %48 : vector<8x8xf32> to vector<8x8xbf16>
    %cst_15 = arith.constant dense<0.000000e+00> : vector<8x64xf32>
    %50 = tpu.matmul %49, %36, %cst_15 {dimension_numbers = #tpu.dot_dimension_numbers<[1], [0], [0], [1], [0, 0, 1, 1], [], []>} : vector<8x8xbf16>, vector<8x64xbf16>, vector<8x64xf32> -> vector<8x64xf32>
    %51 = vector.extract_strided_slice %8 {offsets = [0, 128], sizes = [8, 64], strides = [1, 1]} : vector<8x256xf32> to vector<8x64xf32>
    %52 = arith.truncf %51 : vector<8x64xf32> to vector<8x64xbf16>
    %53 = vector.extract_strided_slice %9 {offsets = [0, 128], sizes = [8, 64], strides = [1, 1]} : vector<8x256xf32> to vector<8x64xf32>
    %54 = arith.truncf %53 : vector<8x64xf32> to vector<8x64xbf16>
    %55 = vector.extract_strided_slice %10 {offsets = [0, 128], sizes = [8, 64], strides = [1, 1]} : vector<8x256xf32> to vector<8x64xf32>
    %56 = arith.truncf %55 : vector<8x64xf32> to vector<8x64xbf16>
    %cst_16 = arith.constant dense<0.000000e+00> : vector<8x8xf32>
    %57 = tpu.matmul %52, %54, %cst_16 {dimension_numbers = #tpu.dot_dimension_numbers<[1], [1], [0], [0], [0, 0, 1, 0], [], []>} : vector<8x64xbf16>, vector<8x64xbf16>, vector<8x8xf32> -> vector<8x8xf32>
    %cst_17 = arith.constant 1.250000e-01 : f32
    %58 = vector.broadcast %cst_17 : f32 to vector<8x8xf32>
    %59 = arith.mulf %57, %58 : vector<8x8xf32>
    %cst_18 = arith.constant dense<0xFF800000> : vector<8xf32>
    %60 = vector.multi_reduction <maximumf>, %59, %cst_18 [1] : vector<8x8xf32> to vector<8xf32>
    %61 = vector.shape_cast %60 : vector<8xf32> to vector<8x1xf32>
    %62 = vector.broadcast %61 : vector<8x1xf32> to vector<8x8xf32>
    %63 = arith.subf %59, %62 : vector<8x8xf32>
    %64 = math.exp %63 : vector<8x8xf32>
    %cst_19 = arith.constant dense<0.000000e+00> : vector<8xf32>
    %65 = vector.multi_reduction <add>, %64, %cst_19 [1] : vector<8x8xf32> to vector<8xf32>
    %66 = vector.shape_cast %65 : vector<8xf32> to vector<8x1xf32>
    %67 = vector.broadcast %66 : vector<8x1xf32> to vector<8x8xf32>
    %68 = arith.divf %64, %67 : vector<8x8xf32>
    %69 = arith.truncf %68 : vector<8x8xf32> to vector<8x8xbf16>
    %cst_20 = arith.constant dense<0.000000e+00> : vector<8x64xf32>
    %70 = tpu.matmul %69, %56, %cst_20 {dimension_numbers = #tpu.dot_dimension_numbers<[1], [0], [0], [1], [0, 0, 1, 1], [], []>} : vector<8x8xbf16>, vector<8x64xbf16>, vector<8x64xf32> -> vector<8x64xf32>
    %71 = vector.extract_strided_slice %8 {offsets = [0, 192], sizes = [8, 64], strides = [1, 1]} : vector<8x256xf32> to vector<8x64xf32>
    %72 = arith.truncf %71 : vector<8x64xf32> to vector<8x64xbf16>
    %73 = vector.extract_strided_slice %9 {offsets = [0, 192], sizes = [8, 64], strides = [1, 1]} : vector<8x256xf32> to vector<8x64xf32>
    %74 = arith.truncf %73 : vector<8x64xf32> to vector<8x64xbf16>
    %75 = vector.extract_strided_slice %10 {offsets = [0, 192], sizes = [8, 64], strides = [1, 1]} : vector<8x256xf32> to vector<8x64xf32>
    %76 = arith.truncf %75 : vector<8x64xf32> to vector<8x64xbf16>
    %cst_21 = arith.constant dense<0.000000e+00> : vector<8x8xf32>
    %77 = tpu.matmul %72, %74, %cst_21 {dimension_numbers = #tpu.dot_dimension_numbers<[1], [1], [0], [0], [0, 0, 1, 0], [], []>} : vector<8x64xbf16>, vector<8x64xbf16>, vector<8x8xf32> -> vector<8x8xf32>
    %cst_22 = arith.constant 1.250000e-01 : f32
    %78 = vector.broadcast %cst_22 : f32 to vector<8x8xf32>
    %79 = arith.mulf %77, %78 : vector<8x8xf32>
    %cst_23 = arith.constant dense<0xFF800000> : vector<8xf32>
    %80 = vector.multi_reduction <maximumf>, %79, %cst_23 [1] : vector<8x8xf32> to vector<8xf32>
    %81 = vector.shape_cast %80 : vector<8xf32> to vector<8x1xf32>
    %82 = vector.broadcast %81 : vector<8x1xf32> to vector<8x8xf32>
    %83 = arith.subf %79, %82 : vector<8x8xf32>
    %84 = math.exp %83 : vector<8x8xf32>
    %cst_24 = arith.constant dense<0.000000e+00> : vector<8xf32>
    %85 = vector.multi_reduction <add>, %84, %cst_24 [1] : vector<8x8xf32> to vector<8xf32>
    %86 = vector.shape_cast %85 : vector<8xf32> to vector<8x1xf32>
    %87 = vector.broadcast %86 : vector<8x1xf32> to vector<8x8xf32>
    %88 = arith.divf %84, %87 : vector<8x8xf32>
    %89 = arith.truncf %88 : vector<8x8xf32> to vector<8x8xbf16>
    %cst_25 = arith.constant dense<0.000000e+00> : vector<8x64xf32>
    %90 = tpu.matmul %89, %76, %cst_25 {dimension_numbers = #tpu.dot_dimension_numbers<[1], [0], [0], [1], [0, 0, 1, 1], [], []>} : vector<8x8xbf16>, vector<8x64xbf16>, vector<8x64xf32> -> vector<8x64xf32>
    %91 = tpu.concatenate %30, %50, %70, %90 in 1 : vector<8x64xf32>, vector<8x64xf32>, vector<8x64xf32>, vector<8x64xf32> -> vector<8x256xf32>
    %92 = arith.truncf %91 : vector<8x256xf32> to vector<8x256xbf16>
    %c0_26 = arith.constant 0 : index
    %c0_27 = arith.constant 0 : index
    %93 = vector.load %arg4[%c0_26, %c0_27] : memref<256x256xbf16, #tpu.memory_space<vmem>>, vector<256x256xbf16>
    %cst_28 = arith.constant dense<0.000000e+00> : vector<8x256xf32>
    %94 = tpu.matmul %92, %93, %cst_28 {dimension_numbers = #tpu.dot_dimension_numbers<[1], [0], [0], [1], [0, 0, 1, 1], [], []>} : vector<8x256xbf16>, vector<256x256xbf16>, vector<8x256xf32> -> vector<8x256xf32>
    %c0_29 = arith.constant 0 : index
    %c0_30 = arith.constant 0 : index
    %95 = vector.load %arg5[%c0_29, %c0_30] : memref<1x256xf32, #tpu.memory_space<vmem>>, vector<1x256xf32>
    %96 = vector.broadcast %95 : vector<1x256xf32> to vector<8x256xf32>
    %97 = arith.addf %94, %96 : vector<8x256xf32>
    %98 = arith.addf %97, %2 : vector<8x256xf32>
    %c0_31 = arith.constant 0 : index
    %c0_32 = arith.constant 0 : index
    %99 = vector.load %arg6[%c0_31, %c0_32] : memref<1x256xf32, #tpu.memory_space<vmem>>, vector<1x256xf32>
    %c0_33 = arith.constant 0 : index
    %c0_34 = arith.constant 0 : index
    %100 = vector.load %arg7[%c0_33, %c0_34] : memref<1x256xf32, #tpu.memory_space<vmem>>, vector<1x256xf32>
    %cst_35 = arith.constant dense<0.000000e+00> : vector<8xf32>
    %101 = vector.multi_reduction <add>, %98, %cst_35 [1] : vector<8x256xf32> to vector<8xf32>
    %102 = vector.shape_cast %101 : vector<8xf32> to vector<8x1xf32>
    %cst_36 = arith.constant 2.560000e+02 : f32
    %103 = vector.broadcast %cst_36 : f32 to vector<8x1xf32>
    %104 = arith.divf %102, %103 : vector<8x1xf32>
    %105 = vector.broadcast %104 : vector<8x1xf32> to vector<8x256xf32>
    %106 = arith.subf %98, %105 : vector<8x256xf32>
    %107 = vector.broadcast %104 : vector<8x1xf32> to vector<8x256xf32>
    %108 = arith.subf %98, %107 : vector<8x256xf32>
    %109 = arith.mulf %106, %108 : vector<8x256xf32>
    %cst_37 = arith.constant dense<0.000000e+00> : vector<8xf32>
    %110 = vector.multi_reduction <add>, %109, %cst_37 [1] : vector<8x256xf32> to vector<8xf32>
    %111 = vector.shape_cast %110 : vector<8xf32> to vector<8x1xf32>
    %cst_38 = arith.constant 2.560000e+02 : f32
    %112 = vector.broadcast %cst_38 : f32 to vector<8x1xf32>
    %113 = arith.divf %111, %112 : vector<8x1xf32>
    %114 = vector.broadcast %104 : vector<8x1xf32> to vector<8x256xf32>
    %115 = arith.subf %98, %114 : vector<8x256xf32>
    %cst_39 = arith.constant 9.99999974E-6 : f32
    %116 = vector.broadcast %cst_39 : f32 to vector<8x1xf32>
    %117 = arith.addf %113, %116 : vector<8x1xf32>
    %118 = math.rsqrt %117 : vector<8x1xf32>
    %119 = vector.broadcast %118 : vector<8x1xf32> to vector<8x256xf32>
    %120 = arith.mulf %115, %119 : vector<8x256xf32>
    %121 = vector.broadcast %99 : vector<1x256xf32> to vector<8x256xf32>
    %122 = arith.mulf %120, %121 : vector<8x256xf32>
    %123 = vector.broadcast %100 : vector<1x256xf32> to vector<8x256xf32>
    %124 = arith.addf %122, %123 : vector<8x256xf32>
    %125 = arith.truncf %124 : vector<8x256xf32> to vector<8x256xbf16>
    %c0_40 = arith.constant 0 : index
    %c0_41 = arith.constant 0 : index
    %c0_42 = arith.constant 0 : index
    %126 = vector.load %arg8[%c0_40, %c0_41, %c0_42] : memref<1x8x256xbf16, #tpu.memory_space<vmem>>, vector<1x8x256xbf16>
    %127 = vector.shape_cast %126 : vector<1x8x256xbf16> to vector<8x256xbf16>
    %128 = vector.shape_cast %125 : vector<8x256xbf16> to vector<1x8x256xbf16>
    tpu.vector_store %arg8[%c0_40, %c0_41, %c0_42], %128 {strides = array<i32>} : memref<1x8x256xbf16, #tpu.memory_space<vmem>>, vector<1x8x256xbf16>,
    return
  }
  func.func @transform_0(%arg0: i32) -> (i32, i32, i32) {
    %c0_i32 = arith.constant 0 : i32
    %c0_i32_0 = arith.constant 0 : i32
    %c0_i32_1 = arith.constant 0 : i32
    return %arg0, %c0_i32, %c0_i32_0 : i32, i32, i32
  }
  func.func @transform_1(%arg0: i32) -> (i32, i32) {
    %c0_i32 = arith.constant 0 : i32
    %c0_i32_0 = arith.constant 0 : i32
    %c0_i32_1 = arith.constant 0 : i32
    return %c0_i32, %c0_i32_0 : i32, i32
  }
  func.func @transform_2(%arg0: i32) -> (i32, i32) {
    %c0_i32 = arith.constant 0 : i32
    %c0_i32_0 = arith.constant 0 : i32
    %c0_i32_1 = arith.constant 0 : i32
    return %c0_i32, %c0_i32_0 : i32, i32
  }
  func.func @transform_3(%arg0: i32) -> (i32, i32) {
    %c0_i32 = arith.constant 0 : i32
    %c0_i32_0 = arith.constant 0 : i32
    %c0_i32_1 = arith.constant 0 : i32
    return %c0_i32, %c0_i32_0 : i32, i32
  }
  func.func @transform_4(%arg0: i32) -> (i32, i32) {
    %c0_i32 = arith.constant 0 : i32
    %c0_i32_0 = arith.constant 0 : i32
    %c0_i32_1 = arith.constant 0 : i32
    return %c0_i32, %c0_i32_0 : i32, i32
  }
  func.func @transform_5(%arg0: i32) -> (i32, i32) {
    %c0_i32 = arith.constant 0 : i32
    %c0_i32_0 = arith.constant 0 : i32
    %c0_i32_1 = arith.constant 0 : i32
    return %c0_i32, %c0_i32_0 : i32, i32
  }
  func.func @transform_6(%arg0: i32) -> (i32, i32) {
    %c0_i32 = arith.constant 0 : i32
    %c0_i32_0 = arith.constant 0 : i32
    %c0_i32_1 = arith.constant 0 : i32
    return %c0_i32, %c0_i32_0 : i32, i32
  }
  func.func @transform_7(%arg0: i32) -> (i32, i32, i32) {
    %c0_i32 = arith.constant 0 : i32
    %c0_i32_0 = arith.constant 0 : i32
    %c0_i32_1 = arith.constant 0 : i32
    return %arg0, %c0_i32, %c0_i32_0 : i32, i32, i32
  }
}

module attributes {stable_mosaic.version = 11 : i64} {
  func.func @_ffn_block_kernel(%arg0: i32, %arg1: memref<1x8x256xbf16, #tpu.memory_space<vmem>>, %arg2: memref<256x2048xbf16, #tpu.memory_space<vmem>>, %arg3: memref<1x2048xf32, #tpu.memory_space<vmem>>, %arg4: memref<2048x256xbf16, #tpu.memory_space<vmem>>, %arg5: memref<1x256xf32, #tpu.memory_space<vmem>>, %arg6: memref<1x256xf32, #tpu.memory_space<vmem>>, %arg7: memref<1x256xf32, #tpu.memory_space<vmem>>, %arg8: memref<1x8x256xbf16, #tpu.memory_space<vmem>>) attributes {dimension_semantics = [#tpu.dimension_semantics<parallel>], iteration_bounds = array<i64: 2>, scalar_prefetch = 0 : i64, scratch_operands = 0 : i64, tpu.core_type = #tpu.core_type<tc>, window_params = [{transform_indices = @transform_0, window_bounds = array<i64: 1, 8, 256>}, {pipeline_mode = #tpu.pipeline_mode<synchronous>, transform_indices = @transform_1, window_bounds = array<i64: 256, 2048>}, {pipeline_mode = #tpu.pipeline_mode<synchronous>, transform_indices = @transform_2, window_bounds = array<i64: 1, 2048>}, {pipeline_mode = #tpu.pipeline_mode<synchronous>, transform_indices = @transform_3, window_bounds = array<i64: 2048, 256>}, {pipeline_mode = #tpu.pipeline_mode<synchronous>, transform_indices = @transform_4, window_bounds = array<i64: 1, 256>}, {pipeline_mode = #tpu.pipeline_mode<synchronous>, transform_indices = @transform_5, window_bounds = array<i64: 1, 256>}, {pipeline_mode = #tpu.pipeline_mode<synchronous>, transform_indices = @transform_6, window_bounds = array<i64: 1, 256>}, {transform_indices = @transform_7, window_bounds = array<i64: 1, 8, 256>}]} {
    %c0 = arith.constant 0 : index
    %c0_0 = arith.constant 0 : index
    %c0_1 = arith.constant 0 : index
    %0 = vector.load %arg1[%c0, %c0_0, %c0_1] : memref<1x8x256xbf16, #tpu.memory_space<vmem>>, vector<1x8x256xbf16>
    %1 = vector.shape_cast %0 : vector<1x8x256xbf16> to vector<8x256xbf16>
    %2 = arith.extf %1 : vector<8x256xbf16> to vector<8x256xf32>
    %c0_2 = arith.constant 0 : index
    %c0_3 = arith.constant 0 : index
    %3 = vector.load %arg2[%c0_2, %c0_3] : memref<256x2048xbf16, #tpu.memory_space<vmem>>, vector<256x2048xbf16>
    %cst = arith.constant dense<0.000000e+00> : vector<8x2048xf32>
    %4 = tpu.matmul %1, %3, %cst {dimension_numbers = #tpu.dot_dimension_numbers<[1], [0], [0], [1], [0, 0, 1, 1], [], []>} : vector<8x256xbf16>, vector<256x2048xbf16>, vector<8x2048xf32> -> vector<8x2048xf32>
    %c0_4 = arith.constant 0 : index
    %c0_5 = arith.constant 0 : index
    %5 = vector.load %arg3[%c0_4, %c0_5] : memref<1x2048xf32, #tpu.memory_space<vmem>>, vector<1x2048xf32>
    %6 = vector.broadcast %5 : vector<1x2048xf32> to vector<8x2048xf32>
    %7 = arith.addf %4, %6 : vector<8x2048xf32>
    %cst_6 = arith.constant 0.000000e+00 : f32
    %8 = vector.broadcast %cst_6 : f32 to vector<8x2048xf32>
    %9 = arith.maximumf %7, %8 : vector<8x2048xf32>
    %10 = arith.truncf %9 : vector<8x2048xf32> to vector<8x2048xbf16>
    %c0_7 = arith.constant 0 : index
    %c0_8 = arith.constant 0 : index
    %11 = vector.load %arg4[%c0_7, %c0_8] : memref<2048x256xbf16, #tpu.memory_space<vmem>>, vector<2048x256xbf16>
    %cst_9 = arith.constant dense<0.000000e+00> : vector<8x256xf32>
    %12 = tpu.matmul %10, %11, %cst_9 {dimension_numbers = #tpu.dot_dimension_numbers<[1], [0], [0], [1], [0, 0, 1, 1], [], []>} : vector<8x2048xbf16>, vector<2048x256xbf16>, vector<8x256xf32> -> vector<8x256xf32>
    %c0_10 = arith.constant 0 : index
    %c0_11 = arith.constant 0 : index
    %13 = vector.load %arg5[%c0_10, %c0_11] : memref<1x256xf32, #tpu.memory_space<vmem>>, vector<1x256xf32>
    %14 = vector.broadcast %13 : vector<1x256xf32> to vector<8x256xf32>
    %15 = arith.addf %12, %14 : vector<8x256xf32>
    %16 = arith.addf %15, %2 : vector<8x256xf32>
    %c0_12 = arith.constant 0 : index
    %c0_13 = arith.constant 0 : index
    %17 = vector.load %arg6[%c0_12, %c0_13] : memref<1x256xf32, #tpu.memory_space<vmem>>, vector<1x256xf32>
    %c0_14 = arith.constant 0 : index
    %c0_15 = arith.constant 0 : index
    %18 = vector.load %arg7[%c0_14, %c0_15] : memref<1x256xf32, #tpu.memory_space<vmem>>, vector<1x256xf32>
    %cst_16 = arith.constant dense<0.000000e+00> : vector<8xf32>
    %19 = vector.multi_reduction <add>, %16, %cst_16 [1] : vector<8x256xf32> to vector<8xf32>
    %20 = vector.shape_cast %19 : vector<8xf32> to vector<8x1xf32>
    %cst_17 = arith.constant 2.560000e+02 : f32
    %21 = vector.broadcast %cst_17 : f32 to vector<8x1xf32>
    %22 = arith.divf %20, %21 : vector<8x1xf32>
    %23 = vector.broadcast %22 : vector<8x1xf32> to vector<8x256xf32>
    %24 = arith.subf %16, %23 : vector<8x256xf32>
    %25 = vector.broadcast %22 : vector<8x1xf32> to vector<8x256xf32>
    %26 = arith.subf %16, %25 : vector<8x256xf32>
    %27 = arith.mulf %24, %26 : vector<8x256xf32>
    %cst_18 = arith.constant dense<0.000000e+00> : vector<8xf32>
    %28 = vector.multi_reduction <add>, %27, %cst_18 [1] : vector<8x256xf32> to vector<8xf32>
    %29 = vector.shape_cast %28 : vector<8xf32> to vector<8x1xf32>
    %cst_19 = arith.constant 2.560000e+02 : f32
    %30 = vector.broadcast %cst_19 : f32 to vector<8x1xf32>
    %31 = arith.divf %29, %30 : vector<8x1xf32>
    %32 = vector.broadcast %22 : vector<8x1xf32> to vector<8x256xf32>
    %33 = arith.subf %16, %32 : vector<8x256xf32>
    %cst_20 = arith.constant 9.99999974E-6 : f32
    %34 = vector.broadcast %cst_20 : f32 to vector<8x1xf32>
    %35 = arith.addf %31, %34 : vector<8x1xf32>
    %36 = math.rsqrt %35 : vector<8x1xf32>
    %37 = vector.broadcast %36 : vector<8x1xf32> to vector<8x256xf32>
    %38 = arith.mulf %33, %37 : vector<8x256xf32>
    %39 = vector.broadcast %17 : vector<1x256xf32> to vector<8x256xf32>
    %40 = arith.mulf %38, %39 : vector<8x256xf32>
    %41 = vector.broadcast %18 : vector<1x256xf32> to vector<8x256xf32>
    %42 = arith.addf %40, %41 : vector<8x256xf32>
    %43 = arith.truncf %42 : vector<8x256xf32> to vector<8x256xbf16>
    %c0_21 = arith.constant 0 : index
    %c0_22 = arith.constant 0 : index
    %c0_23 = arith.constant 0 : index
    %44 = vector.load %arg8[%c0_21, %c0_22, %c0_23] : memref<1x8x256xbf16, #tpu.memory_space<vmem>>, vector<1x8x256xbf16>
    %45 = vector.shape_cast %44 : vector<1x8x256xbf16> to vector<8x256xbf16>
    %46 = vector.shape_cast %43 : vector<8x256xbf16> to vector<1x8x256xbf16>
    tpu.vector_store %arg8[%c0_21, %c0_22, %c0_23], %46 {strides = array<i32>} : memref<1x8x256xbf16, #tpu.memory_space<vmem>>, vector<1x8x256xbf16>,
    return
  }
  func.func @transform_0(%arg0: i32) -> (i32, i32, i32) {
    %c0_i32 = arith.constant 0 : i32
    %c0_i32_0 = arith.constant 0 : i32
    %c0_i32_1 = arith.constant 0 : i32
    return %arg0, %c0_i32, %c0_i32_0 : i32, i32, i32
  }
  func.func @transform_1(%arg0: i32) -> (i32, i32) {
    %c0_i32 = arith.constant 0 : i32
    %c0_i32_0 = arith.constant 0 : i32
    %c0_i32_1 = arith.constant 0 : i32
    return %c0_i32, %c0_i32_0 : i32, i32
  }
  func.func @transform_2(%arg0: i32) -> (i32, i32) {
    %c0_i32 = arith.constant 0 : i32
    %c0_i32_0 = arith.constant 0 : i32
    %c0_i32_1 = arith.constant 0 : i32
    return %c0_i32, %c0_i32_0 : i32, i32
  }
  func.func @transform_3(%arg0: i32) -> (i32, i32) {
    %c0_i32 = arith.constant 0 : i32
    %c0_i32_0 = arith.constant 0 : i32
    %c0_i32_1 = arith.constant 0 : i32
    return %c0_i32, %c0_i32_0 : i32, i32
  }
  func.func @transform_4(%arg0: i32) -> (i32, i32) {
    %c0_i32 = arith.constant 0 : i32
    %c0_i32_0 = arith.constant 0 : i32
    %c0_i32_1 = arith.constant 0 : i32
    return %c0_i32, %c0_i32_0 : i32, i32
  }
  func.func @transform_5(%arg0: i32) -> (i32, i32) {
    %c0_i32 = arith.constant 0 : i32
    %c0_i32_0 = arith.constant 0 : i32
    %c0_i32_1 = arith.constant 0 : i32
    return %c0_i32, %c0_i32_0 : i32, i32
  }
  func.func @transform_6(%arg0: i32) -> (i32, i32) {
    %c0_i32 = arith.constant 0 : i32
    %c0_i32_0 = arith.constant 0 : i32
    %c0_i32_1 = arith.constant 0 : i32
    return %c0_i32, %c0_i32_0 : i32, i32
  }
  func.func @transform_7(%arg0: i32) -> (i32, i32, i32) {
    %c0_i32 = arith.constant 0 : i32
    %c0_i32_0 = arith.constant 0 : i32
    %c0_i32_1 = arith.constant 0 : i32
    return %arg0, %c0_i32, %c0_i32_0 : i32, i32, i32
  }
}

module attributes {stable_mosaic.version = 11 : i64} {
  func.func @_cross_attn_block_kernel(%arg0: i32, %arg1: memref<1x8x256xbf16, #tpu.memory_space<vmem>>, %arg2: memref<1x8x256xbf16, #tpu.memory_space<vmem>>, %arg3: memref<256x256xbf16, #tpu.memory_space<vmem>>, %arg4: memref<1x256xf32, #tpu.memory_space<vmem>>, %arg5: memref<256x512xbf16, #tpu.memory_space<vmem>>, %arg6: memref<1x512xf32, #tpu.memory_space<vmem>>, %arg7: memref<256x256xbf16, #tpu.memory_space<vmem>>, %arg8: memref<1x256xf32, #tpu.memory_space<vmem>>, %arg9: memref<1x256xf32, #tpu.memory_space<vmem>>, %arg10: memref<1x256xf32, #tpu.memory_space<vmem>>, %arg11: memref<1x8x256xbf16, #tpu.memory_space<vmem>>) attributes {dimension_semantics = [#tpu.dimension_semantics<parallel>], iteration_bounds = array<i64: 2>, scalar_prefetch = 0 : i64, scratch_operands = 0 : i64, tpu.core_type = #tpu.core_type<tc>, window_params = [{transform_indices = @transform_0, window_bounds = array<i64: 1, 8, 256>}, {transform_indices = @transform_1, window_bounds = array<i64: 1, 8, 256>}, {pipeline_mode = #tpu.pipeline_mode<synchronous>, transform_indices = @transform_2, window_bounds = array<i64: 256, 256>}, {pipeline_mode = #tpu.pipeline_mode<synchronous>, transform_indices = @transform_3, window_bounds = array<i64: 1, 256>}, {pipeline_mode = #tpu.pipeline_mode<synchronous>, transform_indices = @transform_4, window_bounds = array<i64: 256, 512>}, {pipeline_mode = #tpu.pipeline_mode<synchronous>, transform_indices = @transform_5, window_bounds = array<i64: 1, 512>}, {pipeline_mode = #tpu.pipeline_mode<synchronous>, transform_indices = @transform_6, window_bounds = array<i64: 256, 256>}, {pipeline_mode = #tpu.pipeline_mode<synchronous>, transform_indices = @transform_7, window_bounds = array<i64: 1, 256>}, {pipeline_mode = #tpu.pipeline_mode<synchronous>, transform_indices = @transform_8, window_bounds = array<i64: 1, 256>}, {pipeline_mode = #tpu.pipeline_mode<synchronous>, transform_indices = @transform_9, window_bounds = array<i64: 1, 256>}, {transform_indices = @transform_10, window_bounds = array<i64: 1, 8, 256>}]} {
    %c0 = arith.constant 0 : index
    %c0_0 = arith.constant 0 : index
    %c0_1 = arith.constant 0 : index
    %0 = vector.load %arg1[%c0, %c0_0, %c0_1] : memref<1x8x256xbf16, #tpu.memory_space<vmem>>, vector<1x8x256xbf16>
    %1 = vector.shape_cast %0 : vector<1x8x256xbf16> to vector<8x256xbf16>
    %c0_2 = arith.constant 0 : index
    %c0_3 = arith.constant 0 : index
    %c0_4 = arith.constant 0 : index
    %2 = vector.load %arg2[%c0_2, %c0_3, %c0_4] : memref<1x8x256xbf16, #tpu.memory_space<vmem>>, vector<1x8x256xbf16>
    %3 = vector.shape_cast %2 : vector<1x8x256xbf16> to vector<8x256xbf16>
    %4 = arith.extf %1 : vector<8x256xbf16> to vector<8x256xf32>
    %c0_5 = arith.constant 0 : index
    %c0_6 = arith.constant 0 : index
    %5 = vector.load %arg3[%c0_5, %c0_6] : memref<256x256xbf16, #tpu.memory_space<vmem>>, vector<256x256xbf16>
    %cst = arith.constant dense<0.000000e+00> : vector<8x256xf32>
    %6 = tpu.matmul %1, %5, %cst {dimension_numbers = #tpu.dot_dimension_numbers<[1], [0], [0], [1], [0, 0, 1, 1], [], []>} : vector<8x256xbf16>, vector<256x256xbf16>, vector<8x256xf32> -> vector<8x256xf32>
    %c0_7 = arith.constant 0 : index
    %c0_8 = arith.constant 0 : index
    %7 = vector.load %arg4[%c0_7, %c0_8] : memref<1x256xf32, #tpu.memory_space<vmem>>, vector<1x256xf32>
    %8 = vector.broadcast %7 : vector<1x256xf32> to vector<8x256xf32>
    %9 = arith.addf %6, %8 : vector<8x256xf32>
    %c0_9 = arith.constant 0 : index
    %c0_10 = arith.constant 0 : index
    %10 = vector.load %arg5[%c0_9, %c0_10] : memref<256x512xbf16, #tpu.memory_space<vmem>>, vector<256x512xbf16>
    %cst_11 = arith.constant dense<0.000000e+00> : vector<8x512xf32>
    %11 = tpu.matmul %3, %10, %cst_11 {dimension_numbers = #tpu.dot_dimension_numbers<[1], [0], [0], [1], [0, 0, 1, 1], [], []>} : vector<8x256xbf16>, vector<256x512xbf16>, vector<8x512xf32> -> vector<8x512xf32>
    %c0_12 = arith.constant 0 : index
    %c0_13 = arith.constant 0 : index
    %12 = vector.load %arg6[%c0_12, %c0_13] : memref<1x512xf32, #tpu.memory_space<vmem>>, vector<1x512xf32>
    %13 = vector.broadcast %12 : vector<1x512xf32> to vector<8x512xf32>
    %14 = arith.addf %11, %13 : vector<8x512xf32>
    %15 = vector.extract_strided_slice %14 {offsets = [0, 0], sizes = [8, 256], strides = [1, 1]} : vector<8x512xf32> to vector<8x256xf32>
    %16 = vector.extract_strided_slice %14 {offsets = [0, 256], sizes = [8, 256], strides = [1, 1]} : vector<8x512xf32> to vector<8x256xf32>
    %17 = vector.extract_strided_slice %9 {offsets = [0, 0], sizes = [8, 64], strides = [1, 1]} : vector<8x256xf32> to vector<8x64xf32>
    %18 = arith.truncf %17 : vector<8x64xf32> to vector<8x64xbf16>
    %19 = vector.extract_strided_slice %15 {offsets = [0, 0], sizes = [8, 64], strides = [1, 1]} : vector<8x256xf32> to vector<8x64xf32>
    %20 = arith.truncf %19 : vector<8x64xf32> to vector<8x64xbf16>
    %21 = vector.extract_strided_slice %16 {offsets = [0, 0], sizes = [8, 64], strides = [1, 1]} : vector<8x256xf32> to vector<8x64xf32>
    %22 = arith.truncf %21 : vector<8x64xf32> to vector<8x64xbf16>
    %cst_14 = arith.constant dense<0.000000e+00> : vector<8x8xf32>
    %23 = tpu.matmul %18, %20, %cst_14 {dimension_numbers = #tpu.dot_dimension_numbers<[1], [1], [0], [0], [0, 0, 1, 0], [], []>} : vector<8x64xbf16>, vector<8x64xbf16>, vector<8x8xf32> -> vector<8x8xf32>
    %cst_15 = arith.constant 1.250000e-01 : f32
    %24 = vector.broadcast %cst_15 : f32 to vector<8x8xf32>
    %25 = arith.mulf %23, %24 : vector<8x8xf32>
    %cst_16 = arith.constant dense<0xFF800000> : vector<8xf32>
    %26 = vector.multi_reduction <maximumf>, %25, %cst_16 [1] : vector<8x8xf32> to vector<8xf32>
    %27 = vector.shape_cast %26 : vector<8xf32> to vector<8x1xf32>
    %28 = vector.broadcast %27 : vector<8x1xf32> to vector<8x8xf32>
    %29 = arith.subf %25, %28 : vector<8x8xf32>
    %30 = math.exp %29 : vector<8x8xf32>
    %cst_17 = arith.constant dense<0.000000e+00> : vector<8xf32>
    %31 = vector.multi_reduction <add>, %30, %cst_17 [1] : vector<8x8xf32> to vector<8xf32>
    %32 = vector.shape_cast %31 : vector<8xf32> to vector<8x1xf32>
    %33 = vector.broadcast %32 : vector<8x1xf32> to vector<8x8xf32>
    %34 = arith.divf %30, %33 : vector<8x8xf32>
    %35 = arith.truncf %34 : vector<8x8xf32> to vector<8x8xbf16>
    %cst_18 = arith.constant dense<0.000000e+00> : vector<8x64xf32>
    %36 = tpu.matmul %35, %22, %cst_18 {dimension_numbers = #tpu.dot_dimension_numbers<[1], [0], [0], [1], [0, 0, 1, 1], [], []>} : vector<8x8xbf16>, vector<8x64xbf16>, vector<8x64xf32> -> vector<8x64xf32>
    %37 = vector.extract_strided_slice %9 {offsets = [0, 64], sizes = [8, 64], strides = [1, 1]} : vector<8x256xf32> to vector<8x64xf32>
    %38 = arith.truncf %37 : vector<8x64xf32> to vector<8x64xbf16>
    %39 = vector.extract_strided_slice %15 {offsets = [0, 64], sizes = [8, 64], strides = [1, 1]} : vector<8x256xf32> to vector<8x64xf32>
    %40 = arith.truncf %39 : vector<8x64xf32> to vector<8x64xbf16>
    %41 = vector.extract_strided_slice %16 {offsets = [0, 64], sizes = [8, 64], strides = [1, 1]} : vector<8x256xf32> to vector<8x64xf32>
    %42 = arith.truncf %41 : vector<8x64xf32> to vector<8x64xbf16>
    %cst_19 = arith.constant dense<0.000000e+00> : vector<8x8xf32>
    %43 = tpu.matmul %38, %40, %cst_19 {dimension_numbers = #tpu.dot_dimension_numbers<[1], [1], [0], [0], [0, 0, 1, 0], [], []>} : vector<8x64xbf16>, vector<8x64xbf16>, vector<8x8xf32> -> vector<8x8xf32>
    %cst_20 = arith.constant 1.250000e-01 : f32
    %44 = vector.broadcast %cst_20 : f32 to vector<8x8xf32>
    %45 = arith.mulf %43, %44 : vector<8x8xf32>
    %cst_21 = arith.constant dense<0xFF800000> : vector<8xf32>
    %46 = vector.multi_reduction <maximumf>, %45, %cst_21 [1] : vector<8x8xf32> to vector<8xf32>
    %47 = vector.shape_cast %46 : vector<8xf32> to vector<8x1xf32>
    %48 = vector.broadcast %47 : vector<8x1xf32> to vector<8x8xf32>
    %49 = arith.subf %45, %48 : vector<8x8xf32>
    %50 = math.exp %49 : vector<8x8xf32>
    %cst_22 = arith.constant dense<0.000000e+00> : vector<8xf32>
    %51 = vector.multi_reduction <add>, %50, %cst_22 [1] : vector<8x8xf32> to vector<8xf32>
    %52 = vector.shape_cast %51 : vector<8xf32> to vector<8x1xf32>
    %53 = vector.broadcast %52 : vector<8x1xf32> to vector<8x8xf32>
    %54 = arith.divf %50, %53 : vector<8x8xf32>
    %55 = arith.truncf %54 : vector<8x8xf32> to vector<8x8xbf16>
    %cst_23 = arith.constant dense<0.000000e+00> : vector<8x64xf32>
    %56 = tpu.matmul %55, %42, %cst_23 {dimension_numbers = #tpu.dot_dimension_numbers<[1], [0], [0], [1], [0, 0, 1, 1], [], []>} : vector<8x8xbf16>, vector<8x64xbf16>, vector<8x64xf32> -> vector<8x64xf32>
    %57 = vector.extract_strided_slice %9 {offsets = [0, 128], sizes = [8, 64], strides = [1, 1]} : vector<8x256xf32> to vector<8x64xf32>
    %58 = arith.truncf %57 : vector<8x64xf32> to vector<8x64xbf16>
    %59 = vector.extract_strided_slice %15 {offsets = [0, 128], sizes = [8, 64], strides = [1, 1]} : vector<8x256xf32> to vector<8x64xf32>
    %60 = arith.truncf %59 : vector<8x64xf32> to vector<8x64xbf16>
    %61 = vector.extract_strided_slice %16 {offsets = [0, 128], sizes = [8, 64], strides = [1, 1]} : vector<8x256xf32> to vector<8x64xf32>
    %62 = arith.truncf %61 : vector<8x64xf32> to vector<8x64xbf16>
    %cst_24 = arith.constant dense<0.000000e+00> : vector<8x8xf32>
    %63 = tpu.matmul %58, %60, %cst_24 {dimension_numbers = #tpu.dot_dimension_numbers<[1], [1], [0], [0], [0, 0, 1, 0], [], []>} : vector<8x64xbf16>, vector<8x64xbf16>, vector<8x8xf32> -> vector<8x8xf32>
    %cst_25 = arith.constant 1.250000e-01 : f32
    %64 = vector.broadcast %cst_25 : f32 to vector<8x8xf32>
    %65 = arith.mulf %63, %64 : vector<8x8xf32>
    %cst_26 = arith.constant dense<0xFF800000> : vector<8xf32>
    %66 = vector.multi_reduction <maximumf>, %65, %cst_26 [1] : vector<8x8xf32> to vector<8xf32>
    %67 = vector.shape_cast %66 : vector<8xf32> to vector<8x1xf32>
    %68 = vector.broadcast %67 : vector<8x1xf32> to vector<8x8xf32>
    %69 = arith.subf %65, %68 : vector<8x8xf32>
    %70 = math.exp %69 : vector<8x8xf32>
    %cst_27 = arith.constant dense<0.000000e+00> : vector<8xf32>
    %71 = vector.multi_reduction <add>, %70, %cst_27 [1] : vector<8x8xf32> to vector<8xf32>
    %72 = vector.shape_cast %71 : vector<8xf32> to vector<8x1xf32>
    %73 = vector.broadcast %72 : vector<8x1xf32> to vector<8x8xf32>
    %74 = arith.divf %70, %73 : vector<8x8xf32>
    %75 = arith.truncf %74 : vector<8x8xf32> to vector<8x8xbf16>
    %cst_28 = arith.constant dense<0.000000e+00> : vector<8x64xf32>
    %76 = tpu.matmul %75, %62, %cst_28 {dimension_numbers = #tpu.dot_dimension_numbers<[1], [0], [0], [1], [0, 0, 1, 1], [], []>} : vector<8x8xbf16>, vector<8x64xbf16>, vector<8x64xf32> -> vector<8x64xf32>
    %77 = vector.extract_strided_slice %9 {offsets = [0, 192], sizes = [8, 64], strides = [1, 1]} : vector<8x256xf32> to vector<8x64xf32>
    %78 = arith.truncf %77 : vector<8x64xf32> to vector<8x64xbf16>
    %79 = vector.extract_strided_slice %15 {offsets = [0, 192], sizes = [8, 64], strides = [1, 1]} : vector<8x256xf32> to vector<8x64xf32>
    %80 = arith.truncf %79 : vector<8x64xf32> to vector<8x64xbf16>
    %81 = vector.extract_strided_slice %16 {offsets = [0, 192], sizes = [8, 64], strides = [1, 1]} : vector<8x256xf32> to vector<8x64xf32>
    %82 = arith.truncf %81 : vector<8x64xf32> to vector<8x64xbf16>
    %cst_29 = arith.constant dense<0.000000e+00> : vector<8x8xf32>
    %83 = tpu.matmul %78, %80, %cst_29 {dimension_numbers = #tpu.dot_dimension_numbers<[1], [1], [0], [0], [0, 0, 1, 0], [], []>} : vector<8x64xbf16>, vector<8x64xbf16>, vector<8x8xf32> -> vector<8x8xf32>
    %cst_30 = arith.constant 1.250000e-01 : f32
    %84 = vector.broadcast %cst_30 : f32 to vector<8x8xf32>
    %85 = arith.mulf %83, %84 : vector<8x8xf32>
    %cst_31 = arith.constant dense<0xFF800000> : vector<8xf32>
    %86 = vector.multi_reduction <maximumf>, %85, %cst_31 [1] : vector<8x8xf32> to vector<8xf32>
    %87 = vector.shape_cast %86 : vector<8xf32> to vector<8x1xf32>
    %88 = vector.broadcast %87 : vector<8x1xf32> to vector<8x8xf32>
    %89 = arith.subf %85, %88 : vector<8x8xf32>
    %90 = math.exp %89 : vector<8x8xf32>
    %cst_32 = arith.constant dense<0.000000e+00> : vector<8xf32>
    %91 = vector.multi_reduction <add>, %90, %cst_32 [1] : vector<8x8xf32> to vector<8xf32>
    %92 = vector.shape_cast %91 : vector<8xf32> to vector<8x1xf32>
    %93 = vector.broadcast %92 : vector<8x1xf32> to vector<8x8xf32>
    %94 = arith.divf %90, %93 : vector<8x8xf32>
    %95 = arith.truncf %94 : vector<8x8xf32> to vector<8x8xbf16>
    %cst_33 = arith.constant dense<0.000000e+00> : vector<8x64xf32>
    %96 = tpu.matmul %95, %82, %cst_33 {dimension_numbers = #tpu.dot_dimension_numbers<[1], [0], [0], [1], [0, 0, 1, 1], [], []>} : vector<8x8xbf16>, vector<8x64xbf16>, vector<8x64xf32> -> vector<8x64xf32>
    %97 = tpu.concatenate %36, %56, %76, %96 in 1 : vector<8x64xf32>, vector<8x64xf32>, vector<8x64xf32>, vector<8x64xf32> -> vector<8x256xf32>
    %98 = arith.truncf %97 : vector<8x256xf32> to vector<8x256xbf16>
    %c0_34 = arith.constant 0 : index
    %c0_35 = arith.constant 0 : index
    %99 = vector.load %arg7[%c0_34, %c0_35] : memref<256x256xbf16, #tpu.memory_space<vmem>>, vector<256x256xbf16>
    %cst_36 = arith.constant dense<0.000000e+00> : vector<8x256xf32>
    %100 = tpu.matmul %98, %99, %cst_36 {dimension_numbers = #tpu.dot_dimension_numbers<[1], [0], [0], [1], [0, 0, 1, 1], [], []>} : vector<8x256xbf16>, vector<256x256xbf16>, vector<8x256xf32> -> vector<8x256xf32>
    %c0_37 = arith.constant 0 : index
    %c0_38 = arith.constant 0 : index
    %101 = vector.load %arg8[%c0_37, %c0_38] : memref<1x256xf32, #tpu.memory_space<vmem>>, vector<1x256xf32>
    %102 = vector.broadcast %101 : vector<1x256xf32> to vector<8x256xf32>
    %103 = arith.addf %100, %102 : vector<8x256xf32>
    %104 = arith.addf %103, %4 : vector<8x256xf32>
    %c0_39 = arith.constant 0 : index
    %c0_40 = arith.constant 0 : index
    %105 = vector.load %arg9[%c0_39, %c0_40] : memref<1x256xf32, #tpu.memory_space<vmem>>, vector<1x256xf32>
    %c0_41 = arith.constant 0 : index
    %c0_42 = arith.constant 0 : index
    %106 = vector.load %arg10[%c0_41, %c0_42] : memref<1x256xf32, #tpu.memory_space<vmem>>, vector<1x256xf32>
    %cst_43 = arith.constant dense<0.000000e+00> : vector<8xf32>
    %107 = vector.multi_reduction <add>, %104, %cst_43 [1] : vector<8x256xf32> to vector<8xf32>
    %108 = vector.shape_cast %107 : vector<8xf32> to vector<8x1xf32>
    %cst_44 = arith.constant 2.560000e+02 : f32
    %109 = vector.broadcast %cst_44 : f32 to vector<8x1xf32>
    %110 = arith.divf %108, %109 : vector<8x1xf32>
    %111 = vector.broadcast %110 : vector<8x1xf32> to vector<8x256xf32>
    %112 = arith.subf %104, %111 : vector<8x256xf32>
    %113 = vector.broadcast %110 : vector<8x1xf32> to vector<8x256xf32>
    %114 = arith.subf %104, %113 : vector<8x256xf32>
    %115 = arith.mulf %112, %114 : vector<8x256xf32>
    %cst_45 = arith.constant dense<0.000000e+00> : vector<8xf32>
    %116 = vector.multi_reduction <add>, %115, %cst_45 [1] : vector<8x256xf32> to vector<8xf32>
    %117 = vector.shape_cast %116 : vector<8xf32> to vector<8x1xf32>
    %cst_46 = arith.constant 2.560000e+02 : f32
    %118 = vector.broadcast %cst_46 : f32 to vector<8x1xf32>
    %119 = arith.divf %117, %118 : vector<8x1xf32>
    %120 = vector.broadcast %110 : vector<8x1xf32> to vector<8x256xf32>
    %121 = arith.subf %104, %120 : vector<8x256xf32>
    %cst_47 = arith.constant 9.99999974E-6 : f32
    %122 = vector.broadcast %cst_47 : f32 to vector<8x1xf32>
    %123 = arith.addf %119, %122 : vector<8x1xf32>
    %124 = math.rsqrt %123 : vector<8x1xf32>
    %125 = vector.broadcast %124 : vector<8x1xf32> to vector<8x256xf32>
    %126 = arith.mulf %121, %125 : vector<8x256xf32>
    %127 = vector.broadcast %105 : vector<1x256xf32> to vector<8x256xf32>
    %128 = arith.mulf %126, %127 : vector<8x256xf32>
    %129 = vector.broadcast %106 : vector<1x256xf32> to vector<8x256xf32>
    %130 = arith.addf %128, %129 : vector<8x256xf32>
    %131 = arith.truncf %130 : vector<8x256xf32> to vector<8x256xbf16>
    %c0_48 = arith.constant 0 : index
    %c0_49 = arith.constant 0 : index
    %c0_50 = arith.constant 0 : index
    %132 = vector.load %arg11[%c0_48, %c0_49, %c0_50] : memref<1x8x256xbf16, #tpu.memory_space<vmem>>, vector<1x8x256xbf16>
    %133 = vector.shape_cast %132 : vector<1x8x256xbf16> to vector<8x256xbf16>
    %134 = vector.shape_cast %131 : vector<8x256xbf16> to vector<1x8x256xbf16>
    tpu.vector_store %arg11[%c0_48, %c0_49, %c0_50], %134 {strides = array<i32>} : memref<1x8x256xbf16, #tpu.memory_space<vmem>>, vector<1x8x256xbf16>,
    return
  }
  func.func @transform_0(%arg0: i32) -> (i32, i32, i32) {
    %c0_i32 = arith.constant 0 : i32
    %c0_i32_0 = arith.constant 0 : i32
    %c0_i32_1 = arith.constant 0 : i32
    return %arg0, %c0_i32, %c0_i32_0 : i32, i32, i32
  }
  func.func @transform_1(%arg0: i32) -> (i32, i32, i32) {
    %c0_i32 = arith.constant 0 : i32
    %c0_i32_0 = arith.constant 0 : i32
    %c0_i32_1 = arith.constant 0 : i32
    return %arg0, %c0_i32, %c0_i32_0 : i32, i32, i32
  }
  func.func @transform_2(%arg0: i32) -> (i32, i32) {
    %c0_i32 = arith.constant 0 : i32
    %c0_i32_0 = arith.constant 0 : i32
    %c0_i32_1 = arith.constant 0 : i32
    return %c0_i32, %c0_i32_0 : i32, i32
  }
  func.func @transform_3(%arg0: i32) -> (i32, i32) {
    %c0_i32 = arith.constant 0 : i32
    %c0_i32_0 = arith.constant 0 : i32
    %c0_i32_1 = arith.constant 0 : i32
    return %c0_i32, %c0_i32_0 : i32, i32
  }
  func.func @transform_4(%arg0: i32) -> (i32, i32) {
    %c0_i32 = arith.constant 0 : i32
    %c0_i32_0 = arith.constant 0 : i32
    %c0_i32_1 = arith.constant 0 : i32
    return %c0_i32, %c0_i32_0 : i32, i32
  }
  func.func @transform_5(%arg0: i32) -> (i32, i32) {
    %c0_i32 = arith.constant 0 : i32
    %c0_i32_0 = arith.constant 0 : i32
    %c0_i32_1 = arith.constant 0 : i32
    return %c0_i32, %c0_i32_0 : i32, i32
  }
  func.func @transform_6(%arg0: i32) -> (i32, i32) {
    %c0_i32 = arith.constant 0 : i32
    %c0_i32_0 = arith.constant 0 : i32
    %c0_i32_1 = arith.constant 0 : i32
    return %c0_i32, %c0_i32_0 : i32, i32
  }
  func.func @transform_7(%arg0: i32) -> (i32, i32) {
    %c0_i32 = arith.constant 0 : i32
    %c0_i32_0 = arith.constant 0 : i32
    %c0_i32_1 = arith.constant 0 : i32
    return %c0_i32, %c0_i32_0 : i32, i32
  }
  func.func @transform_8(%arg0: i32) -> (i32, i32) {
    %c0_i32 = arith.constant 0 : i32
    %c0_i32_0 = arith.constant 0 : i32
    %c0_i32_1 = arith.constant 0 : i32
    return %c0_i32, %c0_i32_0 : i32, i32
  }
  func.func @transform_9(%arg0: i32) -> (i32, i32) {
    %c0_i32 = arith.constant 0 : i32
    %c0_i32_0 = arith.constant 0 : i32
    %c0_i32_1 = arith.constant 0 : i32
    return %c0_i32, %c0_i32_0 : i32, i32
  }
  func.func @transform_10(%arg0: i32) -> (i32, i32, i32) {
    %c0_i32 = arith.constant 0 : i32
    %c0_i32_0 = arith.constant 0 : i32
    %c0_i32_1 = arith.constant 0 : i32
    return %arg0, %c0_i32, %c0_i32_0 : i32, i32, i32
  }
}

module attributes {stable_mosaic.version = 11 : i64} {
  func.func @_self_attn_block_kernel(%arg0: i32, %arg1: memref<1x8x256xbf16, #tpu.memory_space<vmem>>, %arg2: memref<256x768xbf16, #tpu.memory_space<vmem>>, %arg3: memref<1x768xf32, #tpu.memory_space<vmem>>, %arg4: memref<256x256xbf16, #tpu.memory_space<vmem>>, %arg5: memref<1x256xf32, #tpu.memory_space<vmem>>, %arg6: memref<1x256xf32, #tpu.memory_space<vmem>>, %arg7: memref<1x256xf32, #tpu.memory_space<vmem>>, %arg8: memref<1x8x256xbf16, #tpu.memory_space<vmem>>) attributes {dimension_semantics = [#tpu.dimension_semantics<parallel>], iteration_bounds = array<i64: 2>, scalar_prefetch = 0 : i64, scratch_operands = 0 : i64, tpu.core_type = #tpu.core_type<tc>, window_params = [{transform_indices = @transform_0, window_bounds = array<i64: 1, 8, 256>}, {pipeline_mode = #tpu.pipeline_mode<synchronous>, transform_indices = @transform_1, window_bounds = array<i64: 256, 768>}, {pipeline_mode = #tpu.pipeline_mode<synchronous>, transform_indices = @transform_2, window_bounds = array<i64: 1, 768>}, {pipeline_mode = #tpu.pipeline_mode<synchronous>, transform_indices = @transform_3, window_bounds = array<i64: 256, 256>}, {pipeline_mode = #tpu.pipeline_mode<synchronous>, transform_indices = @transform_4, window_bounds = array<i64: 1, 256>}, {pipeline_mode = #tpu.pipeline_mode<synchronous>, transform_indices = @transform_5, window_bounds = array<i64: 1, 256>}, {pipeline_mode = #tpu.pipeline_mode<synchronous>, transform_indices = @transform_6, window_bounds = array<i64: 1, 256>}, {transform_indices = @transform_7, window_bounds = array<i64: 1, 8, 256>}]} {
    %c0 = arith.constant 0 : index
    %c0_0 = arith.constant 0 : index
    %c0_1 = arith.constant 0 : index
    %0 = vector.load %arg1[%c0, %c0_0, %c0_1] : memref<1x8x256xbf16, #tpu.memory_space<vmem>>, vector<1x8x256xbf16>
    %1 = vector.shape_cast %0 : vector<1x8x256xbf16> to vector<8x256xbf16>
    %2 = arith.extf %1 : vector<8x256xbf16> to vector<8x256xf32>
    %c0_2 = arith.constant 0 : index
    %c0_3 = arith.constant 0 : index
    %3 = vector.load %arg2[%c0_2, %c0_3] : memref<256x768xbf16, #tpu.memory_space<vmem>>, vector<256x768xbf16>
    %cst = arith.constant dense<0.000000e+00> : vector<8x768xf32>
    %4 = tpu.matmul %1, %3, %cst {dimension_numbers = #tpu.dot_dimension_numbers<[1], [0], [0], [1], [0, 0, 1, 1], [], []>} : vector<8x256xbf16>, vector<256x768xbf16>, vector<8x768xf32> -> vector<8x768xf32>
    %c0_4 = arith.constant 0 : index
    %c0_5 = arith.constant 0 : index
    %5 = vector.load %arg3[%c0_4, %c0_5] : memref<1x768xf32, #tpu.memory_space<vmem>>, vector<1x768xf32>
    %6 = vector.broadcast %5 : vector<1x768xf32> to vector<8x768xf32>
    %7 = arith.addf %4, %6 : vector<8x768xf32>
    %8 = vector.extract_strided_slice %7 {offsets = [0, 0], sizes = [8, 256], strides = [1, 1]} : vector<8x768xf32> to vector<8x256xf32>
    %9 = vector.extract_strided_slice %7 {offsets = [0, 256], sizes = [8, 256], strides = [1, 1]} : vector<8x768xf32> to vector<8x256xf32>
    %10 = vector.extract_strided_slice %7 {offsets = [0, 512], sizes = [8, 256], strides = [1, 1]} : vector<8x768xf32> to vector<8x256xf32>
    %11 = vector.extract_strided_slice %8 {offsets = [0, 0], sizes = [8, 64], strides = [1, 1]} : vector<8x256xf32> to vector<8x64xf32>
    %12 = arith.truncf %11 : vector<8x64xf32> to vector<8x64xbf16>
    %13 = vector.extract_strided_slice %9 {offsets = [0, 0], sizes = [8, 64], strides = [1, 1]} : vector<8x256xf32> to vector<8x64xf32>
    %14 = arith.truncf %13 : vector<8x64xf32> to vector<8x64xbf16>
    %15 = vector.extract_strided_slice %10 {offsets = [0, 0], sizes = [8, 64], strides = [1, 1]} : vector<8x256xf32> to vector<8x64xf32>
    %16 = arith.truncf %15 : vector<8x64xf32> to vector<8x64xbf16>
    %cst_6 = arith.constant dense<0.000000e+00> : vector<8x8xf32>
    %17 = tpu.matmul %12, %14, %cst_6 {dimension_numbers = #tpu.dot_dimension_numbers<[1], [1], [0], [0], [0, 0, 1, 0], [], []>} : vector<8x64xbf16>, vector<8x64xbf16>, vector<8x8xf32> -> vector<8x8xf32>
    %cst_7 = arith.constant 1.250000e-01 : f32
    %18 = vector.broadcast %cst_7 : f32 to vector<8x8xf32>
    %19 = arith.mulf %17, %18 : vector<8x8xf32>
    %cst_8 = arith.constant dense<0xFF800000> : vector<8xf32>
    %20 = vector.multi_reduction <maximumf>, %19, %cst_8 [1] : vector<8x8xf32> to vector<8xf32>
    %21 = vector.shape_cast %20 : vector<8xf32> to vector<8x1xf32>
    %22 = vector.broadcast %21 : vector<8x1xf32> to vector<8x8xf32>
    %23 = arith.subf %19, %22 : vector<8x8xf32>
    %24 = math.exp %23 : vector<8x8xf32>
    %cst_9 = arith.constant dense<0.000000e+00> : vector<8xf32>
    %25 = vector.multi_reduction <add>, %24, %cst_9 [1] : vector<8x8xf32> to vector<8xf32>
    %26 = vector.shape_cast %25 : vector<8xf32> to vector<8x1xf32>
    %27 = vector.broadcast %26 : vector<8x1xf32> to vector<8x8xf32>
    %28 = arith.divf %24, %27 : vector<8x8xf32>
    %29 = arith.truncf %28 : vector<8x8xf32> to vector<8x8xbf16>
    %cst_10 = arith.constant dense<0.000000e+00> : vector<8x64xf32>
    %30 = tpu.matmul %29, %16, %cst_10 {dimension_numbers = #tpu.dot_dimension_numbers<[1], [0], [0], [1], [0, 0, 1, 1], [], []>} : vector<8x8xbf16>, vector<8x64xbf16>, vector<8x64xf32> -> vector<8x64xf32>
    %31 = vector.extract_strided_slice %8 {offsets = [0, 64], sizes = [8, 64], strides = [1, 1]} : vector<8x256xf32> to vector<8x64xf32>
    %32 = arith.truncf %31 : vector<8x64xf32> to vector<8x64xbf16>
    %33 = vector.extract_strided_slice %9 {offsets = [0, 64], sizes = [8, 64], strides = [1, 1]} : vector<8x256xf32> to vector<8x64xf32>
    %34 = arith.truncf %33 : vector<8x64xf32> to vector<8x64xbf16>
    %35 = vector.extract_strided_slice %10 {offsets = [0, 64], sizes = [8, 64], strides = [1, 1]} : vector<8x256xf32> to vector<8x64xf32>
    %36 = arith.truncf %35 : vector<8x64xf32> to vector<8x64xbf16>
    %cst_11 = arith.constant dense<0.000000e+00> : vector<8x8xf32>
    %37 = tpu.matmul %32, %34, %cst_11 {dimension_numbers = #tpu.dot_dimension_numbers<[1], [1], [0], [0], [0, 0, 1, 0], [], []>} : vector<8x64xbf16>, vector<8x64xbf16>, vector<8x8xf32> -> vector<8x8xf32>
    %cst_12 = arith.constant 1.250000e-01 : f32
    %38 = vector.broadcast %cst_12 : f32 to vector<8x8xf32>
    %39 = arith.mulf %37, %38 : vector<8x8xf32>
    %cst_13 = arith.constant dense<0xFF800000> : vector<8xf32>
    %40 = vector.multi_reduction <maximumf>, %39, %cst_13 [1] : vector<8x8xf32> to vector<8xf32>
    %41 = vector.shape_cast %40 : vector<8xf32> to vector<8x1xf32>
    %42 = vector.broadcast %41 : vector<8x1xf32> to vector<8x8xf32>
    %43 = arith.subf %39, %42 : vector<8x8xf32>
    %44 = math.exp %43 : vector<8x8xf32>
    %cst_14 = arith.constant dense<0.000000e+00> : vector<8xf32>
    %45 = vector.multi_reduction <add>, %44, %cst_14 [1] : vector<8x8xf32> to vector<8xf32>
    %46 = vector.shape_cast %45 : vector<8xf32> to vector<8x1xf32>
    %47 = vector.broadcast %46 : vector<8x1xf32> to vector<8x8xf32>
    %48 = arith.divf %44, %47 : vector<8x8xf32>
    %49 = arith.truncf %48 : vector<8x8xf32> to vector<8x8xbf16>
    %cst_15 = arith.constant dense<0.000000e+00> : vector<8x64xf32>
    %50 = tpu.matmul %49, %36, %cst_15 {dimension_numbers = #tpu.dot_dimension_numbers<[1], [0], [0], [1], [0, 0, 1, 1], [], []>} : vector<8x8xbf16>, vector<8x64xbf16>, vector<8x64xf32> -> vector<8x64xf32>
    %51 = vector.extract_strided_slice %8 {offsets = [0, 128], sizes = [8, 64], strides = [1, 1]} : vector<8x256xf32> to vector<8x64xf32>
    %52 = arith.truncf %51 : vector<8x64xf32> to vector<8x64xbf16>
    %53 = vector.extract_strided_slice %9 {offsets = [0, 128], sizes = [8, 64], strides = [1, 1]} : vector<8x256xf32> to vector<8x64xf32>
    %54 = arith.truncf %53 : vector<8x64xf32> to vector<8x64xbf16>
    %55 = vector.extract_strided_slice %10 {offsets = [0, 128], sizes = [8, 64], strides = [1, 1]} : vector<8x256xf32> to vector<8x64xf32>
    %56 = arith.truncf %55 : vector<8x64xf32> to vector<8x64xbf16>
    %cst_16 = arith.constant dense<0.000000e+00> : vector<8x8xf32>
    %57 = tpu.matmul %52, %54, %cst_16 {dimension_numbers = #tpu.dot_dimension_numbers<[1], [1], [0], [0], [0, 0, 1, 0], [], []>} : vector<8x64xbf16>, vector<8x64xbf16>, vector<8x8xf32> -> vector<8x8xf32>
    %cst_17 = arith.constant 1.250000e-01 : f32
    %58 = vector.broadcast %cst_17 : f32 to vector<8x8xf32>
    %59 = arith.mulf %57, %58 : vector<8x8xf32>
    %cst_18 = arith.constant dense<0xFF800000> : vector<8xf32>
    %60 = vector.multi_reduction <maximumf>, %59, %cst_18 [1] : vector<8x8xf32> to vector<8xf32>
    %61 = vector.shape_cast %60 : vector<8xf32> to vector<8x1xf32>
    %62 = vector.broadcast %61 : vector<8x1xf32> to vector<8x8xf32>
    %63 = arith.subf %59, %62 : vector<8x8xf32>
    %64 = math.exp %63 : vector<8x8xf32>
    %cst_19 = arith.constant dense<0.000000e+00> : vector<8xf32>
    %65 = vector.multi_reduction <add>, %64, %cst_19 [1] : vector<8x8xf32> to vector<8xf32>
    %66 = vector.shape_cast %65 : vector<8xf32> to vector<8x1xf32>
    %67 = vector.broadcast %66 : vector<8x1xf32> to vector<8x8xf32>
    %68 = arith.divf %64, %67 : vector<8x8xf32>
    %69 = arith.truncf %68 : vector<8x8xf32> to vector<8x8xbf16>
    %cst_20 = arith.constant dense<0.000000e+00> : vector<8x64xf32>
    %70 = tpu.matmul %69, %56, %cst_20 {dimension_numbers = #tpu.dot_dimension_numbers<[1], [0], [0], [1], [0, 0, 1, 1], [], []>} : vector<8x8xbf16>, vector<8x64xbf16>, vector<8x64xf32> -> vector<8x64xf32>
    %71 = vector.extract_strided_slice %8 {offsets = [0, 192], sizes = [8, 64], strides = [1, 1]} : vector<8x256xf32> to vector<8x64xf32>
    %72 = arith.truncf %71 : vector<8x64xf32> to vector<8x64xbf16>
    %73 = vector.extract_strided_slice %9 {offsets = [0, 192], sizes = [8, 64], strides = [1, 1]} : vector<8x256xf32> to vector<8x64xf32>
    %74 = arith.truncf %73 : vector<8x64xf32> to vector<8x64xbf16>
    %75 = vector.extract_strided_slice %10 {offsets = [0, 192], sizes = [8, 64], strides = [1, 1]} : vector<8x256xf32> to vector<8x64xf32>
    %76 = arith.truncf %75 : vector<8x64xf32> to vector<8x64xbf16>
    %cst_21 = arith.constant dense<0.000000e+00> : vector<8x8xf32>
    %77 = tpu.matmul %72, %74, %cst_21 {dimension_numbers = #tpu.dot_dimension_numbers<[1], [1], [0], [0], [0, 0, 1, 0], [], []>} : vector<8x64xbf16>, vector<8x64xbf16>, vector<8x8xf32> -> vector<8x8xf32>
    %cst_22 = arith.constant 1.250000e-01 : f32
    %78 = vector.broadcast %cst_22 : f32 to vector<8x8xf32>
    %79 = arith.mulf %77, %78 : vector<8x8xf32>
    %cst_23 = arith.constant dense<0xFF800000> : vector<8xf32>
    %80 = vector.multi_reduction <maximumf>, %79, %cst_23 [1] : vector<8x8xf32> to vector<8xf32>
    %81 = vector.shape_cast %80 : vector<8xf32> to vector<8x1xf32>
    %82 = vector.broadcast %81 : vector<8x1xf32> to vector<8x8xf32>
    %83 = arith.subf %79, %82 : vector<8x8xf32>
    %84 = math.exp %83 : vector<8x8xf32>
    %cst_24 = arith.constant dense<0.000000e+00> : vector<8xf32>
    %85 = vector.multi_reduction <add>, %84, %cst_24 [1] : vector<8x8xf32> to vector<8xf32>
    %86 = vector.shape_cast %85 : vector<8xf32> to vector<8x1xf32>
    %87 = vector.broadcast %86 : vector<8x1xf32> to vector<8x8xf32>
    %88 = arith.divf %84, %87 : vector<8x8xf32>
    %89 = arith.truncf %88 : vector<8x8xf32> to vector<8x8xbf16>
    %cst_25 = arith.constant dense<0.000000e+00> : vector<8x64xf32>
    %90 = tpu.matmul %89, %76, %cst_25 {dimension_numbers = #tpu.dot_dimension_numbers<[1], [0], [0], [1], [0, 0, 1, 1], [], []>} : vector<8x8xbf16>, vector<8x64xbf16>, vector<8x64xf32> -> vector<8x64xf32>
    %91 = tpu.concatenate %30, %50, %70, %90 in 1 : vector<8x64xf32>, vector<8x64xf32>, vector<8x64xf32>, vector<8x64xf32> -> vector<8x256xf32>
    %92 = arith.truncf %91 : vector<8x256xf32> to vector<8x256xbf16>
    %c0_26 = arith.constant 0 : index
    %c0_27 = arith.constant 0 : index
    %93 = vector.load %arg4[%c0_26, %c0_27] : memref<256x256xbf16, #tpu.memory_space<vmem>>, vector<256x256xbf16>
    %cst_28 = arith.constant dense<0.000000e+00> : vector<8x256xf32>
    %94 = tpu.matmul %92, %93, %cst_28 {dimension_numbers = #tpu.dot_dimension_numbers<[1], [0], [0], [1], [0, 0, 1, 1], [], []>} : vector<8x256xbf16>, vector<256x256xbf16>, vector<8x256xf32> -> vector<8x256xf32>
    %c0_29 = arith.constant 0 : index
    %c0_30 = arith.constant 0 : index
    %95 = vector.load %arg5[%c0_29, %c0_30] : memref<1x256xf32, #tpu.memory_space<vmem>>, vector<1x256xf32>
    %96 = vector.broadcast %95 : vector<1x256xf32> to vector<8x256xf32>
    %97 = arith.addf %94, %96 : vector<8x256xf32>
    %98 = arith.addf %97, %2 : vector<8x256xf32>
    %c0_31 = arith.constant 0 : index
    %c0_32 = arith.constant 0 : index
    %99 = vector.load %arg6[%c0_31, %c0_32] : memref<1x256xf32, #tpu.memory_space<vmem>>, vector<1x256xf32>
    %c0_33 = arith.constant 0 : index
    %c0_34 = arith.constant 0 : index
    %100 = vector.load %arg7[%c0_33, %c0_34] : memref<1x256xf32, #tpu.memory_space<vmem>>, vector<1x256xf32>
    %cst_35 = arith.constant dense<0.000000e+00> : vector<8xf32>
    %101 = vector.multi_reduction <add>, %98, %cst_35 [1] : vector<8x256xf32> to vector<8xf32>
    %102 = vector.shape_cast %101 : vector<8xf32> to vector<8x1xf32>
    %cst_36 = arith.constant 2.560000e+02 : f32
    %103 = vector.broadcast %cst_36 : f32 to vector<8x1xf32>
    %104 = arith.divf %102, %103 : vector<8x1xf32>
    %105 = vector.broadcast %104 : vector<8x1xf32> to vector<8x256xf32>
    %106 = arith.subf %98, %105 : vector<8x256xf32>
    %107 = vector.broadcast %104 : vector<8x1xf32> to vector<8x256xf32>
    %108 = arith.subf %98, %107 : vector<8x256xf32>
    %109 = arith.mulf %106, %108 : vector<8x256xf32>
    %cst_37 = arith.constant dense<0.000000e+00> : vector<8xf32>
    %110 = vector.multi_reduction <add>, %109, %cst_37 [1] : vector<8x256xf32> to vector<8xf32>
    %111 = vector.shape_cast %110 : vector<8xf32> to vector<8x1xf32>
    %cst_38 = arith.constant 2.560000e+02 : f32
    %112 = vector.broadcast %cst_38 : f32 to vector<8x1xf32>
    %113 = arith.divf %111, %112 : vector<8x1xf32>
    %114 = vector.broadcast %104 : vector<8x1xf32> to vector<8x256xf32>
    %115 = arith.subf %98, %114 : vector<8x256xf32>
    %cst_39 = arith.constant 9.99999974E-6 : f32
    %116 = vector.broadcast %cst_39 : f32 to vector<8x1xf32>
    %117 = arith.addf %113, %116 : vector<8x1xf32>
    %118 = math.rsqrt %117 : vector<8x1xf32>
    %119 = vector.broadcast %118 : vector<8x1xf32> to vector<8x256xf32>
    %120 = arith.mulf %115, %119 : vector<8x256xf32>
    %121 = vector.broadcast %99 : vector<1x256xf32> to vector<8x256xf32>
    %122 = arith.mulf %120, %121 : vector<8x256xf32>
    %123 = vector.broadcast %100 : vector<1x256xf32> to vector<8x256xf32>
    %124 = arith.addf %122, %123 : vector<8x256xf32>
    %125 = arith.truncf %124 : vector<8x256xf32> to vector<8x256xbf16>
    %c0_40 = arith.constant 0 : index
    %c0_41 = arith.constant 0 : index
    %c0_42 = arith.constant 0 : index
    %126 = vector.load %arg8[%c0_40, %c0_41, %c0_42] : memref<1x8x256xbf16, #tpu.memory_space<vmem>>, vector<1x8x256xbf16>
    %127 = vector.shape_cast %126 : vector<1x8x256xbf16> to vector<8x256xbf16>
    %128 = vector.shape_cast %125 : vector<8x256xbf16> to vector<1x8x256xbf16>
    tpu.vector_store %arg8[%c0_40, %c0_41, %c0_42], %128 {strides = array<i32>} : memref<1x8x256xbf16, #tpu.memory_space<vmem>>, vector<1x8x256xbf16>,
    return
  }
  func.func @transform_0(%arg0: i32) -> (i32, i32, i32) {
    %c0_i32 = arith.constant 0 : i32
    %c0_i32_0 = arith.constant 0 : i32
    %c0_i32_1 = arith.constant 0 : i32
    return %arg0, %c0_i32, %c0_i32_0 : i32, i32, i32
  }
  func.func @transform_1(%arg0: i32) -> (i32, i32) {
    %c0_i32 = arith.constant 0 : i32
    %c0_i32_0 = arith.constant 0 : i32
    %c0_i32_1 = arith.constant 0 : i32
    return %c0_i32, %c0_i32_0 : i32, i32
  }
  func.func @transform_2(%arg0: i32) -> (i32, i32) {
    %c0_i32 = arith.constant 0 : i32
    %c0_i32_0 = arith.constant 0 : i32
    %c0_i32_1 = arith.constant 0 : i32
    return %c0_i32, %c0_i32_0 : i32, i32
  }
  func.func @transform_3(%arg0: i32) -> (i32, i32) {
    %c0_i32 = arith.constant 0 : i32
    %c0_i32_0 = arith.constant 0 : i32
    %c0_i32_1 = arith.constant 0 : i32
    return %c0_i32, %c0_i32_0 : i32, i32
  }
  func.func @transform_4(%arg0: i32) -> (i32, i32) {
    %c0_i32 = arith.constant 0 : i32
    %c0_i32_0 = arith.constant 0 : i32
    %c0_i32_1 = arith.constant 0 : i32
    return %c0_i32, %c0_i32_0 : i32, i32
  }
  func.func @transform_5(%arg0: i32) -> (i32, i32) {
    %c0_i32 = arith.constant 0 : i32
    %c0_i32_0 = arith.constant 0 : i32
    %c0_i32_1 = arith.constant 0 : i32
    return %c0_i32, %c0_i32_0 : i32, i32
  }
  func.func @transform_6(%arg0: i32) -> (i32, i32) {
    %c0_i32 = arith.constant 0 : i32
    %c0_i32_0 = arith.constant 0 : i32
    %c0_i32_1 = arith.constant 0 : i32
    return %c0_i32, %c0_i32_0 : i32, i32
  }
  func.func @transform_7(%arg0: i32) -> (i32, i32, i32) {
    %c0_i32 = arith.constant 0 : i32
    %c0_i32_0 = arith.constant 0 : i32
    %c0_i32_1 = arith.constant 0 : i32
    return %arg0, %c0_i32, %c0_i32_0 : i32, i32, i32
  }
}

module attributes {stable_mosaic.version = 11 : i64} {
  func.func @_matmul_bias_kernel(%arg0: i32, %arg1: memref<16x256xbf16, #tpu.memory_space<vmem>>, %arg2: memref<256x512xbf16, #tpu.memory_space<vmem>>, %arg3: memref<1x512xf32, #tpu.memory_space<vmem>>, %arg4: memref<16x512xf32, #tpu.memory_space<vmem>>) attributes {dimension_semantics = [#tpu.dimension_semantics<parallel>], iteration_bounds = array<i64: 1>, scalar_prefetch = 0 : i64, scratch_operands = 0 : i64, tpu.core_type = #tpu.core_type<tc>, window_params = [{pipeline_mode = #tpu.pipeline_mode<synchronous>, transform_indices = @transform_0, window_bounds = array<i64: 16, 256>}, {transform_indices = @transform_1, window_bounds = array<i64: 256, 512>}, {transform_indices = @transform_2, window_bounds = array<i64: 1, 512>}, {transform_indices = @transform_3, window_bounds = array<i64: 16, 512>}]} {
    %c0 = arith.constant 0 : index
    %c0_0 = arith.constant 0 : index
    %0 = vector.load %arg1[%c0, %c0_0] : memref<16x256xbf16, #tpu.memory_space<vmem>>, vector<16x256xbf16>
    %c0_1 = arith.constant 0 : index
    %c0_2 = arith.constant 0 : index
    %1 = vector.load %arg2[%c0_1, %c0_2] : memref<256x512xbf16, #tpu.memory_space<vmem>>, vector<256x512xbf16>
    %cst = arith.constant dense<0.000000e+00> : vector<16x512xf32>
    %2 = tpu.matmul %0, %1, %cst {dimension_numbers = #tpu.dot_dimension_numbers<[1], [0], [0], [1], [0, 0, 1, 1], [], []>} : vector<16x256xbf16>, vector<256x512xbf16>, vector<16x512xf32> -> vector<16x512xf32>
    %c0_3 = arith.constant 0 : index
    %c0_4 = arith.constant 0 : index
    %3 = vector.load %arg3[%c0_3, %c0_4] : memref<1x512xf32, #tpu.memory_space<vmem>>, vector<1x512xf32>
    %4 = vector.broadcast %3 : vector<1x512xf32> to vector<16x512xf32>
    %5 = arith.addf %2, %4 : vector<16x512xf32>
    %c0_5 = arith.constant 0 : index
    %c0_6 = arith.constant 0 : index
    %6 = vector.load %arg4[%c0_5, %c0_6] : memref<16x512xf32, #tpu.memory_space<vmem>>, vector<16x512xf32>
    tpu.vector_store %arg4[%c0_5, %c0_6], %5 {strides = array<i32>} : memref<16x512xf32, #tpu.memory_space<vmem>>, vector<16x512xf32>,
    return
  }
  func.func @transform_0(%arg0: i32) -> (i32, i32) {
    %c0_i32 = arith.constant 0 : i32
    %c0_i32_0 = arith.constant 0 : i32
    %c0_i32_1 = arith.constant 0 : i32
    return %c0_i32, %c0_i32_0 : i32, i32
  }
  func.func @transform_1(%arg0: i32) -> (i32, i32) {
    %c0_i32 = arith.constant 0 : i32
    %c0_i32_0 = arith.constant 0 : i32
    return %c0_i32, %arg0 : i32, i32
  }
  func.func @transform_2(%arg0: i32) -> (i32, i32) {
    %c0_i32 = arith.constant 0 : i32
    %c0_i32_0 = arith.constant 0 : i32
    return %c0_i32, %arg0 : i32, i32
  }
  func.func @transform_3(%arg0: i32) -> (i32, i32) {
    %c0_i32 = arith.constant 0 : i32
    %c0_i32_0 = arith.constant 0 : i32
    return %c0_i32, %arg0 : i32, i32
  }
}

</mosaic_0001>

<llo_original>
// kernel: text_decoder_forward.7
$region0: #{text_decoder_forward.7}
  #allocation0 [shape = 'u32[]', space=smem, size = 0x4, offset = 0x4, fixed_abs, tag = 'smem constant byte address 0x4 - core index']
  #allocation1 [shape = 'u32[72,128]{1,0:T(1,128)}', space=vmem, size = 0x9000, scoped, tag = 'internal scratch']
  %s0 = inlined_call_operand.vmem [shape: bf16[2,8,256], index: 0, kind: input, shape index: {}]
  %s1 = inlined_call_operand.hbm [shape: bf16[256,768], index: 1, kind: input, shape index: {}]
  %s2 = inlined_call_operand.vmem [shape: f32[1,768], index: 2, kind: input, shape index: {}]
  %s3 = inlined_call_operand.vmem [shape: bf16[256,256], index: 3, kind: input, shape index: {}]
  %s4 = inlined_call_operand.vmem [shape: f32[1,256], index: 4, kind: input, shape index: {}]
  %s5 = inlined_call_operand.vmem [shape: f32[1,256], index: 5, kind: input, shape index: {}]
  %s6 = inlined_call_operand.vmem [shape: f32[1,256], index: 6, kind: input, shape index: {}]
  %s7 = inlined_call_operand.vmem [shape: bf16[2,8,256], index: 7, kind: output, shape index: {}]
  %s8 = sld [smem:[#allocation0]]
  $region65: #{text_decoder_forward.7} parent=0
    _
  %s10 = ssub.s32 1, %s8
  %s11 = scalar_select 0, %s10, %s8
  $region1: #{text_decoder_forward.7} parent=0
    #allocation2 [shape = 'u8[393216]{0}', space=vmem, size = 0x60000, scoped, tag = 'input window, operand 1, single buffered']
    #allocation3 [shape = 's32[2]{0}', space=sflag, size = 0x8, scoped, tag = 'scoped memory for text_decoder_forward.7']
    %12 = vsyncpa [#allocation3], 0
    loop: start=0, step=1, limit=4
    $region2: #{text_decoder_forward.7} parent=1 // loop_pre_header
      _
    $region3: #{text_decoder_forward.7} parent=1 // loop_header
      %s14 = sphi 0, %s18
      %p15 = scmp.ge.s32.totalorder %s14, 4
      %s24 = sphi 0, %s26
      %s27 = sphi 0, %s24
      %s28 = sphi 0, %s27
      %s44 = sphi 0, %s28
      %s48 = sphi 0, %s48
      %s50 = sphi 0, %s48
      %s51 = sphi 0, %s50
      %s65 = sphi 0, %s51
      %s69 = sphi 0, %s69
      %s71 = sphi 0, %s69
      %s72 = sphi 0, %s71
      %s86 = sphi 0, %s72
      %s90 = sphi 0, %s90
      %s92 = sphi 0, %s90
      %s93 = sphi 0, %s92
      %s107 = sphi 0, %s93
      %s111 = sphi 0, %s111
      %s113 = sphi 0, %s111
      %s114 = sphi 0, %s113
      %s128 = sphi 0, %s114
      %s132 = sphi 0, %s132
      %s134 = sphi 0, %s132
      %s135 = sphi 0, %s134
      %s149 = sphi 0, %s135
      %s153 = sphi 0, %s153
      %s155 = sphi 0, %s153
      %s156 = sphi 0, %s155
      %s170 = sphi 0, %s156
      %s176 = sphi 0, %s178
      %s179 = sphi 0, %s176
      %s180 = sphi 0, %s179
      %s196 = sphi 0, %s180
    $region4: #{text_decoder_forward.7} parent=1 // loop_header_branch
      %17 = sbr.rel (%p15) target = $region8
    $region5: #{text_decoder_forward.7} parent=1 // loop_body
      %s19 = ssub.s32 %s14, 1
      %s20 = ssub.s32 %s14, 2
      %s21 = sadd.s32 %s14, 1
      %s22 = ssub.s32 %s14, %s21
      %p23 = scmp.eq.s32.totalorder %s22, 0
      %s25 = sadd.s32 %s24, 1
      %s26 = scalar_select %p23, %s24, %s25
      %p29 = pneg %p23
      %p30 = scmp.eq.s32.totalorder %s14, 1
      %p31 = por %p29, %p30
      %p32 = scmp.ne.s32.totalorder %s24, %s27
      %p33 = scmp.eq.s32.totalorder %s14, 0
      %p34 = por %p32, %p33
      %p35 = scmp.ne.s32.totalorder %s24, %s27
      %p36 = scmp.eq.s32.totalorder %s19, 1
      %p37 = por %p35, %p36
      %p38 = scmp.ne.s32.totalorder %s27, %s28
      %p39 = scmp.eq.s32.totalorder %s19, 0
      %p40 = por %p38, %p39
      %p41 = scmp.ne.s32.totalorder %s27, %s28
      %p42 = scmp.eq.s32.totalorder %s20, 1
      %p43 = por %p41, %p42
      %p45 = scmp.ne.s32.totalorder %s28, %s44
      %p46 = scmp.eq.s32.totalorder %s20, 0
      %p47 = por %p45, %p46
      %s49 = sadd.s32 %s48, 1
      %p52 = scmp.eq.s32.totalorder %s14, 1
      %p53 = scmp.ne.s32.totalorder %s48, %s50
      %p54 = scmp.eq.s32.totalorder %s14, 0
      %p55 = por %p53, %p54
      %p56 = scmp.ne.s32.totalorder %s48, %s50
      %p57 = scmp.eq.s32.totalorder %s19, 1
      %p58 = por %p56, %p57
      %p59 = scmp.ne.s32.totalorder %s50, %s51
      %p60 = scmp.eq.s32.totalorder %s19, 0
      %p61 = por %p59, %p60
      %p62 = scmp.ne.s32.totalorder %s50, %s51
      %p63 = scmp.eq.s32.totalorder %s20, 1
      %p64 = por %p62, %p63
      %p66 = scmp.ne.s32.totalorder %s51, %s65
      %p67 = scmp.eq.s32.totalorder %s20, 0
      %p68 = por %p66, %p67
      %s70 = sadd.s32 %s69, 1
      %p73 = scmp.eq.s32.totalorder %s14, 1
      %p74 = scmp.ne.s32.totalorder %s69, %s71
      %p75 = scmp.eq.s32.totalorder %s14, 0
      %p76 = por %p74, %p75
      %p77 = scmp.ne.s32.totalorder %s69, %s71
      %p78 = scmp.eq.s32.totalorder %s19, 1
      %p79 = por %p77, %p78
      %p80 = scmp.ne.s32.totalorder %s71, %s72
      %p81 = scmp.eq.s32.totalorder %s19, 0
      %p82 = por %p80, %p81
      %p83 = scmp.ne.s32.totalorder %s71, %s72
      %p84 = scmp.eq.s32.totalorder %s20, 1
      %p85 = por %p83, %p84
      %p87 = scmp.ne.s32.totalorder %s72, %s86
      %p88 = scmp.eq.s32.totalorder %s20, 0
      %p89 = por %p87, %p88
      %s91 = sadd.s32 %s90, 1
      %p94 = scmp.eq.s32.totalorder %s14, 1
      %p95 = scmp.ne.s32.totalorder %s90, %s92
      %p96 = scmp.eq.s32.totalorder %s14, 0
      %p97 = por %p95, %p96
      %p98 = scmp.ne.s32.totalorder %s90, %s92
      %p99 = scmp.eq.s32.totalorder %s19, 1
      %p100 = por %p98, %p99
      %p101 = scmp.ne.s32.totalorder %s92, %s93
      %p102 = scmp.eq.s32.totalorder %s19, 0
      %p103 = por %p101, %p102
      %p104 = scmp.ne.s32.totalorder %s92, %s93
      %p105 = scmp.eq.s32.totalorder %s20, 1
      %p106 = por %p104, %p105
      %p108 = scmp.ne.s32.totalorder %s93, %s107
      %p109 = scmp.eq.s32.totalorder %s20, 0
      %p110 = por %p108, %p109
      %s112 = sadd.s32 %s111, 1
      %p115 = scmp.eq.s32.totalorder %s14, 1
      %p116 = scmp.ne.s32.totalorder %s111, %s113
      %p117 = scmp.eq.s32.totalorder %s14, 0
      %p118 = por %p116, %p117
      %p119 = scmp.ne.s32.totalorder %s111, %s113
      %p120 = scmp.eq.s32.totalorder %s19, 1
      %p121 = por %p119, %p120
      %p122 = scmp.ne.s32.totalorder %s113, %s114
      %p123 = scmp.eq.s32.totalorder %s19, 0
      %p124 = por %p122, %p123
      %p125 = scmp.ne.s32.totalorder %s113, %s114
      %p126 = scmp.eq.s32.totalorder %s20, 1
      %p127 = por %p125, %p126
      %p129 = scmp.ne.s32.totalorder %s114, %s128
      %p130 = scmp.eq.s32.totalorder %s20, 0
      %p131 = por %p129, %p130
      %s133 = sadd.s32 %s132, 1
      %p136 = scmp.eq.s32.totalorder %s14, 1
      %p137 = scmp.ne.s32.totalorder %s132, %s134
      %p138 = scmp.eq.s32.totalorder %s14, 0
      %p139 = por %p137, %p138
      %p140 = scmp.ne.s32.totalorder %s132, %s134
      %p141 = scmp.eq.s32.totalorder %s19, 1
      %p142 = por %p140, %p141
      %p143 = scmp.ne.s32.totalorder %s134, %s135
      %p144 = scmp.eq.s32.totalorder %s19, 0
      %p145 = por %p143, %p144
      %p146 = scmp.ne.s32.totalorder %s134, %s135
      %p147 = scmp.eq.s32.totalorder %s20, 1
      %p148 = por %p146, %p147
      %p150 = scmp.ne.s32.totalorder %s135, %s149
      %p151 = scmp.eq.s32.totalorder %s20, 0
      %p152 = por %p150, %p151
      %s154 = sadd.s32 %s153, 1
      %p157 = scmp.eq.s32.totalorder %s14, 1
      %p158 = scmp.ne.s32.totalorder %s153, %s155
      %p159 = scmp.eq.s32.totalorder %s14, 0
      %p160 = por %p158, %p159
      %p161 = scmp.ne.s32.totalorder %s153, %s155
      %p162 = scmp.eq.s32.totalorder %s19, 1
      %p163 = por %p161, %p162
      %p164 = scmp.ne.s32.totalorder %s155, %s156
      %p165 = scmp.eq.s32.totalorder %s19, 0
      %p166 = por %p164, %p165
      %p167 = scmp.ne.s32.totalorder %s155, %s156
      %p168 = scmp.eq.s32.totalorder %s20, 1
      %p169 = por %p167, %p168
      %p171 = scmp.ne.s32.totalorder %s156, %s170
      %p172 = scmp.eq.s32.totalorder %s20, 0
      %p173 = por %p171, %p172
      %s174 = ssub.s32 %s14, %s21
      %p175 = scmp.eq.s32.totalorder %s174, 0
      %s177 = sadd.s32 %s176, 1
      %s178 = scalar_select %p175, %s176, %s177
      %p181 = pneg %p175
      %p182 = scmp.eq.s32.totalorder %s14, 1
      %p183 = por %p181, %p182
      %p184 = scmp.ne.s32.totalorder %s176, %s179
      %p185 = scmp.eq.s32.totalorder %s14, 0
      %p186 = por %p184, %p185
      %p187 = scmp.ne.s32.totalorder %s176, %s179
      %p188 = scmp.eq.s32.totalorder %s19, 1
      %p189 = por %p187, %p188
      %p190 = scmp.ne.s32.totalorder %s179, %s180
      %p191 = scmp.eq.s32.totalorder %s19, 0
      %p192 = por %p190, %p191
      %p193 = scmp.ne.s32.totalorder %s179, %s180
      %p194 = scmp.eq.s32.totalorder %s20, 1
      %p195 = por %p193, %p194
      %p197 = scmp.ne.s32.totalorder %s180, %s196
      %p198 = scmp.eq.s32.totalorder %s20, 0
      %p199 = por %p197, %p198
      %p200 = scmp.le.s32.totalorder 1, %s14
      %p201 = scmp.lt.s32.totalorder %s14, 3
      %p202 = pnand %p200, %p201
      %p203 = pneg %p202
      // Predicated region
      $region9: #{text_decoder_forward.7} parent=5 // pred_check
        _
      $region10: #{text_decoder_forward.7} parent=5 // pred_check_branch
        %205 = sbr.rel (%p202) target = $region12
      $region11: #{text_decoder_forward.7} parent=5 // pred_region
        %s206 = ssub.s32 %s14, 1
        // Predicated region
        $region13: #{text_decoder_forward.7} parent=11 // pred_check
          %p207 = pneg %p61
        $region14: #{text_decoder_forward.7} parent=11 // pred_check_branch
          %209 = sbr.rel (%p207) target = $region16
        $region15: #{text_decoder_forward.7} parent=11 // pred_region
          %211 = vsyncadd [#allocation3], 0
          %s212 = sshll.u32 %s1, 4
          %s213 = int_to_ptr.hbm [resolvable:$true] %s212
          %s214 = sshll.u32 [#allocation2], 4
          %s215 = int_to_ptr.vmem [resolvable:$true] %s214
          %220 = dma.hbm_to_vmem [thread:$0]  %s213, 12288, %s215, [#allocation3], 384, 384, 24
        $region16: #{text_decoder_forward.7} parent=11 // pred_fallthru
          _
        // Predicated region
        $region17: #{text_decoder_forward.7} parent=11 // pred_check
          %p221 = pneg %p82
        $region18: #{text_decoder_forward.7} parent=11 // pred_check_branch
          %223 = sbr.rel (%p221) target = $region20
        $region19: #{text_decoder_forward.7} parent=11 // pred_region
          _
        $region20: #{text_decoder_forward.7} parent=11 // pred_fallthru
          _
        // Predicated region
        $region21: #{text_decoder_forward.7} parent=11 // pred_check
          %p224 = pneg %p103
        $region22: #{text_decoder_forward.7} parent=11 // pred_check_branch
          %226 = sbr.rel (%p224) target = $region24
        $region23: #{text_decoder_forward.7} parent=11 // pred_region
          _
        $region24: #{text_decoder_forward.7} parent=11 // pred_fallthru
          _
        // Predicated region
        $region25: #{text_decoder_forward.7} parent=11 // pred_check
          %p227 = pneg %p124
        $region26: #{text_decoder_forward.7} parent=11 // pred_check_branch
          %229 = sbr.rel (%p227) target = $region28
        $region27: #{text_decoder_forward.7} parent=11 // pred_region
          _
        $region28: #{text_decoder_forward.7} parent=11 // pred_fallthru
          _
        // Predicated region
        $region29: #{text_decoder_forward.7} parent=11 // pred_check
          %p230 = pneg %p145
        $region30: #{text_decoder_forward.7} parent=11 // pred_check_branch
          %232 = sbr.rel (%p230) target = $region32
        $region31: #{text_decoder_forward.7} parent=11 // pred_region
          _
        $region32: #{text_decoder_forward.7} parent=11 // pred_fallthru
          _
        // Predicated region
        $region33: #{text_decoder_forward.7} parent=11 // pred_check
          %p233 = pneg %p166
        $region34: #{text_decoder_forward.7} parent=11 // pred_check_branch
          %235 = sbr.rel (%p233) target = $region36
        $region35: #{text_decoder_forward.7} parent=11 // pred_region
          _
        $region36: #{text_decoder_forward.7} parent=11 // pred_fallthru
          _
      $region12: #{text_decoder_forward.7} parent=5 // pred_fallthru
        _
      %p236 = scmp.lt.s32.totalorder %s14, 2
      // Predicated region
      $region37: #{text_decoder_forward.7} parent=5 // pred_check
        %p237 = pneg %p236
      $region38: #{text_decoder_forward.7} parent=5 // pred_check_branch
        %239 = sbr.rel (%p237) target = $region40
      $region39: #{text_decoder_forward.7} parent=5 // pred_region
        // Predicated region
        $region41: #{text_decoder_forward.7} parent=39 // pred_check
          %p240 = pneg %p34
        $region42: #{text_decoder_forward.7} parent=39 // pred_check_branch
          %242 = sbr.rel (%p240) target = $region44
        $region43: #{text_decoder_forward.7} parent=39 // pred_region
          %p243 = scmp.lt.s32.totalorder %s14, 1
          %s244 = scalar_select %p243, %s14, 1
          %s245 = smul.addr %s244, 2
          %s246 = smul.addr %s245, 4
          %s247 = scalar_lea.vmem %s0, %s246
        $region44: #{text_decoder_forward.7} parent=39 // pred_fallthru
          _
      $region40: #{text_decoder_forward.7} parent=5 // pred_fallthru
        _
      %p248 = scmp.le.s32.totalorder 1, %s14
      %p249 = scmp.lt.s32.totalorder %s14, 3
      %p250 = pnand %p248, %p249
      %p251 = pneg %p250
      // Predicated region
      $region45: #{text_decoder_forward.7} parent=5 // pred_check
        _
      $region46: #{text_decoder_forward.7} parent=5 // pred_check_branch
        %253 = sbr.rel (%p250) target = $region48
      $region47: #{text_decoder_forward.7} parent=5 // pred_region
        %s254 = ssub.s32 %s14, 1
        // Predicated region
        $region49: #{text_decoder_forward.7} parent=47 // pred_check
          %p255 = pneg %p61
        $region50: #{text_decoder_forward.7} parent=47 // pred_check_branch
          %257 = sbr.rel (%p255) target = $region52
        $region51: #{text_decoder_forward.7} parent=47 // pred_region
          %259 = dma.done [#allocation3], 12288
        $region52: #{text_decoder_forward.7} parent=47 // pred_fallthru
          _
        %p260 = scmp.lt.s32.totalorder %s19, 1
        %s261 = scalar_select %p260, %s19, 1
        %s262 = smul.addr %s261, 2
        %s263 = smul.addr %s262, 4
        %s264 = scalar_lea.vmem %s0, %s263
        %p265 = pneg %p40
        %p266 = pneg %p37
        %p267 = pneg %p61
        %p268 = pneg %p58
        %p269 = pneg %p82
        %p270 = pneg %p79
        %p271 = pneg %p103
        %p272 = pneg %p100
        %p273 = pneg %p124
        %p274 = pneg %p121
        %p275 = pneg %p145
        %p276 = pneg %p142
        %p277 = pneg %p166
        %p278 = pneg %p163
        %p279 = pneg %p192
        %p280 = pneg %p189
        %p281 = scmp.lt.s32.totalorder %s19, 1
        %s282 = scalar_select %p281, %s19, 1
        %s283 = smul.addr %s282, 2
        %s284 = smul.addr %s283, 4
        %s285 = scalar_lea.vmem %s7, %s284
        %p286 = scmp.lt.s32.totalorder %s19, 1
        %s287 = scalar_select %p286, %s19, 1
        %s288 = smul.addr %s287, 2
        %s289 = smul.addr %s288, 4
        %s290 = scalar_lea.vmem %s0, %s289
        %p291 = scmp.lt.s32.totalorder %s19, 1
        %s292 = scalar_select %p291, %s19, 1
        %s293 = smul.addr %s292, 2
        %s294 = smul.addr %s293, 4
        %s295 = scalar_lea.vmem %s7, %s294
        %v297 = vld [vmem:[%s290] sm:$0xff]
        %v298 = vunpack.c.l.bf16 %v297
        %v299 = vunpack.c.h.bf16 %v297
        %v300 = vld [vmem:[#allocation2] sm:$0xff]
        %v301 = vld [vmem:[#allocation2 + $0x8] sm:$0xff]
        %v302 = vld [vmem:[#allocation2 + $0x10] sm:$0xff]
        %v303 = vld [vmem:[#allocation2 + $0x18] sm:$0xff]
        %v304 = vld [vmem:[#allocation2 + $0x20] sm:$0xff]
        %v305 = vld [vmem:[#allocation2 + $0x28] sm:$0xff]
        %v306 = vld [vmem:[#allocation2 + $0x30] sm:$0xff]
        %v307 = vld [vmem:[#allocation2 + $0x38] sm:$0xff]
        %v308 = vld [vmem:[#allocation2 + $0x40] sm:$0xff]
        %v309 = vld [vmem:[#allocation2 + $0x48] sm:$0xff]
        %v310 = vld [vmem:[#allocation2 + $0x50] sm:$0xff]
        %v311 = vld [vmem:[#allocation2 + $0x58] sm:$0xff]
        %v312 = vld [vmem:[#allocation2 + $0x60] sm:$0xff]
        %v313 = vld [vmem:[#allocation2 + $0x68] sm:$0xff]
        %v314 = vld [vmem:[#allocation2 + $0x70] sm:$0xff]
        %v315 = vld [vmem:[#allocation2 + $0x78] sm:$0xff]
        %v316 = vld [vmem:[#allocation2 + $0x80] sm:$0xff]
        %v317 = vld [vmem:[#allocation2 + $0x88] sm:$0xff]
        %v318 = vld [vmem:[#allocation2 + $0x90] sm:$0xff]
        %v319 = vld [vmem:[#allocation2 + $0x98] sm:$0xff]
        %v320 = vld [vmem:[#allocation2 + $0xa0] sm:$0xff]
        %v321 = vld [vmem:[#allocation2 + $0xa8] sm:$0xff]
        %v322 = vld [vmem:[#allocation2 + $0xb0] sm:$0xff]
        %v323 = vld [vmem:[#allocation2 + $0xb8] sm:$0xff]
        %v324 = vld [vmem:[#allocation2 + $0xc0] sm:$0xff]
        %v325 = vld [vmem:[#allocation2 + $0xc8] sm:$0xff]
        %v326 = vld [vmem:[#allocation2 + $0xd0] sm:$0xff]
        %v327 = vld [vmem:[#allocation2 + $0xd8] sm:$0xff]
        %v328 = vld [vmem:[#allocation2 + $0xe0] sm:$0xff]
        %v329 = vld [vmem:[#allocation2 + $0xe8] sm:$0xff]
        %v330 = vld [vmem:[#allocation2 + $0xf0] sm:$0xff]
        %v331 = vld [vmem:[#allocation2 + $0xf8] sm:$0xff]
        %v332 = vld [vmem:[#allocation2 + $0x100] sm:$0xff]
        %v333 = vld [vmem:[#allocation2 + $0x108] sm:$0xff]
        %v334 = vld [vmem:[#allocation2 + $0x110] sm:$0xff]
        %v335 = vld [vmem:[#allocation2 + $0x118] sm:$0xff]
        %v336 = vld [vmem:[#allocation2 + $0x120] sm:$0xff]
        %v337 = vld [vmem:[#allocation2 + $0x128] sm:$0xff]
        %v338 = vld [vmem:[#allocation2 + $0x130] sm:$0xff]
        %v339 = vld [vmem:[#allocation2 + $0x138] sm:$0xff]
        %v340 = vld [vmem:[#allocation2 + $0x140] sm:$0xff]
        %v341 = vld [vmem:[#allocation2 + $0x148] sm:$0xff]
        %v342 = vld [vmem:[#allocation2 + $0x150] sm:$0xff]
        %v343 = vld [vmem:[#allocation2 + $0x158] sm:$0xff]
        %v344 = vld [vmem:[#allocation2 + $0x160] sm:$0xff]
        %v345 = vld [vmem:[#allocation2 + $0x168] sm:$0xff]
        %v346 = vld [vmem:[#allocation2 + $0x170] sm:$0xff]
        %v347 = vld [vmem:[#allocation2 + $0x178] sm:$0xff]
        %v348 = vld [vmem:[#allocation2 + $0x180] sm:$0xff]
        %v349 = vld [vmem:[#allocation2 + $0x188] sm:$0xff]
        %v350 = vld [vmem:[#allocation2 + $0x190] sm:$0xff]
        %v351 = vld [vmem:[#allocation2 + $0x198] sm:$0xff]
        %v352 = vld [vmem:[#allocation2 + $0x1a0] sm:$0xff]
        %v353 = vld [vmem:[#allocation2 + $0x1a8] sm:$0xff]
        %v354 = vld [vmem:[#allocation2 + $0x1b0] sm:$0xff]
        %v355 = vld [vmem:[#allocation2 + $0x1b8] sm:$0xff]
        %v356 = vld [vmem:[#allocation2 + $0x1c0] sm:$0xff]
        %v357 = vld [vmem:[#allocation2 + $0x1c8] sm:$0xff]
        %v358 = vld [vmem:[#allocation2 + $0x1d0] sm:$0xff]
        %v359 = vld [vmem:[#allocation2 + $0x1d8] sm:$0xff]
        %v360 = vld [vmem:[#allocation2 + $0x1e0] sm:$0xff]
        %v361 = vld [vmem:[#allocation2 + $0x1e8] sm:$0xff]
        %v362 = vld [vmem:[#allocation2 + $0x1f0] sm:$0xff]
        %v363 = vld [vmem:[#allocation2 + $0x1f8] sm:$0xff]
        %v364 = vld [vmem:[#allocation2 + $0x200] sm:$0xff]
        %v365 = vld [vmem:[#allocation2 + $0x208] sm:$0xff]
        %v366 = vld [vmem:[#allocation2 + $0x210] sm:$0xff]
        %v367 = vld [vmem:[#allocation2 + $0x218] sm:$0xff]
        %v368 = vld [vmem:[#allocation2 + $0x220] sm:$0xff]
        %v369 = vld [vmem:[#allocation2 + $0x228] sm:$0xff]
        %v370 = vld [vmem:[#allocation2 + $0x230] sm:$0xff]
        %v371 = vld [vmem:[#allocation2 + $0x238] sm:$0xff]
        %v372 = vld [vmem:[#allocation2 + $0x240] sm:$0xff]
        %v373 = vld [vmem:[#allocation2 + $0x248] sm:$0xff]
        %v374 = vld [vmem:[#allocation2 + $0x250] sm:$0xff]
        %v375 = vld [vmem:[#allocation2 + $0x258] sm:$0xff]
        %v376 = vld [vmem:[#allocation2 + $0x260] sm:$0xff]
        %v377 = vld [vmem:[#allocation2 + $0x268] sm:$0xff]
        %v378 = vld [vmem:[#allocation2 + $0x270] sm:$0xff]
        %v379 = vld [vmem:[#allocation2 + $0x278] sm:$0xff]
        %v380 = vld [vmem:[#allocation2 + $0x280] sm:$0xff]
        %v381 = vld [vmem:[#allocation2 + $0x288] sm:$0xff]
        %v382 = vld [vmem:[#allocation2 + $0x290] sm:$0xff]
        %v383 = vld [vmem:[#allocation2 + $0x298] sm:$0xff]
        %v384 = vld [vmem:[#allocation2 + $0x2a0] sm:$0xff]
        %v385 = vld [vmem:[#allocation2 + $0x2a8] sm:$0xff]
        %v386 = vld [vmem:[#allocation2 + $0x2b0] sm:$0xff]
        %v387 = vld [vmem:[#allocation2 + $0x2b8] sm:$0xff]
        %v388 = vld [vmem:[#allocation2 + $0x2c0] sm:$0xff]
        %v389 = vld [vmem:[#allocation2 + $0x2c8] sm:$0xff]
        %v390 = vld [vmem:[#allocation2 + $0x2d0] sm:$0xff]
        %v391 = vld [vmem:[#allocation2 + $0x2d8] sm:$0xff]
        %v392 = vld [vmem:[#allocation2 + $0x2e0] sm:$0xff]
        %v393 = vld [vmem:[#allocation2 + $0x2e8] sm:$0xff]
        %v394 = vld [vmem:[#allocation2 + $0x2f0] sm:$0xff]
        %v395 = vld [vmem:[#allocation2 + $0x2f8] sm:$0xff]
        %v396 = vld [vmem:[%s2] sm:$0x3f]
        %v398 = vperm.slane %v396, 0
        %v399 = vperm.slane %v396, 1
        %v400 = vperm.slane %v396, 2
        %v401 = vperm.slane %v396, 3
        %v402 = vperm.slane %v396, 4
        %v403 = vperm.slane %v396, 5
        %v411 = vunpack.c.l.b16 %v297
        %v412 = vunpack.c.h.b16 %v297
        %v413 = vpack.c.b16 %v411, %v411
        %v414 = vpack.c.b16 %v412, %v412
        %v513 = vunpack.c.l.b16 %v300
        %v514 = vunpack.c.h.b16 %v300
        %v515 = vunpack.c.l.b16 %v301
        %v516 = vunpack.c.h.b16 %v301
        %v517 = vunpack.c.l.b16 %v302
        %v518 = vunpack.c.h.b16 %v302
        %v519 = vunpack.c.l.b16 %v303
        %v520 = vunpack.c.h.b16 %v303
        %v521 = vunpack.c.l.b16 %v304
        %v522 = vunpack.c.h.b16 %v304
        %v523 = vunpack.c.l.b16 %v305
        %v524 = vunpack.c.h.b16 %v305
        %v525 = vunpack.c.l.b16 %v306
        %v526 = vunpack.c.h.b16 %v306
        %v527 = vunpack.c.l.b16 %v307
        %v528 = vunpack.c.h.b16 %v307
        %v529 = vunpack.c.l.b16 %v308
        %v530 = vunpack.c.h.b16 %v308
        %v531 = vunpack.c.l.b16 %v309
        %v532 = vunpack.c.h.b16 %v309
        %v533 = vunpack.c.l.b16 %v310
        %v534 = vunpack.c.h.b16 %v310
        %v535 = vunpack.c.l.b16 %v311
        %v536 = vunpack.c.h.b16 %v311
        %v537 = vunpack.c.l.b16 %v312
        %v538 = vunpack.c.h.b16 %v312
        %v539 = vunpack.c.l.b16 %v313
        %v540 = vunpack.c.h.b16 %v313
        %v541 = vunpack.c.l.b16 %v314
        %v542 = vunpack.c.h.b16 %v314
        %v543 = vunpack.c.l.b16 %v315
        %v544 = vunpack.c.h.b16 %v315
        %v545 = vunpack.c.l.b16 %v316
        %v546 = vunpack.c.h.b16 %v316
        %v547 = vunpack.c.l.b16 %v317
        %v548 = vunpack.c.h.b16 %v317
        %v549 = vunpack.c.l.b16 %v318
        %v550 = vunpack.c.h.b16 %v318
        %v551 = vunpack.c.l.b16 %v319
        %v552 = vunpack.c.h.b16 %v319
        %v553 = vunpack.c.l.b16 %v320
        %v554 = vunpack.c.h.b16 %v320
        %v555 = vunpack.c.l.b16 %v321
        %v556 = vunpack.c.h.b16 %v321
        %v557 = vunpack.c.l.b16 %v322
        %v558 = vunpack.c.h.b16 %v322
        %v559 = vunpack.c.l.b16 %v323
        %v560 = vunpack.c.h.b16 %v323
        %v561 = vunpack.c.l.b16 %v324
        %v562 = vunpack.c.h.b16 %v324
        %v563 = vunpack.c.l.b16 %v325
        %v564 = vunpack.c.h.b16 %v325
        %v565 = vunpack.c.l.b16 %v326
        %v566 = vunpack.c.h.b16 %v326
        %v567 = vunpack.c.l.b16 %v327
        %v568 = vunpack.c.h.b16 %v327
        %v569 = vunpack.c.l.b16 %v328
        %v570 = vunpack.c.h.b16 %v328
        %v571 = vunpack.c.l.b16 %v329
        %v572 = vunpack.c.h.b16 %v329
        %v573 = vunpack.c.l.b16 %v330
        %v574 = vunpack.c.h.b16 %v330
        %v575 = vunpack.c.l.b16 %v331
        %v576 = vunpack.c.h.b16 %v331
        %v577 = vunpack.c.l.b16 %v332
        %v578 = vunpack.c.h.b16 %v332
        %v579 = vunpack.c.l.b16 %v333
        %v580 = vunpack.c.h.b16 %v333
        %v581 = vunpack.c.l.b16 %v334
        %v582 = vunpack.c.h.b16 %v334
        %v583 = vunpack.c.l.b16 %v335
        %v584 = vunpack.c.h.b16 %v335
        %v585 = vunpack.c.l.b16 %v336
        %v586 = vunpack.c.h.b16 %v336
        %v587 = vunpack.c.l.b16 %v337
        %v588 = vunpack.c.h.b16 %v337
        %v589 = vunpack.c.l.b16 %v338
        %v590 = vunpack.c.h.b16 %v338
        %v591 = vunpack.c.l.b16 %v339
        %v592 = vunpack.c.h.b16 %v339
        %v593 = vunpack.c.l.b16 %v340
        %v594 = vunpack.c.h.b16 %v340
        %v595 = vunpack.c.l.b16 %v341
        %v596 = vunpack.c.h.b16 %v341
        %v597 = vunpack.c.l.b16 %v342
        %v598 = vunpack.c.h.b16 %v342
        %v599 = vunpack.c.l.b16 %v343
        %v600 = vunpack.c.h.b16 %v343
        %v601 = vunpack.c.l.b16 %v344
        %v602 = vunpack.c.h.b16 %v344
        %v603 = vunpack.c.l.b16 %v345
        %v604 = vunpack.c.h.b16 %v345
        %v605 = vunpack.c.l.b16 %v346
        %v606 = vunpack.c.h.b16 %v346
        %v607 = vunpack.c.l.b16 %v347
        %v608 = vunpack.c.h.b16 %v347
        %v609 = vunpack.c.l.b16 %v348
        %v610 = vunpack.c.h.b16 %v348
        %v611 = vunpack.c.l.b16 %v349
        %v612 = vunpack.c.h.b16 %v349
        %v613 = vunpack.c.l.b16 %v350
        %v614 = vunpack.c.h.b16 %v350
        %v615 = vunpack.c.l.b16 %v351
        %v616 = vunpack.c.h.b16 %v351
        %v617 = vunpack.c.l.b16 %v352
        %v618 = vunpack.c.h.b16 %v352
        %v619 = vunpack.c.l.b16 %v353
        %v620 = vunpack.c.h.b16 %v353
        %v621 = vunpack.c.l.b16 %v354
        %v622 = vunpack.c.h.b16 %v354
        %v623 = vunpack.c.l.b16 %v355
        %v624 = vunpack.c.h.b16 %v355
        %v625 = vunpack.c.l.b16 %v356
        %v626 = vunpack.c.h.b16 %v356
        %v627 = vunpack.c.l.b16 %v357
        %v628 = vunpack.c.h.b16 %v357
        %v629 = vunpack.c.l.b16 %v358
        %v630 = vunpack.c.h.b16 %v358
        %v631 = vunpack.c.l.b16 %v359
        %v632 = vunpack.c.h.b16 %v359
        %v633 = vunpack.c.l.b16 %v360
        %v634 = vunpack.c.h.b16 %v360
        %v635 = vunpack.c.l.b16 %v361
        %v636 = vunpack.c.h.b16 %v361
        %v637 = vunpack.c.l.b16 %v362
        %v638 = vunpack.c.h.b16 %v362
        %v639 = vunpack.c.l.b16 %v363
        %v640 = vunpack.c.h.b16 %v363
        %v641 = vunpack.c.l.b16 %v364
        %v642 = vunpack.c.h.b16 %v364
        %v643 = vunpack.c.l.b16 %v365
        %v644 = vunpack.c.h.b16 %v365
        %v645 = vunpack.c.l.b16 %v366
        %v646 = vunpack.c.h.b16 %v366
        %v647 = vunpack.c.l.b16 %v367
        %v648 = vunpack.c.h.b16 %v367
        %v649 = vunpack.c.l.b16 %v368
        %v650 = vunpack.c.h.b16 %v368
        %v651 = vunpack.c.l.b16 %v369
        %v652 = vunpack.c.h.b16 %v369
        %v653 = vunpack.c.l.b16 %v370
        %v654 = vunpack.c.h.b16 %v370
        %v655 = vunpack.c.l.b16 %v371
        %v656 = vunpack.c.h.b16 %v371
        %v657 = vunpack.c.l.b16 %v372
        %v658 = vunpack.c.h.b16 %v372
        %v659 = vunpack.c.l.b16 %v373
        %v660 = vunpack.c.h.b16 %v373
        %v661 = vunpack.c.l.b16 %v374
        %v662 = vunpack.c.h.b16 %v374
        %v663 = vunpack.c.l.b16 %v375
        %v664 = vunpack.c.h.b16 %v375
        %v665 = vunpack.c.l.b16 %v376
        %v666 = vunpack.c.h.b16 %v376
        %v667 = vunpack.c.l.b16 %v377
        %v668 = vunpack.c.h.b16 %v377
        %v669 = vunpack.c.l.b16 %v378
        %v670 = vunpack.c.h.b16 %v378
        %v671 = vunpack.c.l.b16 %v379
        %v672 = vunpack.c.h.b16 %v379
        %v673 = vunpack.c.l.b16 %v380
        %v674 = vunpack.c.h.b16 %v380
        %v675 = vunpack.c.l.b16 %v381
        %v676 = vunpack.c.h.b16 %v381
        %v677 = vunpack.c.l.b16 %v382
        %v678 = vunpack.c.h.b16 %v382
        %v679 = vunpack.c.l.b16 %v383
        %v680 = vunpack.c.h.b16 %v383
        %v681 = vunpack.c.l.b16 %v384
        %v682 = vunpack.c.h.b16 %v384
        %v683 = vunpack.c.l.b16 %v385
        %v684 = vunpack.c.h.b16 %v385
        %v685 = vunpack.c.l.b16 %v386
        %v686 = vunpack.c.h.b16 %v386
        %v687 = vunpack.c.l.b16 %v387
        %v688 = vunpack.c.h.b16 %v387
        %v689 = vunpack.c.l.b16 %v388
        %v690 = vunpack.c.h.b16 %v388
        %v691 = vunpack.c.l.b16 %v389
        %v692 = vunpack.c.h.b16 %v389
        %v693 = vunpack.c.l.b16 %v390
        %v694 = vunpack.c.h.b16 %v390
        %v695 = vunpack.c.l.b16 %v391
        %v696 = vunpack.c.h.b16 %v391
        %v697 = vunpack.c.l.b16 %v392
        %v698 = vunpack.c.h.b16 %v392
        %v699 = vunpack.c.l.b16 %v393
        %v700 = vunpack.c.h.b16 %v393
        %v701 = vunpack.c.l.b16 %v394
        %v702 = vunpack.c.h.b16 %v394
        %v703 = vunpack.c.l.b16 %v395
        %v704 = vunpack.c.h.b16 %v395
        %v705 = vpack.c.b16 %v519, %v513
        %v706 = vpack.c.b16 %v520, %v514
        %v707 = vpack.c.b16 %v521, %v515
        %v708 = vpack.c.b16 %v522, %v516
        %v709 = vpack.c.b16 %v523, %v517
        %v710 = vpack.c.b16 %v524, %v518
        %v711 = vpack.c.b16 %v531, %v525
        %v712 = vpack.c.b16 %v532, %v526
        %v713 = vpack.c.b16 %v533, %v527
        %v714 = vpack.c.b16 %v534, %v528
        %v715 = vpack.c.b16 %v535, %v529
        %v716 = vpack.c.b16 %v536, %v530
        %v717 = vpack.c.b16 %v543, %v537
        %v718 = vpack.c.b16 %v544, %v538
        %v719 = vpack.c.b16 %v545, %v539
        %v720 = vpack.c.b16 %v546, %v540
        %v721 = vpack.c.b16 %v547, %v541
        %v722 = vpack.c.b16 %v548, %v542
        %v723 = vpack.c.b16 %v555, %v549
        %v724 = vpack.c.b16 %v556, %v550
        %v725 = vpack.c.b16 %v557, %v551
        %v726 = vpack.c.b16 %v558, %v552
        %v727 = vpack.c.b16 %v559, %v553
        %v728 = vpack.c.b16 %v560, %v554
        %v729 = vpack.c.b16 %v567, %v561
        %v730 = vpack.c.b16 %v568, %v562
        %v731 = vpack.c.b16 %v569, %v563
        %v732 = vpack.c.b16 %v570, %v564
        %v733 = vpack.c.b16 %v571, %v565
        %v734 = vpack.c.b16 %v572, %v566
        %v735 = vpack.c.b16 %v579, %v573
        %v736 = vpack.c.b16 %v580, %v574
        %v737 = vpack.c.b16 %v581, %v575
        %v738 = vpack.c.b16 %v582, %v576
        %v739 = vpack.c.b16 %v583, %v577
        %v740 = vpack.c.b16 %v584, %v578
        %v741 = vpack.c.b16 %v591, %v585
        %v742 = vpack.c.b16 %v592, %v586
        %v743 = vpack.c.b16 %v593, %v587
        %v744 = vpack.c.b16 %v594, %v588
        %v745 = vpack.c.b16 %v595, %v589
        %v746 = vpack.c.b16 %v596, %v590
        %v747 = vpack.c.b16 %v603, %v597
        %v748 = vpack.c.b16 %v604, %v598
        %v749 = vpack.c.b16 %v605, %v599
        %v750 = vpack.c.b16 %v606, %v600
        %v751 = vpack.c.b16 %v607, %v601
        %v752 = vpack.c.b16 %v608, %v602
        %v753 = vpack.c.b16 %v615, %v609
        %v754 = vpack.c.b16 %v616, %v610
        %v755 = vpack.c.b16 %v617, %v611
        %v756 = vpack.c.b16 %v618, %v612
        %v757 = vpack.c.b16 %v619, %v613
        %v758 = vpack.c.b16 %v620, %v614
        %v759 = vpack.c.b16 %v627, %v621
        %v760 = vpack.c.b16 %v628, %v622
        %v761 = vpack.c.b16 %v629, %v623
        %v762 = vpack.c.b16 %v630, %v624
        %v763 = vpack.c.b16 %v631, %v625
        %v764 = vpack.c.b16 %v632, %v626
        %v765 = vpack.c.b16 %v639, %v633
        %v766 = vpack.c.b16 %v640, %v634
        %v767 = vpack.c.b16 %v641, %v635
        %v768 = vpack.c.b16 %v642, %v636
        %v769 = vpack.c.b16 %v643, %v637
        %v770 = vpack.c.b16 %v644, %v638
        %v771 = vpack.c.b16 %v651, %v645
        %v772 = vpack.c.b16 %v652, %v646
        %v773 = vpack.c.b16 %v653, %v647
        %v774 = vpack.c.b16 %v654, %v648
        %v775 = vpack.c.b16 %v655, %v649
        %v776 = vpack.c.b16 %v656, %v650
        %v777 = vpack.c.b16 %v663, %v657
        %v778 = vpack.c.b16 %v664, %v658
        %v779 = vpack.c.b16 %v665, %v659
        %v780 = vpack.c.b16 %v666, %v660
        %v781 = vpack.c.b16 %v667, %v661
        %v782 = vpack.c.b16 %v668, %v662
        %v783 = vpack.c.b16 %v675, %v669
        %v784 = vpack.c.b16 %v676, %v670
        %v785 = vpack.c.b16 %v677, %v671
        %v786 = vpack.c.b16 %v678, %v672
        %v787 = vpack.c.b16 %v679, %v673
        %v788 = vpack.c.b16 %v680, %v674
        %v789 = vpack.c.b16 %v687, %v681
        %v790 = vpack.c.b16 %v688, %v682
        %v791 = vpack.c.b16 %v689, %v683
        %v792 = vpack.c.b16 %v690, %v684
        %v793 = vpack.c.b16 %v691, %v685
        %v794 = vpack.c.b16 %v692, %v686
        %v795 = vpack.c.b16 %v699, %v693
        %v796 = vpack.c.b16 %v700, %v694
        %v797 = vpack.c.b16 %v701, %v695
        %v798 = vpack.c.b16 %v702, %v696
        %v799 = vpack.c.b16 %v703, %v697
        %v800 = vpack.c.b16 %v704, %v698
        %897 = vmatpush.bf16.msra.mxu0 %v747
        %898 = vmatpush.bf16.msra.mxu0 %v741
        %899 = vmatpush.bf16.msra.mxu0 %v735
        %900 = vmatpush.bf16.msra.mxu0 %v729
        %901 = vmatpush.bf16.msra.mxu0 %v723
        %902 = vmatpush.bf16.msra.mxu0 %v717
        %903 = vmatpush.bf16.msra.mxu0 %v711
        %904 = vmatpush.bf16.msra.mxu0 %v705
        %905 = vmatmul.bf16.gmra.mxu0 %v413
        %v906 = vpop.f32.mrf.mxu0
        %v907 = vadd.f32 %v398, %v906
        %v908 = vpop.f32.mrf.mxu0
        %909 = vdwg.mxu0
        %910 = vmatpush.bf16.msra.mxu0 %v795
        %911 = vmatpush.bf16.msra.mxu0 %v789
        %912 = vmatpush.bf16.msra.mxu0 %v783
        %913 = vmatpush.bf16.msra.mxu0 %v777
        %914 = vmatpush.bf16.msra.mxu0 %v771
        %915 = vmatpush.bf16.msra.mxu0 %v765
        %916 = vmatpush.bf16.msra.mxu0 %v759
        %917 = vmatpush.bf16.msra.mxu0 %v753
        %918 = vmatmul.bf16.gmra.mxu0 %v414
        %v919 = vpop.f32.mrf.mxu0
        %v920 = vadd.f32 %v907, %v919
        %v921 = vpop.f32.mrf.mxu0
        %922 = vdwg.mxu0
        %923 = vmatpush.bf16.msra.mxu0 %v748
        %924 = vmatpush.bf16.msra.mxu0 %v742
        %925 = vmatpush.bf16.msra.mxu0 %v736
        %926 = vmatpush.bf16.msra.mxu0 %v730
        %927 = vmatpush.bf16.msra.mxu0 %v724
        %928 = vmatpush.bf16.msra.mxu0 %v718
        %929 = vmatpush.bf16.msra.mxu0 %v712
        %930 = vmatpush.bf16.msra.mxu0 %v706
        %931 = vmatmul.bf16.gmra.mxu0 %v413
        %v932 = vpop.f32.mrf.mxu0
        %v933 = vadd.f32 %v399, %v932
        %v934 = vpop.f32.mrf.mxu0
        %935 = vdwg.mxu0
        %936 = vmatpush.bf16.msra.mxu0 %v796
        %937 = vmatpush.bf16.msra.mxu0 %v790
        %938 = vmatpush.bf16.msra.mxu0 %v784
        %939 = vmatpush.bf16.msra.mxu0 %v778
        %940 = vmatpush.bf16.msra.mxu0 %v772
        %941 = vmatpush.bf16.msra.mxu0 %v766
        %942 = vmatpush.bf16.msra.mxu0 %v760
        %943 = vmatpush.bf16.msra.mxu0 %v754
        %944 = vmatmul.bf16.gmra.mxu0 %v414
        %v945 = vpop.f32.mrf.mxu0
        %v946 = vadd.f32 %v933, %v945
        %v947 = vpop.f32.mrf.mxu0
        %948 = vdwg.mxu0
        %949 = vmatpush.bf16.msra.mxu0 %v749
        %950 = vmatpush.bf16.msra.mxu0 %v743
        %951 = vmatpush.bf16.msra.mxu0 %v737
        %952 = vmatpush.bf16.msra.mxu0 %v731
        %953 = vmatpush.bf16.msra.mxu0 %v725
        %954 = vmatpush.bf16.msra.mxu0 %v719
        %955 = vmatpush.bf16.msra.mxu0 %v713
        %956 = vmatpush.bf16.msra.mxu0 %v707
        %957 = vmatmul.bf16.gmra.mxu0 %v413
        %v958 = vpop.f32.mrf.mxu0
        %v959 = vadd.f32 %v400, %v958
        %v960 = vpop.f32.mrf.mxu0
        %961 = vdwg.mxu0
        %962 = vmatpush.bf16.msra.mxu0 %v797
        %963 = vmatpush.bf16.msra.mxu0 %v791
        %964 = vmatpush.bf16.msra.mxu0 %v785
        %965 = vmatpush.bf16.msra.mxu0 %v779
        %966 = vmatpush.bf16.msra.mxu0 %v773
        %967 = vmatpush.bf16.msra.mxu0 %v767
        %968 = vmatpush.bf16.msra.mxu0 %v761
        %969 = vmatpush.bf16.msra.mxu0 %v755
        %970 = vmatmul.bf16.gmra.mxu0 %v414
        %v971 = vpop.f32.mrf.mxu0
        %v972 = vadd.f32 %v959, %v971
        %v973 = vpop.f32.mrf.mxu0
        %974 = vdwg.mxu0
        %975 = vmatpush.bf16.msra.mxu0 %v750
        %976 = vmatpush.bf16.msra.mxu0 %v744
        %977 = vmatpush.bf16.msra.mxu0 %v738
        %978 = vmatpush.bf16.msra.mxu0 %v732
        %979 = vmatpush.bf16.msra.mxu0 %v726
        %980 = vmatpush.bf16.msra.mxu0 %v720
        %981 = vmatpush.bf16.msra.mxu0 %v714
        %982 = vmatpush.bf16.msra.mxu0 %v708
        %983 = vmatmul.bf16.gmra.mxu0 %v413
        %v984 = vpop.f32.mrf.mxu0
        %v985 = vadd.f32 %v401, %v984
        %v986 = vpop.f32.mrf.mxu0
        %987 = vdwg.mxu0
        %988 = vmatpush.bf16.msra.mxu0 %v798
        %989 = vmatpush.bf16.msra.mxu0 %v792
        %990 = vmatpush.bf16.msra.mxu0 %v786
        %991 = vmatpush.bf16.msra.mxu0 %v780
        %992 = vmatpush.bf16.msra.mxu0 %v774
        %993 = vmatpush.bf16.msra.mxu0 %v768
        %994 = vmatpush.bf16.msra.mxu0 %v762
        %995 = vmatpush.bf16.msra.mxu0 %v756
        %996 = vmatmul.bf16.gmra.mxu0 %v414
        %v997 = vpop.f32.mrf.mxu0
        %v998 = vadd.f32 %v985, %v997
        %v999 = vpop.f32.mrf.mxu0
        %1000 = vdwg.mxu0
        %1001 = vmatpush.bf16.msra.mxu0 %v751
        %1002 = vmatpush.bf16.msra.mxu0 %v745
        %1003 = vmatpush.bf16.msra.mxu0 %v739
        %1004 = vmatpush.bf16.msra.mxu0 %v733
        %1005 = vmatpush.bf16.msra.mxu0 %v727
        %1006 = vmatpush.bf16.msra.mxu0 %v721
        %1007 = vmatpush.bf16.msra.mxu0 %v715
        %1008 = vmatpush.bf16.msra.mxu0 %v709
        %1009 = vmatmul.bf16.gmra.mxu0 %v413
        %v1010 = vpop.f32.mrf.mxu0
        %v1011 = vadd.f32 %v402, %v1010
        %v1012 = vpop.f32.mrf.mxu0
        %1013 = vdwg.mxu0
        %1014 = vmatpush.bf16.msra.mxu0 %v799
        %1015 = vmatpush.bf16.msra.mxu0 %v793
        %1016 = vmatpush.bf16.msra.mxu0 %v787
        %1017 = vmatpush.bf16.msra.mxu0 %v781
        %1018 = vmatpush.bf16.msra.mxu0 %v775
        %1019 = vmatpush.bf16.msra.mxu0 %v769
        %1020 = vmatpush.bf16.msra.mxu0 %v763
        %1021 = vmatpush.bf16.msra.mxu0 %v757
        %1022 = vmatmul.bf16.gmra.mxu0 %v414
        %v1023 = vpop.f32.mrf.mxu0
        %v1024 = vadd.f32 %v1011, %v1023
        %v1025 = vpop.f32.mrf.mxu0
        %1026 = vdwg.mxu0
        %1027 = vmatpush.bf16.msra.mxu0 %v752
        %1028 = vmatpush.bf16.msra.mxu0 %v746
        %1029 = vmatpush.bf16.msra.mxu0 %v740
        %1030 = vmatpush.bf16.msra.mxu0 %v734
        %1031 = vmatpush.bf16.msra.mxu0 %v728
        %1032 = vmatpush.bf16.msra.mxu0 %v722
        %1033 = vmatpush.bf16.msra.mxu0 %v716
        %1034 = vmatpush.bf16.msra.mxu0 %v710
        %1035 = vmatmul.bf16.gmra.mxu0 %v413
        %v1036 = vpop.f32.mrf.mxu0
        %v1037 = vadd.f32 %v403, %v1036
        %v1038 = vpop.f32.mrf.mxu0
        %1039 = vdwg.mxu0
        %1040 = vmatpush.bf16.msra.mxu0 %v800
        %1041 = vmatpush.bf16.msra.mxu0 %v794
        %1042 = vmatpush.bf16.msra.mxu0 %v788
        %1043 = vmatpush.bf16.msra.mxu0 %v782
        %1044 = vmatpush.bf16.msra.mxu0 %v776
        %1045 = vmatpush.bf16.msra.mxu0 %v770
        %1046 = vmatpush.bf16.msra.mxu0 %v764
        %1047 = vmatpush.bf16.msra.mxu0 %v758
        %1048 = vmatmul.bf16.gmra.mxu0 %v414
        %v1049 = vpop.f32.mrf.mxu0
        %v1050 = vadd.f32 %v1037, %v1049
        %v1051 = vpop.f32.mrf.mxu0
        %1052 = vdwg.mxu0
        %v1053 = vpack.c.bf16 %v920, %v920
        %v1054 = vpack.c.bf16 %v972, %v972
        %v1055 = vpack.c.bf16 %v1024, %v1024
        %vm1056 = vcmask 523264
        %v1058 = vsel %vm1056, %v1053, 0
        %v1061 = vsel %vm1056, %v1054, 0
        %1063 = vmatpush.bf16.xpose.msra.mxu0 0
        %1064 = vmatpush.bf16.xpose.msra.mxu0 0
        %1065 = vmatpush.bf16.xpose.msra.mxu0 0
        %1066 = vmatpush.bf16.xpose.msra.mxu0 0
        %1067 = vmatpush.bf16.xpose.msra.mxu0 0
        %1068 = vmatpush.bf16.xpose.msra.mxu0 0
        %1069 = vmatpush.bf16.xpose.msra.mxu0 0
        %1070 = vmatpush.bf16.xpose.msra.mxu0 %v1061
        %1071 = vmatmul.bf16.gmra.mxu0 %v1058
        %v1072 = vpop.f32.mrf.mxu0
        %v1073 = vadd.f32 0.0, %v1072
        %v1074 = vpop.f32.mrf.mxu0
        %1075 = vdwg.mxu0
        %v1076 = vmul.f32 %v1073, 0.125
        %vm1077 = vcmask 64512
        %v1078 = vsel %vm1077, %v1076, -inf
        %1079 = vmax.xlane.f32.xlu0 %v1078
        %v1080 = vpop.xlane.xlu0 %1079
        %v1081 = vsub.f32 %v1076, %v1080
        %v1082 = vmul.f32 %v1081, 1.442695
        %v1083 = vpow.pop %v1082
        %v1084 = vsel %vm1077, %v1083, 0.0
        %1085 = vadd.xlane.f32.xlu0 %v1084
        %v1086 = vpop.xlane.xlu0 %1085
        %v1087 = vrcp.pop %v1086
        %v1088 = vmul.f32 %v1086, %v1087
        %v1089 = vsub.f32 1.0, %v1088
        %v1090 = vmul.f32 %v1087, %v1089
        %v1091 = vadd.f32 %v1087, %v1090
        %vm1092 = vweird.f32 %v1086
        %vm1093 = vweird.f32 %v1087
        %vm1094 = vmor %vm1092, %vm1093
        %v1095 = vsel %vm1094, %v1087, %v1091
        %v1096 = vand.u32 2147483647, %v1086
        %vm1097 = vcmp.eq.f32.partialorder %v1096, 8.507059e+37
        %v1098 = vand.u32 %v1086, 2147483648
        %v1099 = vor.u32 1.1754944e-38, %v1098
        %v1100 = vsel %vm1097, %v1099, %v1095
        %v1101 = vmul.f32 %v1083, %v1100
        %v1102 = vpack.c.bf16 %v1101, %v1101
        %v1104 = vsel %vm1077, %v1102, 0
        %vm1106 = vcmask 1043456
        %v1108 = vsel %vm1106, %v1055, 0
        %1110 = vmatpush.bf16.msra.mxu0 0
        %1111 = vmatpush.bf16.msra.mxu0 0
        %1112 = vmatpush.bf16.msra.mxu0 0
        %1113 = vmatpush.bf16.msra.mxu0 0
        %1114 = vmatpush.bf16.msra.mxu0 0
        %1115 = vmatpush.bf16.msra.mxu0 0
        %1116 = vmatpush.bf16.msra.mxu0 0
        %1117 = vmatpush.bf16.msra.mxu0 %v1108
        %1118 = vmatmul.bf16.gmra.mxu0 %v1104
        %v1119 = vpop.f32.mrf.mxu0
        %v1120 = vadd.f32 0.0, %v1119
        %v1121 = vpop.f32.mrf.mxu0
        %1122 = vdwg.mxu0
        %1124 = vrot.lane.b32.xlu0 %v1053, 64
        %v1125 = vpop.permute.xlu0 %1124
        %1127 = vrot.lane.b32.xlu0 %v1054, 64
        %v1128 = vpop.permute.xlu0 %1127
        %v1130 = vsel %vm1056, %v1125, 0
        %v1133 = vsel %vm1056, %v1128, 0
        %1135 = vmatpush.bf16.xpose.msra.mxu0 0
        %1136 = vmatpush.bf16.xpose.msra.mxu0 0
        %1137 = vmatpush.bf16.xpose.msra.mxu0 0
        %1138 = vmatpush.bf16.xpose.msra.mxu0 0
        %1139 = vmatpush.bf16.xpose.msra.mxu0 0
        %1140 = vmatpush.bf16.xpose.msra.mxu0 0
        %1141 = vmatpush.bf16.xpose.msra.mxu0 0
        %1142 = vmatpush.bf16.xpose.msra.mxu0 %v1133
        %1143 = vmatmul.bf16.gmra.mxu0 %v1130
        %v1144 = vpop.f32.mrf.mxu0
        %v1145 = vadd.f32 0.0, %v1144
        %v1146 = vpop.f32.mrf.mxu0
        %1147 = vdwg.mxu0
        %v1148 = vmul.f32 %v1145, 0.125
        %v1149 = vsel %vm1077, %v1148, -inf
        %1150 = vmax.xlane.f32.xlu0 %v1149
        %v1151 = vpop.xlane.xlu0 %1150
        %v1152 = vsub.f32 %v1148, %v1151
        %v1153 = vmul.f32 %v1152, 1.442695
        %v1154 = vpow.pop %v1153
        %v1155 = vsel %vm1077, %v1154, 0.0
        %1156 = vadd.xlane.f32.xlu0 %v1155
        %v1157 = vpop.xlane.xlu0 %1156
        %v1158 = vrcp.pop %v1157
        %v1159 = vmul.f32 %v1157, %v1158
        %v1160 = vsub.f32 1.0, %v1159
        %v1161 = vmul.f32 %v1158, %v1160
        %v1162 = vadd.f32 %v1158, %v1161
        %vm1163 = vweird.f32 %v1157
        %vm1164 = vweird.f32 %v1158
        %vm1165 = vmor %vm1163, %vm1164
        %v1166 = vsel %vm1165, %v1158, %v1162
        %v1167 = vand.u32 2147483647, %v1157
        %vm1168 = vcmp.eq.f32.partialorder %v1167, 8.507059e+37
        %v1169 = vand.u32 %v1157, 2147483648
        %v1170 = vor.u32 1.1754944e-38, %v1169
        %v1171 = vsel %vm1168, %v1170, %v1166
        %v1172 = vmul.f32 %v1154, %v1171
        %v1173 = vpack.c.bf16 %v1172, %v1172
        %1175 = vrot.lane.b32.xlu0 %v1055, 64
        %v1176 = vpop.permute.xlu0 %1175
        %v1178 = vsel %vm1077, %v1173, 0
        %v1181 = vsel %vm1106, %v1176, 0
        %1183 = vmatpush.bf16.msra.mxu0 0
        %1184 = vmatpush.bf16.msra.mxu0 0
        %1185 = vmatpush.bf16.msra.mxu0 0
        %1186 = vmatpush.bf16.msra.mxu0 0
        %1187 = vmatpush.bf16.msra.mxu0 0
        %1188 = vmatpush.bf16.msra.mxu0 0
        %1189 = vmatpush.bf16.msra.mxu0 0
        %1190 = vmatpush.bf16.msra.mxu0 %v1181
        %1191 = vmatmul.bf16.gmra.mxu0 %v1178
        %v1192 = vpop.f32.mrf.mxu0
        %v1193 = vadd.f32 0.0, %v1192
        %v1194 = vpop.f32.mrf.mxu0
        %1195 = vdwg.mxu0
        %v1196 = vpack.c.bf16 %v946, %v946
        %v1197 = vpack.c.bf16 %v998, %v998
        %v1198 = vpack.c.bf16 %v1050, %v1050
        %v1200 = vsel %vm1056, %v1196, 0
        %v1203 = vsel %vm1056, %v1197, 0
        %1205 = vmatpush.bf16.xpose.msra.mxu0 0
        %1206 = vmatpush.bf16.xpose.msra.mxu0 0
        %1207 = vmatpush.bf16.xpose.msra.mxu0 0
        %1208 = vmatpush.bf16.xpose.msra.mxu0 0
        %1209 = vmatpush.bf16.xpose.msra.mxu0 0
        %1210 = vmatpush.bf16.xpose.msra.mxu0 0
        %1211 = vmatpush.bf16.xpose.msra.mxu0 0
        %1212 = vmatpush.bf16.xpose.msra.mxu0 %v1203
        %1213 = vmatmul.bf16.gmra.mxu0 %v1200
        %v1214 = vpop.f32.mrf.mxu0
        %v1215 = vadd.f32 0.0, %v1214
        %v1216 = vpop.f32.mrf.mxu0
        %1217 = vdwg.mxu0
        %v1218 = vmul.f32 %v1215, 0.125
        %v1219 = vsel %vm1077, %v1218, -inf
        %1220 = vmax.xlane.f32.xlu0 %v1219
        %v1221 = vpop.xlane.xlu0 %1220
        %v1222 = vsub.f32 %v1218, %v1221
        %v1223 = vmul.f32 %v1222, 1.442695
        %v1224 = vpow.pop %v1223
        %v1225 = vsel %vm1077, %v1224, 0.0
        %1226 = vadd.xlane.f32.xlu0 %v1225
        %v1227 = vpop.xlane.xlu0 %1226
        %v1228 = vrcp.pop %v1227
        %v1229 = vmul.f32 %v1227, %v1228
        %v1230 = vsub.f32 1.0, %v1229
        %v1231 = vmul.f32 %v1228, %v1230
        %v1232 = vadd.f32 %v1228, %v1231
        %vm1233 = vweird.f32 %v1227
        %vm1234 = vweird.f32 %v1228
        %vm1235 = vmor %vm1233, %vm1234
        %v1236 = vsel %vm1235, %v1228, %v1232
        %v1237 = vand.u32 2147483647, %v1227
        %vm1238 = vcmp.eq.f32.partialorder %v1237, 8.507059e+37
        %v1239 = vand.u32 %v1227, 2147483648
        %v1240 = vor.u32 1.1754944e-38, %v1239
        %v1241 = vsel %vm1238, %v1240, %v1236
        %v1242 = vmul.f32 %v1224, %v1241
        %v1243 = vpack.c.bf16 %v1242, %v1242
        %v1245 = vsel %vm1077, %v1243, 0
        %v1248 = vsel %vm1106, %v1198, 0
        %1250 = vmatpush.bf16.msra.mxu0 0
        %1251 = vmatpush.bf16.msra.mxu0 0
        %1252 = vmatpush.bf16.msra.mxu0 0
        %1253 = vmatpush.bf16.msra.mxu0 0
        %1254 = vmatpush.bf16.msra.mxu0 0
        %1255 = vmatpush.bf16.msra.mxu0 0
        %1256 = vmatpush.bf16.msra.mxu0 0
        %1257 = vmatpush.bf16.msra.mxu0 %v1248
        %1258 = vmatmul.bf16.gmra.mxu0 %v1245
        %v1259 = vpop.f32.mrf.mxu0
        %v1260 = vadd.f32 0.0, %v1259
        %v1261 = vpop.f32.mrf.mxu0
        %1262 = vdwg.mxu0
        %1264 = vrot.lane.b32.xlu0 %v1196, 64
        %v1265 = vpop.permute.xlu0 %1264
        %1267 = vrot.lane.b32.xlu0 %v1197, 64
        %v1268 = vpop.permute.xlu0 %1267
        %v1270 = vsel %vm1056, %v1265, 0
        %v1273 = vsel %vm1056, %v1268, 0
        %1275 = vmatpush.bf16.xpose.msra.mxu0 0
        %1276 = vmatpush.bf16.xpose.msra.mxu0 0
        %1277 = vmatpush.bf16.xpose.msra.mxu0 0
        %1278 = vmatpush.bf16.xpose.msra.mxu0 0
        %1279 = vmatpush.bf16.xpose.msra.mxu0 0
        %1280 = vmatpush.bf16.xpose.msra.mxu0 0
        %1281 = vmatpush.bf16.xpose.msra.mxu0 0
        %1282 = vmatpush.bf16.xpose.msra.mxu0 %v1273
        %1283 = vmatmul.bf16.gmra.mxu0 %v1270
        %v1284 = vpop.f32.mrf.mxu0
        %v1285 = vadd.f32 0.0, %v1284
        %v1286 = vpop.f32.mrf.mxu0
        %1287 = vdwg.mxu0
        %v1288 = vmul.f32 %v1285, 0.125
        %v1289 = vsel %vm1077, %v1288, -inf
        %1290 = vmax.xlane.f32.xlu0 %v1289
        %v1291 = vpop.xlane.xlu0 %1290
        %v1292 = vsub.f32 %v1288, %v1291
        %v1293 = vmul.f32 %v1292, 1.442695
        %v1294 = vpow.pop %v1293
        %v1295 = vsel %vm1077, %v1294, 0.0
        %1296 = vadd.xlane.f32.xlu0 %v1295
        %v1297 = vpop.xlane.xlu0 %1296
        %v1298 = vrcp.pop %v1297
        %v1299 = vmul.f32 %v1297, %v1298
        %v1300 = vsub.f32 1.0, %v1299
        %v1301 = vmul.f32 %v1298, %v1300
        %v1302 = vadd.f32 %v1298, %v1301
        %vm1303 = vweird.f32 %v1297
        %vm1304 = vweird.f32 %v1298
        %vm1305 = vmor %vm1303, %vm1304
        %v1306 = vsel %vm1305, %v1298, %v1302
        %v1307 = vand.u32 2147483647, %v1297
        %vm1308 = vcmp.eq.f32.partialorder %v1307, 8.507059e+37
        %v1309 = vand.u32 %v1297, 2147483648
        %v1310 = vor.u32 1.1754944e-38, %v1309
        %v1311 = vsel %vm1308, %v1310, %v1306
        %v1312 = vmul.f32 %v1294, %v1311
        %v1313 = vpack.c.bf16 %v1312, %v1312
        %1315 = vrot.lane.b32.xlu0 %v1198, 64
        %v1316 = vpop.permute.xlu0 %1315
        %v1318 = vsel %vm1077, %v1313, 0
        %v1321 = vsel %vm1106, %v1316, 0
        %1323 = vmatpush.bf16.msra.mxu0 0
        %1324 = vmatpush.bf16.msra.mxu0 0
        %1325 = vmatpush.bf16.msra.mxu0 0
        %1326 = vmatpush.bf16.msra.mxu0 0
        %1327 = vmatpush.bf16.msra.mxu0 0
        %1328 = vmatpush.bf16.msra.mxu0 0
        %1329 = vmatpush.bf16.msra.mxu0 0
        %1330 = vmatpush.bf16.msra.mxu0 %v1321
        %1331 = vmatmul.bf16.gmra.mxu0 %v1318
        %v1332 = vpop.f32.mrf.mxu0
        %v1333 = vadd.f32 0.0, %v1332
        %v1334 = vpop.f32.mrf.mxu0
        %1335 = vdwg.mxu0
        %1337 = vrot.lane.b32.xlu0 %v1193, 64
        %v1338 = vpop.permute.xlu0 %1337
        %1341 = vrot.lane.b32.xlu0 %v1333, 64
        %v1342 = vpop.permute.xlu0 %1341
        %v1344 = vsel %vm1056, %v1120, %v1338
        %v1345 = vsel %vm1056, %v1260, %v1342
        %v1346 = vpack.c.bf16 %v1344, %v1344
        %v1347 = vpack.c.bf16 %v1345, %v1345
        %v1348 = vld [vmem:[%s3] sm:$0xff]
        %v1349 = vld [vmem:[%s3 + $0x8] sm:$0xff]
        %v1350 = vld [vmem:[%s3 + $0x10] sm:$0xff]
        %v1351 = vld [vmem:[%s3 + $0x18] sm:$0xff]
        %v1352 = vld [vmem:[%s3 + $0x20] sm:$0xff]
        %v1353 = vld [vmem:[%s3 + $0x28] sm:$0xff]
        %v1354 = vld [vmem:[%s3 + $0x30] sm:$0xff]
        %v1355 = vld [vmem:[%s3 + $0x38] sm:$0xff]
        %v1356 = vld [vmem:[%s3 + $0x40] sm:$0xff]
        %v1357 = vld [vmem:[%s3 + $0x48] sm:$0xff]
        %v1358 = vld [vmem:[%s3 + $0x50] sm:$0xff]
        %v1359 = vld [vmem:[%s3 + $0x58] sm:$0xff]
        %v1360 = vld [vmem:[%s3 + $0x60] sm:$0xff]
        %v1361 = vld [vmem:[%s3 + $0x68] sm:$0xff]
        %v1362 = vld [vmem:[%s3 + $0x70] sm:$0xff]
        %v1363 = vld [vmem:[%s3 + $0x78] sm:$0xff]
        %v1364 = vld [vmem:[%s3 + $0x80] sm:$0xff]
        %v1365 = vld [vmem:[%s3 + $0x88] sm:$0xff]
        %v1366 = vld [vmem:[%s3 + $0x90] sm:$0xff]
        %v1367 = vld [vmem:[%s3 + $0x98] sm:$0xff]
        %v1368 = vld [vmem:[%s3 + $0xa0] sm:$0xff]
        %v1369 = vld [vmem:[%s3 + $0xa8] sm:$0xff]
        %v1370 = vld [vmem:[%s3 + $0xb0] sm:$0xff]
        %v1371 = vld [vmem:[%s3 + $0xb8] sm:$0xff]
        %v1372 = vld [vmem:[%s3 + $0xc0] sm:$0xff]
        %v1373 = vld [vmem:[%s3 + $0xc8] sm:$0xff]
        %v1374 = vld [vmem:[%s3 + $0xd0] sm:$0xff]
        %v1375 = vld [vmem:[%s3 + $0xd8] sm:$0xff]
        %v1376 = vld [vmem:[%s3 + $0xe0] sm:$0xff]
        %v1377 = vld [vmem:[%s3 + $0xe8] sm:$0xff]
        %v1378 = vld [vmem:[%s3 + $0xf0] sm:$0xff]
        %v1379 = vld [vmem:[%s3 + $0xf8] sm:$0xff]
        %v1380 = vld [vmem:[%s4] sm:$0x3]
        %v1382 = vperm.slane %v1380, 0
        %v1383 = vperm.slane %v1380, 1
        %v1418 = vunpack.c.l.b16 %v1348
        %v1419 = vunpack.c.h.b16 %v1348
        %v1420 = vunpack.c.l.b16 %v1349
        %v1421 = vunpack.c.h.b16 %v1349
        %v1422 = vunpack.c.l.b16 %v1350
        %v1423 = vunpack.c.h.b16 %v1350
        %v1424 = vunpack.c.l.b16 %v1351
        %v1425 = vunpack.c.h.b16 %v1351
        %v1426 = vunpack.c.l.b16 %v1352
        %v1427 = vunpack.c.h.b16 %v1352
        %v1428 = vunpack.c.l.b16 %v1353
        %v1429 = vunpack.c.h.b16 %v1353
        %v1430 = vunpack.c.l.b16 %v1354
        %v1431 = vunpack.c.h.b16 %v1354
        %v1432 = vunpack.c.l.b16 %v1355
        %v1433 = vunpack.c.h.b16 %v1355
        %v1434 = vunpack.c.l.b16 %v1356
        %v1435 = vunpack.c.h.b16 %v1356
        %v1436 = vunpack.c.l.b16 %v1357
        %v1437 = vunpack.c.h.b16 %v1357
        %v1438 = vunpack.c.l.b16 %v1358
        %v1439 = vunpack.c.h.b16 %v1358
        %v1440 = vunpack.c.l.b16 %v1359
        %v1441 = vunpack.c.h.b16 %v1359
        %v1442 = vunpack.c.l.b16 %v1360
        %v1443 = vunpack.c.h.b16 %v1360
        %v1444 = vunpack.c.l.b16 %v1361
        %v1445 = vunpack.c.h.b16 %v1361
        %v1446 = vunpack.c.l.b16 %v1362
        %v1447 = vunpack.c.h.b16 %v1362
        %v1448 = vunpack.c.l.b16 %v1363
        %v1449 = vunpack.c.h.b16 %v1363
        %v1450 = vunpack.c.l.b16 %v1364
        %v1451 = vunpack.c.h.b16 %v1364
        %v1452 = vunpack.c.l.b16 %v1365
        %v1453 = vunpack.c.h.b16 %v1365
        %v1454 = vunpack.c.l.b16 %v1366
        %v1455 = vunpack.c.h.b16 %v1366
        %v1456 = vunpack.c.l.b16 %v1367
        %v1457 = vunpack.c.h.b16 %v1367
        %v1458 = vunpack.c.l.b16 %v1368
        %v1459 = vunpack.c.h.b16 %v1368
        %v1460 = vunpack.c.l.b16 %v1369
        %v1461 = vunpack.c.h.b16 %v1369
        %v1462 = vunpack.c.l.b16 %v1370
        %v1463 = vunpack.c.h.b16 %v1370
        %v1464 = vunpack.c.l.b16 %v1371
        %v1465 = vunpack.c.h.b16 %v1371
        %v1466 = vunpack.c.l.b16 %v1372
        %v1467 = vunpack.c.h.b16 %v1372
        %v1468 = vunpack.c.l.b16 %v1373
        %v1469 = vunpack.c.h.b16 %v1373
        %v1470 = vunpack.c.l.b16 %v1374
        %v1471 = vunpack.c.h.b16 %v1374
        %v1472 = vunpack.c.l.b16 %v1375
        %v1473 = vunpack.c.h.b16 %v1375
        %v1474 = vunpack.c.l.b16 %v1376
        %v1475 = vunpack.c.h.b16 %v1376
        %v1476 = vunpack.c.l.b16 %v1377
        %v1477 = vunpack.c.h.b16 %v1377
        %v1478 = vunpack.c.l.b16 %v1378
        %v1479 = vunpack.c.h.b16 %v1378
        %v1480 = vunpack.c.l.b16 %v1379
        %v1481 = vunpack.c.h.b16 %v1379
        %v1482 = vpack.c.b16 %v1420, %v1418
        %v1483 = vpack.c.b16 %v1421, %v1419
        %v1484 = vpack.c.b16 %v1424, %v1422
        %v1485 = vpack.c.b16 %v1425, %v1423
        %v1486 = vpack.c.b16 %v1428, %v1426
        %v1487 = vpack.c.b16 %v1429, %v1427
        %v1488 = vpack.c.b16 %v1432, %v1430
        %v1489 = vpack.c.b16 %v1433, %v1431
        %v1490 = vpack.c.b16 %v1436, %v1434
        %v1491 = vpack.c.b16 %v1437, %v1435
        %v1492 = vpack.c.b16 %v1440, %v1438
        %v1493 = vpack.c.b16 %v1441, %v1439
        %v1494 = vpack.c.b16 %v1444, %v1442
        %v1495 = vpack.c.b16 %v1445, %v1443
        %v1496 = vpack.c.b16 %v1448, %v1446
        %v1497 = vpack.c.b16 %v1449, %v1447
        %v1498 = vpack.c.b16 %v1452, %v1450
        %v1499 = vpack.c.b16 %v1453, %v1451
        %v1500 = vpack.c.b16 %v1456, %v1454
        %v1501 = vpack.c.b16 %v1457, %v1455
        %v1502 = vpack.c.b16 %v1460, %v1458
        %v1503 = vpack.c.b16 %v1461, %v1459
        %v1504 = vpack.c.b16 %v1464, %v1462
        %v1505 = vpack.c.b16 %v1465, %v1463
        %v1506 = vpack.c.b16 %v1468, %v1466
        %v1507 = vpack.c.b16 %v1469, %v1467
        %v1508 = vpack.c.b16 %v1472, %v1470
        %v1509 = vpack.c.b16 %v1473, %v1471
        %v1510 = vpack.c.b16 %v1476, %v1474
        %v1511 = vpack.c.b16 %v1477, %v1475
        %v1512 = vpack.c.b16 %v1480, %v1478
        %v1513 = vpack.c.b16 %v1481, %v1479
        %1546 = vmatpush.bf16.msra.mxu0 %v1496
        %1547 = vmatpush.bf16.msra.mxu0 %v1494
        %1548 = vmatpush.bf16.msra.mxu0 %v1492
        %1549 = vmatpush.bf16.msra.mxu0 %v1490
        %1550 = vmatpush.bf16.msra.mxu0 %v1488
        %1551 = vmatpush.bf16.msra.mxu0 %v1486
        %1552 = vmatpush.bf16.msra.mxu0 %v1484
        %1553 = vmatpush.bf16.msra.mxu0 %v1482
        %1554 = vmatmul.bf16.gmra.mxu0 %v1346
        %v1555 = vpop.f32.mrf.mxu0
        %v1556 = vadd.f32 %v1382, %v1555
        %v1557 = vpop.f32.mrf.mxu0
        %1558 = vdwg.mxu0
        %1559 = vmatpush.bf16.msra.mxu0 %v1512
        %1560 = vmatpush.bf16.msra.mxu0 %v1510
        %1561 = vmatpush.bf16.msra.mxu0 %v1508
        %1562 = vmatpush.bf16.msra.mxu0 %v1506
        %1563 = vmatpush.bf16.msra.mxu0 %v1504
        %1564 = vmatpush.bf16.msra.mxu0 %v1502
        %1565 = vmatpush.bf16.msra.mxu0 %v1500
        %1566 = vmatpush.bf16.msra.mxu0 %v1498
        %1567 = vmatmul.bf16.gmra.mxu0 %v1347
        %v1568 = vpop.f32.mrf.mxu0
        %v1569 = vadd.f32 %v1556, %v1568
        %v1570 = vpop.f32.mrf.mxu0
        %1571 = vdwg.mxu0
        %1572 = vmatpush.bf16.msra.mxu0 %v1497
        %1573 = vmatpush.bf16.msra.mxu0 %v1495
        %1574 = vmatpush.bf16.msra.mxu0 %v1493
        %1575 = vmatpush.bf16.msra.mxu0 %v1491
        %1576 = vmatpush.bf16.msra.mxu0 %v1489
        %1577 = vmatpush.bf16.msra.mxu0 %v1487
        %1578 = vmatpush.bf16.msra.mxu0 %v1485
        %1579 = vmatpush.bf16.msra.mxu0 %v1483
        %1580 = vmatmul.bf16.gmra.mxu0 %v1346
        %v1581 = vpop.f32.mrf.mxu0
        %v1582 = vadd.f32 %v1383, %v1581
        %v1583 = vpop.f32.mrf.mxu0
        %1584 = vdwg.mxu0
        %1585 = vmatpush.bf16.msra.mxu0 %v1513
        %1586 = vmatpush.bf16.msra.mxu0 %v1511
        %1587 = vmatpush.bf16.msra.mxu0 %v1509
        %1588 = vmatpush.bf16.msra.mxu0 %v1507
        %1589 = vmatpush.bf16.msra.mxu0 %v1505
        %1590 = vmatpush.bf16.msra.mxu0 %v1503
        %1591 = vmatpush.bf16.msra.mxu0 %v1501
        %1592 = vmatpush.bf16.msra.mxu0 %v1499
        %1593 = vmatmul.bf16.gmra.mxu0 %v1347
        %v1594 = vpop.f32.mrf.mxu0
        %v1595 = vadd.f32 %v1582, %v1594
        %v1596 = vpop.f32.mrf.mxu0
        %1597 = vdwg.mxu0
        %v1598 = vadd.f32 %v1569, %v298
        %v1599 = vadd.f32 %v1595, %v299
        %v1600 = vld [vmem:[%s5] sm:$0x3]
        %v1601 = vld [vmem:[%s6] sm:$0x3]
        %v1602 = vadd.f32 %v1598, %v1599
        %1603 = vadd.xlane.f32.xlu0 %v1602
        %v1604 = vpop.xlane.xlu0 %1603
        %v1605 = vrcp.pop 256.0
        %v1606 = vmul.f32 256.0, %v1605
        %v1607 = vsub.f32 1.0, %v1606
        %v1608 = vmul.f32 %v1605, %v1607
        %v1609 = vadd.f32 %v1605, %v1608
        %vm1610 = vweird.f32 %v1605
        %v1611 = vsel %vm1610, %v1605, %v1609
        %v1612 = vmul.f32 %v1604, %v1611
        %v1613 = vsub.f32 %v1598, %v1612
        %v1614 = vsub.f32 %v1599, %v1612
        %v1615 = vmul.f32 %v1613, %v1613
        %v1616 = vmul.f32 %v1614, %v1614
        %v1617 = vadd.f32 %v1615, %v1616
        %1618 = vadd.xlane.f32.xlu0 %v1617
        %v1619 = vpop.xlane.xlu0 %1618
        %v1620 = vmul.f32 %v1619, %v1611
        %v1621 = vadd.f32 %v1620, 1e-05
        %v1622 = vrsqrt.pop %v1621
        %v1623 = vmul.f32 %v1622, %v1621
        %v1624 = vmul.f32 %v1623, %v1622
        %v1625 = vmul.f32 0.5, %v1624
        %v1626 = vsub.f32 1.5, %v1625
        %v1627 = vmul.f32 %v1622, %v1626
        %vm1628 = vweird.f32 %v1621
        %vm1629 = vweird.f32 %v1622
        %vm1630 = vmor %vm1628, %vm1629
        %v1631 = vsel %vm1630, %v1622, %v1627
        %v1632 = vmul.f32 %v1613, %v1631
        %v1633 = vmul.f32 %v1614, %v1631
        %v1635 = vperm.slane %v1600, 0
        %v1636 = vperm.slane %v1600, 1
        %v1639 = vmul.f32 %v1632, %v1635
        %v1640 = vmul.f32 %v1633, %v1636
        %v1642 = vperm.slane %v1601, 0
        %v1643 = vperm.slane %v1601, 1
        %v1646 = vadd.f32 %v1639, %v1642
        %v1647 = vadd.f32 %v1640, %v1643
        %v1648 = vpack.c.bf16 %v1647, %v1646
        %1649 = vst [vmem:[%s295] sm:$0xff] %v1648
        %p1650 = scmp.lt.s32.totalorder %s19, 1
        %s1651 = scalar_select %p1650, %s19, 1
        %s1652 = smul.addr %s1651, 2
        %s1653 = smul.addr %s1652, 4
        %s1654 = scalar_lea.vmem %s7, %s1653
        // Predicated region
        $region53: #{text_decoder_forward.7} parent=47 // pred_check
          %p1655 = pneg %p189
        $region54: #{text_decoder_forward.7} parent=47 // pred_check_branch
          %1657 = sbr.rel (%p1655) target = $region56
        $region55: #{text_decoder_forward.7} parent=47 // pred_region
          _
        $region56: #{text_decoder_forward.7} parent=47 // pred_fallthru
          _
      $region48: #{text_decoder_forward.7} parent=5 // pred_fallthru
        _
      %p1658 = scmp.le.s32.totalorder 2, %s14
      // Predicated region
      $region57: #{text_decoder_forward.7} parent=5 // pred_check
        %p1659 = pneg %p1658
      $region58: #{text_decoder_forward.7} parent=5 // pred_check_branch
        %1661 = sbr.rel (%p1659) target = $region60
      $region59: #{text_decoder_forward.7} parent=5 // pred_region
        %s1662 = ssub.s32 %s14, 2
        // Predicated region
        $region61: #{text_decoder_forward.7} parent=59 // pred_check
          %p1663 = pneg %p195
        $region62: #{text_decoder_forward.7} parent=59 // pred_check_branch
          %1665 = sbr.rel (%p1663) target = $region64
        $region63: #{text_decoder_forward.7} parent=59 // pred_region
          %p1666 = scmp.lt.s32.totalorder %s20, 1
          %s1667 = scalar_select %p1666, %s20, 1
          %s1668 = smul.addr %s1667, 2
          %s1669 = smul.addr %s1668, 4
          %s1670 = scalar_lea.vmem %s7, %s1669
        $region64: #{text_decoder_forward.7} parent=59 // pred_fallthru
          _
      $region60: #{text_decoder_forward.7} parent=5 // pred_fallthru
        _
    $region6: #{text_decoder_forward.7} parent=1 // loop_footer
      %s18 = sadd.s32 1, %s14
    $region7: #{text_decoder_forward.7} parent=1 // loop_footer_branch
      %13 = sbr.rel target = $region3
    $region8: #{text_decoder_forward.7} parent=1 // loop_exit
      _
    %1671 = vsyncpa [#allocation3], 1
    %s1672 = scalar_lea.sflag [#allocation3], 1
    %1673 = vsyncpa %s1672, 1

// kernel: text_decoder_forward.10
$region0: #{text_decoder_forward.10}
  #allocation0 [shape = 'u32[]', space=smem, size = 0x4, offset = 0x4, fixed_abs, tag = 'smem constant byte address 0x4 - core index']
  #allocation1 [shape = 'u32[72,128]{1,0:T(1,128)}', space=vmem, size = 0x9000, scoped, tag = 'internal scratch']
  %s0 = inlined_call_operand.vmem [shape: bf16[2,8,256], index: 0, kind: input, shape index: {}]
  %s1 = inlined_call_operand.hbm [shape: bf16[256,768], index: 1, kind: input, shape index: {}]
  %s2 = inlined_call_operand.vmem [shape: f32[1,768], index: 2, kind: input, shape index: {}]
  %s3 = inlined_call_operand.hbm [shape: bf16[256,256], index: 3, kind: input, shape index: {}]
  %s4 = inlined_call_operand.vmem [shape: f32[1,256], index: 4, kind: input, shape index: {}]
  %s5 = inlined_call_operand.vmem [shape: f32[1,256], index: 5, kind: input, shape index: {}]
  %s6 = inlined_call_operand.vmem [shape: f32[1,256], index: 6, kind: input, shape index: {}]
  %s7 = inlined_call_operand.vmem [shape: bf16[2,8,256], index: 7, kind: output, shape index: {}]
  %s8 = sld [smem:[#allocation0]]
  $region69: #{text_decoder_forward.10} parent=0
    _
  %s10 = ssub.s32 1, %s8
  %s11 = scalar_select 0, %s10, %s8
  $region1: #{text_decoder_forward.10} parent=0
    #allocation2 [shape = 'u8[393216]{0}', space=vmem, size = 0x60000, scoped, tag = 'input window, operand 1, single buffered']
    #allocation3 [shape = 's32[2]{0}', space=sflag, size = 0x8, scoped, tag = 'scoped memory for text_decoder_forward.10']
    #allocation4 [shape = 'u8[131072]{0}', space=vmem, size = 0x20000, scoped, tag = 'input window, operand 3, single buffered']
    #allocation5 [shape = 's32[1]{0}', space=sflag, size = 0x4, scoped, tag = 'scoped memory for text_decoder_forward.10']
    %12 = vsyncpa [#allocation3], 0
    %13 = vsyncpa [#allocation5], 0
    loop: start=0, step=1, limit=4
    $region2: #{text_decoder_forward.10} parent=1 // loop_pre_header
      _
    $region3: #{text_decoder_forward.10} parent=1 // loop_header
      %s15 = sphi 0, %s19
      %p16 = scmp.ge.s32.totalorder %s15, 4
      %s25 = sphi 0, %s27
      %s28 = sphi 0, %s25
      %s29 = sphi 0, %s28
      %s45 = sphi 0, %s29
      %s49 = sphi 0, %s49
      %s51 = sphi 0, %s49
      %s52 = sphi 0, %s51
      %s66 = sphi 0, %s52
      %s70 = sphi 0, %s70
      %s72 = sphi 0, %s70
      %s73 = sphi 0, %s72
      %s87 = sphi 0, %s73
      %s91 = sphi 0, %s91
      %s93 = sphi 0, %s91
      %s94 = sphi 0, %s93
      %s108 = sphi 0, %s94
      %s112 = sphi 0, %s112
      %s114 = sphi 0, %s112
      %s115 = sphi 0, %s114
      %s129 = sphi 0, %s115
      %s133 = sphi 0, %s133
      %s135 = sphi 0, %s133
      %s136 = sphi 0, %s135
      %s150 = sphi 0, %s136
      %s154 = sphi 0, %s154
      %s156 = sphi 0, %s154
      %s157 = sphi 0, %s156
      %s171 = sphi 0, %s157
      %s177 = sphi 0, %s179
      %s180 = sphi 0, %s177
      %s181 = sphi 0, %s180
      %s197 = sphi 0, %s181
    $region4: #{text_decoder_forward.10} parent=1 // loop_header_branch
      %18 = sbr.rel (%p16) target = $region8
    $region5: #{text_decoder_forward.10} parent=1 // loop_body
      %s20 = ssub.s32 %s15, 1
      %s21 = ssub.s32 %s15, 2
      %s22 = sadd.s32 %s15, 1
      %s23 = ssub.s32 %s15, %s22
      %p24 = scmp.eq.s32.totalorder %s23, 0
      %s26 = sadd.s32 %s25, 1
      %s27 = scalar_select %p24, %s25, %s26
      %p30 = pneg %p24
      %p31 = scmp.eq.s32.totalorder %s15, 1
      %p32 = por %p30, %p31
      %p33 = scmp.ne.s32.totalorder %s25, %s28
      %p34 = scmp.eq.s32.totalorder %s15, 0
      %p35 = por %p33, %p34
      %p36 = scmp.ne.s32.totalorder %s25, %s28
      %p37 = scmp.eq.s32.totalorder %s20, 1
      %p38 = por %p36, %p37
      %p39 = scmp.ne.s32.totalorder %s28, %s29
      %p40 = scmp.eq.s32.totalorder %s20, 0
      %p41 = por %p39, %p40
      %p42 = scmp.ne.s32.totalorder %s28, %s29
      %p43 = scmp.eq.s32.totalorder %s21, 1
      %p44 = por %p42, %p43
      %p46 = scmp.ne.s32.totalorder %s29, %s45
      %p47 = scmp.eq.s32.totalorder %s21, 0
      %p48 = por %p46, %p47
      %s50 = sadd.s32 %s49, 1
      %p53 = scmp.eq.s32.totalorder %s15, 1
      %p54 = scmp.ne.s32.totalorder %s49, %s51
      %p55 = scmp.eq.s32.totalorder %s15, 0
      %p56 = por %p54, %p55
      %p57 = scmp.ne.s32.totalorder %s49, %s51
      %p58 = scmp.eq.s32.totalorder %s20, 1
      %p59 = por %p57, %p58
      %p60 = scmp.ne.s32.totalorder %s51, %s52
      %p61 = scmp.eq.s32.totalorder %s20, 0
      %p62 = por %p60, %p61
      %p63 = scmp.ne.s32.totalorder %s51, %s52
      %p64 = scmp.eq.s32.totalorder %s21, 1
      %p65 = por %p63, %p64
      %p67 = scmp.ne.s32.totalorder %s52, %s66
      %p68 = scmp.eq.s32.totalorder %s21, 0
      %p69 = por %p67, %p68
      %s71 = sadd.s32 %s70, 1
      %p74 = scmp.eq.s32.totalorder %s15, 1
      %p75 = scmp.ne.s32.totalorder %s70, %s72
      %p76 = scmp.eq.s32.totalorder %s15, 0
      %p77 = por %p75, %p76
      %p78 = scmp.ne.s32.totalorder %s70, %s72
      %p79 = scmp.eq.s32.totalorder %s20, 1
      %p80 = por %p78, %p79
      %p81 = scmp.ne.s32.totalorder %s72, %s73
      %p82 = scmp.eq.s32.totalorder %s20, 0
      %p83 = por %p81, %p82
      %p84 = scmp.ne.s32.totalorder %s72, %s73
      %p85 = scmp.eq.s32.totalorder %s21, 1
      %p86 = por %p84, %p85
      %p88 = scmp.ne.s32.totalorder %s73, %s87
      %p89 = scmp.eq.s32.totalorder %s21, 0
      %p90 = por %p88, %p89
      %s92 = sadd.s32 %s91, 1
      %p95 = scmp.eq.s32.totalorder %s15, 1
      %p96 = scmp.ne.s32.totalorder %s91, %s93
      %p97 = scmp.eq.s32.totalorder %s15, 0
      %p98 = por %p96, %p97
      %p99 = scmp.ne.s32.totalorder %s91, %s93
      %p100 = scmp.eq.s32.totalorder %s20, 1
      %p101 = por %p99, %p100
      %p102 = scmp.ne.s32.totalorder %s93, %s94
      %p103 = scmp.eq.s32.totalorder %s20, 0
      %p104 = por %p102, %p103
      %p105 = scmp.ne.s32.totalorder %s93, %s94
      %p106 = scmp.eq.s32.totalorder %s21, 1
      %p107 = por %p105, %p106
      %p109 = scmp.ne.s32.totalorder %s94, %s108
      %p110 = scmp.eq.s32.totalorder %s21, 0
      %p111 = por %p109, %p110
      %s113 = sadd.s32 %s112, 1
      %p116 = scmp.eq.s32.totalorder %s15, 1
      %p117 = scmp.ne.s32.totalorder %s112, %s114
      %p118 = scmp.eq.s32.totalorder %s15, 0
      %p119 = por %p117, %p118
      %p120 = scmp.ne.s32.totalorder %s112, %s114
      %p121 = scmp.eq.s32.totalorder %s20, 1
      %p122 = por %p120, %p121
      %p123 = scmp.ne.s32.totalorder %s114, %s115
      %p124 = scmp.eq.s32.totalorder %s20, 0
      %p125 = por %p123, %p124
      %p126 = scmp.ne.s32.totalorder %s114, %s115
      %p127 = scmp.eq.s32.totalorder %s21, 1
      %p128 = por %p126, %p127
      %p130 = scmp.ne.s32.totalorder %s115, %s129
      %p131 = scmp.eq.s32.totalorder %s21, 0
      %p132 = por %p130, %p131
      %s134 = sadd.s32 %s133, 1
      %p137 = scmp.eq.s32.totalorder %s15, 1
      %p138 = scmp.ne.s32.totalorder %s133, %s135
      %p139 = scmp.eq.s32.totalorder %s15, 0
      %p140 = por %p138, %p139
      %p141 = scmp.ne.s32.totalorder %s133, %s135
      %p142 = scmp.eq.s32.totalorder %s20, 1
      %p143 = por %p141, %p142
      %p144 = scmp.ne.s32.totalorder %s135, %s136
      %p145 = scmp.eq.s32.totalorder %s20, 0
      %p146 = por %p144, %p145
      %p147 = scmp.ne.s32.totalorder %s135, %s136
      %p148 = scmp.eq.s32.totalorder %s21, 1
      %p149 = por %p147, %p148
      %p151 = scmp.ne.s32.totalorder %s136, %s150
      %p152 = scmp.eq.s32.totalorder %s21, 0
      %p153 = por %p151, %p152
      %s155 = sadd.s32 %s154, 1
      %p158 = scmp.eq.s32.totalorder %s15, 1
      %p159 = scmp.ne.s32.totalorder %s154, %s156
      %p160 = scmp.eq.s32.totalorder %s15, 0
      %p161 = por %p159, %p160
      %p162 = scmp.ne.s32.totalorder %s154, %s156
      %p163 = scmp.eq.s32.totalorder %s20, 1
      %p164 = por %p162, %p163
      %p165 = scmp.ne.s32.totalorder %s156, %s157
      %p166 = scmp.eq.s32.totalorder %s20, 0
      %p167 = por %p165, %p166
      %p168 = scmp.ne.s32.totalorder %s156, %s157
      %p169 = scmp.eq.s32.totalorder %s21, 1
      %p170 = por %p168, %p169
      %p172 = scmp.ne.s32.totalorder %s157, %s171
      %p173 = scmp.eq.s32.totalorder %s21, 0
      %p174 = por %p172, %p173
      %s175 = ssub.s32 %s15, %s22
      %p176 = scmp.eq.s32.totalorder %s175, 0
      %s178 = sadd.s32 %s177, 1
      %s179 = scalar_select %p176, %s177, %s178
      %p182 = pneg %p176
      %p183 = scmp.eq.s32.totalorder %s15, 1
      %p184 = por %p182, %p183
      %p185 = scmp.ne.s32.totalorder %s177, %s180
      %p186 = scmp.eq.s32.totalorder %s15, 0
      %p187 = por %p185, %p186
      %p188 = scmp.ne.s32.totalorder %s177, %s180
      %p189 = scmp.eq.s32.totalorder %s20, 1
      %p190 = por %p188, %p189
      %p191 = scmp.ne.s32.totalorder %s180, %s181
      %p192 = scmp.eq.s32.totalorder %s20, 0
      %p193 = por %p191, %p192
      %p194 = scmp.ne.s32.totalorder %s180, %s181
      %p195 = scmp.eq.s32.totalorder %s21, 1
      %p196 = por %p194, %p195
      %p198 = scmp.ne.s32.totalorder %s181, %s197
      %p199 = scmp.eq.s32.totalorder %s21, 0
      %p200 = por %p198, %p199
      %p201 = scmp.le.s32.totalorder 1, %s15
      %p202 = scmp.lt.s32.totalorder %s15, 3
      %p203 = pnand %p201, %p202
      %p204 = pneg %p203
      // Predicated region
      $region9: #{text_decoder_forward.10} parent=5 // pred_check
        _
      $region10: #{text_decoder_forward.10} parent=5 // pred_check_branch
        %206 = sbr.rel (%p203) target = $region12
      $region11: #{text_decoder_forward.10} parent=5 // pred_region
        %s207 = ssub.s32 %s15, 1
        // Predicated region
        $region13: #{text_decoder_forward.10} parent=11 // pred_check
          %p208 = pneg %p62
        $region14: #{text_decoder_forward.10} parent=11 // pred_check_branch
          %210 = sbr.rel (%p208) target = $region16
        $region15: #{text_decoder_forward.10} parent=11 // pred_region
          %212 = vsyncadd [#allocation3], 0
          %s213 = sshll.u32 %s1, 4
          %s214 = int_to_ptr.hbm [resolvable:$true] %s213
          %s215 = sshll.u32 [#allocation2], 4
          %s216 = int_to_ptr.vmem [resolvable:$true] %s215
          %221 = dma.hbm_to_vmem [thread:$0]  %s214, 12288, %s216, [#allocation3], 384, 384, 24
        $region16: #{text_decoder_forward.10} parent=11 // pred_fallthru
          _
        // Predicated region
        $region17: #{text_decoder_forward.10} parent=11 // pred_check
          %p222 = pneg %p83
        $region18: #{text_decoder_forward.10} parent=11 // pred_check_branch
          %224 = sbr.rel (%p222) target = $region20
        $region19: #{text_decoder_forward.10} parent=11 // pred_region
          _
        $region20: #{text_decoder_forward.10} parent=11 // pred_fallthru
          _
        // Predicated region
        $region21: #{text_decoder_forward.10} parent=11 // pred_check
          %p225 = pneg %p104
        $region22: #{text_decoder_forward.10} parent=11 // pred_check_branch
          %227 = sbr.rel (%p225) target = $region24
        $region23: #{text_decoder_forward.10} parent=11 // pred_region
          %229 = vsyncadd [#allocation5], 0
          %s230 = sshll.u32 %s3, 4
          %s231 = int_to_ptr.hbm [resolvable:$true] %s230
          %s232 = sshll.u32 [#allocation4], 4
          %s233 = int_to_ptr.vmem [resolvable:$true] %s232
          %238 = dma.hbm_to_vmem [thread:$0]  %s231, 4096, %s233, [#allocation5], 128, 128, 8
        $region24: #{text_decoder_forward.10} parent=11 // pred_fallthru
          _
        // Predicated region
        $region25: #{text_decoder_forward.10} parent=11 // pred_check
          %p239 = pneg %p125
        $region26: #{text_decoder_forward.10} parent=11 // pred_check_branch
          %241 = sbr.rel (%p239) target = $region28
        $region27: #{text_decoder_forward.10} parent=11 // pred_region
          _
        $region28: #{text_decoder_forward.10} parent=11 // pred_fallthru
          _
        // Predicated region
        $region29: #{text_decoder_forward.10} parent=11 // pred_check
          %p242 = pneg %p146
        $region30: #{text_decoder_forward.10} parent=11 // pred_check_branch
          %244 = sbr.rel (%p242) target = $region32
        $region31: #{text_decoder_forward.10} parent=11 // pred_region
          _
        $region32: #{text_decoder_forward.10} parent=11 // pred_fallthru
          _
        // Predicated region
        $region33: #{text_decoder_forward.10} parent=11 // pred_check
          %p245 = pneg %p167
        $region34: #{text_decoder_forward.10} parent=11 // pred_check_branch
          %247 = sbr.rel (%p245) target = $region36
        $region35: #{text_decoder_forward.10} parent=11 // pred_region
          _
        $region36: #{text_decoder_forward.10} parent=11 // pred_fallthru
          _
      $region12: #{text_decoder_forward.10} parent=5 // pred_fallthru
        _
      %p248 = scmp.lt.s32.totalorder %s15, 2
      // Predicated region
      $region37: #{text_decoder_forward.10} parent=5 // pred_check
        %p249 = pneg %p248
      $region38: #{text_decoder_forward.10} parent=5 // pred_check_branch
        %251 = sbr.rel (%p249) target = $region40
      $region39: #{text_decoder_forward.10} parent=5 // pred_region
        // Predicated region
        $region41: #{text_decoder_forward.10} parent=39 // pred_check
          %p252 = pneg %p35
        $region42: #{text_decoder_forward.10} parent=39 // pred_check_branch
          %254 = sbr.rel (%p252) target = $region44
        $region43: #{text_decoder_forward.10} parent=39 // pred_region
          %p255 = scmp.lt.s32.totalorder %s15, 1
          %s256 = scalar_select %p255, %s15, 1
          %s257 = smul.addr %s256, 2
          %s258 = smul.addr %s257, 4
          %s259 = scalar_lea.vmem %s0, %s258
        $region44: #{text_decoder_forward.10} parent=39 // pred_fallthru
          _
      $region40: #{text_decoder_forward.10} parent=5 // pred_fallthru
        _
      %p260 = scmp.le.s32.totalorder 1, %s15
      %p261 = scmp.lt.s32.totalorder %s15, 3
      %p262 = pnand %p260, %p261
      %p263 = pneg %p262
      // Predicated region
      $region45: #{text_decoder_forward.10} parent=5 // pred_check
        _
      $region46: #{text_decoder_forward.10} parent=5 // pred_check_branch
        %265 = sbr.rel (%p262) target = $region48
      $region47: #{text_decoder_forward.10} parent=5 // pred_region
        %s266 = ssub.s32 %s15, 1
        // Predicated region
        $region49: #{text_decoder_forward.10} parent=47 // pred_check
          %p267 = pneg %p62
        $region50: #{text_decoder_forward.10} parent=47 // pred_check_branch
          %269 = sbr.rel (%p267) target = $region52
        $region51: #{text_decoder_forward.10} parent=47 // pred_region
          %271 = dma.done [#allocation3], 12288
        $region52: #{text_decoder_forward.10} parent=47 // pred_fallthru
          _
        // Predicated region
        $region53: #{text_decoder_forward.10} parent=47 // pred_check
          %p272 = pneg %p104
        $region54: #{text_decoder_forward.10} parent=47 // pred_check_branch
          %274 = sbr.rel (%p272) target = $region56
        $region55: #{text_decoder_forward.10} parent=47 // pred_region
          %276 = dma.done [#allocation5], 4096
        $region56: #{text_decoder_forward.10} parent=47 // pred_fallthru
          _
        %p277 = scmp.lt.s32.totalorder %s20, 1
        %s278 = scalar_select %p277, %s20, 1
        %s279 = smul.addr %s278, 2
        %s280 = smul.addr %s279, 4
        %s281 = scalar_lea.vmem %s0, %s280
        %p282 = pneg %p41
        %p283 = pneg %p38
        %p284 = pneg %p62
        %p285 = pneg %p59
        %p286 = pneg %p83
        %p287 = pneg %p80
        %p288 = pneg %p104
        %p289 = pneg %p101
        %p290 = pneg %p125
        %p291 = pneg %p122
        %p292 = pneg %p146
        %p293 = pneg %p143
        %p294 = pneg %p167
        %p295 = pneg %p164
        %p296 = pneg %p193
        %p297 = pneg %p190
        %p298 = scmp.lt.s32.totalorder %s20, 1
        %s299 = scalar_select %p298, %s20, 1
        %s300 = smul.addr %s299, 2
        %s301 = smul.addr %s300, 4
        %s302 = scalar_lea.vmem %s7, %s301
        %p303 = scmp.lt.s32.totalorder %s20, 1
        %s304 = scalar_select %p303, %s20, 1
        %s305 = smul.addr %s304, 2
        %s306 = smul.addr %s305, 4
        %s307 = scalar_lea.vmem %s0, %s306
        %p308 = scmp.lt.s32.totalorder %s20, 1
        %s309 = scalar_select %p308, %s20, 1
        %s310 = smul.addr %s309, 2
        %s311 = smul.addr %s310, 4
        %s312 = scalar_lea.vmem %s7, %s311
        %v314 = vld [vmem:[%s307] sm:$0xff]
        %v315 = vunpack.c.l.bf16 %v314
        %v316 = vunpack.c.h.bf16 %v314
        %v317 = vld [vmem:[#allocation2] sm:$0xff]
        %v318 = vld [vmem:[#allocation2 + $0x8] sm:$0xff]
        %v319 = vld [vmem:[#allocation2 + $0x10] sm:$0xff]
        %v320 = vld [vmem:[#allocation2 + $0x18] sm:$0xff]
        %v321 = vld [vmem:[#allocation2 + $0x20] sm:$0xff]
        %v322 = vld [vmem:[#allocation2 + $0x28] sm:$0xff]
        %v323 = vld [vmem:[#allocation2 + $0x30] sm:$0xff]
        %v324 = vld [vmem:[#allocation2 + $0x38] sm:$0xff]
        %v325 = vld [vmem:[#allocation2 + $0x40] sm:$0xff]
        %v326 = vld [vmem:[#allocation2 + $0x48] sm:$0xff]
        %v327 = vld [vmem:[#allocation2 + $0x50] sm:$0xff]
        %v328 = vld [vmem:[#allocation2 + $0x58] sm:$0xff]
        %v329 = vld [vmem:[#allocation2 + $0x60] sm:$0xff]
        %v330 = vld [vmem:[#allocation2 + $0x68] sm:$0xff]
        %v331 = vld [vmem:[#allocation2 + $0x70] sm:$0xff]
        %v332 = vld [vmem:[#allocation2 + $0x78] sm:$0xff]
        %v333 = vld [vmem:[#allocation2 + $0x80] sm:$0xff]
        %v334 = vld [vmem:[#allocation2 + $0x88] sm:$0xff]
        %v335 = vld [vmem:[#allocation2 + $0x90] sm:$0xff]
        %v336 = vld [vmem:[#allocation2 + $0x98] sm:$0xff]
        %v337 = vld [vmem:[#allocation2 + $0xa0] sm:$0xff]
        %v338 = vld [vmem:[#allocation2 + $0xa8] sm:$0xff]
        %v339 = vld [vmem:[#allocation2 + $0xb0] sm:$0xff]
        %v340 = vld [vmem:[#allocation2 + $0xb8] sm:$0xff]
        %v341 = vld [vmem:[#allocation2 + $0xc0] sm:$0xff]
        %v342 = vld [vmem:[#allocation2 + $0xc8] sm:$0xff]
        %v343 = vld [vmem:[#allocation2 + $0xd0] sm:$0xff]
        %v344 = vld [vmem:[#allocation2 + $0xd8] sm:$0xff]
        %v345 = vld [vmem:[#allocation2 + $0xe0] sm:$0xff]
        %v346 = vld [vmem:[#allocation2 + $0xe8] sm:$0xff]
        %v347 = vld [vmem:[#allocation2 + $0xf0] sm:$0xff]
        %v348 = vld [vmem:[#allocation2 + $0xf8] sm:$0xff]
        %v349 = vld [vmem:[#allocation2 + $0x100] sm:$0xff]
        %v350 = vld [vmem:[#allocation2 + $0x108] sm:$0xff]
        %v351 = vld [vmem:[#allocation2 + $0x110] sm:$0xff]
        %v352 = vld [vmem:[#allocation2 + $0x118] sm:$0xff]
        %v353 = vld [vmem:[#allocation2 + $0x120] sm:$0xff]
        %v354 = vld [vmem:[#allocation2 + $0x128] sm:$0xff]
        %v355 = vld [vmem:[#allocation2 + $0x130] sm:$0xff]
        %v356 = vld [vmem:[#allocation2 + $0x138] sm:$0xff]
        %v357 = vld [vmem:[#allocation2 + $0x140] sm:$0xff]
        %v358 = vld [vmem:[#allocation2 + $0x148] sm:$0xff]
        %v359 = vld [vmem:[#allocation2 + $0x150] sm:$0xff]
        %v360 = vld [vmem:[#allocation2 + $0x158] sm:$0xff]
        %v361 = vld [vmem:[#allocation2 + $0x160] sm:$0xff]
        %v362 = vld [vmem:[#allocation2 + $0x168] sm:$0xff]
        %v363 = vld [vmem:[#allocation2 + $0x170] sm:$0xff]
        %v364 = vld [vmem:[#allocation2 + $0x178] sm:$0xff]
        %v365 = vld [vmem:[#allocation2 + $0x180] sm:$0xff]
        %v366 = vld [vmem:[#allocation2 + $0x188] sm:$0xff]
        %v367 = vld [vmem:[#allocation2 + $0x190] sm:$0xff]
        %v368 = vld [vmem:[#allocation2 + $0x198] sm:$0xff]
        %v369 = vld [vmem:[#allocation2 + $0x1a0] sm:$0xff]
        %v370 = vld [vmem:[#allocation2 + $0x1a8] sm:$0xff]
        %v371 = vld [vmem:[#allocation2 + $0x1b0] sm:$0xff]
        %v372 = vld [vmem:[#allocation2 + $0x1b8] sm:$0xff]
        %v373 = vld [vmem:[#allocation2 + $0x1c0] sm:$0xff]
        %v374 = vld [vmem:[#allocation2 + $0x1c8] sm:$0xff]
        %v375 = vld [vmem:[#allocation2 + $0x1d0] sm:$0xff]
        %v376 = vld [vmem:[#allocation2 + $0x1d8] sm:$0xff]
        %v377 = vld [vmem:[#allocation2 + $0x1e0] sm:$0xff]
        %v378 = vld [vmem:[#allocation2 + $0x1e8] sm:$0xff]
        %v379 = vld [vmem:[#allocation2 + $0x1f0] sm:$0xff]
        %v380 = vld [vmem:[#allocation2 + $0x1f8] sm:$0xff]
        %v381 = vld [vmem:[#allocation2 + $0x200] sm:$0xff]
        %v382 = vld [vmem:[#allocation2 + $0x208] sm:$0xff]
        %v383 = vld [vmem:[#allocation2 + $0x210] sm:$0xff]
        %v384 = vld [vmem:[#allocation2 + $0x218] sm:$0xff]
        %v385 = vld [vmem:[#allocation2 + $0x220] sm:$0xff]
        %v386 = vld [vmem:[#allocation2 + $0x228] sm:$0xff]
        %v387 = vld [vmem:[#allocation2 + $0x230] sm:$0xff]
        %v388 = vld [vmem:[#allocation2 + $0x238] sm:$0xff]
        %v389 = vld [vmem:[#allocation2 + $0x240] sm:$0xff]
        %v390 = vld [vmem:[#allocation2 + $0x248] sm:$0xff]
        %v391 = vld [vmem:[#allocation2 + $0x250] sm:$0xff]
        %v392 = vld [vmem:[#allocation2 + $0x258] sm:$0xff]
        %v393 = vld [vmem:[#allocation2 + $0x260] sm:$0xff]
        %v394 = vld [vmem:[#allocation2 + $0x268] sm:$0xff]
        %v395 = vld [vmem:[#allocation2 + $0x270] sm:$0xff]
        %v396 = vld [vmem:[#allocation2 + $0x278] sm:$0xff]
        %v397 = vld [vmem:[#allocation2 + $0x280] sm:$0xff]
        %v398 = vld [vmem:[#allocation2 + $0x288] sm:$0xff]
        %v399 = vld [vmem:[#allocation2 + $0x290] sm:$0xff]
        %v400 = vld [vmem:[#allocation2 + $0x298] sm:$0xff]
        %v401 = vld [vmem:[#allocation2 + $0x2a0] sm:$0xff]
        %v402 = vld [vmem:[#allocation2 + $0x2a8] sm:$0xff]
        %v403 = vld [vmem:[#allocation2 + $0x2b0] sm:$0xff]
        %v404 = vld [vmem:[#allocation2 + $0x2b8] sm:$0xff]
        %v405 = vld [vmem:[#allocation2 + $0x2c0] sm:$0xff]
        %v406 = vld [vmem:[#allocation2 + $0x2c8] sm:$0xff]
        %v407 = vld [vmem:[#allocation2 + $0x2d0] sm:$0xff]
        %v408 = vld [vmem:[#allocation2 + $0x2d8] sm:$0xff]
        %v409 = vld [vmem:[#allocation2 + $0x2e0] sm:$0xff]
        %v410 = vld [vmem:[#allocation2 + $0x2e8] sm:$0xff]
        %v411 = vld [vmem:[#allocation2 + $0x2f0] sm:$0xff]
        %v412 = vld [vmem:[#allocation2 + $0x2f8] sm:$0xff]
        %v413 = vld [vmem:[%s2] sm:$0x3f]
        %v415 = vperm.slane %v413, 0
        %v416 = vperm.slane %v413, 1
        %v417 = vperm.slane %v413, 2
        %v418 = vperm.slane %v413, 3
        %v419 = vperm.slane %v413, 4
        %v420 = vperm.slane %v413, 5
        %v428 = vunpack.c.l.b16 %v314
        %v429 = vunpack.c.h.b16 %v314
        %v430 = vpack.c.b16 %v428, %v428
        %v431 = vpack.c.b16 %v429, %v429
        %v530 = vunpack.c.l.b16 %v317
        %v531 = vunpack.c.h.b16 %v317
        %v532 = vunpack.c.l.b16 %v318
        %v533 = vunpack.c.h.b16 %v318
        %v534 = vunpack.c.l.b16 %v319
        %v535 = vunpack.c.h.b16 %v319
        %v536 = vunpack.c.l.b16 %v320
        %v537 = vunpack.c.h.b16 %v320
        %v538 = vunpack.c.l.b16 %v321
        %v539 = vunpack.c.h.b16 %v321
        %v540 = vunpack.c.l.b16 %v322
        %v541 = vunpack.c.h.b16 %v322
        %v542 = vunpack.c.l.b16 %v323
        %v543 = vunpack.c.h.b16 %v323
        %v544 = vunpack.c.l.b16 %v324
        %v545 = vunpack.c.h.b16 %v324
        %v546 = vunpack.c.l.b16 %v325
        %v547 = vunpack.c.h.b16 %v325
        %v548 = vunpack.c.l.b16 %v326
        %v549 = vunpack.c.h.b16 %v326
        %v550 = vunpack.c.l.b16 %v327
        %v551 = vunpack.c.h.b16 %v327
        %v552 = vunpack.c.l.b16 %v328
        %v553 = vunpack.c.h.b16 %v328
        %v554 = vunpack.c.l.b16 %v329
        %v555 = vunpack.c.h.b16 %v329
        %v556 = vunpack.c.l.b16 %v330
        %v557 = vunpack.c.h.b16 %v330
        %v558 = vunpack.c.l.b16 %v331
        %v559 = vunpack.c.h.b16 %v331
        %v560 = vunpack.c.l.b16 %v332
        %v561 = vunpack.c.h.b16 %v332
        %v562 = vunpack.c.l.b16 %v333
        %v563 = vunpack.c.h.b16 %v333
        %v564 = vunpack.c.l.b16 %v334
        %v565 = vunpack.c.h.b16 %v334
        %v566 = vunpack.c.l.b16 %v335
        %v567 = vunpack.c.h.b16 %v335
        %v568 = vunpack.c.l.b16 %v336
        %v569 = vunpack.c.h.b16 %v336
        %v570 = vunpack.c.l.b16 %v337
        %v571 = vunpack.c.h.b16 %v337
        %v572 = vunpack.c.l.b16 %v338
        %v573 = vunpack.c.h.b16 %v338
        %v574 = vunpack.c.l.b16 %v339
        %v575 = vunpack.c.h.b16 %v339
        %v576 = vunpack.c.l.b16 %v340
        %v577 = vunpack.c.h.b16 %v340
        %v578 = vunpack.c.l.b16 %v341
        %v579 = vunpack.c.h.b16 %v341
        %v580 = vunpack.c.l.b16 %v342
        %v581 = vunpack.c.h.b16 %v342
        %v582 = vunpack.c.l.b16 %v343
        %v583 = vunpack.c.h.b16 %v343
        %v584 = vunpack.c.l.b16 %v344
        %v585 = vunpack.c.h.b16 %v344
        %v586 = vunpack.c.l.b16 %v345
        %v587 = vunpack.c.h.b16 %v345
        %v588 = vunpack.c.l.b16 %v346
        %v589 = vunpack.c.h.b16 %v346
        %v590 = vunpack.c.l.b16 %v347
        %v591 = vunpack.c.h.b16 %v347
        %v592 = vunpack.c.l.b16 %v348
        %v593 = vunpack.c.h.b16 %v348
        %v594 = vunpack.c.l.b16 %v349
        %v595 = vunpack.c.h.b16 %v349
        %v596 = vunpack.c.l.b16 %v350
        %v597 = vunpack.c.h.b16 %v350
        %v598 = vunpack.c.l.b16 %v351
        %v599 = vunpack.c.h.b16 %v351
        %v600 = vunpack.c.l.b16 %v352
        %v601 = vunpack.c.h.b16 %v352
        %v602 = vunpack.c.l.b16 %v353
        %v603 = vunpack.c.h.b16 %v353
        %v604 = vunpack.c.l.b16 %v354
        %v605 = vunpack.c.h.b16 %v354
        %v606 = vunpack.c.l.b16 %v355
        %v607 = vunpack.c.h.b16 %v355
        %v608 = vunpack.c.l.b16 %v356
        %v609 = vunpack.c.h.b16 %v356
        %v610 = vunpack.c.l.b16 %v357
        %v611 = vunpack.c.h.b16 %v357
        %v612 = vunpack.c.l.b16 %v358
        %v613 = vunpack.c.h.b16 %v358
        %v614 = vunpack.c.l.b16 %v359
        %v615 = vunpack.c.h.b16 %v359
        %v616 = vunpack.c.l.b16 %v360
        %v617 = vunpack.c.h.b16 %v360
        %v618 = vunpack.c.l.b16 %v361
        %v619 = vunpack.c.h.b16 %v361
        %v620 = vunpack.c.l.b16 %v362
        %v621 = vunpack.c.h.b16 %v362
        %v622 = vunpack.c.l.b16 %v363
        %v623 = vunpack.c.h.b16 %v363
        %v624 = vunpack.c.l.b16 %v364
        %v625 = vunpack.c.h.b16 %v364
        %v626 = vunpack.c.l.b16 %v365
        %v627 = vunpack.c.h.b16 %v365
        %v628 = vunpack.c.l.b16 %v366
        %v629 = vunpack.c.h.b16 %v366
        %v630 = vunpack.c.l.b16 %v367
        %v631 = vunpack.c.h.b16 %v367
        %v632 = vunpack.c.l.b16 %v368
        %v633 = vunpack.c.h.b16 %v368
        %v634 = vunpack.c.l.b16 %v369
        %v635 = vunpack.c.h.b16 %v369
        %v636 = vunpack.c.l.b16 %v370
        %v637 = vunpack.c.h.b16 %v370
        %v638 = vunpack.c.l.b16 %v371
        %v639 = vunpack.c.h.b16 %v371
        %v640 = vunpack.c.l.b16 %v372
        %v641 = vunpack.c.h.b16 %v372
        %v642 = vunpack.c.l.b16 %v373
        %v643 = vunpack.c.h.b16 %v373
        %v644 = vunpack.c.l.b16 %v374
        %v645 = vunpack.c.h.b16 %v374
        %v646 = vunpack.c.l.b16 %v375
        %v647 = vunpack.c.h.b16 %v375
        %v648 = vunpack.c.l.b16 %v376
        %v649 = vunpack.c.h.b16 %v376
        %v650 = vunpack.c.l.b16 %v377
        %v651 = vunpack.c.h.b16 %v377
        %v652 = vunpack.c.l.b16 %v378
        %v653 = vunpack.c.h.b16 %v378
        %v654 = vunpack.c.l.b16 %v379
        %v655 = vunpack.c.h.b16 %v379
        %v656 = vunpack.c.l.b16 %v380
        %v657 = vunpack.c.h.b16 %v380
        %v658 = vunpack.c.l.b16 %v381
        %v659 = vunpack.c.h.b16 %v381
        %v660 = vunpack.c.l.b16 %v382
        %v661 = vunpack.c.h.b16 %v382
        %v662 = vunpack.c.l.b16 %v383
        %v663 = vunpack.c.h.b16 %v383
        %v664 = vunpack.c.l.b16 %v384
        %v665 = vunpack.c.h.b16 %v384
        %v666 = vunpack.c.l.b16 %v385
        %v667 = vunpack.c.h.b16 %v385
        %v668 = vunpack.c.l.b16 %v386
        %v669 = vunpack.c.h.b16 %v386
        %v670 = vunpack.c.l.b16 %v387
        %v671 = vunpack.c.h.b16 %v387
        %v672 = vunpack.c.l.b16 %v388
        %v673 = vunpack.c.h.b16 %v388
        %v674 = vunpack.c.l.b16 %v389
        %v675 = vunpack.c.h.b16 %v389
        %v676 = vunpack.c.l.b16 %v390
        %v677 = vunpack.c.h.b16 %v390
        %v678 = vunpack.c.l.b16 %v391
        %v679 = vunpack.c.h.b16 %v391
        %v680 = vunpack.c.l.b16 %v392
        %v681 = vunpack.c.h.b16 %v392
        %v682 = vunpack.c.l.b16 %v393
        %v683 = vunpack.c.h.b16 %v393
        %v684 = vunpack.c.l.b16 %v394
        %v685 = vunpack.c.h.b16 %v394
        %v686 = vunpack.c.l.b16 %v395
        %v687 = vunpack.c.h.b16 %v395
        %v688 = vunpack.c.l.b16 %v396
        %v689 = vunpack.c.h.b16 %v396
        %v690 = vunpack.c.l.b16 %v397
        %v691 = vunpack.c.h.b16 %v397
        %v692 = vunpack.c.l.b16 %v398
        %v693 = vunpack.c.h.b16 %v398
        %v694 = vunpack.c.l.b16 %v399
        %v695 = vunpack.c.h.b16 %v399
        %v696 = vunpack.c.l.b16 %v400
        %v697 = vunpack.c.h.b16 %v400
        %v698 = vunpack.c.l.b16 %v401
        %v699 = vunpack.c.h.b16 %v401
        %v700 = vunpack.c.l.b16 %v402
        %v701 = vunpack.c.h.b16 %v402
        %v702 = vunpack.c.l.b16 %v403
        %v703 = vunpack.c.h.b16 %v403
        %v704 = vunpack.c.l.b16 %v404
        %v705 = vunpack.c.h.b16 %v404
        %v706 = vunpack.c.l.b16 %v405
        %v707 = vunpack.c.h.b16 %v405
        %v708 = vunpack.c.l.b16 %v406
        %v709 = vunpack.c.h.b16 %v406
        %v710 = vunpack.c.l.b16 %v407
        %v711 = vunpack.c.h.b16 %v407
        %v712 = vunpack.c.l.b16 %v408
        %v713 = vunpack.c.h.b16 %v408
        %v714 = vunpack.c.l.b16 %v409
        %v715 = vunpack.c.h.b16 %v409
        %v716 = vunpack.c.l.b16 %v410
        %v717 = vunpack.c.h.b16 %v410
        %v718 = vunpack.c.l.b16 %v411
        %v719 = vunpack.c.h.b16 %v411
        %v720 = vunpack.c.l.b16 %v412
        %v721 = vunpack.c.h.b16 %v412
        %v722 = vpack.c.b16 %v536, %v530
        %v723 = vpack.c.b16 %v537, %v531
        %v724 = vpack.c.b16 %v538, %v532
        %v725 = vpack.c.b16 %v539, %v533
        %v726 = vpack.c.b16 %v540, %v534
        %v727 = vpack.c.b16 %v541, %v535
        %v728 = vpack.c.b16 %v548, %v542
        %v729 = vpack.c.b16 %v549, %v543
        %v730 = vpack.c.b16 %v550, %v544
        %v731 = vpack.c.b16 %v551, %v545
        %v732 = vpack.c.b16 %v552, %v546
        %v733 = vpack.c.b16 %v553, %v547
        %v734 = vpack.c.b16 %v560, %v554
        %v735 = vpack.c.b16 %v561, %v555
        %v736 = vpack.c.b16 %v562, %v556
        %v737 = vpack.c.b16 %v563, %v557
        %v738 = vpack.c.b16 %v564, %v558
        %v739 = vpack.c.b16 %v565, %v559
        %v740 = vpack.c.b16 %v572, %v566
        %v741 = vpack.c.b16 %v573, %v567
        %v742 = vpack.c.b16 %v574, %v568
        %v743 = vpack.c.b16 %v575, %v569
        %v744 = vpack.c.b16 %v576, %v570
        %v745 = vpack.c.b16 %v577, %v571
        %v746 = vpack.c.b16 %v584, %v578
        %v747 = vpack.c.b16 %v585, %v579
        %v748 = vpack.c.b16 %v586, %v580
        %v749 = vpack.c.b16 %v587, %v581
        %v750 = vpack.c.b16 %v588, %v582
        %v751 = vpack.c.b16 %v589, %v583
        %v752 = vpack.c.b16 %v596, %v590
        %v753 = vpack.c.b16 %v597, %v591
        %v754 = vpack.c.b16 %v598, %v592
        %v755 = vpack.c.b16 %v599, %v593
        %v756 = vpack.c.b16 %v600, %v594
        %v757 = vpack.c.b16 %v601, %v595
        %v758 = vpack.c.b16 %v608, %v602
        %v759 = vpack.c.b16 %v609, %v603
        %v760 = vpack.c.b16 %v610, %v604
        %v761 = vpack.c.b16 %v611, %v605
        %v762 = vpack.c.b16 %v612, %v606
        %v763 = vpack.c.b16 %v613, %v607
        %v764 = vpack.c.b16 %v620, %v614
        %v765 = vpack.c.b16 %v621, %v615
        %v766 = vpack.c.b16 %v622, %v616
        %v767 = vpack.c.b16 %v623, %v617
        %v768 = vpack.c.b16 %v624, %v618
        %v769 = vpack.c.b16 %v625, %v619
        %v770 = vpack.c.b16 %v632, %v626
        %v771 = vpack.c.b16 %v633, %v627
        %v772 = vpack.c.b16 %v634, %v628
        %v773 = vpack.c.b16 %v635, %v629
        %v774 = vpack.c.b16 %v636, %v630
        %v775 = vpack.c.b16 %v637, %v631
        %v776 = vpack.c.b16 %v644, %v638
        %v777 = vpack.c.b16 %v645, %v639
        %v778 = vpack.c.b16 %v646, %v640
        %v779 = vpack.c.b16 %v647, %v641
        %v780 = vpack.c.b16 %v648, %v642
        %v781 = vpack.c.b16 %v649, %v643
        %v782 = vpack.c.b16 %v656, %v650
        %v783 = vpack.c.b16 %v657, %v651
        %v784 = vpack.c.b16 %v658, %v652
        %v785 = vpack.c.b16 %v659, %v653
        %v786 = vpack.c.b16 %v660, %v654
        %v787 = vpack.c.b16 %v661, %v655
        %v788 = vpack.c.b16 %v668, %v662
        %v789 = vpack.c.b16 %v669, %v663
        %v790 = vpack.c.b16 %v670, %v664
        %v791 = vpack.c.b16 %v671, %v665
        %v792 = vpack.c.b16 %v672, %v666
        %v793 = vpack.c.b16 %v673, %v667
        %v794 = vpack.c.b16 %v680, %v674
        %v795 = vpack.c.b16 %v681, %v675
        %v796 = vpack.c.b16 %v682, %v676
        %v797 = vpack.c.b16 %v683, %v677
        %v798 = vpack.c.b16 %v684, %v678
        %v799 = vpack.c.b16 %v685, %v679
        %v800 = vpack.c.b16 %v692, %v686
        %v801 = vpack.c.b16 %v693, %v687
        %v802 = vpack.c.b16 %v694, %v688
        %v803 = vpack.c.b16 %v695, %v689
        %v804 = vpack.c.b16 %v696, %v690
        %v805 = vpack.c.b16 %v697, %v691
        %v806 = vpack.c.b16 %v704, %v698
        %v807 = vpack.c.b16 %v705, %v699
        %v808 = vpack.c.b16 %v706, %v700
        %v809 = vpack.c.b16 %v707, %v701
        %v810 = vpack.c.b16 %v708, %v702
        %v811 = vpack.c.b16 %v709, %v703
        %v812 = vpack.c.b16 %v716, %v710
        %v813 = vpack.c.b16 %v717, %v711
        %v814 = vpack.c.b16 %v718, %v712
        %v815 = vpack.c.b16 %v719, %v713
        %v816 = vpack.c.b16 %v720, %v714
        %v817 = vpack.c.b16 %v721, %v715
        %914 = vmatpush.bf16.msra.mxu0 %v764
        %915 = vmatpush.bf16.msra.mxu0 %v758
        %916 = vmatpush.bf16.msra.mxu0 %v752
        %917 = vmatpush.bf16.msra.mxu0 %v746
        %918 = vmatpush.bf16.msra.mxu0 %v740
        %919 = vmatpush.bf16.msra.mxu0 %v734
        %920 = vmatpush.bf16.msra.mxu0 %v728
        %921 = vmatpush.bf16.msra.mxu0 %v722
        %922 = vmatmul.bf16.gmra.mxu0 %v430
        %v923 = vpop.f32.mrf.mxu0
        %v924 = vadd.f32 %v415, %v923
        %v925 = vpop.f32.mrf.mxu0
        %926 = vdwg.mxu0
        %927 = vmatpush.bf16.msra.mxu0 %v812
        %928 = vmatpush.bf16.msra.mxu0 %v806
        %929 = vmatpush.bf16.msra.mxu0 %v800
        %930 = vmatpush.bf16.msra.mxu0 %v794
        %931 = vmatpush.bf16.msra.mxu0 %v788
        %932 = vmatpush.bf16.msra.mxu0 %v782
        %933 = vmatpush.bf16.msra.mxu0 %v776
        %934 = vmatpush.bf16.msra.mxu0 %v770
        %935 = vmatmul.bf16.gmra.mxu0 %v431
        %v936 = vpop.f32.mrf.mxu0
        %v937 = vadd.f32 %v924, %v936
        %v938 = vpop.f32.mrf.mxu0
        %939 = vdwg.mxu0
        %940 = vmatpush.bf16.msra.mxu0 %v765
        %941 = vmatpush.bf16.msra.mxu0 %v759
        %942 = vmatpush.bf16.msra.mxu0 %v753
        %943 = vmatpush.bf16.msra.mxu0 %v747
        %944 = vmatpush.bf16.msra.mxu0 %v741
        %945 = vmatpush.bf16.msra.mxu0 %v735
        %946 = vmatpush.bf16.msra.mxu0 %v729
        %947 = vmatpush.bf16.msra.mxu0 %v723
        %948 = vmatmul.bf16.gmra.mxu0 %v430
        %v949 = vpop.f32.mrf.mxu0
        %v950 = vadd.f32 %v416, %v949
        %v951 = vpop.f32.mrf.mxu0
        %952 = vdwg.mxu0
        %953 = vmatpush.bf16.msra.mxu0 %v813
        %954 = vmatpush.bf16.msra.mxu0 %v807
        %955 = vmatpush.bf16.msra.mxu0 %v801
        %956 = vmatpush.bf16.msra.mxu0 %v795
        %957 = vmatpush.bf16.msra.mxu0 %v789
        %958 = vmatpush.bf16.msra.mxu0 %v783
        %959 = vmatpush.bf16.msra.mxu0 %v777
        %960 = vmatpush.bf16.msra.mxu0 %v771
        %961 = vmatmul.bf16.gmra.mxu0 %v431
        %v962 = vpop.f32.mrf.mxu0
        %v963 = vadd.f32 %v950, %v962
        %v964 = vpop.f32.mrf.mxu0
        %965 = vdwg.mxu0
        %966 = vmatpush.bf16.msra.mxu0 %v766
        %967 = vmatpush.bf16.msra.mxu0 %v760
        %968 = vmatpush.bf16.msra.mxu0 %v754
        %969 = vmatpush.bf16.msra.mxu0 %v748
        %970 = vmatpush.bf16.msra.mxu0 %v742
        %971 = vmatpush.bf16.msra.mxu0 %v736
        %972 = vmatpush.bf16.msra.mxu0 %v730
        %973 = vmatpush.bf16.msra.mxu0 %v724
        %974 = vmatmul.bf16.gmra.mxu0 %v430
        %v975 = vpop.f32.mrf.mxu0
        %v976 = vadd.f32 %v417, %v975
        %v977 = vpop.f32.mrf.mxu0
        %978 = vdwg.mxu0
        %979 = vmatpush.bf16.msra.mxu0 %v814
        %980 = vmatpush.bf16.msra.mxu0 %v808
        %981 = vmatpush.bf16.msra.mxu0 %v802
        %982 = vmatpush.bf16.msra.mxu0 %v796
        %983 = vmatpush.bf16.msra.mxu0 %v790
        %984 = vmatpush.bf16.msra.mxu0 %v784
        %985 = vmatpush.bf16.msra.mxu0 %v778
        %986 = vmatpush.bf16.msra.mxu0 %v772
        %987 = vmatmul.bf16.gmra.mxu0 %v431
        %v988 = vpop.f32.mrf.mxu0
        %v989 = vadd.f32 %v976, %v988
        %v990 = vpop.f32.mrf.mxu0
        %991 = vdwg.mxu0
        %992 = vmatpush.bf16.msra.mxu0 %v767
        %993 = vmatpush.bf16.msra.mxu0 %v761
        %994 = vmatpush.bf16.msra.mxu0 %v755
        %995 = vmatpush.bf16.msra.mxu0 %v749
        %996 = vmatpush.bf16.msra.mxu0 %v743
        %997 = vmatpush.bf16.msra.mxu0 %v737
        %998 = vmatpush.bf16.msra.mxu0 %v731
        %999 = vmatpush.bf16.msra.mxu0 %v725
        %1000 = vmatmul.bf16.gmra.mxu0 %v430
        %v1001 = vpop.f32.mrf.mxu0
        %v1002 = vadd.f32 %v418, %v1001
        %v1003 = vpop.f32.mrf.mxu0
        %1004 = vdwg.mxu0
        %1005 = vmatpush.bf16.msra.mxu0 %v815
        %1006 = vmatpush.bf16.msra.mxu0 %v809
        %1007 = vmatpush.bf16.msra.mxu0 %v803
        %1008 = vmatpush.bf16.msra.mxu0 %v797
        %1009 = vmatpush.bf16.msra.mxu0 %v791
        %1010 = vmatpush.bf16.msra.mxu0 %v785
        %1011 = vmatpush.bf16.msra.mxu0 %v779
        %1012 = vmatpush.bf16.msra.mxu0 %v773
        %1013 = vmatmul.bf16.gmra.mxu0 %v431
        %v1014 = vpop.f32.mrf.mxu0
        %v1015 = vadd.f32 %v1002, %v1014
        %v1016 = vpop.f32.mrf.mxu0
        %1017 = vdwg.mxu0
        %1018 = vmatpush.bf16.msra.mxu0 %v768
        %1019 = vmatpush.bf16.msra.mxu0 %v762
        %1020 = vmatpush.bf16.msra.mxu0 %v756
        %1021 = vmatpush.bf16.msra.mxu0 %v750
        %1022 = vmatpush.bf16.msra.mxu0 %v744
        %1023 = vmatpush.bf16.msra.mxu0 %v738
        %1024 = vmatpush.bf16.msra.mxu0 %v732
        %1025 = vmatpush.bf16.msra.mxu0 %v726
        %1026 = vmatmul.bf16.gmra.mxu0 %v430
        %v1027 = vpop.f32.mrf.mxu0
        %v1028 = vadd.f32 %v419, %v1027
        %v1029 = vpop.f32.mrf.mxu0
        %1030 = vdwg.mxu0
        %1031 = vmatpush.bf16.msra.mxu0 %v816
        %1032 = vmatpush.bf16.msra.mxu0 %v810
        %1033 = vmatpush.bf16.msra.mxu0 %v804
        %1034 = vmatpush.bf16.msra.mxu0 %v798
        %1035 = vmatpush.bf16.msra.mxu0 %v792
        %1036 = vmatpush.bf16.msra.mxu0 %v786
        %1037 = vmatpush.bf16.msra.mxu0 %v780
        %1038 = vmatpush.bf16.msra.mxu0 %v774
        %1039 = vmatmul.bf16.gmra.mxu0 %v431
        %v1040 = vpop.f32.mrf.mxu0
        %v1041 = vadd.f32 %v1028, %v1040
        %v1042 = vpop.f32.mrf.mxu0
        %1043 = vdwg.mxu0
        %1044 = vmatpush.bf16.msra.mxu0 %v769
        %1045 = vmatpush.bf16.msra.mxu0 %v763
        %1046 = vmatpush.bf16.msra.mxu0 %v757
        %1047 = vmatpush.bf16.msra.mxu0 %v751
        %1048 = vmatpush.bf16.msra.mxu0 %v745
        %1049 = vmatpush.bf16.msra.mxu0 %v739
        %1050 = vmatpush.bf16.msra.mxu0 %v733
        %1051 = vmatpush.bf16.msra.mxu0 %v727
        %1052 = vmatmul.bf16.gmra.mxu0 %v430
        %v1053 = vpop.f32.mrf.mxu0
        %v1054 = vadd.f32 %v420, %v1053
        %v1055 = vpop.f32.mrf.mxu0
        %1056 = vdwg.mxu0
        %1057 = vmatpush.bf16.msra.mxu0 %v817
        %1058 = vmatpush.bf16.msra.mxu0 %v811
        %1059 = vmatpush.bf16.msra.mxu0 %v805
        %1060 = vmatpush.bf16.msra.mxu0 %v799
        %1061 = vmatpush.bf16.msra.mxu0 %v793
        %1062 = vmatpush.bf16.msra.mxu0 %v787
        %1063 = vmatpush.bf16.msra.mxu0 %v781
        %1064 = vmatpush.bf16.msra.mxu0 %v775
        %1065 = vmatmul.bf16.gmra.mxu0 %v431
        %v1066 = vpop.f32.mrf.mxu0
        %v1067 = vadd.f32 %v1054, %v1066
        %v1068 = vpop.f32.mrf.mxu0
        %1069 = vdwg.mxu0
        %v1070 = vpack.c.bf16 %v937, %v937
        %v1071 = vpack.c.bf16 %v989, %v989
        %v1072 = vpack.c.bf16 %v1041, %v1041
        %vm1073 = vcmask 523264
        %v1075 = vsel %vm1073, %v1070, 0
        %v1078 = vsel %vm1073, %v1071, 0
        %1080 = vmatpush.bf16.xpose.msra.mxu0 0
        %1081 = vmatpush.bf16.xpose.msra.mxu0 0
        %1082 = vmatpush.bf16.xpose.msra.mxu0 0
        %1083 = vmatpush.bf16.xpose.msra.mxu0 0
        %1084 = vmatpush.bf16.xpose.msra.mxu0 0
        %1085 = vmatpush.bf16.xpose.msra.mxu0 0
        %1086 = vmatpush.bf16.xpose.msra.mxu0 0
        %1087 = vmatpush.bf16.xpose.msra.mxu0 %v1078
        %1088 = vmatmul.bf16.gmra.mxu0 %v1075
        %v1089 = vpop.f32.mrf.mxu0
        %v1090 = vadd.f32 0.0, %v1089
        %v1091 = vpop.f32.mrf.mxu0
        %1092 = vdwg.mxu0
        %v1093 = vmul.f32 %v1090, 0.125
        %vm1094 = vcmask 64512
        %v1095 = vsel %vm1094, %v1093, -inf
        %1096 = vmax.xlane.f32.xlu0 %v1095
        %v1097 = vpop.xlane.xlu0 %1096
        %v1098 = vsub.f32 %v1093, %v1097
        %v1099 = vmul.f32 %v1098, 1.442695
        %v1100 = vpow.pop %v1099
        %v1101 = vsel %vm1094, %v1100, 0.0
        %1102 = vadd.xlane.f32.xlu0 %v1101
        %v1103 = vpop.xlane.xlu0 %1102
        %v1104 = vrcp.pop %v1103
        %v1105 = vmul.f32 %v1103, %v1104
        %v1106 = vsub.f32 1.0, %v1105
        %v1107 = vmul.f32 %v1104, %v1106
        %v1108 = vadd.f32 %v1104, %v1107
        %vm1109 = vweird.f32 %v1103
        %vm1110 = vweird.f32 %v1104
        %vm1111 = vmor %vm1109, %vm1110
        %v1112 = vsel %vm1111, %v1104, %v1108
        %v1113 = vand.u32 2147483647, %v1103
        %vm1114 = vcmp.eq.f32.partialorder %v1113, 8.507059e+37
        %v1115 = vand.u32 %v1103, 2147483648
        %v1116 = vor.u32 1.1754944e-38, %v1115
        %v1117 = vsel %vm1114, %v1116, %v1112
        %v1118 = vmul.f32 %v1100, %v1117
        %v1119 = vpack.c.bf16 %v1118, %v1118
        %v1121 = vsel %vm1094, %v1119, 0
        %vm1123 = vcmask 1043456
        %v1125 = vsel %vm1123, %v1072, 0
        %1127 = vmatpush.bf16.msra.mxu0 0
        %1128 = vmatpush.bf16.msra.mxu0 0
        %1129 = vmatpush.bf16.msra.mxu0 0
        %1130 = vmatpush.bf16.msra.mxu0 0
        %1131 = vmatpush.bf16.msra.mxu0 0
        %1132 = vmatpush.bf16.msra.mxu0 0
        %1133 = vmatpush.bf16.msra.mxu0 0
        %1134 = vmatpush.bf16.msra.mxu0 %v1125
        %1135 = vmatmul.bf16.gmra.mxu0 %v1121
        %v1136 = vpop.f32.mrf.mxu0
        %v1137 = vadd.f32 0.0, %v1136
        %v1138 = vpop.f32.mrf.mxu0
        %1139 = vdwg.mxu0
        %1141 = vrot.lane.b32.xlu0 %v1070, 64
        %v1142 = vpop.permute.xlu0 %1141
        %1144 = vrot.lane.b32.xlu0 %v1071, 64
        %v1145 = vpop.permute.xlu0 %1144
        %v1147 = vsel %vm1073, %v1142, 0
        %v1150 = vsel %vm1073, %v1145, 0
        %1152 = vmatpush.bf16.xpose.msra.mxu0 0
        %1153 = vmatpush.bf16.xpose.msra.mxu0 0
        %1154 = vmatpush.bf16.xpose.msra.mxu0 0
        %1155 = vmatpush.bf16.xpose.msra.mxu0 0
        %1156 = vmatpush.bf16.xpose.msra.mxu0 0
        %1157 = vmatpush.bf16.xpose.msra.mxu0 0
        %1158 = vmatpush.bf16.xpose.msra.mxu0 0
        %1159 = vmatpush.bf16.xpose.msra.mxu0 %v1150
        %1160 = vmatmul.bf16.gmra.mxu0 %v1147
        %v1161 = vpop.f32.mrf.mxu0
        %v1162 = vadd.f32 0.0, %v1161
        %v1163 = vpop.f32.mrf.mxu0
        %1164 = vdwg.mxu0
        %v1165 = vmul.f32 %v1162, 0.125
        %v1166 = vsel %vm1094, %v1165, -inf
        %1167 = vmax.xlane.f32.xlu0 %v1166
        %v1168 = vpop.xlane.xlu0 %1167
        %v1169 = vsub.f32 %v1165, %v1168
        %v1170 = vmul.f32 %v1169, 1.442695
        %v1171 = vpow.pop %v1170
        %v1172 = vsel %vm1094, %v1171, 0.0
        %1173 = vadd.xlane.f32.xlu0 %v1172
        %v1174 = vpop.xlane.xlu0 %1173
        %v1175 = vrcp.pop %v1174
        %v1176 = vmul.f32 %v1174, %v1175
        %v1177 = vsub.f32 1.0, %v1176
        %v1178 = vmul.f32 %v1175, %v1177
        %v1179 = vadd.f32 %v1175, %v1178
        %vm1180 = vweird.f32 %v1174
        %vm1181 = vweird.f32 %v1175
        %vm1182 = vmor %vm1180, %vm1181
        %v1183 = vsel %vm1182, %v1175, %v1179
        %v1184 = vand.u32 2147483647, %v1174
        %vm1185 = vcmp.eq.f32.partialorder %v1184, 8.507059e+37
        %v1186 = vand.u32 %v1174, 2147483648
        %v1187 = vor.u32 1.1754944e-38, %v1186
        %v1188 = vsel %vm1185, %v1187, %v1183
        %v1189 = vmul.f32 %v1171, %v1188
        %v1190 = vpack.c.bf16 %v1189, %v1189
        %1192 = vrot.lane.b32.xlu0 %v1072, 64
        %v1193 = vpop.permute.xlu0 %1192
        %v1195 = vsel %vm1094, %v1190, 0
        %v1198 = vsel %vm1123, %v1193, 0
        %1200 = vmatpush.bf16.msra.mxu0 0
        %1201 = vmatpush.bf16.msra.mxu0 0
        %1202 = vmatpush.bf16.msra.mxu0 0
        %1203 = vmatpush.bf16.msra.mxu0 0
        %1204 = vmatpush.bf16.msra.mxu0 0
        %1205 = vmatpush.bf16.msra.mxu0 0
        %1206 = vmatpush.bf16.msra.mxu0 0
        %1207 = vmatpush.bf16.msra.mxu0 %v1198
        %1208 = vmatmul.bf16.gmra.mxu0 %v1195
        %v1209 = vpop.f32.mrf.mxu0
        %v1210 = vadd.f32 0.0, %v1209
        %v1211 = vpop.f32.mrf.mxu0
        %1212 = vdwg.mxu0
        %v1213 = vpack.c.bf16 %v963, %v963
        %v1214 = vpack.c.bf16 %v1015, %v1015
        %v1215 = vpack.c.bf16 %v1067, %v1067
        %v1217 = vsel %vm1073, %v1213, 0
        %v1220 = vsel %vm1073, %v1214, 0
        %1222 = vmatpush.bf16.xpose.msra.mxu0 0
        %1223 = vmatpush.bf16.xpose.msra.mxu0 0
        %1224 = vmatpush.bf16.xpose.msra.mxu0 0
        %1225 = vmatpush.bf16.xpose.msra.mxu0 0
        %1226 = vmatpush.bf16.xpose.msra.mxu0 0
        %1227 = vmatpush.bf16.xpose.msra.mxu0 0
        %1228 = vmatpush.bf16.xpose.msra.mxu0 0
        %1229 = vmatpush.bf16.xpose.msra.mxu0 %v1220
        %1230 = vmatmul.bf16.gmra.mxu0 %v1217
        %v1231 = vpop.f32.mrf.mxu0
        %v1232 = vadd.f32 0.0, %v1231
        %v1233 = vpop.f32.mrf.mxu0
        %1234 = vdwg.mxu0
        %v1235 = vmul.f32 %v1232, 0.125
        %v1236 = vsel %vm1094, %v1235, -inf
        %1237 = vmax.xlane.f32.xlu0 %v1236
        %v1238 = vpop.xlane.xlu0 %1237
        %v1239 = vsub.f32 %v1235, %v1238
        %v1240 = vmul.f32 %v1239, 1.442695
        %v1241 = vpow.pop %v1240
        %v1242 = vsel %vm1094, %v1241, 0.0
        %1243 = vadd.xlane.f32.xlu0 %v1242
        %v1244 = vpop.xlane.xlu0 %1243
        %v1245 = vrcp.pop %v1244
        %v1246 = vmul.f32 %v1244, %v1245
        %v1247 = vsub.f32 1.0, %v1246
        %v1248 = vmul.f32 %v1245, %v1247
        %v1249 = vadd.f32 %v1245, %v1248
        %vm1250 = vweird.f32 %v1244
        %vm1251 = vweird.f32 %v1245
        %vm1252 = vmor %vm1250, %vm1251
        %v1253 = vsel %vm1252, %v1245, %v1249
        %v1254 = vand.u32 2147483647, %v1244
        %vm1255 = vcmp.eq.f32.partialorder %v1254, 8.507059e+37
        %v1256 = vand.u32 %v1244, 2147483648
        %v1257 = vor.u32 1.1754944e-38, %v1256
        %v1258 = vsel %vm1255, %v1257, %v1253
        %v1259 = vmul.f32 %v1241, %v1258
        %v1260 = vpack.c.bf16 %v1259, %v1259
        %v1262 = vsel %vm1094, %v1260, 0
        %v1265 = vsel %vm1123, %v1215, 0
        %1267 = vmatpush.bf16.msra.mxu0 0
        %1268 = vmatpush.bf16.msra.mxu0 0
        %1269 = vmatpush.bf16.msra.mxu0 0
        %1270 = vmatpush.bf16.msra.mxu0 0
        %1271 = vmatpush.bf16.msra.mxu0 0
        %1272 = vmatpush.bf16.msra.mxu0 0
        %1273 = vmatpush.bf16.msra.mxu0 0
        %1274 = vmatpush.bf16.msra.mxu0 %v1265
        %1275 = vmatmul.bf16.gmra.mxu0 %v1262
        %v1276 = vpop.f32.mrf.mxu0
        %v1277 = vadd.f32 0.0, %v1276
        %v1278 = vpop.f32.mrf.mxu0
        %1279 = vdwg.mxu0
        %1281 = vrot.lane.b32.xlu0 %v1213, 64
        %v1282 = vpop.permute.xlu0 %1281
        %1284 = vrot.lane.b32.xlu0 %v1214, 64
        %v1285 = vpop.permute.xlu0 %1284
        %v1287 = vsel %vm1073, %v1282, 0
        %v1290 = vsel %vm1073, %v1285, 0
        %1292 = vmatpush.bf16.xpose.msra.mxu0 0
        %1293 = vmatpush.bf16.xpose.msra.mxu0 0
        %1294 = vmatpush.bf16.xpose.msra.mxu0 0
        %1295 = vmatpush.bf16.xpose.msra.mxu0 0
        %1296 = vmatpush.bf16.xpose.msra.mxu0 0
        %1297 = vmatpush.bf16.xpose.msra.mxu0 0
        %1298 = vmatpush.bf16.xpose.msra.mxu0 0
        %1299 = vmatpush.bf16.xpose.msra.mxu0 %v1290
        %1300 = vmatmul.bf16.gmra.mxu0 %v1287
        %v1301 = vpop.f32.mrf.mxu0
        %v1302 = vadd.f32 0.0, %v1301
        %v1303 = vpop.f32.mrf.mxu0
        %1304 = vdwg.mxu0
        %v1305 = vmul.f32 %v1302, 0.125
        %v1306 = vsel %vm1094, %v1305, -inf
        %1307 = vmax.xlane.f32.xlu0 %v1306
        %v1308 = vpop.xlane.xlu0 %1307
        %v1309 = vsub.f32 %v1305, %v1308
        %v1310 = vmul.f32 %v1309, 1.442695
        %v1311 = vpow.pop %v1310
        %v1312 = vsel %vm1094, %v1311, 0.0
        %1313 = vadd.xlane.f32.xlu0 %v1312
        %v1314 = vpop.xlane.xlu0 %1313
        %v1315 = vrcp.pop %v1314
        %v1316 = vmul.f32 %v1314, %v1315
        %v1317 = vsub.f32 1.0, %v1316
        %v1318 = vmul.f32 %v1315, %v1317
        %v1319 = vadd.f32 %v1315, %v1318
        %vm1320 = vweird.f32 %v1314
        %vm1321 = vweird.f32 %v1315
        %vm1322 = vmor %vm1320, %vm1321
        %v1323 = vsel %vm1322, %v1315, %v1319
        %v1324 = vand.u32 2147483647, %v1314
        %vm1325 = vcmp.eq.f32.partialorder %v1324, 8.507059e+37
        %v1326 = vand.u32 %v1314, 2147483648
        %v1327 = vor.u32 1.1754944e-38, %v1326
        %v1328 = vsel %vm1325, %v1327, %v1323
        %v1329 = vmul.f32 %v1311, %v1328
        %v1330 = vpack.c.bf16 %v1329, %v1329
        %1332 = vrot.lane.b32.xlu0 %v1215, 64
        %v1333 = vpop.permute.xlu0 %1332
        %v1335 = vsel %vm1094, %v1330, 0
        %v1338 = vsel %vm1123, %v1333, 0
        %1340 = vmatpush.bf16.msra.mxu0 0
        %1341 = vmatpush.bf16.msra.mxu0 0
        %1342 = vmatpush.bf16.msra.mxu0 0
        %1343 = vmatpush.bf16.msra.mxu0 0
        %1344 = vmatpush.bf16.msra.mxu0 0
        %1345 = vmatpush.bf16.msra.mxu0 0
        %1346 = vmatpush.bf16.msra.mxu0 0
        %1347 = vmatpush.bf16.msra.mxu0 %v1338
        %1348 = vmatmul.bf16.gmra.mxu0 %v1335
        %v1349 = vpop.f32.mrf.mxu0
        %v1350 = vadd.f32 0.0, %v1349
        %v1351 = vpop.f32.mrf.mxu0
        %1352 = vdwg.mxu0
        %1354 = vrot.lane.b32.xlu0 %v1210, 64
        %v1355 = vpop.permute.xlu0 %1354
        %1358 = vrot.lane.b32.xlu0 %v1350, 64
        %v1359 = vpop.permute.xlu0 %1358
        %v1361 = vsel %vm1073, %v1137, %v1355
        %v1362 = vsel %vm1073, %v1277, %v1359
        %v1363 = vpack.c.bf16 %v1361, %v1361
        %v1364 = vpack.c.bf16 %v1362, %v1362
        %v1365 = vld [vmem:[#allocation4] sm:$0xff]
        %v1366 = vld [vmem:[#allocation4 + $0x8] sm:$0xff]
        %v1367 = vld [vmem:[#allocation4 + $0x10] sm:$0xff]
        %v1368 = vld [vmem:[#allocation4 + $0x18] sm:$0xff]
        %v1369 = vld [vmem:[#allocation4 + $0x20] sm:$0xff]
        %v1370 = vld [vmem:[#allocation4 + $0x28] sm:$0xff]
        %v1371 = vld [vmem:[#allocation4 + $0x30] sm:$0xff]
        %v1372 = vld [vmem:[#allocation4 + $0x38] sm:$0xff]
        %v1373 = vld [vmem:[#allocation4 + $0x40] sm:$0xff]
        %v1374 = vld [vmem:[#allocation4 + $0x48] sm:$0xff]
        %v1375 = vld [vmem:[#allocation4 + $0x50] sm:$0xff]
        %v1376 = vld [vmem:[#allocation4 + $0x58] sm:$0xff]
        %v1377 = vld [vmem:[#allocation4 + $0x60] sm:$0xff]
        %v1378 = vld [vmem:[#allocation4 + $0x68] sm:$0xff]
        %v1379 = vld [vmem:[#allocation4 + $0x70] sm:$0xff]
        %v1380 = vld [vmem:[#allocation4 + $0x78] sm:$0xff]
        %v1381 = vld [vmem:[#allocation4 + $0x80] sm:$0xff]
        %v1382 = vld [vmem:[#allocation4 + $0x88] sm:$0xff]
        %v1383 = vld [vmem:[#allocation4 + $0x90] sm:$0xff]
        %v1384 = vld [vmem:[#allocation4 + $0x98] sm:$0xff]
        %v1385 = vld [vmem:[#allocation4 + $0xa0] sm:$0xff]
        %v1386 = vld [vmem:[#allocation4 + $0xa8] sm:$0xff]
        %v1387 = vld [vmem:[#allocation4 + $0xb0] sm:$0xff]
        %v1388 = vld [vmem:[#allocation4 + $0xb8] sm:$0xff]
        %v1389 = vld [vmem:[#allocation4 + $0xc0] sm:$0xff]
        %v1390 = vld [vmem:[#allocation4 + $0xc8] sm:$0xff]
        %v1391 = vld [vmem:[#allocation4 + $0xd0] sm:$0xff]
        %v1392 = vld [vmem:[#allocation4 + $0xd8] sm:$0xff]
        %v1393 = vld [vmem:[#allocation4 + $0xe0] sm:$0xff]
        %v1394 = vld [vmem:[#allocation4 + $0xe8] sm:$0xff]
        %v1395 = vld [vmem:[#allocation4 + $0xf0] sm:$0xff]
        %v1396 = vld [vmem:[#allocation4 + $0xf8] sm:$0xff]
        %v1397 = vld [vmem:[%s4] sm:$0x3]
        %v1399 = vperm.slane %v1397, 0
        %v1400 = vperm.slane %v1397, 1
        %v1435 = vunpack.c.l.b16 %v1365
        %v1436 = vunpack.c.h.b16 %v1365
        %v1437 = vunpack.c.l.b16 %v1366
        %v1438 = vunpack.c.h.b16 %v1366
        %v1439 = vunpack.c.l.b16 %v1367
        %v1440 = vunpack.c.h.b16 %v1367
        %v1441 = vunpack.c.l.b16 %v1368
        %v1442 = vunpack.c.h.b16 %v1368
        %v1443 = vunpack.c.l.b16 %v1369
        %v1444 = vunpack.c.h.b16 %v1369
        %v1445 = vunpack.c.l.b16 %v1370
        %v1446 = vunpack.c.h.b16 %v1370
        %v1447 = vunpack.c.l.b16 %v1371
        %v1448 = vunpack.c.h.b16 %v1371
        %v1449 = vunpack.c.l.b16 %v1372
        %v1450 = vunpack.c.h.b16 %v1372
        %v1451 = vunpack.c.l.b16 %v1373
        %v1452 = vunpack.c.h.b16 %v1373
        %v1453 = vunpack.c.l.b16 %v1374
        %v1454 = vunpack.c.h.b16 %v1374
        %v1455 = vunpack.c.l.b16 %v1375
        %v1456 = vunpack.c.h.b16 %v1375
        %v1457 = vunpack.c.l.b16 %v1376
        %v1458 = vunpack.c.h.b16 %v1376
        %v1459 = vunpack.c.l.b16 %v1377
        %v1460 = vunpack.c.h.b16 %v1377
        %v1461 = vunpack.c.l.b16 %v1378
        %v1462 = vunpack.c.h.b16 %v1378
        %v1463 = vunpack.c.l.b16 %v1379
        %v1464 = vunpack.c.h.b16 %v1379
        %v1465 = vunpack.c.l.b16 %v1380
        %v1466 = vunpack.c.h.b16 %v1380
        %v1467 = vunpack.c.l.b16 %v1381
        %v1468 = vunpack.c.h.b16 %v1381
        %v1469 = vunpack.c.l.b16 %v1382
        %v1470 = vunpack.c.h.b16 %v1382
        %v1471 = vunpack.c.l.b16 %v1383
        %v1472 = vunpack.c.h.b16 %v1383
        %v1473 = vunpack.c.l.b16 %v1384
        %v1474 = vunpack.c.h.b16 %v1384
        %v1475 = vunpack.c.l.b16 %v1385
        %v1476 = vunpack.c.h.b16 %v1385
        %v1477 = vunpack.c.l.b16 %v1386
        %v1478 = vunpack.c.h.b16 %v1386
        %v1479 = vunpack.c.l.b16 %v1387
        %v1480 = vunpack.c.h.b16 %v1387
        %v1481 = vunpack.c.l.b16 %v1388
        %v1482 = vunpack.c.h.b16 %v1388
        %v1483 = vunpack.c.l.b16 %v1389
        %v1484 = vunpack.c.h.b16 %v1389
        %v1485 = vunpack.c.l.b16 %v1390
        %v1486 = vunpack.c.h.b16 %v1390
        %v1487 = vunpack.c.l.b16 %v1391
        %v1488 = vunpack.c.h.b16 %v1391
        %v1489 = vunpack.c.l.b16 %v1392
        %v1490 = vunpack.c.h.b16 %v1392
        %v1491 = vunpack.c.l.b16 %v1393
        %v1492 = vunpack.c.h.b16 %v1393
        %v1493 = vunpack.c.l.b16 %v1394
        %v1494 = vunpack.c.h.b16 %v1394
        %v1495 = vunpack.c.l.b16 %v1395
        %v1496 = vunpack.c.h.b16 %v1395
        %v1497 = vunpack.c.l.b16 %v1396
        %v1498 = vunpack.c.h.b16 %v1396
        %v1499 = vpack.c.b16 %v1437, %v1435
        %v1500 = vpack.c.b16 %v1438, %v1436
        %v1501 = vpack.c.b16 %v1441, %v1439
        %v1502 = vpack.c.b16 %v1442, %v1440
        %v1503 = vpack.c.b16 %v1445, %v1443
        %v1504 = vpack.c.b16 %v1446, %v1444
        %v1505 = vpack.c.b16 %v1449, %v1447
        %v1506 = vpack.c.b16 %v1450, %v1448
        %v1507 = vpack.c.b16 %v1453, %v1451
        %v1508 = vpack.c.b16 %v1454, %v1452
        %v1509 = vpack.c.b16 %v1457, %v1455
        %v1510 = vpack.c.b16 %v1458, %v1456
        %v1511 = vpack.c.b16 %v1461, %v1459
        %v1512 = vpack.c.b16 %v1462, %v1460
        %v1513 = vpack.c.b16 %v1465, %v1463
        %v1514 = vpack.c.b16 %v1466, %v1464
        %v1515 = vpack.c.b16 %v1469, %v1467
        %v1516 = vpack.c.b16 %v1470, %v1468
        %v1517 = vpack.c.b16 %v1473, %v1471
        %v1518 = vpack.c.b16 %v1474, %v1472
        %v1519 = vpack.c.b16 %v1477, %v1475
        %v1520 = vpack.c.b16 %v1478, %v1476
        %v1521 = vpack.c.b16 %v1481, %v1479
        %v1522 = vpack.c.b16 %v1482, %v1480
        %v1523 = vpack.c.b16 %v1485, %v1483
        %v1524 = vpack.c.b16 %v1486, %v1484
        %v1525 = vpack.c.b16 %v1489, %v1487
        %v1526 = vpack.c.b16 %v1490, %v1488
        %v1527 = vpack.c.b16 %v1493, %v1491
        %v1528 = vpack.c.b16 %v1494, %v1492
        %v1529 = vpack.c.b16 %v1497, %v1495
        %v1530 = vpack.c.b16 %v1498, %v1496
        %1563 = vmatpush.bf16.msra.mxu0 %v1513
        %1564 = vmatpush.bf16.msra.mxu0 %v1511
        %1565 = vmatpush.bf16.msra.mxu0 %v1509
        %1566 = vmatpush.bf16.msra.mxu0 %v1507
        %1567 = vmatpush.bf16.msra.mxu0 %v1505
        %1568 = vmatpush.bf16.msra.mxu0 %v1503
        %1569 = vmatpush.bf16.msra.mxu0 %v1501
        %1570 = vmatpush.bf16.msra.mxu0 %v1499
        %1571 = vmatmul.bf16.gmra.mxu0 %v1363
        %v1572 = vpop.f32.mrf.mxu0
        %v1573 = vadd.f32 %v1399, %v1572
        %v1574 = vpop.f32.mrf.mxu0
        %1575 = vdwg.mxu0
        %1576 = vmatpush.bf16.msra.mxu0 %v1529
        %1577 = vmatpush.bf16.msra.mxu0 %v1527
        %1578 = vmatpush.bf16.msra.mxu0 %v1525
        %1579 = vmatpush.bf16.msra.mxu0 %v1523
        %1580 = vmatpush.bf16.msra.mxu0 %v1521
        %1581 = vmatpush.bf16.msra.mxu0 %v1519
        %1582 = vmatpush.bf16.msra.mxu0 %v1517
        %1583 = vmatpush.bf16.msra.mxu0 %v1515
        %1584 = vmatmul.bf16.gmra.mxu0 %v1364
        %v1585 = vpop.f32.mrf.mxu0
        %v1586 = vadd.f32 %v1573, %v1585
        %v1587 = vpop.f32.mrf.mxu0
        %1588 = vdwg.mxu0
        %1589 = vmatpush.bf16.msra.mxu0 %v1514
        %1590 = vmatpush.bf16.msra.mxu0 %v1512
        %1591 = vmatpush.bf16.msra.mxu0 %v1510
        %1592 = vmatpush.bf16.msra.mxu0 %v1508
        %1593 = vmatpush.bf16.msra.mxu0 %v1506
        %1594 = vmatpush.bf16.msra.mxu0 %v1504
        %1595 = vmatpush.bf16.msra.mxu0 %v1502
        %1596 = vmatpush.bf16.msra.mxu0 %v1500
        %1597 = vmatmul.bf16.gmra.mxu0 %v1363
        %v1598 = vpop.f32.mrf.mxu0
        %v1599 = vadd.f32 %v1400, %v1598
        %v1600 = vpop.f32.mrf.mxu0
        %1601 = vdwg.mxu0
        %1602 = vmatpush.bf16.msra.mxu0 %v1530
        %1603 = vmatpush.bf16.msra.mxu0 %v1528
        %1604 = vmatpush.bf16.msra.mxu0 %v1526
        %1605 = vmatpush.bf16.msra.mxu0 %v1524
        %1606 = vmatpush.bf16.msra.mxu0 %v1522
        %1607 = vmatpush.bf16.msra.mxu0 %v1520
        %1608 = vmatpush.bf16.msra.mxu0 %v1518
        %1609 = vmatpush.bf16.msra.mxu0 %v1516
        %1610 = vmatmul.bf16.gmra.mxu0 %v1364
        %v1611 = vpop.f32.mrf.mxu0
        %v1612 = vadd.f32 %v1599, %v1611
        %v1613 = vpop.f32.mrf.mxu0
        %1614 = vdwg.mxu0
        %v1615 = vadd.f32 %v1586, %v315
        %v1616 = vadd.f32 %v1612, %v316
        %v1617 = vld [vmem:[%s5] sm:$0x3]
        %v1618 = vld [vmem:[%s6] sm:$0x3]
        %v1619 = vadd.f32 %v1615, %v1616
        %1620 = vadd.xlane.f32.xlu0 %v1619
        %v1621 = vpop.xlane.xlu0 %1620
        %v1622 = vrcp.pop 256.0
        %v1623 = vmul.f32 256.0, %v1622
        %v1624 = vsub.f32 1.0, %v1623
        %v1625 = vmul.f32 %v1622, %v1624
        %v1626 = vadd.f32 %v1622, %v1625
        %vm1627 = vweird.f32 %v1622
        %v1628 = vsel %vm1627, %v1622, %v1626
        %v1629 = vmul.f32 %v1621, %v1628
        %v1630 = vsub.f32 %v1615, %v1629
        %v1631 = vsub.f32 %v1616, %v1629
        %v1632 = vmul.f32 %v1630, %v1630
        %v1633 = vmul.f32 %v1631, %v1631
        %v1634 = vadd.f32 %v1632, %v1633
        %1635 = vadd.xlane.f32.xlu0 %v1634
        %v1636 = vpop.xlane.xlu0 %1635
        %v1637 = vmul.f32 %v1636, %v1628
        %v1638 = vadd.f32 %v1637, 1e-05
        %v1639 = vrsqrt.pop %v1638
        %v1640 = vmul.f32 %v1639, %v1638
        %v1641 = vmul.f32 %v1640, %v1639
        %v1642 = vmul.f32 0.5, %v1641
        %v1643 = vsub.f32 1.5, %v1642
        %v1644 = vmul.f32 %v1639, %v1643
        %vm1645 = vweird.f32 %v1638
        %vm1646 = vweird.f32 %v1639
        %vm1647 = vmor %vm1645, %vm1646
        %v1648 = vsel %vm1647, %v1639, %v1644
        %v1649 = vmul.f32 %v1630, %v1648
        %v1650 = vmul.f32 %v1631, %v1648
        %v1652 = vperm.slane %v1617, 0
        %v1653 = vperm.slane %v1617, 1
        %v1656 = vmul.f32 %v1649, %v1652
        %v1657 = vmul.f32 %v1650, %v1653
        %v1659 = vperm.slane %v1618, 0
        %v1660 = vperm.slane %v1618, 1
        %v1663 = vadd.f32 %v1656, %v1659
        %v1664 = vadd.f32 %v1657, %v1660
        %v1665 = vpack.c.bf16 %v1664, %v1663
        %1666 = vst [vmem:[%s312] sm:$0xff] %v1665
        %p1667 = scmp.lt.s32.totalorder %s20, 1
        %s1668 = scalar_select %p1667, %s20, 1
        %s1669 = smul.addr %s1668, 2
        %s1670 = smul.addr %s1669, 4
        %s1671 = scalar_lea.vmem %s7, %s1670
        // Predicated region
        $region57: #{text_decoder_forward.10} parent=47 // pred_check
          %p1672 = pneg %p190
        $region58: #{text_decoder_forward.10} parent=47 // pred_check_branch
          %1674 = sbr.rel (%p1672) target = $region60
        $region59: #{text_decoder_forward.10} parent=47 // pred_region
          _
        $region60: #{text_decoder_forward.10} parent=47 // pred_fallthru
          _
      $region48: #{text_decoder_forward.10} parent=5 // pred_fallthru
        _
      %p1675 = scmp.le.s32.totalorder 2, %s15
      // Predicated region
      $region61: #{text_decoder_forward.10} parent=5 // pred_check
        %p1676 = pneg %p1675
      $region62: #{text_decoder_forward.10} parent=5 // pred_check_branch
        %1678 = sbr.rel (%p1676) target = $region64
      $region63: #{text_decoder_forward.10} parent=5 // pred_region
        %s1679 = ssub.s32 %s15, 2
        // Predicated region
        $region65: #{text_decoder_forward.10} parent=63 // pred_check
          %p1680 = pneg %p196
        $region66: #{text_decoder_forward.10} parent=63 // pred_check_branch
          %1682 = sbr.rel (%p1680) target = $region68
        $region67: #{text_decoder_forward.10} parent=63 // pred_region
          %p1683 = scmp.lt.s32.totalorder %s21, 1
          %s1684 = scalar_select %p1683, %s21, 1
          %s1685 = smul.addr %s1684, 2
          %s1686 = smul.addr %s1685, 4
          %s1687 = scalar_lea.vmem %s7, %s1686
        $region68: #{text_decoder_forward.10} parent=63 // pred_fallthru
          _
      $region64: #{text_decoder_forward.10} parent=5 // pred_fallthru
        _
    $region6: #{text_decoder_forward.10} parent=1 // loop_footer
      %s19 = sadd.s32 1, %s15
    $region7: #{text_decoder_forward.10} parent=1 // loop_footer_branch
      %14 = sbr.rel target = $region3
    $region8: #{text_decoder_forward.10} parent=1 // loop_exit
      _
    %1688 = vsyncpa [#allocation3], 1
    %s1689 = scalar_lea.sflag [#allocation3], 1
    %1690 = vsyncpa %s1689, 1
    %1691 = vsyncpa [#allocation5], 1

// kernel: text_decoder_forward.8
$region0: #{text_decoder_forward.8}
  #allocation0 [shape = 'u32[]', space=smem, size = 0x4, offset = 0x4, fixed_abs, tag = 'smem constant byte address 0x4 - core index']
  #allocation1 [shape = 'u32[72,128]{1,0:T(1,128)}', space=vmem, size = 0x9000, scoped, tag = 'internal scratch']
  %s0 = inlined_call_operand.vmem [shape: bf16[2,8,256], index: 0, kind: input, shape index: {}]
  %s1 = inlined_call_operand.vmem [shape: bf16[2,8,256], index: 1, kind: input, shape index: {}]
  %s2 = inlined_call_operand.hbm [shape: bf16[256,256], index: 2, kind: input, shape index: {}]
  %s3 = inlined_call_operand.vmem [shape: f32[1,256], index: 3, kind: input, shape index: {}]
  %s4 = inlined_call_operand.hbm [shape: bf16[256,512], index: 4, kind: input, shape index: {}]
  %s5 = inlined_call_operand.vmem [shape: f32[1,512], index: 5, kind: input, shape index: {}]
  %s6 = inlined_call_operand.hbm [shape: bf16[256,256], index: 6, kind: input, shape index: {}]
  %s7 = inlined_call_operand.vmem [shape: f32[1,256], index: 7, kind: input, shape index: {}]
  %s8 = inlined_call_operand.vmem [shape: f32[1,256], index: 8, kind: input, shape index: {}]
  %s9 = inlined_call_operand.vmem [shape: f32[1,256], index: 9, kind: input, shape index: {}]
  %s10 = inlined_call_operand.vmem [shape: bf16[2,8,256], index: 10, kind: output, shape index: {}]
  %s11 = sld [smem:[#allocation0]]
  $region85: #{text_decoder_forward.8} parent=0
    _
  %s13 = ssub.s32 1, %s11
  %s14 = scalar_select 0, %s13, %s11
  $region1: #{text_decoder_forward.8} parent=0
    #allocation2 [shape = 'u8[131072]{0}', space=vmem, size = 0x20000, scoped, tag = 'input window, operand 2, single buffered']
    #allocation3 [shape = 's32[2]{0}', space=sflag, size = 0x8, scoped, tag = 'scoped memory for text_decoder_forward.8']
    #allocation4 [shape = 'u8[262144]{0}', space=vmem, size = 0x40000, scoped, tag = 'input window, operand 4, single buffered']
    #allocation5 [shape = 's32[1]{0}', space=sflag, size = 0x4, scoped, tag = 'scoped memory for text_decoder_forward.8']
    #allocation6 [shape = 'u8[131072]{0}', space=vmem, size = 0x20000, scoped, tag = 'input window, operand 6, single buffered']
    %15 = vsyncpa [#allocation3], 0
    %16 = vsyncpa [#allocation5], 0
    loop: start=0, step=1, limit=4
    $region2: #{text_decoder_forward.8} parent=1 // loop_pre_header
      _
    $region3: #{text_decoder_forward.8} parent=1 // loop_header
      %s18 = sphi 0, %s22
      %p19 = scmp.ge.s32.totalorder %s18, 4
      %s28 = sphi 0, %s30
      %s31 = sphi 0, %s28
      %s32 = sphi 0, %s31
      %s48 = sphi 0, %s32
      %s54 = sphi 0, %s56
      %s57 = sphi 0, %s54
      %s58 = sphi 0, %s57
      %s74 = sphi 0, %s58
      %s78 = sphi 0, %s78
      %s80 = sphi 0, %s78
      %s81 = sphi 0, %s80
      %s95 = sphi 0, %s81
      %s99 = sphi 0, %s99
      %s101 = sphi 0, %s99
      %s102 = sphi 0, %s101
      %s116 = sphi 0, %s102
      %s120 = sphi 0, %s120
      %s122 = sphi 0, %s120
      %s123 = sphi 0, %s122
      %s137 = sphi 0, %s123
      %s141 = sphi 0, %s141
      %s143 = sphi 0, %s141
      %s144 = sphi 0, %s143
      %s158 = sphi 0, %s144
      %s162 = sphi 0, %s162
      %s164 = sphi 0, %s162
      %s165 = sphi 0, %s164
      %s179 = sphi 0, %s165
      %s183 = sphi 0, %s183
      %s185 = sphi 0, %s183
      %s186 = sphi 0, %s185
      %s200 = sphi 0, %s186
      %s204 = sphi 0, %s204
      %s206 = sphi 0, %s204
      %s207 = sphi 0, %s206
      %s221 = sphi 0, %s207
      %s225 = sphi 0, %s225
      %s227 = sphi 0, %s225
      %s228 = sphi 0, %s227
      %s242 = sphi 0, %s228
      %s248 = sphi 0, %s250
      %s251 = sphi 0, %s248
      %s252 = sphi 0, %s251
      %s268 = sphi 0, %s252
    $region4: #{text_decoder_forward.8} parent=1 // loop_header_branch
      %21 = sbr.rel (%p19) target = $region8
    $region5: #{text_decoder_forward.8} parent=1 // loop_body
      %s23 = ssub.s32 %s18, 1
      %s24 = ssub.s32 %s18, 2
      %s25 = sadd.s32 %s18, 1
      %s26 = ssub.s32 %s18, %s25
      %p27 = scmp.eq.s32.totalorder %s26, 0
      %s29 = sadd.s32 %s28, 1
      %s30 = scalar_select %p27, %s28, %s29
      %p33 = pneg %p27
      %p34 = scmp.eq.s32.totalorder %s18, 1
      %p35 = por %p33, %p34
      %p36 = scmp.ne.s32.totalorder %s28, %s31
      %p37 = scmp.eq.s32.totalorder %s18, 0
      %p38 = por %p36, %p37
      %p39 = scmp.ne.s32.totalorder %s28, %s31
      %p40 = scmp.eq.s32.totalorder %s23, 1
      %p41 = por %p39, %p40
      %p42 = scmp.ne.s32.totalorder %s31, %s32
      %p43 = scmp.eq.s32.totalorder %s23, 0
      %p44 = por %p42, %p43
      %p45 = scmp.ne.s32.totalorder %s31, %s32
      %p46 = scmp.eq.s32.totalorder %s24, 1
      %p47 = por %p45, %p46
      %p49 = scmp.ne.s32.totalorder %s32, %s48
      %p50 = scmp.eq.s32.totalorder %s24, 0
      %p51 = por %p49, %p50
      %s52 = ssub.s32 %s18, %s25
      %p53 = scmp.eq.s32.totalorder %s52, 0
      %s55 = sadd.s32 %s54, 1
      %s56 = scalar_select %p53, %s54, %s55
      %p59 = pneg %p53
      %p60 = scmp.eq.s32.totalorder %s18, 1
      %p61 = por %p59, %p60
      %p62 = scmp.ne.s32.totalorder %s54, %s57
      %p63 = scmp.eq.s32.totalorder %s18, 0
      %p64 = por %p62, %p63
      %p65 = scmp.ne.s32.totalorder %s54, %s57
      %p66 = scmp.eq.s32.totalorder %s23, 1
      %p67 = por %p65, %p66
      %p68 = scmp.ne.s32.totalorder %s57, %s58
      %p69 = scmp.eq.s32.totalorder %s23, 0
      %p70 = por %p68, %p69
      %p71 = scmp.ne.s32.totalorder %s57, %s58
      %p72 = scmp.eq.s32.totalorder %s24, 1
      %p73 = por %p71, %p72
      %p75 = scmp.ne.s32.totalorder %s58, %s74
      %p76 = scmp.eq.s32.totalorder %s24, 0
      %p77 = por %p75, %p76
      %s79 = sadd.s32 %s78, 1
      %p82 = scmp.eq.s32.totalorder %s18, 1
      %p83 = scmp.ne.s32.totalorder %s78, %s80
      %p84 = scmp.eq.s32.totalorder %s18, 0
      %p85 = por %p83, %p84
      %p86 = scmp.ne.s32.totalorder %s78, %s80
      %p87 = scmp.eq.s32.totalorder %s23, 1
      %p88 = por %p86, %p87
      %p89 = scmp.ne.s32.totalorder %s80, %s81
      %p90 = scmp.eq.s32.totalorder %s23, 0
      %p91 = por %p89, %p90
      %p92 = scmp.ne.s32.totalorder %s80, %s81
      %p93 = scmp.eq.s32.totalorder %s24, 1
      %p94 = por %p92, %p93
      %p96 = scmp.ne.s32.totalorder %s81, %s95
      %p97 = scmp.eq.s32.totalorder %s24, 0
      %p98 = por %p96, %p97
      %s100 = sadd.s32 %s99, 1
      %p103 = scmp.eq.s32.totalorder %s18, 1
      %p104 = scmp.ne.s32.totalorder %s99, %s101
      %p105 = scmp.eq.s32.totalorder %s18, 0
      %p106 = por %p104, %p105
      %p107 = scmp.ne.s32.totalorder %s99, %s101
      %p108 = scmp.eq.s32.totalorder %s23, 1
      %p109 = por %p107, %p108
      %p110 = scmp.ne.s32.totalorder %s101, %s102
      %p111 = scmp.eq.s32.totalorder %s23, 0
      %p112 = por %p110, %p111
      %p113 = scmp.ne.s32.totalorder %s101, %s102
      %p114 = scmp.eq.s32.totalorder %s24, 1
      %p115 = por %p113, %p114
      %p117 = scmp.ne.s32.totalorder %s102, %s116
      %p118 = scmp.eq.s32.totalorder %s24, 0
      %p119 = por %p117, %p118
      %s121 = sadd.s32 %s120, 1
      %p124 = scmp.eq.s32.totalorder %s18, 1
      %p125 = scmp.ne.s32.totalorder %s120, %s122
      %p126 = scmp.eq.s32.totalorder %s18, 0
      %p127 = por %p125, %p126
      %p128 = scmp.ne.s32.totalorder %s120, %s122
      %p129 = scmp.eq.s32.totalorder %s23, 1
      %p130 = por %p128, %p129
      %p131 = scmp.ne.s32.totalorder %s122, %s123
      %p132 = scmp.eq.s32.totalorder %s23, 0
      %p133 = por %p131, %p132
      %p134 = scmp.ne.s32.totalorder %s122, %s123
      %p135 = scmp.eq.s32.totalorder %s24, 1
      %p136 = por %p134, %p135
      %p138 = scmp.ne.s32.totalorder %s123, %s137
      %p139 = scmp.eq.s32.totalorder %s24, 0
      %p140 = por %p138, %p139
      %s142 = sadd.s32 %s141, 1
      %p145 = scmp.eq.s32.totalorder %s18, 1
      %p146 = scmp.ne.s32.totalorder %s141, %s143
      %p147 = scmp.eq.s32.totalorder %s18, 0
      %p148 = por %p146, %p147
      %p149 = scmp.ne.s32.totalorder %s141, %s143
      %p150 = scmp.eq.s32.totalorder %s23, 1
      %p151 = por %p149, %p150
      %p152 = scmp.ne.s32.totalorder %s143, %s144
      %p153 = scmp.eq.s32.totalorder %s23, 0
      %p154 = por %p152, %p153
      %p155 = scmp.ne.s32.totalorder %s143, %s144
      %p156 = scmp.eq.s32.totalorder %s24, 1
      %p157 = por %p155, %p156
      %p159 = scmp.ne.s32.totalorder %s144, %s158
      %p160 = scmp.eq.s32.totalorder %s24, 0
      %p161 = por %p159, %p160
      %s163 = sadd.s32 %s162, 1
      %p166 = scmp.eq.s32.totalorder %s18, 1
      %p167 = scmp.ne.s32.totalorder %s162, %s164
      %p168 = scmp.eq.s32.totalorder %s18, 0
      %p169 = por %p167, %p168
      %p170 = scmp.ne.s32.totalorder %s162, %s164
      %p171 = scmp.eq.s32.totalorder %s23, 1
      %p172 = por %p170, %p171
      %p173 = scmp.ne.s32.totalorder %s164, %s165
      %p174 = scmp.eq.s32.totalorder %s23, 0
      %p175 = por %p173, %p174
      %p176 = scmp.ne.s32.totalorder %s164, %s165
      %p177 = scmp.eq.s32.totalorder %s24, 1
      %p178 = por %p176, %p177
      %p180 = scmp.ne.s32.totalorder %s165, %s179
      %p181 = scmp.eq.s32.totalorder %s24, 0
      %p182 = por %p180, %p181
      %s184 = sadd.s32 %s183, 1
      %p187 = scmp.eq.s32.totalorder %s18, 1
      %p188 = scmp.ne.s32.totalorder %s183, %s185
      %p189 = scmp.eq.s32.totalorder %s18, 0
      %p190 = por %p188, %p189
      %p191 = scmp.ne.s32.totalorder %s183, %s185
      %p192 = scmp.eq.s32.totalorder %s23, 1
      %p193 = por %p191, %p192
      %p194 = scmp.ne.s32.totalorder %s185, %s186
      %p195 = scmp.eq.s32.totalorder %s23, 0
      %p196 = por %p194, %p195
      %p197 = scmp.ne.s32.totalorder %s185, %s186
      %p198 = scmp.eq.s32.totalorder %s24, 1
      %p199 = por %p197, %p198
      %p201 = scmp.ne.s32.totalorder %s186, %s200
      %p202 = scmp.eq.s32.totalorder %s24, 0
      %p203 = por %p201, %p202
      %s205 = sadd.s32 %s204, 1
      %p208 = scmp.eq.s32.totalorder %s18, 1
      %p209 = scmp.ne.s32.totalorder %s204, %s206
      %p210 = scmp.eq.s32.totalorder %s18, 0
      %p211 = por %p209, %p210
      %p212 = scmp.ne.s32.totalorder %s204, %s206
      %p213 = scmp.eq.s32.totalorder %s23, 1
      %p214 = por %p212, %p213
      %p215 = scmp.ne.s32.totalorder %s206, %s207
      %p216 = scmp.eq.s32.totalorder %s23, 0
      %p217 = por %p215, %p216
      %p218 = scmp.ne.s32.totalorder %s206, %s207
      %p219 = scmp.eq.s32.totalorder %s24, 1
      %p220 = por %p218, %p219
      %p222 = scmp.ne.s32.totalorder %s207, %s221
      %p223 = scmp.eq.s32.totalorder %s24, 0
      %p224 = por %p222, %p223
      %s226 = sadd.s32 %s225, 1
      %p229 = scmp.eq.s32.totalorder %s18, 1
      %p230 = scmp.ne.s32.totalorder %s225, %s227
      %p231 = scmp.eq.s32.totalorder %s18, 0
      %p232 = por %p230, %p231
      %p233 = scmp.ne.s32.totalorder %s225, %s227
      %p234 = scmp.eq.s32.totalorder %s23, 1
      %p235 = por %p233, %p234
      %p236 = scmp.ne.s32.totalorder %s227, %s228
      %p237 = scmp.eq.s32.totalorder %s23, 0
      %p238 = por %p236, %p237
      %p239 = scmp.ne.s32.totalorder %s227, %s228
      %p240 = scmp.eq.s32.totalorder %s24, 1
      %p241 = por %p239, %p240
      %p243 = scmp.ne.s32.totalorder %s228, %s242
      %p244 = scmp.eq.s32.totalorder %s24, 0
      %p245 = por %p243, %p244
      %s246 = ssub.s32 %s18, %s25
      %p247 = scmp.eq.s32.totalorder %s246, 0
      %s249 = sadd.s32 %s248, 1
      %s250 = scalar_select %p247, %s248, %s249
      %p253 = pneg %p247
      %p254 = scmp.eq.s32.totalorder %s18, 1
      %p255 = por %p253, %p254
      %p256 = scmp.ne.s32.totalorder %s248, %s251
      %p257 = scmp.eq.s32.totalorder %s18, 0
      %p258 = por %p256, %p257
      %p259 = scmp.ne.s32.totalorder %s248, %s251
      %p260 = scmp.eq.s32.totalorder %s23, 1
      %p261 = por %p259, %p260
      %p262 = scmp.ne.s32.totalorder %s251, %s252
      %p263 = scmp.eq.s32.totalorder %s23, 0
      %p264 = por %p262, %p263
      %p265 = scmp.ne.s32.totalorder %s251, %s252
      %p266 = scmp.eq.s32.totalorder %s24, 1
      %p267 = por %p265, %p266
      %p269 = scmp.ne.s32.totalorder %s252, %s268
      %p270 = scmp.eq.s32.totalorder %s24, 0
      %p271 = por %p269, %p270
      %p272 = scmp.le.s32.totalorder 1, %s18
      %p273 = scmp.lt.s32.totalorder %s18, 3
      %p274 = pnand %p272, %p273
      %p275 = pneg %p274
      // Predicated region
      $region9: #{text_decoder_forward.8} parent=5 // pred_check
        _
      $region10: #{text_decoder_forward.8} parent=5 // pred_check_branch
        %277 = sbr.rel (%p274) target = $region12
      $region11: #{text_decoder_forward.8} parent=5 // pred_region
        %s278 = ssub.s32 %s18, 1
        // Predicated region
        $region13: #{text_decoder_forward.8} parent=11 // pred_check
          %p279 = pneg %p91
        $region14: #{text_decoder_forward.8} parent=11 // pred_check_branch
          %281 = sbr.rel (%p279) target = $region16
        $region15: #{text_decoder_forward.8} parent=11 // pred_region
          %283 = vsyncadd [#allocation3], 0
          %s284 = sshll.u32 %s2, 4
          %s285 = int_to_ptr.hbm [resolvable:$true] %s284
          %s286 = sshll.u32 [#allocation2], 4
          %s287 = int_to_ptr.vmem [resolvable:$true] %s286
          %292 = dma.hbm_to_vmem [thread:$0]  %s285, 4096, %s287, [#allocation3], 128, 128, 8
        $region16: #{text_decoder_forward.8} parent=11 // pred_fallthru
          _
        // Predicated region
        $region17: #{text_decoder_forward.8} parent=11 // pred_check
          %p293 = pneg %p112
        $region18: #{text_decoder_forward.8} parent=11 // pred_check_branch
          %295 = sbr.rel (%p293) target = $region20
        $region19: #{text_decoder_forward.8} parent=11 // pred_region
          _
        $region20: #{text_decoder_forward.8} parent=11 // pred_fallthru
          _
        // Predicated region
        $region21: #{text_decoder_forward.8} parent=11 // pred_check
          %p296 = pneg %p133
        $region22: #{text_decoder_forward.8} parent=11 // pred_check_branch
          %298 = sbr.rel (%p296) target = $region24
        $region23: #{text_decoder_forward.8} parent=11 // pred_region
          %300 = vsyncadd [#allocation5], 0
          %s301 = sshll.u32 %s4, 4
          %s302 = int_to_ptr.hbm [resolvable:$true] %s301
          %s303 = sshll.u32 [#allocation4], 4
          %s304 = int_to_ptr.vmem [resolvable:$true] %s303
          %309 = dma.hbm_to_vmem [thread:$0]  %s302, 8192, %s304, [#allocation5], 256, 256, 16
        $region24: #{text_decoder_forward.8} parent=11 // pred_fallthru
          _
        // Predicated region
        $region25: #{text_decoder_forward.8} parent=11 // pred_check
          %p310 = pneg %p154
        $region26: #{text_decoder_forward.8} parent=11 // pred_check_branch
          %312 = sbr.rel (%p310) target = $region28
        $region27: #{text_decoder_forward.8} parent=11 // pred_region
          _
        $region28: #{text_decoder_forward.8} parent=11 // pred_fallthru
          _
        // Predicated region
        $region29: #{text_decoder_forward.8} parent=11 // pred_check
          %p313 = pneg %p175
        $region30: #{text_decoder_forward.8} parent=11 // pred_check_branch
          %315 = sbr.rel (%p313) target = $region32
        $region31: #{text_decoder_forward.8} parent=11 // pred_region
          %317 = vsyncadd [#allocation5], 0
          %s318 = sshll.u32 %s6, 4
          %s319 = int_to_ptr.hbm [resolvable:$true] %s318
          %s320 = sshll.u32 [#allocation6], 4
          %s321 = int_to_ptr.vmem [resolvable:$true] %s320
          %326 = dma.hbm_to_vmem [thread:$0]  %s319, 4096, %s321, [#allocation5], 128, 128, 8
        $region32: #{text_decoder_forward.8} parent=11 // pred_fallthru
          _
        // Predicated region
        $region33: #{text_decoder_forward.8} parent=11 // pred_check
          %p327 = pneg %p196
        $region34: #{text_decoder_forward.8} parent=11 // pred_check_branch
          %329 = sbr.rel (%p327) target = $region36
        $region35: #{text_decoder_forward.8} parent=11 // pred_region
          _
        $region36: #{text_decoder_forward.8} parent=11 // pred_fallthru
          _
        // Predicated region
        $region37: #{text_decoder_forward.8} parent=11 // pred_check
          %p330 = pneg %p217
        $region38: #{text_decoder_forward.8} parent=11 // pred_check_branch
          %332 = sbr.rel (%p330) target = $region40
        $region39: #{text_decoder_forward.8} parent=11 // pred_region
          _
        $region40: #{text_decoder_forward.8} parent=11 // pred_fallthru
          _
        // Predicated region
        $region41: #{text_decoder_forward.8} parent=11 // pred_check
          %p333 = pneg %p238
        $region42: #{text_decoder_forward.8} parent=11 // pred_check_branch
          %335 = sbr.rel (%p333) target = $region44
        $region43: #{text_decoder_forward.8} parent=11 // pred_region
          _
        $region44: #{text_decoder_forward.8} parent=11 // pred_fallthru
          _
      $region12: #{text_decoder_forward.8} parent=5 // pred_fallthru
        _
      %p336 = scmp.lt.s32.totalorder %s18, 2
      // Predicated region
      $region45: #{text_decoder_forward.8} parent=5 // pred_check
        %p337 = pneg %p336
      $region46: #{text_decoder_forward.8} parent=5 // pred_check_branch
        %339 = sbr.rel (%p337) target = $region48
      $region47: #{text_decoder_forward.8} parent=5 // pred_region
        // Predicated region
        $region49: #{text_decoder_forward.8} parent=47 // pred_check
          %p340 = pneg %p38
        $region50: #{text_decoder_forward.8} parent=47 // pred_check_branch
          %342 = sbr.rel (%p340) target = $region52
        $region51: #{text_decoder_forward.8} parent=47 // pred_region
          %p343 = scmp.lt.s32.totalorder %s18, 1
          %s344 = scalar_select %p343, %s18, 1
          %s345 = smul.addr %s344, 2
          %s346 = smul.addr %s345, 4
          %s347 = scalar_lea.vmem %s0, %s346
        $region52: #{text_decoder_forward.8} parent=47 // pred_fallthru
          _
        // Predicated region
        $region53: #{text_decoder_forward.8} parent=47 // pred_check
          %p348 = pneg %p64
        $region54: #{text_decoder_forward.8} parent=47 // pred_check_branch
          %350 = sbr.rel (%p348) target = $region56
        $region55: #{text_decoder_forward.8} parent=47 // pred_region
          %p351 = scmp.lt.s32.totalorder %s18, 1
          %s352 = scalar_select %p351, %s18, 1
          %s353 = smul.addr %s352, 2
          %s354 = smul.addr %s353, 4
          %s355 = scalar_lea.vmem %s1, %s354
        $region56: #{text_decoder_forward.8} parent=47 // pred_fallthru
          _
      $region48: #{text_decoder_forward.8} parent=5 // pred_fallthru
        _
      %p356 = scmp.le.s32.totalorder 1, %s18
      %p357 = scmp.lt.s32.totalorder %s18, 3
      %p358 = pnand %p356, %p357
      %p359 = pneg %p358
      // Predicated region
      $region57: #{text_decoder_forward.8} parent=5 // pred_check
        _
      $region58: #{text_decoder_forward.8} parent=5 // pred_check_branch
        %361 = sbr.rel (%p358) target = $region60
      $region59: #{text_decoder_forward.8} parent=5 // pred_region
        %s362 = ssub.s32 %s18, 1
        // Predicated region
        $region61: #{text_decoder_forward.8} parent=59 // pred_check
          %p363 = pneg %p91
        $region62: #{text_decoder_forward.8} parent=59 // pred_check_branch
          %365 = sbr.rel (%p363) target = $region64
        $region63: #{text_decoder_forward.8} parent=59 // pred_region
          %367 = dma.done [#allocation3], 4096
        $region64: #{text_decoder_forward.8} parent=59 // pred_fallthru
          _
        // Predicated region
        $region65: #{text_decoder_forward.8} parent=59 // pred_check
          %p368 = pneg %p133
        $region66: #{text_decoder_forward.8} parent=59 // pred_check_branch
          %370 = sbr.rel (%p368) target = $region68
        $region67: #{text_decoder_forward.8} parent=59 // pred_region
          %372 = dma.done [#allocation5], 8192
        $region68: #{text_decoder_forward.8} parent=59 // pred_fallthru
          _
        // Predicated region
        $region69: #{text_decoder_forward.8} parent=59 // pred_check
          %p373 = pneg %p175
        $region70: #{text_decoder_forward.8} parent=59 // pred_check_branch
          %375 = sbr.rel (%p373) target = $region72
        $region71: #{text_decoder_forward.8} parent=59 // pred_region
          %377 = dma.done [#allocation5], 4096
        $region72: #{text_decoder_forward.8} parent=59 // pred_fallthru
          _
        %p378 = scmp.lt.s32.totalorder %s23, 1
        %s379 = scalar_select %p378, %s23, 1
        %s380 = smul.addr %s379, 2
        %s381 = smul.addr %s380, 4
        %s382 = scalar_lea.vmem %s0, %s381
        %p383 = pneg %p44
        %p384 = pneg %p41
        %p385 = scmp.lt.s32.totalorder %s23, 1
        %s386 = scalar_select %p385, %s23, 1
        %s387 = smul.addr %s386, 2
        %s388 = smul.addr %s387, 4
        %s389 = scalar_lea.vmem %s1, %s388
        %p390 = pneg %p70
        %p391 = pneg %p67
        %p392 = pneg %p91
        %p393 = pneg %p88
        %p394 = pneg %p112
        %p395 = pneg %p109
        %p396 = pneg %p133
        %p397 = pneg %p130
        %p398 = pneg %p154
        %p399 = pneg %p151
        %p400 = pneg %p175
        %p401 = pneg %p172
        %p402 = pneg %p196
        %p403 = pneg %p193
        %p404 = pneg %p217
        %p405 = pneg %p214
        %p406 = pneg %p238
        %p407 = pneg %p235
        %p408 = pneg %p264
        %p409 = pneg %p261
        %p410 = scmp.lt.s32.totalorder %s23, 1
        %s411 = scalar_select %p410, %s23, 1
        %s412 = smul.addr %s411, 2
        %s413 = smul.addr %s412, 4
        %s414 = scalar_lea.vmem %s10, %s413
        %p415 = scmp.lt.s32.totalorder %s23, 1
        %s416 = scalar_select %p415, %s23, 1
        %s417 = smul.addr %s416, 2
        %s418 = smul.addr %s417, 4
        %s419 = scalar_lea.vmem %s0, %s418
        %p420 = scmp.lt.s32.totalorder %s23, 1
        %s421 = scalar_select %p420, %s23, 1
        %s422 = smul.addr %s421, 2
        %s423 = smul.addr %s422, 4
        %s424 = scalar_lea.vmem %s1, %s423
        %p425 = scmp.lt.s32.totalorder %s23, 1
        %s426 = scalar_select %p425, %s23, 1
        %s427 = smul.addr %s426, 2
        %s428 = smul.addr %s427, 4
        %s429 = scalar_lea.vmem %s10, %s428
        %v431 = vld [vmem:[%s419] sm:$0xff]
        %v432 = vld [vmem:[%s424] sm:$0xff]
        %v433 = vunpack.c.l.bf16 %v431
        %v434 = vunpack.c.h.bf16 %v431
        %v435 = vld [vmem:[#allocation2] sm:$0xff]
        %v436 = vld [vmem:[#allocation2 + $0x8] sm:$0xff]
        %v437 = vld [vmem:[#allocation2 + $0x10] sm:$0xff]
        %v438 = vld [vmem:[#allocation2 + $0x18] sm:$0xff]
        %v439 = vld [vmem:[#allocation2 + $0x20] sm:$0xff]
        %v440 = vld [vmem:[#allocation2 + $0x28] sm:$0xff]
        %v441 = vld [vmem:[#allocation2 + $0x30] sm:$0xff]
        %v442 = vld [vmem:[#allocation2 + $0x38] sm:$0xff]
        %v443 = vld [vmem:[#allocation2 + $0x40] sm:$0xff]
        %v444 = vld [vmem:[#allocation2 + $0x48] sm:$0xff]
        %v445 = vld [vmem:[#allocation2 + $0x50] sm:$0xff]
        %v446 = vld [vmem:[#allocation2 + $0x58] sm:$0xff]
        %v447 = vld [vmem:[#allocation2 + $0x60] sm:$0xff]
        %v448 = vld [vmem:[#allocation2 + $0x68] sm:$0xff]
        %v449 = vld [vmem:[#allocation2 + $0x70] sm:$0xff]
        %v450 = vld [vmem:[#allocation2 + $0x78] sm:$0xff]
        %v451 = vld [vmem:[#allocation2 + $0x80] sm:$0xff]
        %v452 = vld [vmem:[#allocation2 + $0x88] sm:$0xff]
        %v453 = vld [vmem:[#allocation2 + $0x90] sm:$0xff]
        %v454 = vld [vmem:[#allocation2 + $0x98] sm:$0xff]
        %v455 = vld [vmem:[#allocation2 + $0xa0] sm:$0xff]
        %v456 = vld [vmem:[#allocation2 + $0xa8] sm:$0xff]
        %v457 = vld [vmem:[#allocation2 + $0xb0] sm:$0xff]
        %v458 = vld [vmem:[#allocation2 + $0xb8] sm:$0xff]
        %v459 = vld [vmem:[#allocation2 + $0xc0] sm:$0xff]
        %v460 = vld [vmem:[#allocation2 + $0xc8] sm:$0xff]
        %v461 = vld [vmem:[#allocation2 + $0xd0] sm:$0xff]
        %v462 = vld [vmem:[#allocation2 + $0xd8] sm:$0xff]
        %v463 = vld [vmem:[#allocation2 + $0xe0] sm:$0xff]
        %v464 = vld [vmem:[#allocation2 + $0xe8] sm:$0xff]
        %v465 = vld [vmem:[#allocation2 + $0xf0] sm:$0xff]
        %v466 = vld [vmem:[#allocation2 + $0xf8] sm:$0xff]
        %v467 = vld [vmem:[%s3] sm:$0x3]
        %v469 = vperm.slane %v467, 0
        %v470 = vperm.slane %v467, 1
        %v474 = vunpack.c.l.b16 %v431
        %v475 = vunpack.c.h.b16 %v431
        %v476 = vpack.c.b16 %v474, %v474
        %v477 = vpack.c.b16 %v475, %v475
        %v512 = vunpack.c.l.b16 %v435
        %v513 = vunpack.c.h.b16 %v435
        %v514 = vunpack.c.l.b16 %v436
        %v515 = vunpack.c.h.b16 %v436
        %v516 = vunpack.c.l.b16 %v437
        %v517 = vunpack.c.h.b16 %v437
        %v518 = vunpack.c.l.b16 %v438
        %v519 = vunpack.c.h.b16 %v438
        %v520 = vunpack.c.l.b16 %v439
        %v521 = vunpack.c.h.b16 %v439
        %v522 = vunpack.c.l.b16 %v440
        %v523 = vunpack.c.h.b16 %v440
        %v524 = vunpack.c.l.b16 %v441
        %v525 = vunpack.c.h.b16 %v441
        %v526 = vunpack.c.l.b16 %v442
        %v527 = vunpack.c.h.b16 %v442
        %v528 = vunpack.c.l.b16 %v443
        %v529 = vunpack.c.h.b16 %v443
        %v530 = vunpack.c.l.b16 %v444
        %v531 = vunpack.c.h.b16 %v444
        %v532 = vunpack.c.l.b16 %v445
        %v533 = vunpack.c.h.b16 %v445
        %v534 = vunpack.c.l.b16 %v446
        %v535 = vunpack.c.h.b16 %v446
        %v536 = vunpack.c.l.b16 %v447
        %v537 = vunpack.c.h.b16 %v447
        %v538 = vunpack.c.l.b16 %v448
        %v539 = vunpack.c.h.b16 %v448
        %v540 = vunpack.c.l.b16 %v449
        %v541 = vunpack.c.h.b16 %v449
        %v542 = vunpack.c.l.b16 %v450
        %v543 = vunpack.c.h.b16 %v450
        %v544 = vunpack.c.l.b16 %v451
        %v545 = vunpack.c.h.b16 %v451
        %v546 = vunpack.c.l.b16 %v452
        %v547 = vunpack.c.h.b16 %v452
        %v548 = vunpack.c.l.b16 %v453
        %v549 = vunpack.c.h.b16 %v453
        %v550 = vunpack.c.l.b16 %v454
        %v551 = vunpack.c.h.b16 %v454
        %v552 = vunpack.c.l.b16 %v455
        %v553 = vunpack.c.h.b16 %v455
        %v554 = vunpack.c.l.b16 %v456
        %v555 = vunpack.c.h.b16 %v456
        %v556 = vunpack.c.l.b16 %v457
        %v557 = vunpack.c.h.b16 %v457
        %v558 = vunpack.c.l.b16 %v458
        %v559 = vunpack.c.h.b16 %v458
        %v560 = vunpack.c.l.b16 %v459
        %v561 = vunpack.c.h.b16 %v459
        %v562 = vunpack.c.l.b16 %v460
        %v563 = vunpack.c.h.b16 %v460
        %v564 = vunpack.c.l.b16 %v461
        %v565 = vunpack.c.h.b16 %v461
        %v566 = vunpack.c.l.b16 %v462
        %v567 = vunpack.c.h.b16 %v462
        %v568 = vunpack.c.l.b16 %v463
        %v569 = vunpack.c.h.b16 %v463
        %v570 = vunpack.c.l.b16 %v464
        %v571 = vunpack.c.h.b16 %v464
        %v572 = vunpack.c.l.b16 %v465
        %v573 = vunpack.c.h.b16 %v465
        %v574 = vunpack.c.l.b16 %v466
        %v575 = vunpack.c.h.b16 %v466
        %v576 = vpack.c.b16 %v514, %v512
        %v577 = vpack.c.b16 %v515, %v513
        %v578 = vpack.c.b16 %v518, %v516
        %v579 = vpack.c.b16 %v519, %v517
        %v580 = vpack.c.b16 %v522, %v520
        %v581 = vpack.c.b16 %v523, %v521
        %v582 = vpack.c.b16 %v526, %v524
        %v583 = vpack.c.b16 %v527, %v525
        %v584 = vpack.c.b16 %v530, %v528
        %v585 = vpack.c.b16 %v531, %v529
        %v586 = vpack.c.b16 %v534, %v532
        %v587 = vpack.c.b16 %v535, %v533
        %v588 = vpack.c.b16 %v538, %v536
        %v589 = vpack.c.b16 %v539, %v537
        %v590 = vpack.c.b16 %v542, %v540
        %v591 = vpack.c.b16 %v543, %v541
        %v592 = vpack.c.b16 %v546, %v544
        %v593 = vpack.c.b16 %v547, %v545
        %v594 = vpack.c.b16 %v550, %v548
        %v595 = vpack.c.b16 %v551, %v549
        %v596 = vpack.c.b16 %v554, %v552
        %v597 = vpack.c.b16 %v555, %v553
        %v598 = vpack.c.b16 %v558, %v556
        %v599 = vpack.c.b16 %v559, %v557
        %v600 = vpack.c.b16 %v562, %v560
        %v601 = vpack.c.b16 %v563, %v561
        %v602 = vpack.c.b16 %v566, %v564
        %v603 = vpack.c.b16 %v567, %v565
        %v604 = vpack.c.b16 %v570, %v568
        %v605 = vpack.c.b16 %v571, %v569
        %v606 = vpack.c.b16 %v574, %v572
        %v607 = vpack.c.b16 %v575, %v573
        %640 = vmatpush.bf16.msra.mxu0 %v590
        %641 = vmatpush.bf16.msra.mxu0 %v588
        %642 = vmatpush.bf16.msra.mxu0 %v586
        %643 = vmatpush.bf16.msra.mxu0 %v584
        %644 = vmatpush.bf16.msra.mxu0 %v582
        %645 = vmatpush.bf16.msra.mxu0 %v580
        %646 = vmatpush.bf16.msra.mxu0 %v578
        %647 = vmatpush.bf16.msra.mxu0 %v576
        %648 = vmatmul.bf16.gmra.mxu0 %v476
        %v649 = vpop.f32.mrf.mxu0
        %v650 = vadd.f32 %v469, %v649
        %v651 = vpop.f32.mrf.mxu0
        %652 = vdwg.mxu0
        %653 = vmatpush.bf16.msra.mxu0 %v606
        %654 = vmatpush.bf16.msra.mxu0 %v604
        %655 = vmatpush.bf16.msra.mxu0 %v602
        %656 = vmatpush.bf16.msra.mxu0 %v600
        %657 = vmatpush.bf16.msra.mxu0 %v598
        %658 = vmatpush.bf16.msra.mxu0 %v596
        %659 = vmatpush.bf16.msra.mxu0 %v594
        %660 = vmatpush.bf16.msra.mxu0 %v592
        %661 = vmatmul.bf16.gmra.mxu0 %v477
        %v662 = vpop.f32.mrf.mxu0
        %v663 = vadd.f32 %v650, %v662
        %v664 = vpop.f32.mrf.mxu0
        %665 = vdwg.mxu0
        %666 = vmatpush.bf16.msra.mxu0 %v591
        %667 = vmatpush.bf16.msra.mxu0 %v589
        %668 = vmatpush.bf16.msra.mxu0 %v587
        %669 = vmatpush.bf16.msra.mxu0 %v585
        %670 = vmatpush.bf16.msra.mxu0 %v583
        %671 = vmatpush.bf16.msra.mxu0 %v581
        %672 = vmatpush.bf16.msra.mxu0 %v579
        %673 = vmatpush.bf16.msra.mxu0 %v577
        %674 = vmatmul.bf16.gmra.mxu0 %v476
        %v675 = vpop.f32.mrf.mxu0
        %v676 = vadd.f32 %v470, %v675
        %v677 = vpop.f32.mrf.mxu0
        %678 = vdwg.mxu0
        %679 = vmatpush.bf16.msra.mxu0 %v607
        %680 = vmatpush.bf16.msra.mxu0 %v605
        %681 = vmatpush.bf16.msra.mxu0 %v603
        %682 = vmatpush.bf16.msra.mxu0 %v601
        %683 = vmatpush.bf16.msra.mxu0 %v599
        %684 = vmatpush.bf16.msra.mxu0 %v597
        %685 = vmatpush.bf16.msra.mxu0 %v595
        %686 = vmatpush.bf16.msra.mxu0 %v593
        %687 = vmatmul.bf16.gmra.mxu0 %v477
        %v688 = vpop.f32.mrf.mxu0
        %v689 = vadd.f32 %v676, %v688
        %v690 = vpop.f32.mrf.mxu0
        %691 = vdwg.mxu0
        %v692 = vld [vmem:[#allocation4] sm:$0xff]
        %v693 = vld [vmem:[#allocation4 + $0x8] sm:$0xff]
        %v694 = vld [vmem:[#allocation4 + $0x10] sm:$0xff]
        %v695 = vld [vmem:[#allocation4 + $0x18] sm:$0xff]
        %v696 = vld [vmem:[#allocation4 + $0x20] sm:$0xff]
        %v697 = vld [vmem:[#allocation4 + $0x28] sm:$0xff]
        %v698 = vld [vmem:[#allocation4 + $0x30] sm:$0xff]
        %v699 = vld [vmem:[#allocation4 + $0x38] sm:$0xff]
        %v700 = vld [vmem:[#allocation4 + $0x40] sm:$0xff]
        %v701 = vld [vmem:[#allocation4 + $0x48] sm:$0xff]
        %v702 = vld [vmem:[#allocation4 + $0x50] sm:$0xff]
        %v703 = vld [vmem:[#allocation4 + $0x58] sm:$0xff]
        %v704 = vld [vmem:[#allocation4 + $0x60] sm:$0xff]
        %v705 = vld [vmem:[#allocation4 + $0x68] sm:$0xff]
        %v706 = vld [vmem:[#allocation4 + $0x70] sm:$0xff]
        %v707 = vld [vmem:[#allocation4 + $0x78] sm:$0xff]
        %v708 = vld [vmem:[#allocation4 + $0x80] sm:$0xff]
        %v709 = vld [vmem:[#allocation4 + $0x88] sm:$0xff]
        %v710 = vld [vmem:[#allocation4 + $0x90] sm:$0xff]
        %v711 = vld [vmem:[#allocation4 + $0x98] sm:$0xff]
        %v712 = vld [vmem:[#allocation4 + $0xa0] sm:$0xff]
        %v713 = vld [vmem:[#allocation4 + $0xa8] sm:$0xff]
        %v714 = vld [vmem:[#allocation4 + $0xb0] sm:$0xff]
        %v715 = vld [vmem:[#allocation4 + $0xb8] sm:$0xff]
        %v716 = vld [vmem:[#allocation4 + $0xc0] sm:$0xff]
        %v717 = vld [vmem:[#allocation4 + $0xc8] sm:$0xff]
        %v718 = vld [vmem:[#allocation4 + $0xd0] sm:$0xff]
        %v719 = vld [vmem:[#allocation4 + $0xd8] sm:$0xff]
        %v720 = vld [vmem:[#allocation4 + $0xe0] sm:$0xff]
        %v721 = vld [vmem:[#allocation4 + $0xe8] sm:$0xff]
        %v722 = vld [vmem:[#allocation4 + $0xf0] sm:$0xff]
        %v723 = vld [vmem:[#allocation4 + $0xf8] sm:$0xff]
        %v724 = vld [vmem:[#allocation4 + $0x100] sm:$0xff]
        %v725 = vld [vmem:[#allocation4 + $0x108] sm:$0xff]
        %v726 = vld [vmem:[#allocation4 + $0x110] sm:$0xff]
        %v727 = vld [vmem:[#allocation4 + $0x118] sm:$0xff]
        %v728 = vld [vmem:[#allocation4 + $0x120] sm:$0xff]
        %v729 = vld [vmem:[#allocation4 + $0x128] sm:$0xff]
        %v730 = vld [vmem:[#allocation4 + $0x130] sm:$0xff]
        %v731 = vld [vmem:[#allocation4 + $0x138] sm:$0xff]
        %v732 = vld [vmem:[#allocation4 + $0x140] sm:$0xff]
        %v733 = vld [vmem:[#allocation4 + $0x148] sm:$0xff]
        %v734 = vld [vmem:[#allocation4 + $0x150] sm:$0xff]
        %v735 = vld [vmem:[#allocation4 + $0x158] sm:$0xff]
        %v736 = vld [vmem:[#allocation4 + $0x160] sm:$0xff]
        %v737 = vld [vmem:[#allocation4 + $0x168] sm:$0xff]
        %v738 = vld [vmem:[#allocation4 + $0x170] sm:$0xff]
        %v739 = vld [vmem:[#allocation4 + $0x178] sm:$0xff]
        %v740 = vld [vmem:[#allocation4 + $0x180] sm:$0xff]
        %v741 = vld [vmem:[#allocation4 + $0x188] sm:$0xff]
        %v742 = vld [vmem:[#allocation4 + $0x190] sm:$0xff]
        %v743 = vld [vmem:[#allocation4 + $0x198] sm:$0xff]
        %v744 = vld [vmem:[#allocation4 + $0x1a0] sm:$0xff]
        %v745 = vld [vmem:[#allocation4 + $0x1a8] sm:$0xff]
        %v746 = vld [vmem:[#allocation4 + $0x1b0] sm:$0xff]
        %v747 = vld [vmem:[#allocation4 + $0x1b8] sm:$0xff]
        %v748 = vld [vmem:[#allocation4 + $0x1c0] sm:$0xff]
        %v749 = vld [vmem:[#allocation4 + $0x1c8] sm:$0xff]
        %v750 = vld [vmem:[#allocation4 + $0x1d0] sm:$0xff]
        %v751 = vld [vmem:[#allocation4 + $0x1d8] sm:$0xff]
        %v752 = vld [vmem:[#allocation4 + $0x1e0] sm:$0xff]
        %v753 = vld [vmem:[#allocation4 + $0x1e8] sm:$0xff]
        %v754 = vld [vmem:[#allocation4 + $0x1f0] sm:$0xff]
        %v755 = vld [vmem:[#allocation4 + $0x1f8] sm:$0xff]
        %v756 = vld [vmem:[%s5] sm:$0xf]
        %v758 = vperm.slane %v756, 0
        %v759 = vperm.slane %v756, 1
        %v760 = vperm.slane %v756, 2
        %v761 = vperm.slane %v756, 3
        %v767 = vunpack.c.l.b16 %v432
        %v768 = vunpack.c.h.b16 %v432
        %v769 = vpack.c.b16 %v767, %v767
        %v770 = vpack.c.b16 %v768, %v768
        %v837 = vunpack.c.l.b16 %v692
        %v838 = vunpack.c.h.b16 %v692
        %v839 = vunpack.c.l.b16 %v693
        %v840 = vunpack.c.h.b16 %v693
        %v841 = vunpack.c.l.b16 %v694
        %v842 = vunpack.c.h.b16 %v694
        %v843 = vunpack.c.l.b16 %v695
        %v844 = vunpack.c.h.b16 %v695
        %v845 = vunpack.c.l.b16 %v696
        %v846 = vunpack.c.h.b16 %v696
        %v847 = vunpack.c.l.b16 %v697
        %v848 = vunpack.c.h.b16 %v697
        %v849 = vunpack.c.l.b16 %v698
        %v850 = vunpack.c.h.b16 %v698
        %v851 = vunpack.c.l.b16 %v699
        %v852 = vunpack.c.h.b16 %v699
        %v853 = vunpack.c.l.b16 %v700
        %v854 = vunpack.c.h.b16 %v700
        %v855 = vunpack.c.l.b16 %v701
        %v856 = vunpack.c.h.b16 %v701
        %v857 = vunpack.c.l.b16 %v702
        %v858 = vunpack.c.h.b16 %v702
        %v859 = vunpack.c.l.b16 %v703
        %v860 = vunpack.c.h.b16 %v703
        %v861 = vunpack.c.l.b16 %v704
        %v862 = vunpack.c.h.b16 %v704
        %v863 = vunpack.c.l.b16 %v705
        %v864 = vunpack.c.h.b16 %v705
        %v865 = vunpack.c.l.b16 %v706
        %v866 = vunpack.c.h.b16 %v706
        %v867 = vunpack.c.l.b16 %v707
        %v868 = vunpack.c.h.b16 %v707
        %v869 = vunpack.c.l.b16 %v708
        %v870 = vunpack.c.h.b16 %v708
        %v871 = vunpack.c.l.b16 %v709
        %v872 = vunpack.c.h.b16 %v709
        %v873 = vunpack.c.l.b16 %v710
        %v874 = vunpack.c.h.b16 %v710
        %v875 = vunpack.c.l.b16 %v711
        %v876 = vunpack.c.h.b16 %v711
        %v877 = vunpack.c.l.b16 %v712
        %v878 = vunpack.c.h.b16 %v712
        %v879 = vunpack.c.l.b16 %v713
        %v880 = vunpack.c.h.b16 %v713
        %v881 = vunpack.c.l.b16 %v714
        %v882 = vunpack.c.h.b16 %v714
        %v883 = vunpack.c.l.b16 %v715
        %v884 = vunpack.c.h.b16 %v715
        %v885 = vunpack.c.l.b16 %v716
        %v886 = vunpack.c.h.b16 %v716
        %v887 = vunpack.c.l.b16 %v717
        %v888 = vunpack.c.h.b16 %v717
        %v889 = vunpack.c.l.b16 %v718
        %v890 = vunpack.c.h.b16 %v718
        %v891 = vunpack.c.l.b16 %v719
        %v892 = vunpack.c.h.b16 %v719
        %v893 = vunpack.c.l.b16 %v720
        %v894 = vunpack.c.h.b16 %v720
        %v895 = vunpack.c.l.b16 %v721
        %v896 = vunpack.c.h.b16 %v721
        %v897 = vunpack.c.l.b16 %v722
        %v898 = vunpack.c.h.b16 %v722
        %v899 = vunpack.c.l.b16 %v723
        %v900 = vunpack.c.h.b16 %v723
        %v901 = vunpack.c.l.b16 %v724
        %v902 = vunpack.c.h.b16 %v724
        %v903 = vunpack.c.l.b16 %v725
        %v904 = vunpack.c.h.b16 %v725
        %v905 = vunpack.c.l.b16 %v726
        %v906 = vunpack.c.h.b16 %v726
        %v907 = vunpack.c.l.b16 %v727
        %v908 = vunpack.c.h.b16 %v727
        %v909 = vunpack.c.l.b16 %v728
        %v910 = vunpack.c.h.b16 %v728
        %v911 = vunpack.c.l.b16 %v729
        %v912 = vunpack.c.h.b16 %v729
        %v913 = vunpack.c.l.b16 %v730
        %v914 = vunpack.c.h.b16 %v730
        %v915 = vunpack.c.l.b16 %v731
        %v916 = vunpack.c.h.b16 %v731
        %v917 = vunpack.c.l.b16 %v732
        %v918 = vunpack.c.h.b16 %v732
        %v919 = vunpack.c.l.b16 %v733
        %v920 = vunpack.c.h.b16 %v733
        %v921 = vunpack.c.l.b16 %v734
        %v922 = vunpack.c.h.b16 %v734
        %v923 = vunpack.c.l.b16 %v735
        %v924 = vunpack.c.h.b16 %v735
        %v925 = vunpack.c.l.b16 %v736
        %v926 = vunpack.c.h.b16 %v736
        %v927 = vunpack.c.l.b16 %v737
        %v928 = vunpack.c.h.b16 %v737
        %v929 = vunpack.c.l.b16 %v738
        %v930 = vunpack.c.h.b16 %v738
        %v931 = vunpack.c.l.b16 %v739
        %v932 = vunpack.c.h.b16 %v739
        %v933 = vunpack.c.l.b16 %v740
        %v934 = vunpack.c.h.b16 %v740
        %v935 = vunpack.c.l.b16 %v741
        %v936 = vunpack.c.h.b16 %v741
        %v937 = vunpack.c.l.b16 %v742
        %v938 = vunpack.c.h.b16 %v742
        %v939 = vunpack.c.l.b16 %v743
        %v940 = vunpack.c.h.b16 %v743
        %v941 = vunpack.c.l.b16 %v744
        %v942 = vunpack.c.h.b16 %v744
        %v943 = vunpack.c.l.b16 %v745
        %v944 = vunpack.c.h.b16 %v745
        %v945 = vunpack.c.l.b16 %v746
        %v946 = vunpack.c.h.b16 %v746
        %v947 = vunpack.c.l.b16 %v747
        %v948 = vunpack.c.h.b16 %v747
        %v949 = vunpack.c.l.b16 %v748
        %v950 = vunpack.c.h.b16 %v748
        %v951 = vunpack.c.l.b16 %v749
        %v952 = vunpack.c.h.b16 %v749
        %v953 = vunpack.c.l.b16 %v750
        %v954 = vunpack.c.h.b16 %v750
        %v955 = vunpack.c.l.b16 %v751
        %v956 = vunpack.c.h.b16 %v751
        %v957 = vunpack.c.l.b16 %v752
        %v958 = vunpack.c.h.b16 %v752
        %v959 = vunpack.c.l.b16 %v753
        %v960 = vunpack.c.h.b16 %v753
        %v961 = vunpack.c.l.b16 %v754
        %v962 = vunpack.c.h.b16 %v754
        %v963 = vunpack.c.l.b16 %v755
        %v964 = vunpack.c.h.b16 %v755
        %v965 = vpack.c.b16 %v841, %v837
        %v966 = vpack.c.b16 %v842, %v838
        %v967 = vpack.c.b16 %v843, %v839
        %v968 = vpack.c.b16 %v844, %v840
        %v969 = vpack.c.b16 %v849, %v845
        %v970 = vpack.c.b16 %v850, %v846
        %v971 = vpack.c.b16 %v851, %v847
        %v972 = vpack.c.b16 %v852, %v848
        %v973 = vpack.c.b16 %v857, %v853
        %v974 = vpack.c.b16 %v858, %v854
        %v975 = vpack.c.b16 %v859, %v855
        %v976 = vpack.c.b16 %v860, %v856
        %v977 = vpack.c.b16 %v865, %v861
        %v978 = vpack.c.b16 %v866, %v862
        %v979 = vpack.c.b16 %v867, %v863
        %v980 = vpack.c.b16 %v868, %v864
        %v981 = vpack.c.b16 %v873, %v869
        %v982 = vpack.c.b16 %v874, %v870
        %v983 = vpack.c.b16 %v875, %v871
        %v984 = vpack.c.b16 %v876, %v872
        %v985 = vpack.c.b16 %v881, %v877
        %v986 = vpack.c.b16 %v882, %v878
        %v987 = vpack.c.b16 %v883, %v879
        %v988 = vpack.c.b16 %v884, %v880
        %v989 = vpack.c.b16 %v889, %v885
        %v990 = vpack.c.b16 %v890, %v886
        %v991 = vpack.c.b16 %v891, %v887
        %v992 = vpack.c.b16 %v892, %v888
        %v993 = vpack.c.b16 %v897, %v893
        %v994 = vpack.c.b16 %v898, %v894
        %v995 = vpack.c.b16 %v899, %v895
        %v996 = vpack.c.b16 %v900, %v896
        %v997 = vpack.c.b16 %v905, %v901
        %v998 = vpack.c.b16 %v906, %v902
        %v999 = vpack.c.b16 %v907, %v903
        %v1000 = vpack.c.b16 %v908, %v904
        %v1001 = vpack.c.b16 %v913, %v909
        %v1002 = vpack.c.b16 %v914, %v910
        %v1003 = vpack.c.b16 %v915, %v911
        %v1004 = vpack.c.b16 %v916, %v912
        %v1005 = vpack.c.b16 %v921, %v917
        %v1006 = vpack.c.b16 %v922, %v918
        %v1007 = vpack.c.b16 %v923, %v919
        %v1008 = vpack.c.b16 %v924, %v920
        %v1009 = vpack.c.b16 %v929, %v925
        %v1010 = vpack.c.b16 %v930, %v926
        %v1011 = vpack.c.b16 %v931, %v927
        %v1012 = vpack.c.b16 %v932, %v928
        %v1013 = vpack.c.b16 %v937, %v933
        %v1014 = vpack.c.b16 %v938, %v934
        %v1015 = vpack.c.b16 %v939, %v935
        %v1016 = vpack.c.b16 %v940, %v936
        %v1017 = vpack.c.b16 %v945, %v941
        %v1018 = vpack.c.b16 %v946, %v942
        %v1019 = vpack.c.b16 %v947, %v943
        %v1020 = vpack.c.b16 %v948, %v944
        %v1021 = vpack.c.b16 %v953, %v949
        %v1022 = vpack.c.b16 %v954, %v950
        %v1023 = vpack.c.b16 %v955, %v951
        %v1024 = vpack.c.b16 %v956, %v952
        %v1025 = vpack.c.b16 %v961, %v957
        %v1026 = vpack.c.b16 %v962, %v958
        %v1027 = vpack.c.b16 %v963, %v959
        %v1028 = vpack.c.b16 %v964, %v960
        %1093 = vmatpush.bf16.msra.mxu0 %v993
        %1094 = vmatpush.bf16.msra.mxu0 %v989
        %1095 = vmatpush.bf16.msra.mxu0 %v985
        %1096 = vmatpush.bf16.msra.mxu0 %v981
        %1097 = vmatpush.bf16.msra.mxu0 %v977
        %1098 = vmatpush.bf16.msra.mxu0 %v973
        %1099 = vmatpush.bf16.msra.mxu0 %v969
        %1100 = vmatpush.bf16.msra.mxu0 %v965
        %1101 = vmatmul.bf16.gmra.mxu0 %v769
        %v1102 = vpop.f32.mrf.mxu0
        %v1103 = vadd.f32 %v758, %v1102
        %v1104 = vpop.f32.mrf.mxu0
        %1105 = vdwg.mxu0
        %1106 = vmatpush.bf16.msra.mxu0 %v1025
        %1107 = vmatpush.bf16.msra.mxu0 %v1021
        %1108 = vmatpush.bf16.msra.mxu0 %v1017
        %1109 = vmatpush.bf16.msra.mxu0 %v1013
        %1110 = vmatpush.bf16.msra.mxu0 %v1009
        %1111 = vmatpush.bf16.msra.mxu0 %v1005
        %1112 = vmatpush.bf16.msra.mxu0 %v1001
        %1113 = vmatpush.bf16.msra.mxu0 %v997
        %1114 = vmatmul.bf16.gmra.mxu0 %v770
        %v1115 = vpop.f32.mrf.mxu0
        %v1116 = vadd.f32 %v1103, %v1115
        %v1117 = vpop.f32.mrf.mxu0
        %1118 = vdwg.mxu0
        %1119 = vmatpush.bf16.msra.mxu0 %v994
        %1120 = vmatpush.bf16.msra.mxu0 %v990
        %1121 = vmatpush.bf16.msra.mxu0 %v986
        %1122 = vmatpush.bf16.msra.mxu0 %v982
        %1123 = vmatpush.bf16.msra.mxu0 %v978
        %1124 = vmatpush.bf16.msra.mxu0 %v974
        %1125 = vmatpush.bf16.msra.mxu0 %v970
        %1126 = vmatpush.bf16.msra.mxu0 %v966
        %1127 = vmatmul.bf16.gmra.mxu0 %v769
        %v1128 = vpop.f32.mrf.mxu0
        %v1129 = vadd.f32 %v759, %v1128
        %v1130 = vpop.f32.mrf.mxu0
        %1131 = vdwg.mxu0
        %1132 = vmatpush.bf16.msra.mxu0 %v1026
        %1133 = vmatpush.bf16.msra.mxu0 %v1022
        %1134 = vmatpush.bf16.msra.mxu0 %v1018
        %1135 = vmatpush.bf16.msra.mxu0 %v1014
        %1136 = vmatpush.bf16.msra.mxu0 %v1010
        %1137 = vmatpush.bf16.msra.mxu0 %v1006
        %1138 = vmatpush.bf16.msra.mxu0 %v1002
        %1139 = vmatpush.bf16.msra.mxu0 %v998
        %1140 = vmatmul.bf16.gmra.mxu0 %v770
        %v1141 = vpop.f32.mrf.mxu0
        %v1142 = vadd.f32 %v1129, %v1141
        %v1143 = vpop.f32.mrf.mxu0
        %1144 = vdwg.mxu0
        %1145 = vmatpush.bf16.msra.mxu0 %v995
        %1146 = vmatpush.bf16.msra.mxu0 %v991
        %1147 = vmatpush.bf16.msra.mxu0 %v987
        %1148 = vmatpush.bf16.msra.mxu0 %v983
        %1149 = vmatpush.bf16.msra.mxu0 %v979
        %1150 = vmatpush.bf16.msra.mxu0 %v975
        %1151 = vmatpush.bf16.msra.mxu0 %v971
        %1152 = vmatpush.bf16.msra.mxu0 %v967
        %1153 = vmatmul.bf16.gmra.mxu0 %v769
        %v1154 = vpop.f32.mrf.mxu0
        %v1155 = vadd.f32 %v760, %v1154
        %v1156 = vpop.f32.mrf.mxu0
        %1157 = vdwg.mxu0
        %1158 = vmatpush.bf16.msra.mxu0 %v1027
        %1159 = vmatpush.bf16.msra.mxu0 %v1023
        %1160 = vmatpush.bf16.msra.mxu0 %v1019
        %1161 = vmatpush.bf16.msra.mxu0 %v1015
        %1162 = vmatpush.bf16.msra.mxu0 %v1011
        %1163 = vmatpush.bf16.msra.mxu0 %v1007
        %1164 = vmatpush.bf16.msra.mxu0 %v1003
        %1165 = vmatpush.bf16.msra.mxu0 %v999
        %1166 = vmatmul.bf16.gmra.mxu0 %v770
        %v1167 = vpop.f32.mrf.mxu0
        %v1168 = vadd.f32 %v1155, %v1167
        %v1169 = vpop.f32.mrf.mxu0
        %1170 = vdwg.mxu0
        %1171 = vmatpush.bf16.msra.mxu0 %v996
        %1172 = vmatpush.bf16.msra.mxu0 %v992
        %1173 = vmatpush.bf16.msra.mxu0 %v988
        %1174 = vmatpush.bf16.msra.mxu0 %v984
        %1175 = vmatpush.bf16.msra.mxu0 %v980
        %1176 = vmatpush.bf16.msra.mxu0 %v976
        %1177 = vmatpush.bf16.msra.mxu0 %v972
        %1178 = vmatpush.bf16.msra.mxu0 %v968
        %1179 = vmatmul.bf16.gmra.mxu0 %v769
        %v1180 = vpop.f32.mrf.mxu0
        %v1181 = vadd.f32 %v761, %v1180
        %v1182 = vpop.f32.mrf.mxu0
        %1183 = vdwg.mxu0
        %1184 = vmatpush.bf16.msra.mxu0 %v1028
        %1185 = vmatpush.bf16.msra.mxu0 %v1024
        %1186 = vmatpush.bf16.msra.mxu0 %v1020
        %1187 = vmatpush.bf16.msra.mxu0 %v1016
        %1188 = vmatpush.bf16.msra.mxu0 %v1012
        %1189 = vmatpush.bf16.msra.mxu0 %v1008
        %1190 = vmatpush.bf16.msra.mxu0 %v1004
        %1191 = vmatpush.bf16.msra.mxu0 %v1000
        %1192 = vmatmul.bf16.gmra.mxu0 %v770
        %v1193 = vpop.f32.mrf.mxu0
        %v1194 = vadd.f32 %v1181, %v1193
        %v1195 = vpop.f32.mrf.mxu0
        %1196 = vdwg.mxu0
        %v1197 = vpack.c.bf16 %v663, %v663
        %v1198 = vpack.c.bf16 %v1116, %v1116
        %v1199 = vpack.c.bf16 %v1168, %v1168
        %vm1200 = vcmask 523264
        %v1202 = vsel %vm1200, %v1197, 0
        %v1205 = vsel %vm1200, %v1198, 0
        %1207 = vmatpush.bf16.xpose.msra.mxu0 0
        %1208 = vmatpush.bf16.xpose.msra.mxu0 0
        %1209 = vmatpush.bf16.xpose.msra.mxu0 0
        %1210 = vmatpush.bf16.xpose.msra.mxu0 0
        %1211 = vmatpush.bf16.xpose.msra.mxu0 0
        %1212 = vmatpush.bf16.xpose.msra.mxu0 0
        %1213 = vmatpush.bf16.xpose.msra.mxu0 0
        %1214 = vmatpush.bf16.xpose.msra.mxu0 %v1205
        %1215 = vmatmul.bf16.gmra.mxu0 %v1202
        %v1216 = vpop.f32.mrf.mxu0
        %v1217 = vadd.f32 0.0, %v1216
        %v1218 = vpop.f32.mrf.mxu0
        %1219 = vdwg.mxu0
        %v1220 = vmul.f32 %v1217, 0.125
        %vm1221 = vcmask 64512
        %v1222 = vsel %vm1221, %v1220, -inf
        %1223 = vmax.xlane.f32.xlu0 %v1222
        %v1224 = vpop.xlane.xlu0 %1223
        %v1225 = vsub.f32 %v1220, %v1224
        %v1226 = vmul.f32 %v1225, 1.442695
        %v1227 = vpow.pop %v1226
        %v1228 = vsel %vm1221, %v1227, 0.0
        %1229 = vadd.xlane.f32.xlu0 %v1228
        %v1230 = vpop.xlane.xlu0 %1229
        %v1231 = vrcp.pop %v1230
        %v1232 = vmul.f32 %v1230, %v1231
        %v1233 = vsub.f32 1.0, %v1232
        %v1234 = vmul.f32 %v1231, %v1233
        %v1235 = vadd.f32 %v1231, %v1234
        %vm1236 = vweird.f32 %v1230
        %vm1237 = vweird.f32 %v1231
        %vm1238 = vmor %vm1236, %vm1237
        %v1239 = vsel %vm1238, %v1231, %v1235
        %v1240 = vand.u32 2147483647, %v1230
        %vm1241 = vcmp.eq.f32.partialorder %v1240, 8.507059e+37
        %v1242 = vand.u32 %v1230, 2147483648
        %v1243 = vor.u32 1.1754944e-38, %v1242
        %v1244 = vsel %vm1241, %v1243, %v1239
        %v1245 = vmul.f32 %v1227, %v1244
        %v1246 = vpack.c.bf16 %v1245, %v1245
        %v1248 = vsel %vm1221, %v1246, 0
        %vm1250 = vcmask 1043456
        %v1252 = vsel %vm1250, %v1199, 0
        %1254 = vmatpush.bf16.msra.mxu0 0
        %1255 = vmatpush.bf16.msra.mxu0 0
        %1256 = vmatpush.bf16.msra.mxu0 0
        %1257 = vmatpush.bf16.msra.mxu0 0
        %1258 = vmatpush.bf16.msra.mxu0 0
        %1259 = vmatpush.bf16.msra.mxu0 0
        %1260 = vmatpush.bf16.msra.mxu0 0
        %1261 = vmatpush.bf16.msra.mxu0 %v1252
        %1262 = vmatmul.bf16.gmra.mxu0 %v1248
        %v1263 = vpop.f32.mrf.mxu0
        %v1264 = vadd.f32 0.0, %v1263
        %v1265 = vpop.f32.mrf.mxu0
        %1266 = vdwg.mxu0
        %1268 = vrot.lane.b32.xlu0 %v1197, 64
        %v1269 = vpop.permute.xlu0 %1268
        %1271 = vrot.lane.b32.xlu0 %v1198, 64
        %v1272 = vpop.permute.xlu0 %1271
        %v1274 = vsel %vm1200, %v1269, 0
        %v1277 = vsel %vm1200, %v1272, 0
        %1279 = vmatpush.bf16.xpose.msra.mxu0 0
        %1280 = vmatpush.bf16.xpose.msra.mxu0 0
        %1281 = vmatpush.bf16.xpose.msra.mxu0 0
        %1282 = vmatpush.bf16.xpose.msra.mxu0 0
        %1283 = vmatpush.bf16.xpose.msra.mxu0 0
        %1284 = vmatpush.bf16.xpose.msra.mxu0 0
        %1285 = vmatpush.bf16.xpose.msra.mxu0 0
        %1286 = vmatpush.bf16.xpose.msra.mxu0 %v1277
        %1287 = vmatmul.bf16.gmra.mxu0 %v1274
        %v1288 = vpop.f32.mrf.mxu0
        %v1289 = vadd.f32 0.0, %v1288
        %v1290 = vpop.f32.mrf.mxu0
        %1291 = vdwg.mxu0
        %v1292 = vmul.f32 %v1289, 0.125
        %v1293 = vsel %vm1221, %v1292, -inf
        %1294 = vmax.xlane.f32.xlu0 %v1293
        %v1295 = vpop.xlane.xlu0 %1294
        %v1296 = vsub.f32 %v1292, %v1295
        %v1297 = vmul.f32 %v1296, 1.442695
        %v1298 = vpow.pop %v1297
        %v1299 = vsel %vm1221, %v1298, 0.0
        %1300 = vadd.xlane.f32.xlu0 %v1299
        %v1301 = vpop.xlane.xlu0 %1300
        %v1302 = vrcp.pop %v1301
        %v1303 = vmul.f32 %v1301, %v1302
        %v1304 = vsub.f32 1.0, %v1303
        %v1305 = vmul.f32 %v1302, %v1304
        %v1306 = vadd.f32 %v1302, %v1305
        %vm1307 = vweird.f32 %v1301
        %vm1308 = vweird.f32 %v1302
        %vm1309 = vmor %vm1307, %vm1308
        %v1310 = vsel %vm1309, %v1302, %v1306
        %v1311 = vand.u32 2147483647, %v1301
        %vm1312 = vcmp.eq.f32.partialorder %v1311, 8.507059e+37
        %v1313 = vand.u32 %v1301, 2147483648
        %v1314 = vor.u32 1.1754944e-38, %v1313
        %v1315 = vsel %vm1312, %v1314, %v1310
        %v1316 = vmul.f32 %v1298, %v1315
        %v1317 = vpack.c.bf16 %v1316, %v1316
        %1319 = vrot.lane.b32.xlu0 %v1199, 64
        %v1320 = vpop.permute.xlu0 %1319
        %v1322 = vsel %vm1221, %v1317, 0
        %v1325 = vsel %vm1250, %v1320, 0
        %1327 = vmatpush.bf16.msra.mxu0 0
        %1328 = vmatpush.bf16.msra.mxu0 0
        %1329 = vmatpush.bf16.msra.mxu0 0
        %1330 = vmatpush.bf16.msra.mxu0 0
        %1331 = vmatpush.bf16.msra.mxu0 0
        %1332 = vmatpush.bf16.msra.mxu0 0
        %1333 = vmatpush.bf16.msra.mxu0 0
        %1334 = vmatpush.bf16.msra.mxu0 %v1325
        %1335 = vmatmul.bf16.gmra.mxu0 %v1322
        %v1336 = vpop.f32.mrf.mxu0
        %v1337 = vadd.f32 0.0, %v1336
        %v1338 = vpop.f32.mrf.mxu0
        %1339 = vdwg.mxu0
        %v1340 = vpack.c.bf16 %v689, %v689
        %v1341 = vpack.c.bf16 %v1142, %v1142
        %v1342 = vpack.c.bf16 %v1194, %v1194
        %v1344 = vsel %vm1200, %v1340, 0
        %v1347 = vsel %vm1200, %v1341, 0
        %1349 = vmatpush.bf16.xpose.msra.mxu0 0
        %1350 = vmatpush.bf16.xpose.msra.mxu0 0
        %1351 = vmatpush.bf16.xpose.msra.mxu0 0
        %1352 = vmatpush.bf16.xpose.msra.mxu0 0
        %1353 = vmatpush.bf16.xpose.msra.mxu0 0
        %1354 = vmatpush.bf16.xpose.msra.mxu0 0
        %1355 = vmatpush.bf16.xpose.msra.mxu0 0
        %1356 = vmatpush.bf16.xpose.msra.mxu0 %v1347
        %1357 = vmatmul.bf16.gmra.mxu0 %v1344
        %v1358 = vpop.f32.mrf.mxu0
        %v1359 = vadd.f32 0.0, %v1358
        %v1360 = vpop.f32.mrf.mxu0
        %1361 = vdwg.mxu0
        %v1362 = vmul.f32 %v1359, 0.125
        %v1363 = vsel %vm1221, %v1362, -inf
        %1364 = vmax.xlane.f32.xlu0 %v1363
        %v1365 = vpop.xlane.xlu0 %1364
        %v1366 = vsub.f32 %v1362, %v1365
        %v1367 = vmul.f32 %v1366, 1.442695
        %v1368 = vpow.pop %v1367
        %v1369 = vsel %vm1221, %v1368, 0.0
        %1370 = vadd.xlane.f32.xlu0 %v1369
        %v1371 = vpop.xlane.xlu0 %1370
        %v1372 = vrcp.pop %v1371
        %v1373 = vmul.f32 %v1371, %v1372
        %v1374 = vsub.f32 1.0, %v1373
        %v1375 = vmul.f32 %v1372, %v1374
        %v1376 = vadd.f32 %v1372, %v1375
        %vm1377 = vweird.f32 %v1371
        %vm1378 = vweird.f32 %v1372
        %vm1379 = vmor %vm1377, %vm1378
        %v1380 = vsel %vm1379, %v1372, %v1376
        %v1381 = vand.u32 2147483647, %v1371
        %vm1382 = vcmp.eq.f32.partialorder %v1381, 8.507059e+37
        %v1383 = vand.u32 %v1371, 2147483648
        %v1384 = vor.u32 1.1754944e-38, %v1383
        %v1385 = vsel %vm1382, %v1384, %v1380
        %v1386 = vmul.f32 %v1368, %v1385
        %v1387 = vpack.c.bf16 %v1386, %v1386
        %v1389 = vsel %vm1221, %v1387, 0
        %v1392 = vsel %vm1250, %v1342, 0
        %1394 = vmatpush.bf16.msra.mxu0 0
        %1395 = vmatpush.bf16.msra.mxu0 0
        %1396 = vmatpush.bf16.msra.mxu0 0
        %1397 = vmatpush.bf16.msra.mxu0 0
        %1398 = vmatpush.bf16.msra.mxu0 0
        %1399 = vmatpush.bf16.msra.mxu0 0
        %1400 = vmatpush.bf16.msra.mxu0 0
        %1401 = vmatpush.bf16.msra.mxu0 %v1392
        %1402 = vmatmul.bf16.gmra.mxu0 %v1389
        %v1403 = vpop.f32.mrf.mxu0
        %v1404 = vadd.f32 0.0, %v1403
        %v1405 = vpop.f32.mrf.mxu0
        %1406 = vdwg.mxu0
        %1408 = vrot.lane.b32.xlu0 %v1340, 64
        %v1409 = vpop.permute.xlu0 %1408
        %1411 = vrot.lane.b32.xlu0 %v1341, 64
        %v1412 = vpop.permute.xlu0 %1411
        %v1414 = vsel %vm1200, %v1409, 0
        %v1417 = vsel %vm1200, %v1412, 0
        %1419 = vmatpush.bf16.xpose.msra.mxu0 0
        %1420 = vmatpush.bf16.xpose.msra.mxu0 0
        %1421 = vmatpush.bf16.xpose.msra.mxu0 0
        %1422 = vmatpush.bf16.xpose.msra.mxu0 0
        %1423 = vmatpush.bf16.xpose.msra.mxu0 0
        %1424 = vmatpush.bf16.xpose.msra.mxu0 0
        %1425 = vmatpush.bf16.xpose.msra.mxu0 0
        %1426 = vmatpush.bf16.xpose.msra.mxu0 %v1417
        %1427 = vmatmul.bf16.gmra.mxu0 %v1414
        %v1428 = vpop.f32.mrf.mxu0
        %v1429 = vadd.f32 0.0, %v1428
        %v1430 = vpop.f32.mrf.mxu0
        %1431 = vdwg.mxu0
        %v1432 = vmul.f32 %v1429, 0.125
        %v1433 = vsel %vm1221, %v1432, -inf
        %1434 = vmax.xlane.f32.xlu0 %v1433
        %v1435 = vpop.xlane.xlu0 %1434
        %v1436 = vsub.f32 %v1432, %v1435
        %v1437 = vmul.f32 %v1436, 1.442695
        %v1438 = vpow.pop %v1437
        %v1439 = vsel %vm1221, %v1438, 0.0
        %1440 = vadd.xlane.f32.xlu0 %v1439
        %v1441 = vpop.xlane.xlu0 %1440
        %v1442 = vrcp.pop %v1441
        %v1443 = vmul.f32 %v1441, %v1442
        %v1444 = vsub.f32 1.0, %v1443
        %v1445 = vmul.f32 %v1442, %v1444
        %v1446 = vadd.f32 %v1442, %v1445
        %vm1447 = vweird.f32 %v1441
        %vm1448 = vweird.f32 %v1442
        %vm1449 = vmor %vm1447, %vm1448
        %v1450 = vsel %vm1449, %v1442, %v1446
        %v1451 = vand.u32 2147483647, %v1441
        %vm1452 = vcmp.eq.f32.partialorder %v1451, 8.507059e+37
        %v1453 = vand.u32 %v1441, 2147483648
        %v1454 = vor.u32 1.1754944e-38, %v1453
        %v1455 = vsel %vm1452, %v1454, %v1450
        %v1456 = vmul.f32 %v1438, %v1455
        %v1457 = vpack.c.bf16 %v1456, %v1456
        %1459 = vrot.lane.b32.xlu0 %v1342, 64
        %v1460 = vpop.permute.xlu0 %1459
        %v1462 = vsel %vm1221, %v1457, 0
        %v1465 = vsel %vm1250, %v1460, 0
        %1467 = vmatpush.bf16.msra.mxu0 0
        %1468 = vmatpush.bf16.msra.mxu0 0
        %1469 = vmatpush.bf16.msra.mxu0 0
        %1470 = vmatpush.bf16.msra.mxu0 0
        %1471 = vmatpush.bf16.msra.mxu0 0
        %1472 = vmatpush.bf16.msra.mxu0 0
        %1473 = vmatpush.bf16.msra.mxu0 0
        %1474 = vmatpush.bf16.msra.mxu0 %v1465
        %1475 = vmatmul.bf16.gmra.mxu0 %v1462
        %v1476 = vpop.f32.mrf.mxu0
        %v1477 = vadd.f32 0.0, %v1476
        %v1478 = vpop.f32.mrf.mxu0
        %1479 = vdwg.mxu0
        %1481 = vrot.lane.b32.xlu0 %v1337, 64
        %v1482 = vpop.permute.xlu0 %1481
        %1485 = vrot.lane.b32.xlu0 %v1477, 64
        %v1486 = vpop.permute.xlu0 %1485
        %v1488 = vsel %vm1200, %v1264, %v1482
        %v1489 = vsel %vm1200, %v1404, %v1486
        %v1490 = vpack.c.bf16 %v1488, %v1488
        %v1491 = vpack.c.bf16 %v1489, %v1489
        %v1492 = vld [vmem:[#allocation6] sm:$0xff]
        %v1493 = vld [vmem:[#allocation6 + $0x8] sm:$0xff]
        %v1494 = vld [vmem:[#allocation6 + $0x10] sm:$0xff]
        %v1495 = vld [vmem:[#allocation6 + $0x18] sm:$0xff]
        %v1496 = vld [vmem:[#allocation6 + $0x20] sm:$0xff]
        %v1497 = vld [vmem:[#allocation6 + $0x28] sm:$0xff]
        %v1498 = vld [vmem:[#allocation6 + $0x30] sm:$0xff]
        %v1499 = vld [vmem:[#allocation6 + $0x38] sm:$0xff]
        %v1500 = vld [vmem:[#allocation6 + $0x40] sm:$0xff]
        %v1501 = vld [vmem:[#allocation6 + $0x48] sm:$0xff]
        %v1502 = vld [vmem:[#allocation6 + $0x50] sm:$0xff]
        %v1503 = vld [vmem:[#allocation6 + $0x58] sm:$0xff]
        %v1504 = vld [vmem:[#allocation6 + $0x60] sm:$0xff]
        %v1505 = vld [vmem:[#allocation6 + $0x68] sm:$0xff]
        %v1506 = vld [vmem:[#allocation6 + $0x70] sm:$0xff]
        %v1507 = vld [vmem:[#allocation6 + $0x78] sm:$0xff]
        %v1508 = vld [vmem:[#allocation6 + $0x80] sm:$0xff]
        %v1509 = vld [vmem:[#allocation6 + $0x88] sm:$0xff]
        %v1510 = vld [vmem:[#allocation6 + $0x90] sm:$0xff]
        %v1511 = vld [vmem:[#allocation6 + $0x98] sm:$0xff]
        %v1512 = vld [vmem:[#allocation6 + $0xa0] sm:$0xff]
        %v1513 = vld [vmem:[#allocation6 + $0xa8] sm:$0xff]
        %v1514 = vld [vmem:[#allocation6 + $0xb0] sm:$0xff]
        %v1515 = vld [vmem:[#allocation6 + $0xb8] sm:$0xff]
        %v1516 = vld [vmem:[#allocation6 + $0xc0] sm:$0xff]
        %v1517 = vld [vmem:[#allocation6 + $0xc8] sm:$0xff]
        %v1518 = vld [vmem:[#allocation6 + $0xd0] sm:$0xff]
        %v1519 = vld [vmem:[#allocation6 + $0xd8] sm:$0xff]
        %v1520 = vld [vmem:[#allocation6 + $0xe0] sm:$0xff]
        %v1521 = vld [vmem:[#allocation6 + $0xe8] sm:$0xff]
        %v1522 = vld [vmem:[#allocation6 + $0xf0] sm:$0xff]
        %v1523 = vld [vmem:[#allocation6 + $0xf8] sm:$0xff]
        %v1524 = vld [vmem:[%s7] sm:$0x3]
        %v1526 = vperm.slane %v1524, 0
        %v1527 = vperm.slane %v1524, 1
        %v1562 = vunpack.c.l.b16 %v1492
        %v1563 = vunpack.c.h.b16 %v1492
        %v1564 = vunpack.c.l.b16 %v1493
        %v1565 = vunpack.c.h.b16 %v1493
        %v1566 = vunpack.c.l.b16 %v1494
        %v1567 = vunpack.c.h.b16 %v1494
        %v1568 = vunpack.c.l.b16 %v1495
        %v1569 = vunpack.c.h.b16 %v1495
        %v1570 = vunpack.c.l.b16 %v1496
        %v1571 = vunpack.c.h.b16 %v1496
        %v1572 = vunpack.c.l.b16 %v1497
        %v1573 = vunpack.c.h.b16 %v1497
        %v1574 = vunpack.c.l.b16 %v1498
        %v1575 = vunpack.c.h.b16 %v1498
        %v1576 = vunpack.c.l.b16 %v1499
        %v1577 = vunpack.c.h.b16 %v1499
        %v1578 = vunpack.c.l.b16 %v1500
        %v1579 = vunpack.c.h.b16 %v1500
        %v1580 = vunpack.c.l.b16 %v1501
        %v1581 = vunpack.c.h.b16 %v1501
        %v1582 = vunpack.c.l.b16 %v1502
        %v1583 = vunpack.c.h.b16 %v1502
        %v1584 = vunpack.c.l.b16 %v1503
        %v1585 = vunpack.c.h.b16 %v1503
        %v1586 = vunpack.c.l.b16 %v1504
        %v1587 = vunpack.c.h.b16 %v1504
        %v1588 = vunpack.c.l.b16 %v1505
        %v1589 = vunpack.c.h.b16 %v1505
        %v1590 = vunpack.c.l.b16 %v1506
        %v1591 = vunpack.c.h.b16 %v1506
        %v1592 = vunpack.c.l.b16 %v1507
        %v1593 = vunpack.c.h.b16 %v1507
        %v1594 = vunpack.c.l.b16 %v1508
        %v1595 = vunpack.c.h.b16 %v1508
        %v1596 = vunpack.c.l.b16 %v1509
        %v1597 = vunpack.c.h.b16 %v1509
        %v1598 = vunpack.c.l.b16 %v1510
        %v1599 = vunpack.c.h.b16 %v1510
        %v1600 = vunpack.c.l.b16 %v1511
        %v1601 = vunpack.c.h.b16 %v1511
        %v1602 = vunpack.c.l.b16 %v1512
        %v1603 = vunpack.c.h.b16 %v1512
        %v1604 = vunpack.c.l.b16 %v1513
        %v1605 = vunpack.c.h.b16 %v1513
        %v1606 = vunpack.c.l.b16 %v1514
        %v1607 = vunpack.c.h.b16 %v1514
        %v1608 = vunpack.c.l.b16 %v1515
        %v1609 = vunpack.c.h.b16 %v1515
        %v1610 = vunpack.c.l.b16 %v1516
        %v1611 = vunpack.c.h.b16 %v1516
        %v1612 = vunpack.c.l.b16 %v1517
        %v1613 = vunpack.c.h.b16 %v1517
        %v1614 = vunpack.c.l.b16 %v1518
        %v1615 = vunpack.c.h.b16 %v1518
        %v1616 = vunpack.c.l.b16 %v1519
        %v1617 = vunpack.c.h.b16 %v1519
        %v1618 = vunpack.c.l.b16 %v1520
        %v1619 = vunpack.c.h.b16 %v1520
        %v1620 = vunpack.c.l.b16 %v1521
        %v1621 = vunpack.c.h.b16 %v1521
        %v1622 = vunpack.c.l.b16 %v1522
        %v1623 = vunpack.c.h.b16 %v1522
        %v1624 = vunpack.c.l.b16 %v1523
        %v1625 = vunpack.c.h.b16 %v1523
        %v1626 = vpack.c.b16 %v1564, %v1562
        %v1627 = vpack.c.b16 %v1565, %v1563
        %v1628 = vpack.c.b16 %v1568, %v1566
        %v1629 = vpack.c.b16 %v1569, %v1567
        %v1630 = vpack.c.b16 %v1572, %v1570
        %v1631 = vpack.c.b16 %v1573, %v1571
        %v1632 = vpack.c.b16 %v1576, %v1574
        %v1633 = vpack.c.b16 %v1577, %v1575
        %v1634 = vpack.c.b16 %v1580, %v1578
        %v1635 = vpack.c.b16 %v1581, %v1579
        %v1636 = vpack.c.b16 %v1584, %v1582
        %v1637 = vpack.c.b16 %v1585, %v1583
        %v1638 = vpack.c.b16 %v1588, %v1586
        %v1639 = vpack.c.b16 %v1589, %v1587
        %v1640 = vpack.c.b16 %v1592, %v1590
        %v1641 = vpack.c.b16 %v1593, %v1591
        %v1642 = vpack.c.b16 %v1596, %v1594
        %v1643 = vpack.c.b16 %v1597, %v1595
        %v1644 = vpack.c.b16 %v1600, %v1598
        %v1645 = vpack.c.b16 %v1601, %v1599
        %v1646 = vpack.c.b16 %v1604, %v1602
        %v1647 = vpack.c.b16 %v1605, %v1603
        %v1648 = vpack.c.b16 %v1608, %v1606
        %v1649 = vpack.c.b16 %v1609, %v1607
        %v1650 = vpack.c.b16 %v1612, %v1610
        %v1651 = vpack.c.b16 %v1613, %v1611
        %v1652 = vpack.c.b16 %v1616, %v1614
        %v1653 = vpack.c.b16 %v1617, %v1615
        %v1654 = vpack.c.b16 %v1620, %v1618
        %v1655 = vpack.c.b16 %v1621, %v1619
        %v1656 = vpack.c.b16 %v1624, %v1622
        %v1657 = vpack.c.b16 %v1625, %v1623
        %1690 = vmatpush.bf16.msra.mxu0 %v1640
        %1691 = vmatpush.bf16.msra.mxu0 %v1638
        %1692 = vmatpush.bf16.msra.mxu0 %v1636
        %1693 = vmatpush.bf16.msra.mxu0 %v1634
        %1694 = vmatpush.bf16.msra.mxu0 %v1632
        %1695 = vmatpush.bf16.msra.mxu0 %v1630
        %1696 = vmatpush.bf16.msra.mxu0 %v1628
        %1697 = vmatpush.bf16.msra.mxu0 %v1626
        %1698 = vmatmul.bf16.gmra.mxu0 %v1490
        %v1699 = vpop.f32.mrf.mxu0
        %v1700 = vadd.f32 %v1526, %v1699
        %v1701 = vpop.f32.mrf.mxu0
        %1702 = vdwg.mxu0
        %1703 = vmatpush.bf16.msra.mxu0 %v1656
        %1704 = vmatpush.bf16.msra.mxu0 %v1654
        %1705 = vmatpush.bf16.msra.mxu0 %v1652
        %1706 = vmatpush.bf16.msra.mxu0 %v1650
        %1707 = vmatpush.bf16.msra.mxu0 %v1648
        %1708 = vmatpush.bf16.msra.mxu0 %v1646
        %1709 = vmatpush.bf16.msra.mxu0 %v1644
        %1710 = vmatpush.bf16.msra.mxu0 %v1642
        %1711 = vmatmul.bf16.gmra.mxu0 %v1491
        %v1712 = vpop.f32.mrf.mxu0
        %v1713 = vadd.f32 %v1700, %v1712
        %v1714 = vpop.f32.mrf.mxu0
        %1715 = vdwg.mxu0
        %1716 = vmatpush.bf16.msra.mxu0 %v1641
        %1717 = vmatpush.bf16.msra.mxu0 %v1639
        %1718 = vmatpush.bf16.msra.mxu0 %v1637
        %1719 = vmatpush.bf16.msra.mxu0 %v1635
        %1720 = vmatpush.bf16.msra.mxu0 %v1633
        %1721 = vmatpush.bf16.msra.mxu0 %v1631
        %1722 = vmatpush.bf16.msra.mxu0 %v1629
        %1723 = vmatpush.bf16.msra.mxu0 %v1627
        %1724 = vmatmul.bf16.gmra.mxu0 %v1490
        %v1725 = vpop.f32.mrf.mxu0
        %v1726 = vadd.f32 %v1527, %v1725
        %v1727 = vpop.f32.mrf.mxu0
        %1728 = vdwg.mxu0
        %1729 = vmatpush.bf16.msra.mxu0 %v1657
        %1730 = vmatpush.bf16.msra.mxu0 %v1655
        %1731 = vmatpush.bf16.msra.mxu0 %v1653
        %1732 = vmatpush.bf16.msra.mxu0 %v1651
        %1733 = vmatpush.bf16.msra.mxu0 %v1649
        %1734 = vmatpush.bf16.msra.mxu0 %v1647
        %1735 = vmatpush.bf16.msra.mxu0 %v1645
        %1736 = vmatpush.bf16.msra.mxu0 %v1643
        %1737 = vmatmul.bf16.gmra.mxu0 %v1491
        %v1738 = vpop.f32.mrf.mxu0
        %v1739 = vadd.f32 %v1726, %v1738
        %v1740 = vpop.f32.mrf.mxu0
        %1741 = vdwg.mxu0
        %v1742 = vadd.f32 %v1713, %v433
        %v1743 = vadd.f32 %v1739, %v434
        %v1744 = vld [vmem:[%s8] sm:$0x3]
        %v1745 = vld [vmem:[%s9] sm:$0x3]
        %v1746 = vadd.f32 %v1742, %v1743
        %1747 = vadd.xlane.f32.xlu0 %v1746
        %v1748 = vpop.xlane.xlu0 %1747
        %v1749 = vrcp.pop 256.0
        %v1750 = vmul.f32 256.0, %v1749
        %v1751 = vsub.f32 1.0, %v1750
        %v1752 = vmul.f32 %v1749, %v1751
        %v1753 = vadd.f32 %v1749, %v1752
        %vm1754 = vweird.f32 %v1749
        %v1755 = vsel %vm1754, %v1749, %v1753
        %v1756 = vmul.f32 %v1748, %v1755
        %v1757 = vsub.f32 %v1742, %v1756
        %v1758 = vsub.f32 %v1743, %v1756
        %v1759 = vmul.f32 %v1757, %v1757
        %v1760 = vmul.f32 %v1758, %v1758
        %v1761 = vadd.f32 %v1759, %v1760
        %1762 = vadd.xlane.f32.xlu0 %v1761
        %v1763 = vpop.xlane.xlu0 %1762
        %v1764 = vmul.f32 %v1763, %v1755
        %v1765 = vadd.f32 %v1764, 1e-05
        %v1766 = vrsqrt.pop %v1765
        %v1767 = vmul.f32 %v1766, %v1765
        %v1768 = vmul.f32 %v1767, %v1766
        %v1769 = vmul.f32 0.5, %v1768
        %v1770 = vsub.f32 1.5, %v1769
        %v1771 = vmul.f32 %v1766, %v1770
        %vm1772 = vweird.f32 %v1765
        %vm1773 = vweird.f32 %v1766
        %vm1774 = vmor %vm1772, %vm1773
        %v1775 = vsel %vm1774, %v1766, %v1771
        %v1776 = vmul.f32 %v1757, %v1775
        %v1777 = vmul.f32 %v1758, %v1775
        %v1779 = vperm.slane %v1744, 0
        %v1780 = vperm.slane %v1744, 1
        %v1783 = vmul.f32 %v1776, %v1779
        %v1784 = vmul.f32 %v1777, %v1780
        %v1786 = vperm.slane %v1745, 0
        %v1787 = vperm.slane %v1745, 1
        %v1790 = vadd.f32 %v1783, %v1786
        %v1791 = vadd.f32 %v1784, %v1787
        %v1792 = vpack.c.bf16 %v1791, %v1790
        %1793 = vst [vmem:[%s429] sm:$0xff] %v1792
        %p1794 = scmp.lt.s32.totalorder %s23, 1
        %s1795 = scalar_select %p1794, %s23, 1
        %s1796 = smul.addr %s1795, 2
        %s1797 = smul.addr %s1796, 4
        %s1798 = scalar_lea.vmem %s10, %s1797
        // Predicated region
        $region73: #{text_decoder_forward.8} parent=59 // pred_check
          %p1799 = pneg %p261
        $region74: #{text_decoder_forward.8} parent=59 // pred_check_branch
          %1801 = sbr.rel (%p1799) target = $region76
        $region75: #{text_decoder_forward.8} parent=59 // pred_region
          _
        $region76: #{text_decoder_forward.8} parent=59 // pred_fallthru
          _
      $region60: #{text_decoder_forward.8} parent=5 // pred_fallthru
        _
      %p1802 = scmp.le.s32.totalorder 2, %s18
      // Predicated region
      $region77: #{text_decoder_forward.8} parent=5 // pred_check
        %p1803 = pneg %p1802
      $region78: #{text_decoder_forward.8} parent=5 // pred_check_branch
        %1805 = sbr.rel (%p1803) target = $region80
      $region79: #{text_decoder_forward.8} parent=5 // pred_region
        %s1806 = ssub.s32 %s18, 2
        // Predicated region
        $region81: #{text_decoder_forward.8} parent=79 // pred_check
          %p1807 = pneg %p267
        $region82: #{text_decoder_forward.8} parent=79 // pred_check_branch
          %1809 = sbr.rel (%p1807) target = $region84
        $region83: #{text_decoder_forward.8} parent=79 // pred_region
          %p1810 = scmp.lt.s32.totalorder %s24, 1
          %s1811 = scalar_select %p1810, %s24, 1
          %s1812 = smul.addr %s1811, 2
          %s1813 = smul.addr %s1812, 4
          %s1814 = scalar_lea.vmem %s10, %s1813
        $region84: #{text_decoder_forward.8} parent=79 // pred_fallthru
          _
      $region80: #{text_decoder_forward.8} parent=5 // pred_fallthru
        _
    $region6: #{text_decoder_forward.8} parent=1 // loop_footer
      %s22 = sadd.s32 1, %s18
    $region7: #{text_decoder_forward.8} parent=1 // loop_footer_branch
      %17 = sbr.rel target = $region3
    $region8: #{text_decoder_forward.8} parent=1 // loop_exit
      _
    %1815 = vsyncpa [#allocation3], 1
    %s1816 = scalar_lea.sflag [#allocation3], 1
    %1817 = vsyncpa %s1816, 1
    %1818 = vsyncpa [#allocation5], 1

// kernel: text_decoder_forward.13
$region0: #{text_decoder_forward.13}
  #allocation0 [shape = 'u32[]', space=smem, size = 0x4, offset = 0x4, fixed_abs, tag = 'smem constant byte address 0x4 - core index']
  #allocation1 [shape = 'u32[72,128]{1,0:T(1,128)}', space=vmem, size = 0x9000, scoped, tag = 'internal scratch']
  %s0 = inlined_call_operand.vmem [shape: bf16[16,256], index: 0, kind: input, shape index: {}]
  %s1 = inlined_call_operand.hbm [shape: bf16[256,512], index: 1, kind: input, shape index: {}]
  %s2 = inlined_call_operand.vmem [shape: f32[1,512], index: 2, kind: input, shape index: {}]
  %s3 = inlined_call_operand.hbm [shape: f32[16,512], index: 3, kind: output, shape index: {}]
  %s4 = sld [smem:[#allocation0]]
  $region26: #{text_decoder_forward.13} parent=0
    _
  %s6 = ssub.s32 1, %s4
  %s7 = scalar_select 0, %s6, %s4
  $region1: #{text_decoder_forward.13} parent=0
    #allocation2 [shape = 'u8[262144]{0}', space=vmem, size = 0x40000, scoped, tag = 'input window, operand 1, single buffered']
    #allocation3 [shape = 's32[1]{0}', space=sflag, size = 0x4, scoped, tag = 'scoped memory for text_decoder_forward.13']
    #allocation4 [shape = 's32[1]{0}', space=sflag, size = 0x4, scoped, tag = 'scoped memory for text_decoder_forward.13']
    #allocation5 [shape = 'u8[32768]{0}', space=vmem, size = 0x8000, scoped, tag = 'output window, operand 0, single buffered']
    %8 = vsyncpa [#allocation3], 0
    %9 = vsyncpa [#allocation4], 0
    // Predicated region
    $region2: #{text_decoder_forward.13} parent=1 // pred_check
      _
    $region3: #{text_decoder_forward.13} parent=1 // pred_check_branch
      %11 = sbr.rel (0) target = $region5
    $region4: #{text_decoder_forward.13} parent=1 // pred_region
      _
    $region5: #{text_decoder_forward.13} parent=1 // pred_fallthru
      _
    // Predicated region
    $region6: #{text_decoder_forward.13} parent=1 // pred_check
      _
    $region7: #{text_decoder_forward.13} parent=1 // pred_check_branch
      %13 = sbr.rel (0) target = $region9
    $region8: #{text_decoder_forward.13} parent=1 // pred_region
      %15 = vsyncadd [#allocation3], 0
      %s16 = sshll.u32 %s1, 4
      %s17 = int_to_ptr.hbm [resolvable:$true] %s16
      %s18 = sshll.u32 [#allocation2], 4
      %s19 = int_to_ptr.vmem [resolvable:$true] %s18
      %24 = dma.hbm_to_vmem [thread:$0]  %s17, 8192, %s19, [#allocation3], 256, 256, 16
    $region9: #{text_decoder_forward.13} parent=1 // pred_fallthru
      _
    // Predicated region
    $region10: #{text_decoder_forward.13} parent=1 // pred_check
      _
    $region11: #{text_decoder_forward.13} parent=1 // pred_check_branch
      %26 = sbr.rel (0) target = $region13
    $region12: #{text_decoder_forward.13} parent=1 // pred_region
      _
    $region13: #{text_decoder_forward.13} parent=1 // pred_fallthru
      _
    // Predicated region
    $region14: #{text_decoder_forward.13} parent=1 // pred_check
      _
    $region15: #{text_decoder_forward.13} parent=1 // pred_check_branch
      %28 = sbr.rel (0) target = $region17
    $region16: #{text_decoder_forward.13} parent=1 // pred_region
      %30 = dma.done [#allocation3], 8192
    $region17: #{text_decoder_forward.13} parent=1 // pred_fallthru
      _
    %v31 = vld [vmem:[%s0] sm:$0xff]
    %v32 = vld [vmem:[%s0 + $0x8] sm:$0xff]
    %v33 = vld [vmem:[#allocation2] sm:$0xff]
    %v34 = vld [vmem:[#allocation2 + $0x8] sm:$0xff]
    %v35 = vld [vmem:[#allocation2 + $0x10] sm:$0xff]
    %v36 = vld [vmem:[#allocation2 + $0x18] sm:$0xff]
    %v37 = vld [vmem:[#allocation2 + $0x20] sm:$0xff]
    %v38 = vld [vmem:[#allocation2 + $0x28] sm:$0xff]
    %v39 = vld [vmem:[#allocation2 + $0x30] sm:$0xff]
    %v40 = vld [vmem:[#allocation2 + $0x38] sm:$0xff]
    %v41 = vld [vmem:[#allocation2 + $0x40] sm:$0xff]
    %v42 = vld [vmem:[#allocation2 + $0x48] sm:$0xff]
    %v43 = vld [vmem:[#allocation2 + $0x50] sm:$0xff]
    %v44 = vld [vmem:[#allocation2 + $0x58] sm:$0xff]
    %v45 = vld [vmem:[#allocation2 + $0x60] sm:$0xff]
    %v46 = vld [vmem:[#allocation2 + $0x68] sm:$0xff]
    %v47 = vld [vmem:[#allocation2 + $0x70] sm:$0xff]
    %v48 = vld [vmem:[#allocation2 + $0x78] sm:$0xff]
    %v49 = vld [vmem:[#allocation2 + $0x80] sm:$0xff]
    %v50 = vld [vmem:[#allocation2 + $0x88] sm:$0xff]
    %v51 = vld [vmem:[#allocation2 + $0x90] sm:$0xff]
    %v52 = vld [vmem:[#allocation2 + $0x98] sm:$0xff]
    %v53 = vld [vmem:[#allocation2 + $0xa0] sm:$0xff]
    %v54 = vld [vmem:[#allocation2 + $0xa8] sm:$0xff]
    %v55 = vld [vmem:[#allocation2 + $0xb0] sm:$0xff]
    %v56 = vld [vmem:[#allocation2 + $0xb8] sm:$0xff]
    %v57 = vld [vmem:[#allocation2 + $0xc0] sm:$0xff]
    %v58 = vld [vmem:[#allocation2 + $0xc8] sm:$0xff]
    %v59 = vld [vmem:[#allocation2 + $0xd0] sm:$0xff]
    %v60 = vld [vmem:[#allocation2 + $0xd8] sm:$0xff]
    %v61 = vld [vmem:[#allocation2 + $0xe0] sm:$0xff]
    %v62 = vld [vmem:[#allocation2 + $0xe8] sm:$0xff]
    %v63 = vld [vmem:[#allocation2 + $0xf0] sm:$0xff]
    %v64 = vld [vmem:[#allocation2 + $0xf8] sm:$0xff]
    %v65 = vld [vmem:[#allocation2 + $0x100] sm:$0xff]
    %v66 = vld [vmem:[#allocation2 + $0x108] sm:$0xff]
    %v67 = vld [vmem:[#allocation2 + $0x110] sm:$0xff]
    %v68 = vld [vmem:[#allocation2 + $0x118] sm:$0xff]
    %v69 = vld [vmem:[#allocation2 + $0x120] sm:$0xff]
    %v70 = vld [vmem:[#allocation2 + $0x128] sm:$0xff]
    %v71 = vld [vmem:[#allocation2 + $0x130] sm:$0xff]
    %v72 = vld [vmem:[#allocation2 + $0x138] sm:$0xff]
    %v73 = vld [vmem:[#allocation2 + $0x140] sm:$0xff]
    %v74 = vld [vmem:[#allocation2 + $0x148] sm:$0xff]
    %v75 = vld [vmem:[#allocation2 + $0x150] sm:$0xff]
    %v76 = vld [vmem:[#allocation2 + $0x158] sm:$0xff]
    %v77 = vld [vmem:[#allocation2 + $0x160] sm:$0xff]
    %v78 = vld [vmem:[#allocation2 + $0x168] sm:$0xff]
    %v79 = vld [vmem:[#allocation2 + $0x170] sm:$0xff]
    %v80 = vld [vmem:[#allocation2 + $0x178] sm:$0xff]
    %v81 = vld [vmem:[#allocation2 + $0x180] sm:$0xff]
    %v82 = vld [vmem:[#allocation2 + $0x188] sm:$0xff]
    %v83 = vld [vmem:[#allocation2 + $0x190] sm:$0xff]
    %v84 = vld [vmem:[#allocation2 + $0x198] sm:$0xff]
    %v85 = vld [vmem:[#allocation2 + $0x1a0] sm:$0xff]
    %v86 = vld [vmem:[#allocation2 + $0x1a8] sm:$0xff]
    %v87 = vld [vmem:[#allocation2 + $0x1b0] sm:$0xff]
    %v88 = vld [vmem:[#allocation2 + $0x1b8] sm:$0xff]
    %v89 = vld [vmem:[#allocation2 + $0x1c0] sm:$0xff]
    %v90 = vld [vmem:[#allocation2 + $0x1c8] sm:$0xff]
    %v91 = vld [vmem:[#allocation2 + $0x1d0] sm:$0xff]
    %v92 = vld [vmem:[#allocation2 + $0x1d8] sm:$0xff]
    %v93 = vld [vmem:[#allocation2 + $0x1e0] sm:$0xff]
    %v94 = vld [vmem:[#allocation2 + $0x1e8] sm:$0xff]
    %v95 = vld [vmem:[#allocation2 + $0x1f0] sm:$0xff]
    %v96 = vld [vmem:[#allocation2 + $0x1f8] sm:$0xff]
    %v97 = vld [vmem:[%s2] sm:$0xf]
    %v99 = vperm.slane %v97, 0
    %v100 = vperm.slane %v97, 1
    %v101 = vperm.slane %v97, 2
    %v102 = vperm.slane %v97, 3
    %v109 = vunpack.c.l.b16 %v31
    %v110 = vunpack.c.h.b16 %v31
    %v111 = vunpack.c.l.b16 %v32
    %v112 = vunpack.c.h.b16 %v32
    %v113 = vpack.c.b16 %v111, %v109
    %v114 = vpack.c.b16 %v112, %v110
    %v181 = vunpack.c.l.b16 %v33
    %v182 = vunpack.c.h.b16 %v33
    %v183 = vunpack.c.l.b16 %v34
    %v184 = vunpack.c.h.b16 %v34
    %v185 = vunpack.c.l.b16 %v35
    %v186 = vunpack.c.h.b16 %v35
    %v187 = vunpack.c.l.b16 %v36
    %v188 = vunpack.c.h.b16 %v36
    %v189 = vunpack.c.l.b16 %v37
    %v190 = vunpack.c.h.b16 %v37
    %v191 = vunpack.c.l.b16 %v38
    %v192 = vunpack.c.h.b16 %v38
    %v193 = vunpack.c.l.b16 %v39
    %v194 = vunpack.c.h.b16 %v39
    %v195 = vunpack.c.l.b16 %v40
    %v196 = vunpack.c.h.b16 %v40
    %v197 = vunpack.c.l.b16 %v41
    %v198 = vunpack.c.h.b16 %v41
    %v199 = vunpack.c.l.b16 %v42
    %v200 = vunpack.c.h.b16 %v42
    %v201 = vunpack.c.l.b16 %v43
    %v202 = vunpack.c.h.b16 %v43
    %v203 = vunpack.c.l.b16 %v44
    %v204 = vunpack.c.h.b16 %v44
    %v205 = vunpack.c.l.b16 %v45
    %v206 = vunpack.c.h.b16 %v45
    %v207 = vunpack.c.l.b16 %v46
    %v208 = vunpack.c.h.b16 %v46
    %v209 = vunpack.c.l.b16 %v47
    %v210 = vunpack.c.h.b16 %v47
    %v211 = vunpack.c.l.b16 %v48
    %v212 = vunpack.c.h.b16 %v48
    %v213 = vunpack.c.l.b16 %v49
    %v214 = vunpack.c.h.b16 %v49
    %v215 = vunpack.c.l.b16 %v50
    %v216 = vunpack.c.h.b16 %v50
    %v217 = vunpack.c.l.b16 %v51
    %v218 = vunpack.c.h.b16 %v51
    %v219 = vunpack.c.l.b16 %v52
    %v220 = vunpack.c.h.b16 %v52
    %v221 = vunpack.c.l.b16 %v53
    %v222 = vunpack.c.h.b16 %v53
    %v223 = vunpack.c.l.b16 %v54
    %v224 = vunpack.c.h.b16 %v54
    %v225 = vunpack.c.l.b16 %v55
    %v226 = vunpack.c.h.b16 %v55
    %v227 = vunpack.c.l.b16 %v56
    %v228 = vunpack.c.h.b16 %v56
    %v229 = vunpack.c.l.b16 %v57
    %v230 = vunpack.c.h.b16 %v57
    %v231 = vunpack.c.l.b16 %v58
    %v232 = vunpack.c.h.b16 %v58
    %v233 = vunpack.c.l.b16 %v59
    %v234 = vunpack.c.h.b16 %v59
    %v235 = vunpack.c.l.b16 %v60
    %v236 = vunpack.c.h.b16 %v60
    %v237 = vunpack.c.l.b16 %v61
    %v238 = vunpack.c.h.b16 %v61
    %v239 = vunpack.c.l.b16 %v62
    %v240 = vunpack.c.h.b16 %v62
    %v241 = vunpack.c.l.b16 %v63
    %v242 = vunpack.c.h.b16 %v63
    %v243 = vunpack.c.l.b16 %v64
    %v244 = vunpack.c.h.b16 %v64
    %v245 = vunpack.c.l.b16 %v65
    %v246 = vunpack.c.h.b16 %v65
    %v247 = vunpack.c.l.b16 %v66
    %v248 = vunpack.c.h.b16 %v66
    %v249 = vunpack.c.l.b16 %v67
    %v250 = vunpack.c.h.b16 %v67
    %v251 = vunpack.c.l.b16 %v68
    %v252 = vunpack.c.h.b16 %v68
    %v253 = vunpack.c.l.b16 %v69
    %v254 = vunpack.c.h.b16 %v69
    %v255 = vunpack.c.l.b16 %v70
    %v256 = vunpack.c.h.b16 %v70
    %v257 = vunpack.c.l.b16 %v71
    %v258 = vunpack.c.h.b16 %v71
    %v259 = vunpack.c.l.b16 %v72
    %v260 = vunpack.c.h.b16 %v72
    %v261 = vunpack.c.l.b16 %v73
    %v262 = vunpack.c.h.b16 %v73
    %v263 = vunpack.c.l.b16 %v74
    %v264 = vunpack.c.h.b16 %v74
    %v265 = vunpack.c.l.b16 %v75
    %v266 = vunpack.c.h.b16 %v75
    %v267 = vunpack.c.l.b16 %v76
    %v268 = vunpack.c.h.b16 %v76
    %v269 = vunpack.c.l.b16 %v77
    %v270 = vunpack.c.h.b16 %v77
    %v271 = vunpack.c.l.b16 %v78
    %v272 = vunpack.c.h.b16 %v78
    %v273 = vunpack.c.l.b16 %v79
    %v274 = vunpack.c.h.b16 %v79
    %v275 = vunpack.c.l.b16 %v80
    %v276 = vunpack.c.h.b16 %v80
    %v277 = vunpack.c.l.b16 %v81
    %v278 = vunpack.c.h.b16 %v81
    %v279 = vunpack.c.l.b16 %v82
    %v280 = vunpack.c.h.b16 %v82
    %v281 = vunpack.c.l.b16 %v83
    %v282 = vunpack.c.h.b16 %v83
    %v283 = vunpack.c.l.b16 %v84
    %v284 = vunpack.c.h.b16 %v84
    %v285 = vunpack.c.l.b16 %v85
    %v286 = vunpack.c.h.b16 %v85
    %v287 = vunpack.c.l.b16 %v86
    %v288 = vunpack.c.h.b16 %v86
    %v289 = vunpack.c.l.b16 %v87
    %v290 = vunpack.c.h.b16 %v87
    %v291 = vunpack.c.l.b16 %v88
    %v292 = vunpack.c.h.b16 %v88
    %v293 = vunpack.c.l.b16 %v89
    %v294 = vunpack.c.h.b16 %v89
    %v295 = vunpack.c.l.b16 %v90
    %v296 = vunpack.c.h.b16 %v90
    %v297 = vunpack.c.l.b16 %v91
    %v298 = vunpack.c.h.b16 %v91
    %v299 = vunpack.c.l.b16 %v92
    %v300 = vunpack.c.h.b16 %v92
    %v301 = vunpack.c.l.b16 %v93
    %v302 = vunpack.c.h.b16 %v93
    %v303 = vunpack.c.l.b16 %v94
    %v304 = vunpack.c.h.b16 %v94
    %v305 = vunpack.c.l.b16 %v95
    %v306 = vunpack.c.h.b16 %v95
    %v307 = vunpack.c.l.b16 %v96
    %v308 = vunpack.c.h.b16 %v96
    %v309 = vpack.c.b16 %v185, %v181
    %v310 = vpack.c.b16 %v186, %v182
    %v311 = vpack.c.b16 %v187, %v183
    %v312 = vpack.c.b16 %v188, %v184
    %v313 = vpack.c.b16 %v193, %v189
    %v314 = vpack.c.b16 %v194, %v190
    %v315 = vpack.c.b16 %v195, %v191
    %v316 = vpack.c.b16 %v196, %v192
    %v317 = vpack.c.b16 %v201, %v197
    %v318 = vpack.c.b16 %v202, %v198
    %v319 = vpack.c.b16 %v203, %v199
    %v320 = vpack.c.b16 %v204, %v200
    %v321 = vpack.c.b16 %v209, %v205
    %v322 = vpack.c.b16 %v210, %v206
    %v323 = vpack.c.b16 %v211, %v207
    %v324 = vpack.c.b16 %v212, %v208
    %v325 = vpack.c.b16 %v217, %v213
    %v326 = vpack.c.b16 %v218, %v214
    %v327 = vpack.c.b16 %v219, %v215
    %v328 = vpack.c.b16 %v220, %v216
    %v329 = vpack.c.b16 %v225, %v221
    %v330 = vpack.c.b16 %v226, %v222
    %v331 = vpack.c.b16 %v227, %v223
    %v332 = vpack.c.b16 %v228, %v224
    %v333 = vpack.c.b16 %v233, %v229
    %v334 = vpack.c.b16 %v234, %v230
    %v335 = vpack.c.b16 %v235, %v231
    %v336 = vpack.c.b16 %v236, %v232
    %v337 = vpack.c.b16 %v241, %v237
    %v338 = vpack.c.b16 %v242, %v238
    %v339 = vpack.c.b16 %v243, %v239
    %v340 = vpack.c.b16 %v244, %v240
    %v341 = vpack.c.b16 %v249, %v245
    %v342 = vpack.c.b16 %v250, %v246
    %v343 = vpack.c.b16 %v251, %v247
    %v344 = vpack.c.b16 %v252, %v248
    %v345 = vpack.c.b16 %v257, %v253
    %v346 = vpack.c.b16 %v258, %v254
    %v347 = vpack.c.b16 %v259, %v255
    %v348 = vpack.c.b16 %v260, %v256
    %v349 = vpack.c.b16 %v265, %v261
    %v350 = vpack.c.b16 %v266, %v262
    %v351 = vpack.c.b16 %v267, %v263
    %v352 = vpack.c.b16 %v268, %v264
    %v353 = vpack.c.b16 %v273, %v269
    %v354 = vpack.c.b16 %v274, %v270
    %v355 = vpack.c.b16 %v275, %v271
    %v356 = vpack.c.b16 %v276, %v272
    %v357 = vpack.c.b16 %v281, %v277
    %v358 = vpack.c.b16 %v282, %v278
    %v359 = vpack.c.b16 %v283, %v279
    %v360 = vpack.c.b16 %v284, %v280
    %v361 = vpack.c.b16 %v289, %v285
    %v362 = vpack.c.b16 %v290, %v286
    %v363 = vpack.c.b16 %v291, %v287
    %v364 = vpack.c.b16 %v292, %v288
    %v365 = vpack.c.b16 %v297, %v293
    %v366 = vpack.c.b16 %v298, %v294
    %v367 = vpack.c.b16 %v299, %v295
    %v368 = vpack.c.b16 %v300, %v296
    %v369 = vpack.c.b16 %v305, %v301
    %v370 = vpack.c.b16 %v306, %v302
    %v371 = vpack.c.b16 %v307, %v303
    %v372 = vpack.c.b16 %v308, %v304
    %437 = vmatpush.bf16.msra.mxu0 %v337
    %438 = vmatpush.bf16.msra.mxu0 %v333
    %439 = vmatpush.bf16.msra.mxu0 %v329
    %440 = vmatpush.bf16.msra.mxu0 %v325
    %441 = vmatpush.bf16.msra.mxu0 %v321
    %442 = vmatpush.bf16.msra.mxu0 %v317
    %443 = vmatpush.bf16.msra.mxu0 %v313
    %444 = vmatpush.bf16.msra.mxu0 %v309
    %445 = vmatmul.bf16.gmra.mxu0 %v113
    %v446 = vpop.f32.mrf.mxu0
    %v447 = vadd.f32 %v99, %v446
    %v448 = vpop.f32.mrf.mxu0
    %v449 = vadd.f32 %v99, %v448
    %450 = vdwg.mxu0
    %451 = vmatpush.bf16.msra.mxu0 %v369
    %452 = vmatpush.bf16.msra.mxu0 %v365
    %453 = vmatpush.bf16.msra.mxu0 %v361
    %454 = vmatpush.bf16.msra.mxu0 %v357
    %455 = vmatpush.bf16.msra.mxu0 %v353
    %456 = vmatpush.bf16.msra.mxu0 %v349
    %457 = vmatpush.bf16.msra.mxu0 %v345
    %458 = vmatpush.bf16.msra.mxu0 %v341
    %459 = vmatmul.bf16.gmra.mxu0 %v114
    %v460 = vpop.f32.mrf.mxu0
    %v461 = vadd.f32 %v447, %v460
    %v462 = vpop.f32.mrf.mxu0
    %v463 = vadd.f32 %v449, %v462
    %464 = vdwg.mxu0
    %465 = vmatpush.bf16.msra.mxu0 %v338
    %466 = vmatpush.bf16.msra.mxu0 %v334
    %467 = vmatpush.bf16.msra.mxu0 %v330
    %468 = vmatpush.bf16.msra.mxu0 %v326
    %469 = vmatpush.bf16.msra.mxu0 %v322
    %470 = vmatpush.bf16.msra.mxu0 %v318
    %471 = vmatpush.bf16.msra.mxu0 %v314
    %472 = vmatpush.bf16.msra.mxu0 %v310
    %473 = vmatmul.bf16.gmra.mxu0 %v113
    %v474 = vpop.f32.mrf.mxu0
    %v475 = vadd.f32 %v100, %v474
    %v476 = vpop.f32.mrf.mxu0
    %v477 = vadd.f32 %v100, %v476
    %478 = vdwg.mxu0
    %479 = vmatpush.bf16.msra.mxu0 %v370
    %480 = vmatpush.bf16.msra.mxu0 %v366
    %481 = vmatpush.bf16.msra.mxu0 %v362
    %482 = vmatpush.bf16.msra.mxu0 %v358
    %483 = vmatpush.bf16.msra.mxu0 %v354
    %484 = vmatpush.bf16.msra.mxu0 %v350
    %485 = vmatpush.bf16.msra.mxu0 %v346
    %486 = vmatpush.bf16.msra.mxu0 %v342
    %487 = vmatmul.bf16.gmra.mxu0 %v114
    %v488 = vpop.f32.mrf.mxu0
    %v489 = vadd.f32 %v475, %v488
    %v490 = vpop.f32.mrf.mxu0
    %v491 = vadd.f32 %v477, %v490
    %492 = vdwg.mxu0
    %493 = vmatpush.bf16.msra.mxu0 %v339
    %494 = vmatpush.bf16.msra.mxu0 %v335
    %495 = vmatpush.bf16.msra.mxu0 %v331
    %496 = vmatpush.bf16.msra.mxu0 %v327
    %497 = vmatpush.bf16.msra.mxu0 %v323
    %498 = vmatpush.bf16.msra.mxu0 %v319
    %499 = vmatpush.bf16.msra.mxu0 %v315
    %500 = vmatpush.bf16.msra.mxu0 %v311
    %501 = vmatmul.bf16.gmra.mxu0 %v113
    %v502 = vpop.f32.mrf.mxu0
    %v503 = vadd.f32 %v101, %v502
    %v504 = vpop.f32.mrf.mxu0
    %v505 = vadd.f32 %v101, %v504
    %506 = vdwg.mxu0
    %507 = vmatpush.bf16.msra.mxu0 %v371
    %508 = vmatpush.bf16.msra.mxu0 %v367
    %509 = vmatpush.bf16.msra.mxu0 %v363
    %510 = vmatpush.bf16.msra.mxu0 %v359
    %511 = vmatpush.bf16.msra.mxu0 %v355
    %512 = vmatpush.bf16.msra.mxu0 %v351
    %513 = vmatpush.bf16.msra.mxu0 %v347
    %514 = vmatpush.bf16.msra.mxu0 %v343
    %515 = vmatmul.bf16.gmra.mxu0 %v114
    %v516 = vpop.f32.mrf.mxu0
    %v517 = vadd.f32 %v503, %v516
    %v518 = vpop.f32.mrf.mxu0
    %v519 = vadd.f32 %v505, %v518
    %520 = vdwg.mxu0
    %521 = vmatpush.bf16.msra.mxu0 %v340
    %522 = vmatpush.bf16.msra.mxu0 %v336
    %523 = vmatpush.bf16.msra.mxu0 %v332
    %524 = vmatpush.bf16.msra.mxu0 %v328
    %525 = vmatpush.bf16.msra.mxu0 %v324
    %526 = vmatpush.bf16.msra.mxu0 %v320
    %527 = vmatpush.bf16.msra.mxu0 %v316
    %528 = vmatpush.bf16.msra.mxu0 %v312
    %529 = vmatmul.bf16.gmra.mxu0 %v113
    %v530 = vpop.f32.mrf.mxu0
    %v531 = vadd.f32 %v102, %v530
    %v532 = vpop.f32.mrf.mxu0
    %v533 = vadd.f32 %v102, %v532
    %534 = vdwg.mxu0
    %535 = vmatpush.bf16.msra.mxu0 %v372
    %536 = vmatpush.bf16.msra.mxu0 %v368
    %537 = vmatpush.bf16.msra.mxu0 %v364
    %538 = vmatpush.bf16.msra.mxu0 %v360
    %539 = vmatpush.bf16.msra.mxu0 %v356
    %540 = vmatpush.bf16.msra.mxu0 %v352
    %541 = vmatpush.bf16.msra.mxu0 %v348
    %542 = vmatpush.bf16.msra.mxu0 %v344
    %543 = vmatmul.bf16.gmra.mxu0 %v114
    %v544 = vpop.f32.mrf.mxu0
    %v545 = vadd.f32 %v531, %v544
    %v546 = vpop.f32.mrf.mxu0
    %v547 = vadd.f32 %v533, %v546
    %548 = vdwg.mxu0
    %549 = vst [vmem:[#allocation5] sm:$0xff] %v461
    %550 = vst [vmem:[#allocation5 + $0x8] sm:$0xff] %v489
    %551 = vst [vmem:[#allocation5 + $0x10] sm:$0xff] %v517
    %552 = vst [vmem:[#allocation5 + $0x18] sm:$0xff] %v545
    %553 = vst [vmem:[#allocation5 + $0x20] sm:$0xff] %v463
    %554 = vst [vmem:[#allocation5 + $0x28] sm:$0xff] %v491
    %555 = vst [vmem:[#allocation5 + $0x30] sm:$0xff] %v519
    %556 = vst [vmem:[#allocation5 + $0x38] sm:$0xff] %v547
    // Predicated region
    $region18: #{text_decoder_forward.13} parent=1 // pred_check
      _
    $region19: #{text_decoder_forward.13} parent=1 // pred_check_branch
      %558 = sbr.rel (0) target = $region21
    $region20: #{text_decoder_forward.13} parent=1 // pred_region
      %560 = vsyncadd [#allocation4], 0
      %s561 = sshll.u32 [#allocation5], 4
      %s562 = int_to_ptr.vmem [resolvable:$true] %s561
      %s563 = sshll.u32 %s3, 4
      %s564 = int_to_ptr.hbm [resolvable:$true] %s563
      %569 = dma.vmem_to_hbm [thread:$0]  %s562, 1024, %s564, [#allocation4], 512, 512, 32
    $region21: #{text_decoder_forward.13} parent=1 // pred_fallthru
      _
    // Predicated region
    $region22: #{text_decoder_forward.13} parent=1 // pred_check
      _
    $region23: #{text_decoder_forward.13} parent=1 // pred_check_branch
      %571 = sbr.rel (0) target = $region25
    $region24: #{text_decoder_forward.13} parent=1 // pred_region
      %573 = dma.done [#allocation4], 1024
    $region25: #{text_decoder_forward.13} parent=1 // pred_fallthru
      _
    %574 = vsyncpa [#allocation3], 1
    %575 = vsyncpa [#allocation4], 1

// kernel: text_decoder_forward.9
$region0: #{text_decoder_forward.9}
  #allocation0 [shape = 'u32[]', space=smem, size = 0x4, offset = 0x4, fixed_abs, tag = 'smem constant byte address 0x4 - core index']
  #allocation1 [shape = 'u32[72,128]{1,0:T(1,128)}', space=vmem, size = 0x9000, scoped, tag = 'internal scratch']
  %s0 = inlined_call_operand.vmem [shape: bf16[2,8,256], index: 0, kind: input, shape index: {}]
  %s1 = inlined_call_operand.hbm [shape: bf16[256,2048], index: 1, kind: input, shape index: {}]
  %s2 = inlined_call_operand.vmem [shape: f32[1,2048], index: 2, kind: input, shape index: {}]
  %s3 = inlined_call_operand.hbm [shape: bf16[2048,256], index: 3, kind: input, shape index: {}]
  %s4 = inlined_call_operand.vmem [shape: f32[1,256], index: 4, kind: input, shape index: {}]
  %s5 = inlined_call_operand.vmem [shape: f32[1,256], index: 5, kind: input, shape index: {}]
  %s6 = inlined_call_operand.vmem [shape: f32[1,256], index: 6, kind: input, shape index: {}]
  %s7 = inlined_call_operand.vmem [shape: bf16[2,8,256], index: 7, kind: output, shape index: {}]
  %s8 = sld [smem:[#allocation0]]
  $region69: #{text_decoder_forward.9} parent=0
    _
  %s10 = ssub.s32 1, %s8
  %s11 = scalar_select 0, %s10, %s8
  $region1: #{text_decoder_forward.9} parent=0
    #allocation2 [shape = 'u8[1048576]{0}', space=vmem, size = 0x100000, scoped, tag = 'input window, operand 1, single buffered']
    #allocation3 [shape = 's32[2]{0}', space=sflag, size = 0x8, scoped, tag = 'scoped memory for text_decoder_forward.9']
    #allocation4 [shape = 'u8[1048576]{0}', space=vmem, size = 0x100000, scoped, tag = 'input window, operand 3, single buffered']
    #allocation5 [shape = 's32[1]{0}', space=sflag, size = 0x4, scoped, tag = 'scoped memory for text_decoder_forward.9']
    %12 = vsyncpa [#allocation3], 0
    %13 = vsyncpa [#allocation5], 0
    loop: start=0, step=1, limit=4
    $region2: #{text_decoder_forward.9} parent=1 // loop_pre_header
      _
    $region3: #{text_decoder_forward.9} parent=1 // loop_header
      %s15 = sphi 0, %s19
      %p16 = scmp.ge.s32.totalorder %s15, 4
      %s25 = sphi 0, %s27
      %s28 = sphi 0, %s25
      %s29 = sphi 0, %s28
      %s45 = sphi 0, %s29
      %s49 = sphi 0, %s49
      %s51 = sphi 0, %s49
      %s52 = sphi 0, %s51
      %s66 = sphi 0, %s52
      %s70 = sphi 0, %s70
      %s72 = sphi 0, %s70
      %s73 = sphi 0, %s72
      %s87 = sphi 0, %s73
      %s91 = sphi 0, %s91
      %s93 = sphi 0, %s91
      %s94 = sphi 0, %s93
      %s108 = sphi 0, %s94
      %s112 = sphi 0, %s112
      %s114 = sphi 0, %s112
      %s115 = sphi 0, %s114
      %s129 = sphi 0, %s115
      %s133 = sphi 0, %s133
      %s135 = sphi 0, %s133
      %s136 = sphi 0, %s135
      %s150 = sphi 0, %s136
      %s154 = sphi 0, %s154
      %s156 = sphi 0, %s154
      %s157 = sphi 0, %s156
      %s171 = sphi 0, %s157
      %s177 = sphi 0, %s179
      %s180 = sphi 0, %s177
      %s181 = sphi 0, %s180
      %s197 = sphi 0, %s181
    $region4: #{text_decoder_forward.9} parent=1 // loop_header_branch
      %18 = sbr.rel (%p16) target = $region8
    $region5: #{text_decoder_forward.9} parent=1 // loop_body
      %s20 = ssub.s32 %s15, 1
      %s21 = ssub.s32 %s15, 2
      %s22 = sadd.s32 %s15, 1
      %s23 = ssub.s32 %s15, %s22
      %p24 = scmp.eq.s32.totalorder %s23, 0
      %s26 = sadd.s32 %s25, 1
      %s27 = scalar_select %p24, %s25, %s26
      %p30 = pneg %p24
      %p31 = scmp.eq.s32.totalorder %s15, 1
      %p32 = por %p30, %p31
      %p33 = scmp.ne.s32.totalorder %s25, %s28
      %p34 = scmp.eq.s32.totalorder %s15, 0
      %p35 = por %p33, %p34
      %p36 = scmp.ne.s32.totalorder %s25, %s28
      %p37 = scmp.eq.s32.totalorder %s20, 1
      %p38 = por %p36, %p37
      %p39 = scmp.ne.s32.totalorder %s28, %s29
      %p40 = scmp.eq.s32.totalorder %s20, 0
      %p41 = por %p39, %p40
      %p42 = scmp.ne.s32.totalorder %s28, %s29
      %p43 = scmp.eq.s32.totalorder %s21, 1
      %p44 = por %p42, %p43
      %p46 = scmp.ne.s32.totalorder %s29, %s45
      %p47 = scmp.eq.s32.totalorder %s21, 0
      %p48 = por %p46, %p47
      %s50 = sadd.s32 %s49, 1
      %p53 = scmp.eq.s32.totalorder %s15, 1
      %p54 = scmp.ne.s32.totalorder %s49, %s51
      %p55 = scmp.eq.s32.totalorder %s15, 0
      %p56 = por %p54, %p55
      %p57 = scmp.ne.s32.totalorder %s49, %s51
      %p58 = scmp.eq.s32.totalorder %s20, 1
      %p59 = por %p57, %p58
      %p60 = scmp.ne.s32.totalorder %s51, %s52
      %p61 = scmp.eq.s32.totalorder %s20, 0
      %p62 = por %p60, %p61
      %p63 = scmp.ne.s32.totalorder %s51, %s52
      %p64 = scmp.eq.s32.totalorder %s21, 1
      %p65 = por %p63, %p64
      %p67 = scmp.ne.s32.totalorder %s52, %s66
      %p68 = scmp.eq.s32.totalorder %s21, 0
      %p69 = por %p67, %p68
      %s71 = sadd.s32 %s70, 1
      %p74 = scmp.eq.s32.totalorder %s15, 1
      %p75 = scmp.ne.s32.totalorder %s70, %s72
      %p76 = scmp.eq.s32.totalorder %s15, 0
      %p77 = por %p75, %p76
      %p78 = scmp.ne.s32.totalorder %s70, %s72
      %p79 = scmp.eq.s32.totalorder %s20, 1
      %p80 = por %p78, %p79
      %p81 = scmp.ne.s32.totalorder %s72, %s73
      %p82 = scmp.eq.s32.totalorder %s20, 0
      %p83 = por %p81, %p82
      %p84 = scmp.ne.s32.totalorder %s72, %s73
      %p85 = scmp.eq.s32.totalorder %s21, 1
      %p86 = por %p84, %p85
      %p88 = scmp.ne.s32.totalorder %s73, %s87
      %p89 = scmp.eq.s32.totalorder %s21, 0
      %p90 = por %p88, %p89
      %s92 = sadd.s32 %s91, 1
      %p95 = scmp.eq.s32.totalorder %s15, 1
      %p96 = scmp.ne.s32.totalorder %s91, %s93
      %p97 = scmp.eq.s32.totalorder %s15, 0
      %p98 = por %p96, %p97
      %p99 = scmp.ne.s32.totalorder %s91, %s93
      %p100 = scmp.eq.s32.totalorder %s20, 1
      %p101 = por %p99, %p100
      %p102 = scmp.ne.s32.totalorder %s93, %s94
      %p103 = scmp.eq.s32.totalorder %s20, 0
      %p104 = por %p102, %p103
      %p105 = scmp.ne.s32.totalorder %s93, %s94
      %p106 = scmp.eq.s32.totalorder %s21, 1
      %p107 = por %p105, %p106
      %p109 = scmp.ne.s32.totalorder %s94, %s108
      %p110 = scmp.eq.s32.totalorder %s21, 0
      %p111 = por %p109, %p110
      %s113 = sadd.s32 %s112, 1
      %p116 = scmp.eq.s32.totalorder %s15, 1
      %p117 = scmp.ne.s32.totalorder %s112, %s114
      %p118 = scmp.eq.s32.totalorder %s15, 0
      %p119 = por %p117, %p118
      %p120 = scmp.ne.s32.totalorder %s112, %s114
      %p121 = scmp.eq.s32.totalorder %s20, 1
      %p122 = por %p120, %p121
      %p123 = scmp.ne.s32.totalorder %s114, %s115
      %p124 = scmp.eq.s32.totalorder %s20, 0
      %p125 = por %p123, %p124
      %p126 = scmp.ne.s32.totalorder %s114, %s115
      %p127 = scmp.eq.s32.totalorder %s21, 1
      %p128 = por %p126, %p127
      %p130 = scmp.ne.s32.totalorder %s115, %s129
      %p131 = scmp.eq.s32.totalorder %s21, 0
      %p132 = por %p130, %p131
      %s134 = sadd.s32 %s133, 1
      %p137 = scmp.eq.s32.totalorder %s15, 1
      %p138 = scmp.ne.s32.totalorder %s133, %s135
      %p139 = scmp.eq.s32.totalorder %s15, 0
      %p140 = por %p138, %p139
      %p141 = scmp.ne.s32.totalorder %s133, %s135
      %p142 = scmp.eq.s32.totalorder %s20, 1
      %p143 = por %p141, %p142
      %p144 = scmp.ne.s32.totalorder %s135, %s136
      %p145 = scmp.eq.s32.totalorder %s20, 0
      %p146 = por %p144, %p145
      %p147 = scmp.ne.s32.totalorder %s135, %s136
      %p148 = scmp.eq.s32.totalorder %s21, 1
      %p149 = por %p147, %p148
      %p151 = scmp.ne.s32.totalorder %s136, %s150
      %p152 = scmp.eq.s32.totalorder %s21, 0
      %p153 = por %p151, %p152
      %s155 = sadd.s32 %s154, 1
      %p158 = scmp.eq.s32.totalorder %s15, 1
      %p159 = scmp.ne.s32.totalorder %s154, %s156
      %p160 = scmp.eq.s32.totalorder %s15, 0
      %p161 = por %p159, %p160
      %p162 = scmp.ne.s32.totalorder %s154, %s156
      %p163 = scmp.eq.s32.totalorder %s20, 1
      %p164 = por %p162, %p163
      %p165 = scmp.ne.s32.totalorder %s156, %s157
      %p166 = scmp.eq.s32.totalorder %s20, 0
      %p167 = por %p165, %p166
      %p168 = scmp.ne.s32.totalorder %s156, %s157
      %p169 = scmp.eq.s32.totalorder %s21, 1
      %p170 = por %p168, %p169
      %p172 = scmp.ne.s32.totalorder %s157, %s171
      %p173 = scmp.eq.s32.totalorder %s21, 0
      %p174 = por %p172, %p173
      %s175 = ssub.s32 %s15, %s22
      %p176 = scmp.eq.s32.totalorder %s175, 0
      %s178 = sadd.s32 %s177, 1
      %s179 = scalar_select %p176, %s177, %s178
      %p182 = pneg %p176
      %p183 = scmp.eq.s32.totalorder %s15, 1
      %p184 = por %p182, %p183
      %p185 = scmp.ne.s32.totalorder %s177, %s180
      %p186 = scmp.eq.s32.totalorder %s15, 0
      %p187 = por %p185, %p186
      %p188 = scmp.ne.s32.totalorder %s177, %s180
      %p189 = scmp.eq.s32.totalorder %s20, 1
      %p190 = por %p188, %p189
      %p191 = scmp.ne.s32.totalorder %s180, %s181
      %p192 = scmp.eq.s32.totalorder %s20, 0
      %p193 = por %p191, %p192
      %p194 = scmp.ne.s32.totalorder %s180, %s181
      %p195 = scmp.eq.s32.totalorder %s21, 1
      %p196 = por %p194, %p195
      %p198 = scmp.ne.s32.totalorder %s181, %s197
      %p199 = scmp.eq.s32.totalorder %s21, 0
      %p200 = por %p198, %p199
      %p201 = scmp.le.s32.totalorder 1, %s15
      %p202 = scmp.lt.s32.totalorder %s15, 3
      %p203 = pnand %p201, %p202
      %p204 = pneg %p203
      // Predicated region
      $region9: #{text_decoder_forward.9} parent=5 // pred_check
        _
      $region10: #{text_decoder_forward.9} parent=5 // pred_check_branch
        %206 = sbr.rel (%p203) target = $region12
      $region11: #{text_decoder_forward.9} parent=5 // pred_region
        %s207 = ssub.s32 %s15, 1
        // Predicated region
        $region13: #{text_decoder_forward.9} parent=11 // pred_check
          %p208 = pneg %p62
        $region14: #{text_decoder_forward.9} parent=11 // pred_check_branch
          %210 = sbr.rel (%p208) target = $region16
        $region15: #{text_decoder_forward.9} parent=11 // pred_region
          %212 = vsyncadd [#allocation3], 0
          %s213 = sshll.u32 %s1, 4
          %s214 = int_to_ptr.hbm [resolvable:$true] %s213
          %s215 = sshll.u32 [#allocation2], 4
          %s216 = int_to_ptr.vmem [resolvable:$true] %s215
          %221 = dma.hbm_to_vmem [thread:$0]  %s214, 32768, %s216, [#allocation3], 1024, 1024, 64
        $region16: #{text_decoder_forward.9} parent=11 // pred_fallthru
          _
        // Predicated region
        $region17: #{text_decoder_forward.9} parent=11 // pred_check
          %p222 = pneg %p83
        $region18: #{text_decoder_forward.9} parent=11 // pred_check_branch
          %224 = sbr.rel (%p222) target = $region20
        $region19: #{text_decoder_forward.9} parent=11 // pred_region
          _
        $region20: #{text_decoder_forward.9} parent=11 // pred_fallthru
          _
        // Predicated region
        $region21: #{text_decoder_forward.9} parent=11 // pred_check
          %p225 = pneg %p104
        $region22: #{text_decoder_forward.9} parent=11 // pred_check_branch
          %227 = sbr.rel (%p225) target = $region24
        $region23: #{text_decoder_forward.9} parent=11 // pred_region
          %229 = vsyncadd [#allocation5], 0
          %s230 = sshll.u32 %s3, 4
          %s231 = int_to_ptr.hbm [resolvable:$true] %s230
          %s232 = sshll.u32 [#allocation4], 4
          %s233 = int_to_ptr.vmem [resolvable:$true] %s232
          %238 = dma.hbm_to_vmem [thread:$0]  %s231, 32768, %s233, [#allocation5], 128, 128, 8
        $region24: #{text_decoder_forward.9} parent=11 // pred_fallthru
          _
        // Predicated region
        $region25: #{text_decoder_forward.9} parent=11 // pred_check
          %p239 = pneg %p125
        $region26: #{text_decoder_forward.9} parent=11 // pred_check_branch
          %241 = sbr.rel (%p239) target = $region28
        $region27: #{text_decoder_forward.9} parent=11 // pred_region
          _
        $region28: #{text_decoder_forward.9} parent=11 // pred_fallthru
          _
        // Predicated region
        $region29: #{text_decoder_forward.9} parent=11 // pred_check
          %p242 = pneg %p146
        $region30: #{text_decoder_forward.9} parent=11 // pred_check_branch
          %244 = sbr.rel (%p242) target = $region32
        $region31: #{text_decoder_forward.9} parent=11 // pred_region
          _
        $region32: #{text_decoder_forward.9} parent=11 // pred_fallthru
          _
        // Predicated region
        $region33: #{text_decoder_forward.9} parent=11 // pred_check
          %p245 = pneg %p167
        $region34: #{text_decoder_forward.9} parent=11 // pred_check_branch
          %247 = sbr.rel (%p245) target = $region36
        $region35: #{text_decoder_forward.9} parent=11 // pred_region
          _
        $region36: #{text_decoder_forward.9} parent=11 // pred_fallthru
          _
      $region12: #{text_decoder_forward.9} parent=5 // pred_fallthru
        _
      %p248 = scmp.lt.s32.totalorder %s15, 2
      // Predicated region
      $region37: #{text_decoder_forward.9} parent=5 // pred_check
        %p249 = pneg %p248
      $region38: #{text_decoder_forward.9} parent=5 // pred_check_branch
        %251 = sbr.rel (%p249) target = $region40
      $region39: #{text_decoder_forward.9} parent=5 // pred_region
        // Predicated region
        $region41: #{text_decoder_forward.9} parent=39 // pred_check
          %p252 = pneg %p35
        $region42: #{text_decoder_forward.9} parent=39 // pred_check_branch
          %254 = sbr.rel (%p252) target = $region44
        $region43: #{text_decoder_forward.9} parent=39 // pred_region
          %p255 = scmp.lt.s32.totalorder %s15, 1
          %s256 = scalar_select %p255, %s15, 1
          %s257 = smul.addr %s256, 2
          %s258 = smul.addr %s257, 4
          %s259 = scalar_lea.vmem %s0, %s258
        $region44: #{text_decoder_forward.9} parent=39 // pred_fallthru
          _
      $region40: #{text_decoder_forward.9} parent=5 // pred_fallthru
        _
      %p260 = scmp.le.s32.totalorder 1, %s15
      %p261 = scmp.lt.s32.totalorder %s15, 3
      %p262 = pnand %p260, %p261
      %p263 = pneg %p262
      // Predicated region
      $region45: #{text_decoder_forward.9} parent=5 // pred_check
        _
      $region46: #{text_decoder_forward.9} parent=5 // pred_check_branch
        %265 = sbr.rel (%p262) target = $region48
      $region47: #{text_decoder_forward.9} parent=5 // pred_region
        %s266 = ssub.s32 %s15, 1
        // Predicated region
        $region49: #{text_decoder_forward.9} parent=47 // pred_check
          %p267 = pneg %p62
        $region50: #{text_decoder_forward.9} parent=47 // pred_check_branch
          %269 = sbr.rel (%p267) target = $region52
        $region51: #{text_decoder_forward.9} parent=47 // pred_region
          %271 = dma.done [#allocation3], 32768
        $region52: #{text_decoder_forward.9} parent=47 // pred_fallthru
          _
        // Predicated region
        $region53: #{text_decoder_forward.9} parent=47 // pred_check
          %p272 = pneg %p104
        $region54: #{text_decoder_forward.9} parent=47 // pred_check_branch
          %274 = sbr.rel (%p272) target = $region56
        $region55: #{text_decoder_forward.9} parent=47 // pred_region
          %276 = dma.done [#allocation5], 32768
        $region56: #{text_decoder_forward.9} parent=47 // pred_fallthru
          _
        %p277 = scmp.lt.s32.totalorder %s20, 1
        %s278 = scalar_select %p277, %s20, 1
        %s279 = smul.addr %s278, 2
        %s280 = smul.addr %s279, 4
        %s281 = scalar_lea.vmem %s0, %s280
        %p282 = pneg %p41
        %p283 = pneg %p38
        %p284 = pneg %p62
        %p285 = pneg %p59
        %p286 = pneg %p83
        %p287 = pneg %p80
        %p288 = pneg %p104
        %p289 = pneg %p101
        %p290 = pneg %p125
        %p291 = pneg %p122
        %p292 = pneg %p146
        %p293 = pneg %p143
        %p294 = pneg %p167
        %p295 = pneg %p164
        %p296 = pneg %p193
        %p297 = pneg %p190
        %p298 = scmp.lt.s32.totalorder %s20, 1
        %s299 = scalar_select %p298, %s20, 1
        %s300 = smul.addr %s299, 2
        %s301 = smul.addr %s300, 4
        %s302 = scalar_lea.vmem %s7, %s301
        %p303 = scmp.lt.s32.totalorder %s20, 1
        %s304 = scalar_select %p303, %s20, 1
        %s305 = smul.addr %s304, 2
        %s306 = smul.addr %s305, 4
        %s307 = scalar_lea.vmem %s0, %s306
        %p308 = scmp.lt.s32.totalorder %s20, 1
        %s309 = scalar_select %p308, %s20, 1
        %s310 = smul.addr %s309, 2
        %s311 = smul.addr %s310, 4
        %s312 = scalar_lea.vmem %s7, %s311
        %v313 = vld [vmem:[%s307] sm:$0xff]
        %v314 = vunpack.c.l.bf16 %v313
        %v315 = vunpack.c.h.bf16 %v313
        %v316 = vld [vmem:[#allocation2] sm:$0xff]
        %v317 = vld [vmem:[#allocation2 + $0x8] sm:$0xff]
        %v318 = vld [vmem:[#allocation2 + $0x10] sm:$0xff]
        %v319 = vld [vmem:[#allocation2 + $0x18] sm:$0xff]
        %v320 = vld [vmem:[#allocation2 + $0x20] sm:$0xff]
        %v321 = vld [vmem:[#allocation2 + $0x28] sm:$0xff]
        %v322 = vld [vmem:[#allocation2 + $0x30] sm:$0xff]
        %v323 = vld [vmem:[#allocation2 + $0x38] sm:$0xff]
        %v324 = vld [vmem:[#allocation2 + $0x40] sm:$0xff]
        %v325 = vld [vmem:[#allocation2 + $0x48] sm:$0xff]
        %v326 = vld [vmem:[#allocation2 + $0x50] sm:$0xff]
        %v327 = vld [vmem:[#allocation2 + $0x58] sm:$0xff]
        %v328 = vld [vmem:[#allocation2 + $0x60] sm:$0xff]
        %v329 = vld [vmem:[#allocation2 + $0x68] sm:$0xff]
        %v330 = vld [vmem:[#allocation2 + $0x70] sm:$0xff]
        %v331 = vld [vmem:[#allocation2 + $0x78] sm:$0xff]
        %v332 = vld [vmem:[#allocation2 + $0x80] sm:$0xff]
        %v333 = vld [vmem:[#allocation2 + $0x88] sm:$0xff]
        %v334 = vld [vmem:[#allocation2 + $0x90] sm:$0xff]
        %v335 = vld [vmem:[#allocation2 + $0x98] sm:$0xff]
        %v336 = vld [vmem:[#allocation2 + $0xa0] sm:$0xff]
        %v337 = vld [vmem:[#allocation2 + $0xa8] sm:$0xff]
        %v338 = vld [vmem:[#allocation2 + $0xb0] sm:$0xff]
        %v339 = vld [vmem:[#allocation2 + $0xb8] sm:$0xff]
        %v340 = vld [vmem:[#allocation2 + $0xc0] sm:$0xff]
        %v341 = vld [vmem:[#allocation2 + $0xc8] sm:$0xff]
        %v342 = vld [vmem:[#allocation2 + $0xd0] sm:$0xff]
        %v343 = vld [vmem:[#allocation2 + $0xd8] sm:$0xff]
        %v344 = vld [vmem:[#allocation2 + $0xe0] sm:$0xff]
        %v345 = vld [vmem:[#allocation2 + $0xe8] sm:$0xff]
        %v346 = vld [vmem:[#allocation2 + $0xf0] sm:$0xff]
        %v347 = vld [vmem:[#allocation2 + $0xf8] sm:$0xff]
        %v348 = vld [vmem:[#allocation2 + $0x100] sm:$0xff]
        %v349 = vld [vmem:[#allocation2 + $0x108] sm:$0xff]
        %v350 = vld [vmem:[#allocation2 + $0x110] sm:$0xff]
        %v351 = vld [vmem:[#allocation2 + $0x118] sm:$0xff]
        %v352 = vld [vmem:[#allocation2 + $0x120] sm:$0xff]
        %v353 = vld [vmem:[#allocation2 + $0x128] sm:$0xff]
        %v354 = vld [vmem:[#allocation2 + $0x130] sm:$0xff]
        %v355 = vld [vmem:[#allocation2 + $0x138] sm:$0xff]
        %v356 = vld [vmem:[#allocation2 + $0x140] sm:$0xff]
        %v357 = vld [vmem:[#allocation2 + $0x148] sm:$0xff]
        %v358 = vld [vmem:[#allocation2 + $0x150] sm:$0xff]
        %v359 = vld [vmem:[#allocation2 + $0x158] sm:$0xff]
        %v360 = vld [vmem:[#allocation2 + $0x160] sm:$0xff]
        %v361 = vld [vmem:[#allocation2 + $0x168] sm:$0xff]
        %v362 = vld [vmem:[#allocation2 + $0x170] sm:$0xff]
        %v363 = vld [vmem:[#allocation2 + $0x178] sm:$0xff]
        %v364 = vld [vmem:[#allocation2 + $0x180] sm:$0xff]
        %v365 = vld [vmem:[#allocation2 + $0x188] sm:$0xff]
        %v366 = vld [vmem:[#allocation2 + $0x190] sm:$0xff]
        %v367 = vld [vmem:[#allocation2 + $0x198] sm:$0xff]
        %v368 = vld [vmem:[#allocation2 + $0x1a0] sm:$0xff]
        %v369 = vld [vmem:[#allocation2 + $0x1a8] sm:$0xff]
        %v370 = vld [vmem:[#allocation2 + $0x1b0] sm:$0xff]
        %v371 = vld [vmem:[#allocation2 + $0x1b8] sm:$0xff]
        %v372 = vld [vmem:[#allocation2 + $0x1c0] sm:$0xff]
        %v373 = vld [vmem:[#allocation2 + $0x1c8] sm:$0xff]
        %v374 = vld [vmem:[#allocation2 + $0x1d0] sm:$0xff]
        %v375 = vld [vmem:[#allocation2 + $0x1d8] sm:$0xff]
        %v376 = vld [vmem:[#allocation2 + $0x1e0] sm:$0xff]
        %v377 = vld [vmem:[#allocation2 + $0x1e8] sm:$0xff]
        %v378 = vld [vmem:[#allocation2 + $0x1f0] sm:$0xff]
        %v379 = vld [vmem:[#allocation2 + $0x1f8] sm:$0xff]
        %v380 = vld [vmem:[#allocation2 + $0x200] sm:$0xff]
        %v381 = vld [vmem:[#allocation2 + $0x208] sm:$0xff]
        %v382 = vld [vmem:[#allocation2 + $0x210] sm:$0xff]
        %v383 = vld [vmem:[#allocation2 + $0x218] sm:$0xff]
        %v384 = vld [vmem:[#allocation2 + $0x220] sm:$0xff]
        %v385 = vld [vmem:[#allocation2 + $0x228] sm:$0xff]
        %v386 = vld [vmem:[#allocation2 + $0x230] sm:$0xff]
        %v387 = vld [vmem:[#allocation2 + $0x238] sm:$0xff]
        %v388 = vld [vmem:[#allocation2 + $0x240] sm:$0xff]
        %v389 = vld [vmem:[#allocation2 + $0x248] sm:$0xff]
        %v390 = vld [vmem:[#allocation2 + $0x250] sm:$0xff]
        %v391 = vld [vmem:[#allocation2 + $0x258] sm:$0xff]
        %v392 = vld [vmem:[#allocation2 + $0x260] sm:$0xff]
        %v393 = vld [vmem:[#allocation2 + $0x268] sm:$0xff]
        %v394 = vld [vmem:[#allocation2 + $0x270] sm:$0xff]
        %v395 = vld [vmem:[#allocation2 + $0x278] sm:$0xff]
        %v396 = vld [vmem:[#allocation2 + $0x280] sm:$0xff]
        %v397 = vld [vmem:[#allocation2 + $0x288] sm:$0xff]
        %v398 = vld [vmem:[#allocation2 + $0x290] sm:$0xff]
        %v399 = vld [vmem:[#allocation2 + $0x298] sm:$0xff]
        %v400 = vld [vmem:[#allocation2 + $0x2a0] sm:$0xff]
        %v401 = vld [vmem:[#allocation2 + $0x2a8] sm:$0xff]
        %v402 = vld [vmem:[#allocation2 + $0x2b0] sm:$0xff]
        %v403 = vld [vmem:[#allocation2 + $0x2b8] sm:$0xff]
        %v404 = vld [vmem:[#allocation2 + $0x2c0] sm:$0xff]
        %v405 = vld [vmem:[#allocation2 + $0x2c8] sm:$0xff]
        %v406 = vld [vmem:[#allocation2 + $0x2d0] sm:$0xff]
        %v407 = vld [vmem:[#allocation2 + $0x2d8] sm:$0xff]
        %v408 = vld [vmem:[#allocation2 + $0x2e0] sm:$0xff]
        %v409 = vld [vmem:[#allocation2 + $0x2e8] sm:$0xff]
        %v410 = vld [vmem:[#allocation2 + $0x2f0] sm:$0xff]
        %v411 = vld [vmem:[#allocation2 + $0x2f8] sm:$0xff]
        %v412 = vld [vmem:[#allocation2 + $0x300] sm:$0xff]
        %v413 = vld [vmem:[#allocation2 + $0x308] sm:$0xff]
        %v414 = vld [vmem:[#allocation2 + $0x310] sm:$0xff]
        %v415 = vld [vmem:[#allocation2 + $0x318] sm:$0xff]
        %v416 = vld [vmem:[#allocation2 + $0x320] sm:$0xff]
        %v417 = vld [vmem:[#allocation2 + $0x328] sm:$0xff]
        %v418 = vld [vmem:[#allocation2 + $0x330] sm:$0xff]
        %v419 = vld [vmem:[#allocation2 + $0x338] sm:$0xff]
        %v420 = vld [vmem:[#allocation2 + $0x340] sm:$0xff]
        %v421 = vld [vmem:[#allocation2 + $0x348] sm:$0xff]
        %v422 = vld [vmem:[#allocation2 + $0x350] sm:$0xff]
        %v423 = vld [vmem:[#allocation2 + $0x358] sm:$0xff]
        %v424 = vld [vmem:[#allocation2 + $0x360] sm:$0xff]
        %v425 = vld [vmem:[#allocation2 + $0x368] sm:$0xff]
        %v426 = vld [vmem:[#allocation2 + $0x370] sm:$0xff]
        %v427 = vld [vmem:[#allocation2 + $0x378] sm:$0xff]
        %v428 = vld [vmem:[#allocation2 + $0x380] sm:$0xff]
        %v429 = vld [vmem:[#allocation2 + $0x388] sm:$0xff]
        %v430 = vld [vmem:[#allocation2 + $0x390] sm:$0xff]
        %v431 = vld [vmem:[#allocation2 + $0x398] sm:$0xff]
        %v432 = vld [vmem:[#allocation2 + $0x3a0] sm:$0xff]
        %v433 = vld [vmem:[#allocation2 + $0x3a8] sm:$0xff]
        %v434 = vld [vmem:[#allocation2 + $0x3b0] sm:$0xff]
        %v435 = vld [vmem:[#allocation2 + $0x3b8] sm:$0xff]
        %v436 = vld [vmem:[#allocation2 + $0x3c0] sm:$0xff]
        %v437 = vld [vmem:[#allocation2 + $0x3c8] sm:$0xff]
        %v438 = vld [vmem:[#allocation2 + $0x3d0] sm:$0xff]
        %v439 = vld [vmem:[#allocation2 + $0x3d8] sm:$0xff]
        %v440 = vld [vmem:[#allocation2 + $0x3e0] sm:$0xff]
        %v441 = vld [vmem:[#allocation2 + $0x3e8] sm:$0xff]
        %v442 = vld [vmem:[#allocation2 + $0x3f0] sm:$0xff]
        %v443 = vld [vmem:[#allocation2 + $0x3f8] sm:$0xff]
        %v444 = vld [vmem:[#allocation2 + $0x400] sm:$0xff]
        %v445 = vld [vmem:[#allocation2 + $0x408] sm:$0xff]
        %v446 = vld [vmem:[#allocation2 + $0x410] sm:$0xff]
        %v447 = vld [vmem:[#allocation2 + $0x418] sm:$0xff]
        %v448 = vld [vmem:[#allocation2 + $0x420] sm:$0xff]
        %v449 = vld [vmem:[#allocation2 + $0x428] sm:$0xff]
        %v450 = vld [vmem:[#allocation2 + $0x430] sm:$0xff]
        %v451 = vld [vmem:[#allocation2 + $0x438] sm:$0xff]
        %v452 = vld [vmem:[#allocation2 + $0x440] sm:$0xff]
        %v453 = vld [vmem:[#allocation2 + $0x448] sm:$0xff]
        %v454 = vld [vmem:[#allocation2 + $0x450] sm:$0xff]
        %v455 = vld [vmem:[#allocation2 + $0x458] sm:$0xff]
        %v456 = vld [vmem:[#allocation2 + $0x460] sm:$0xff]
        %v457 = vld [vmem:[#allocation2 + $0x468] sm:$0xff]
        %v458 = vld [vmem:[#allocation2 + $0x470] sm:$0xff]
        %v459 = vld [vmem:[#allocation2 + $0x478] sm:$0xff]
        %v460 = vld [vmem:[#allocation2 + $0x480] sm:$0xff]
        %v461 = vld [vmem:[#allocation2 + $0x488] sm:$0xff]
        %v462 = vld [vmem:[#allocation2 + $0x490] sm:$0xff]
        %v463 = vld [vmem:[#allocation2 + $0x498] sm:$0xff]
        %v464 = vld [vmem:[#allocation2 + $0x4a0] sm:$0xff]
        %v465 = vld [vmem:[#allocation2 + $0x4a8] sm:$0xff]
        %v466 = vld [vmem:[#allocation2 + $0x4b0] sm:$0xff]
        %v467 = vld [vmem:[#allocation2 + $0x4b8] sm:$0xff]
        %v468 = vld [vmem:[#allocation2 + $0x4c0] sm:$0xff]
        %v469 = vld [vmem:[#allocation2 + $0x4c8] sm:$0xff]
        %v470 = vld [vmem:[#allocation2 + $0x4d0] sm:$0xff]
        %v471 = vld [vmem:[#allocation2 + $0x4d8] sm:$0xff]
        %v472 = vld [vmem:[#allocation2 + $0x4e0] sm:$0xff]
        %v473 = vld [vmem:[#allocation2 + $0x4e8] sm:$0xff]
        %v474 = vld [vmem:[#allocation2 + $0x4f0] sm:$0xff]
        %v475 = vld [vmem:[#allocation2 + $0x4f8] sm:$0xff]
        %v476 = vld [vmem:[#allocation2 + $0x500] sm:$0xff]
        %v477 = vld [vmem:[#allocation2 + $0x508] sm:$0xff]
        %v478 = vld [vmem:[#allocation2 + $0x510] sm:$0xff]
        %v479 = vld [vmem:[#allocation2 + $0x518] sm:$0xff]
        %v480 = vld [vmem:[#allocation2 + $0x520] sm:$0xff]
        %v481 = vld [vmem:[#allocation2 + $0x528] sm:$0xff]
        %v482 = vld [vmem:[#allocation2 + $0x530] sm:$0xff]
        %v483 = vld [vmem:[#allocation2 + $0x538] sm:$0xff]
        %v484 = vld [vmem:[#allocation2 + $0x540] sm:$0xff]
        %v485 = vld [vmem:[#allocation2 + $0x548] sm:$0xff]
        %v486 = vld [vmem:[#allocation2 + $0x550] sm:$0xff]
        %v487 = vld [vmem:[#allocation2 + $0x558] sm:$0xff]
        %v488 = vld [vmem:[#allocation2 + $0x560] sm:$0xff]
        %v489 = vld [vmem:[#allocation2 + $0x568] sm:$0xff]
        %v490 = vld [vmem:[#allocation2 + $0x570] sm:$0xff]
        %v491 = vld [vmem:[#allocation2 + $0x578] sm:$0xff]
        %v492 = vld [vmem:[#allocation2 + $0x580] sm:$0xff]
        %v493 = vld [vmem:[#allocation2 + $0x588] sm:$0xff]
        %v494 = vld [vmem:[#allocation2 + $0x590] sm:$0xff]
        %v495 = vld [vmem:[#allocation2 + $0x598] sm:$0xff]
        %v496 = vld [vmem:[#allocation2 + $0x5a0] sm:$0xff]
        %v497 = vld [vmem:[#allocation2 + $0x5a8] sm:$0xff]
        %v498 = vld [vmem:[#allocation2 + $0x5b0] sm:$0xff]
        %v499 = vld [vmem:[#allocation2 + $0x5b8] sm:$0xff]
        %v500 = vld [vmem:[#allocation2 + $0x5c0] sm:$0xff]
        %v501 = vld [vmem:[#allocation2 + $0x5c8] sm:$0xff]
        %v502 = vld [vmem:[#allocation2 + $0x5d0] sm:$0xff]
        %v503 = vld [vmem:[#allocation2 + $0x5d8] sm:$0xff]
        %v504 = vld [vmem:[#allocation2 + $0x5e0] sm:$0xff]
        %v505 = vld [vmem:[#allocation2 + $0x5e8] sm:$0xff]
        %v506 = vld [vmem:[#allocation2 + $0x5f0] sm:$0xff]
        %v507 = vld [vmem:[#allocation2 + $0x5f8] sm:$0xff]
        %v508 = vld [vmem:[#allocation2 + $0x600] sm:$0xff]
        %v509 = vld [vmem:[#allocation2 + $0x608] sm:$0xff]
        %v510 = vld [vmem:[#allocation2 + $0x610] sm:$0xff]
        %v511 = vld [vmem:[#allocation2 + $0x618] sm:$0xff]
        %v512 = vld [vmem:[#allocation2 + $0x620] sm:$0xff]
        %v513 = vld [vmem:[#allocation2 + $0x628] sm:$0xff]
        %v514 = vld [vmem:[#allocation2 + $0x630] sm:$0xff]
        %v515 = vld [vmem:[#allocation2 + $0x638] sm:$0xff]
        %v516 = vld [vmem:[#allocation2 + $0x640] sm:$0xff]
        %v517 = vld [vmem:[#allocation2 + $0x648] sm:$0xff]
        %v518 = vld [vmem:[#allocation2 + $0x650] sm:$0xff]
        %v519 = vld [vmem:[#allocation2 + $0x658] sm:$0xff]
        %v520 = vld [vmem:[#allocation2 + $0x660] sm:$0xff]
        %v521 = vld [vmem:[#allocation2 + $0x668] sm:$0xff]
        %v522 = vld [vmem:[#allocation2 + $0x670] sm:$0xff]
        %v523 = vld [vmem:[#allocation2 + $0x678] sm:$0xff]
        %v524 = vld [vmem:[#allocation2 + $0x680] sm:$0xff]
        %v525 = vld [vmem:[#allocation2 + $0x688] sm:$0xff]
        %v526 = vld [vmem:[#allocation2 + $0x690] sm:$0xff]
        %v527 = vld [vmem:[#allocation2 + $0x698] sm:$0xff]
        %v528 = vld [vmem:[#allocation2 + $0x6a0] sm:$0xff]
        %v529 = vld [vmem:[#allocation2 + $0x6a8] sm:$0xff]
        %v530 = vld [vmem:[#allocation2 + $0x6b0] sm:$0xff]
        %v531 = vld [vmem:[#allocation2 + $0x6b8] sm:$0xff]
        %v532 = vld [vmem:[#allocation2 + $0x6c0] sm:$0xff]
        %v533 = vld [vmem:[#allocation2 + $0x6c8] sm:$0xff]
        %v534 = vld [vmem:[#allocation2 + $0x6d0] sm:$0xff]
        %v535 = vld [vmem:[#allocation2 + $0x6d8] sm:$0xff]
        %v536 = vld [vmem:[#allocation2 + $0x6e0] sm:$0xff]
        %v537 = vld [vmem:[#allocation2 + $0x6e8] sm:$0xff]
        %v538 = vld [vmem:[#allocation2 + $0x6f0] sm:$0xff]
        %v539 = vld [vmem:[#allocation2 + $0x6f8] sm:$0xff]
        %v540 = vld [vmem:[#allocation2 + $0x700] sm:$0xff]
        %v541 = vld [vmem:[#allocation2 + $0x708] sm:$0xff]
        %v542 = vld [vmem:[#allocation2 + $0x710] sm:$0xff]
        %v543 = vld [vmem:[#allocation2 + $0x718] sm:$0xff]
        %v544 = vld [vmem:[#allocation2 + $0x720] sm:$0xff]
        %v545 = vld [vmem:[#allocation2 + $0x728] sm:$0xff]
        %v546 = vld [vmem:[#allocation2 + $0x730] sm:$0xff]
        %v547 = vld [vmem:[#allocation2 + $0x738] sm:$0xff]
        %v548 = vld [vmem:[#allocation2 + $0x740] sm:$0xff]
        %v549 = vld [vmem:[#allocation2 + $0x748] sm:$0xff]
        %v550 = vld [vmem:[#allocation2 + $0x750] sm:$0xff]
        %v551 = vld [vmem:[#allocation2 + $0x758] sm:$0xff]
        %v552 = vld [vmem:[#allocation2 + $0x760] sm:$0xff]
        %v553 = vld [vmem:[#allocation2 + $0x768] sm:$0xff]
        %v554 = vld [vmem:[#allocation2 + $0x770] sm:$0xff]
        %v555 = vld [vmem:[#allocation2 + $0x778] sm:$0xff]
        %v556 = vld [vmem:[#allocation2 + $0x780] sm:$0xff]
        %v557 = vld [vmem:[#allocation2 + $0x788] sm:$0xff]
        %v558 = vld [vmem:[#allocation2 + $0x790] sm:$0xff]
        %v559 = vld [vmem:[#allocation2 + $0x798] sm:$0xff]
        %v560 = vld [vmem:[#allocation2 + $0x7a0] sm:$0xff]
        %v561 = vld [vmem:[#allocation2 + $0x7a8] sm:$0xff]
        %v562 = vld [vmem:[#allocation2 + $0x7b0] sm:$0xff]
        %v563 = vld [vmem:[#allocation2 + $0x7b8] sm:$0xff]
        %v564 = vld [vmem:[#allocation2 + $0x7c0] sm:$0xff]
        %v565 = vld [vmem:[#allocation2 + $0x7c8] sm:$0xff]
        %v566 = vld [vmem:[#allocation2 + $0x7d0] sm:$0xff]
        %v567 = vld [vmem:[#allocation2 + $0x7d8] sm:$0xff]
        %v568 = vld [vmem:[#allocation2 + $0x7e0] sm:$0xff]
        %v569 = vld [vmem:[#allocation2 + $0x7e8] sm:$0xff]
        %v570 = vld [vmem:[#allocation2 + $0x7f0] sm:$0xff]
        %v571 = vld [vmem:[#allocation2 + $0x7f8] sm:$0xff]
        %v572 = vld [vmem:[%s2] sm:$0xff]
        %v573 = vld [vmem:[%s2 + $0x8] sm:$0xff]
        %v576 = vperm.slane %v572, 0
        %v577 = vperm.slane %v572, 1
        %v578 = vperm.slane %v572, 2
        %v579 = vperm.slane %v572, 3
        %v580 = vperm.slane %v572, 4
        %v581 = vperm.slane %v572, 5
        %v582 = vperm.slane %v572, 6
        %v583 = vperm.slane %v572, 7
        %v584 = vperm.slane %v573, 0
        %v585 = vperm.slane %v573, 1
        %v586 = vperm.slane %v573, 2
        %v587 = vperm.slane %v573, 3
        %v588 = vperm.slane %v573, 4
        %v589 = vperm.slane %v573, 5
        %v590 = vperm.slane %v573, 6
        %v591 = vperm.slane %v573, 7
        %v609 = vunpack.c.l.b16 %v313
        %v610 = vunpack.c.h.b16 %v313
        %v611 = vpack.c.b16 %v609, %v609
        %v612 = vpack.c.b16 %v610, %v610
        %v871 = vunpack.c.l.b16 %v316
        %v872 = vunpack.c.h.b16 %v316
        %v873 = vunpack.c.l.b16 %v317
        %v874 = vunpack.c.h.b16 %v317
        %v875 = vunpack.c.l.b16 %v318
        %v876 = vunpack.c.h.b16 %v318
        %v877 = vunpack.c.l.b16 %v319
        %v878 = vunpack.c.h.b16 %v319
        %v879 = vunpack.c.l.b16 %v320
        %v880 = vunpack.c.h.b16 %v320
        %v881 = vunpack.c.l.b16 %v321
        %v882 = vunpack.c.h.b16 %v321
        %v883 = vunpack.c.l.b16 %v322
        %v884 = vunpack.c.h.b16 %v322
        %v885 = vunpack.c.l.b16 %v323
        %v886 = vunpack.c.h.b16 %v323
        %v887 = vunpack.c.l.b16 %v324
        %v888 = vunpack.c.h.b16 %v324
        %v889 = vunpack.c.l.b16 %v325
        %v890 = vunpack.c.h.b16 %v325
        %v891 = vunpack.c.l.b16 %v326
        %v892 = vunpack.c.h.b16 %v326
        %v893 = vunpack.c.l.b16 %v327
        %v894 = vunpack.c.h.b16 %v327
        %v895 = vunpack.c.l.b16 %v328
        %v896 = vunpack.c.h.b16 %v328
        %v897 = vunpack.c.l.b16 %v329
        %v898 = vunpack.c.h.b16 %v329
        %v899 = vunpack.c.l.b16 %v330
        %v900 = vunpack.c.h.b16 %v330
        %v901 = vunpack.c.l.b16 %v331
        %v902 = vunpack.c.h.b16 %v331
        %v903 = vunpack.c.l.b16 %v332
        %v904 = vunpack.c.h.b16 %v332
        %v905 = vunpack.c.l.b16 %v333
        %v906 = vunpack.c.h.b16 %v333
        %v907 = vunpack.c.l.b16 %v334
        %v908 = vunpack.c.h.b16 %v334
        %v909 = vunpack.c.l.b16 %v335
        %v910 = vunpack.c.h.b16 %v335
        %v911 = vunpack.c.l.b16 %v336
        %v912 = vunpack.c.h.b16 %v336
        %v913 = vunpack.c.l.b16 %v337
        %v914 = vunpack.c.h.b16 %v337
        %v915 = vunpack.c.l.b16 %v338
        %v916 = vunpack.c.h.b16 %v338
        %v917 = vunpack.c.l.b16 %v339
        %v918 = vunpack.c.h.b16 %v339
        %v919 = vunpack.c.l.b16 %v340
        %v920 = vunpack.c.h.b16 %v340
        %v921 = vunpack.c.l.b16 %v341
        %v922 = vunpack.c.h.b16 %v341
        %v923 = vunpack.c.l.b16 %v342
        %v924 = vunpack.c.h.b16 %v342
        %v925 = vunpack.c.l.b16 %v343
        %v926 = vunpack.c.h.b16 %v343
        %v927 = vunpack.c.l.b16 %v344
        %v928 = vunpack.c.h.b16 %v344
        %v929 = vunpack.c.l.b16 %v345
        %v930 = vunpack.c.h.b16 %v345
        %v931 = vunpack.c.l.b16 %v346
        %v932 = vunpack.c.h.b16 %v346
        %v933 = vunpack.c.l.b16 %v347
        %v934 = vunpack.c.h.b16 %v347
        %v935 = vunpack.c.l.b16 %v348
        %v936 = vunpack.c.h.b16 %v348
        %v937 = vunpack.c.l.b16 %v349
        %v938 = vunpack.c.h.b16 %v349
        %v939 = vunpack.c.l.b16 %v350
        %v940 = vunpack.c.h.b16 %v350
        %v941 = vunpack.c.l.b16 %v351
        %v942 = vunpack.c.h.b16 %v351
        %v943 = vunpack.c.l.b16 %v352
        %v944 = vunpack.c.h.b16 %v352
        %v945 = vunpack.c.l.b16 %v353
        %v946 = vunpack.c.h.b16 %v353
        %v947 = vunpack.c.l.b16 %v354
        %v948 = vunpack.c.h.b16 %v354
        %v949 = vunpack.c.l.b16 %v355
        %v950 = vunpack.c.h.b16 %v355
        %v951 = vunpack.c.l.b16 %v356
        %v952 = vunpack.c.h.b16 %v356
        %v953 = vunpack.c.l.b16 %v357
        %v954 = vunpack.c.h.b16 %v357
        %v955 = vunpack.c.l.b16 %v358
        %v956 = vunpack.c.h.b16 %v358
        %v957 = vunpack.c.l.b16 %v359
        %v958 = vunpack.c.h.b16 %v359
        %v959 = vunpack.c.l.b16 %v360
        %v960 = vunpack.c.h.b16 %v360
        %v961 = vunpack.c.l.b16 %v361
        %v962 = vunpack.c.h.b16 %v361
        %v963 = vunpack.c.l.b16 %v362
        %v964 = vunpack.c.h.b16 %v362
        %v965 = vunpack.c.l.b16 %v363
        %v966 = vunpack.c.h.b16 %v363
        %v967 = vunpack.c.l.b16 %v364
        %v968 = vunpack.c.h.b16 %v364
        %v969 = vunpack.c.l.b16 %v365
        %v970 = vunpack.c.h.b16 %v365
        %v971 = vunpack.c.l.b16 %v366
        %v972 = vunpack.c.h.b16 %v366
        %v973 = vunpack.c.l.b16 %v367
        %v974 = vunpack.c.h.b16 %v367
        %v975 = vunpack.c.l.b16 %v368
        %v976 = vunpack.c.h.b16 %v368
        %v977 = vunpack.c.l.b16 %v369
        %v978 = vunpack.c.h.b16 %v369
        %v979 = vunpack.c.l.b16 %v370
        %v980 = vunpack.c.h.b16 %v370
        %v981 = vunpack.c.l.b16 %v371
        %v982 = vunpack.c.h.b16 %v371
        %v983 = vunpack.c.l.b16 %v372
        %v984 = vunpack.c.h.b16 %v372
        %v985 = vunpack.c.l.b16 %v373
        %v986 = vunpack.c.h.b16 %v373
        %v987 = vunpack.c.l.b16 %v374
        %v988 = vunpack.c.h.b16 %v374
        %v989 = vunpack.c.l.b16 %v375
        %v990 = vunpack.c.h.b16 %v375
        %v991 = vunpack.c.l.b16 %v376
        %v992 = vunpack.c.h.b16 %v376
        %v993 = vunpack.c.l.b16 %v377
        %v994 = vunpack.c.h.b16 %v377
        %v995 = vunpack.c.l.b16 %v378
        %v996 = vunpack.c.h.b16 %v378
        %v997 = vunpack.c.l.b16 %v379
        %v998 = vunpack.c.h.b16 %v379
        %v999 = vunpack.c.l.b16 %v380
        %v1000 = vunpack.c.h.b16 %v380
        %v1001 = vunpack.c.l.b16 %v381
        %v1002 = vunpack.c.h.b16 %v381
        %v1003 = vunpack.c.l.b16 %v382
        %v1004 = vunpack.c.h.b16 %v382
        %v1005 = vunpack.c.l.b16 %v383
        %v1006 = vunpack.c.h.b16 %v383
        %v1007 = vunpack.c.l.b16 %v384
        %v1008 = vunpack.c.h.b16 %v384
        %v1009 = vunpack.c.l.b16 %v385
        %v1010 = vunpack.c.h.b16 %v385
        %v1011 = vunpack.c.l.b16 %v386
        %v1012 = vunpack.c.h.b16 %v386
        %v1013 = vunpack.c.l.b16 %v387
        %v1014 = vunpack.c.h.b16 %v387
        %v1015 = vunpack.c.l.b16 %v388
        %v1016 = vunpack.c.h.b16 %v388
        %v1017 = vunpack.c.l.b16 %v389
        %v1018 = vunpack.c.h.b16 %v389
        %v1019 = vunpack.c.l.b16 %v390
        %v1020 = vunpack.c.h.b16 %v390
        %v1021 = vunpack.c.l.b16 %v391
        %v1022 = vunpack.c.h.b16 %v391
        %v1023 = vunpack.c.l.b16 %v392
        %v1024 = vunpack.c.h.b16 %v392
        %v1025 = vunpack.c.l.b16 %v393
        %v1026 = vunpack.c.h.b16 %v393
        %v1027 = vunpack.c.l.b16 %v394
        %v1028 = vunpack.c.h.b16 %v394
        %v1029 = vunpack.c.l.b16 %v395
        %v1030 = vunpack.c.h.b16 %v395
        %v1031 = vunpack.c.l.b16 %v396
        %v1032 = vunpack.c.h.b16 %v396
        %v1033 = vunpack.c.l.b16 %v397
        %v1034 = vunpack.c.h.b16 %v397
        %v1035 = vunpack.c.l.b16 %v398
        %v1036 = vunpack.c.h.b16 %v398
        %v1037 = vunpack.c.l.b16 %v399
        %v1038 = vunpack.c.h.b16 %v399
        %v1039 = vunpack.c.l.b16 %v400
        %v1040 = vunpack.c.h.b16 %v400
        %v1041 = vunpack.c.l.b16 %v401
        %v1042 = vunpack.c.h.b16 %v401
        %v1043 = vunpack.c.l.b16 %v402
        %v1044 = vunpack.c.h.b16 %v402
        %v1045 = vunpack.c.l.b16 %v403
        %v1046 = vunpack.c.h.b16 %v403
        %v1047 = vunpack.c.l.b16 %v404
        %v1048 = vunpack.c.h.b16 %v404
        %v1049 = vunpack.c.l.b16 %v405
        %v1050 = vunpack.c.h.b16 %v405
        %v1051 = vunpack.c.l.b16 %v406
        %v1052 = vunpack.c.h.b16 %v406
        %v1053 = vunpack.c.l.b16 %v407
        %v1054 = vunpack.c.h.b16 %v407
        %v1055 = vunpack.c.l.b16 %v408
        %v1056 = vunpack.c.h.b16 %v408
        %v1057 = vunpack.c.l.b16 %v409
        %v1058 = vunpack.c.h.b16 %v409
        %v1059 = vunpack.c.l.b16 %v410
        %v1060 = vunpack.c.h.b16 %v410
        %v1061 = vunpack.c.l.b16 %v411
        %v1062 = vunpack.c.h.b16 %v411
        %v1063 = vunpack.c.l.b16 %v412
        %v1064 = vunpack.c.h.b16 %v412
        %v1065 = vunpack.c.l.b16 %v413
        %v1066 = vunpack.c.h.b16 %v413
        %v1067 = vunpack.c.l.b16 %v414
        %v1068 = vunpack.c.h.b16 %v414
        %v1069 = vunpack.c.l.b16 %v415
        %v1070 = vunpack.c.h.b16 %v415
        %v1071 = vunpack.c.l.b16 %v416
        %v1072 = vunpack.c.h.b16 %v416
        %v1073 = vunpack.c.l.b16 %v417
        %v1074 = vunpack.c.h.b16 %v417
        %v1075 = vunpack.c.l.b16 %v418
        %v1076 = vunpack.c.h.b16 %v418
        %v1077 = vunpack.c.l.b16 %v419
        %v1078 = vunpack.c.h.b16 %v419
        %v1079 = vunpack.c.l.b16 %v420
        %v1080 = vunpack.c.h.b16 %v420
        %v1081 = vunpack.c.l.b16 %v421
        %v1082 = vunpack.c.h.b16 %v421
        %v1083 = vunpack.c.l.b16 %v422
        %v1084 = vunpack.c.h.b16 %v422
        %v1085 = vunpack.c.l.b16 %v423
        %v1086 = vunpack.c.h.b16 %v423
        %v1087 = vunpack.c.l.b16 %v424
        %v1088 = vunpack.c.h.b16 %v424
        %v1089 = vunpack.c.l.b16 %v425
        %v1090 = vunpack.c.h.b16 %v425
        %v1091 = vunpack.c.l.b16 %v426
        %v1092 = vunpack.c.h.b16 %v426
        %v1093 = vunpack.c.l.b16 %v427
        %v1094 = vunpack.c.h.b16 %v427
        %v1095 = vunpack.c.l.b16 %v428
        %v1096 = vunpack.c.h.b16 %v428
        %v1097 = vunpack.c.l.b16 %v429
        %v1098 = vunpack.c.h.b16 %v429
        %v1099 = vunpack.c.l.b16 %v430
        %v1100 = vunpack.c.h.b16 %v430
        %v1101 = vunpack.c.l.b16 %v431
        %v1102 = vunpack.c.h.b16 %v431
        %v1103 = vunpack.c.l.b16 %v432
        %v1104 = vunpack.c.h.b16 %v432
        %v1105 = vunpack.c.l.b16 %v433
        %v1106 = vunpack.c.h.b16 %v433
        %v1107 = vunpack.c.l.b16 %v434
        %v1108 = vunpack.c.h.b16 %v434
        %v1109 = vunpack.c.l.b16 %v435
        %v1110 = vunpack.c.h.b16 %v435
        %v1111 = vunpack.c.l.b16 %v436
        %v1112 = vunpack.c.h.b16 %v436
        %v1113 = vunpack.c.l.b16 %v437
        %v1114 = vunpack.c.h.b16 %v437
        %v1115 = vunpack.c.l.b16 %v438
        %v1116 = vunpack.c.h.b16 %v438
        %v1117 = vunpack.c.l.b16 %v439
        %v1118 = vunpack.c.h.b16 %v439
        %v1119 = vunpack.c.l.b16 %v440
        %v1120 = vunpack.c.h.b16 %v440
        %v1121 = vunpack.c.l.b16 %v441
        %v1122 = vunpack.c.h.b16 %v441
        %v1123 = vunpack.c.l.b16 %v442
        %v1124 = vunpack.c.h.b16 %v442
        %v1125 = vunpack.c.l.b16 %v443
        %v1126 = vunpack.c.h.b16 %v443
        %v1127 = vunpack.c.l.b16 %v444
        %v1128 = vunpack.c.h.b16 %v444
        %v1129 = vunpack.c.l.b16 %v445
        %v1130 = vunpack.c.h.b16 %v445
        %v1131 = vunpack.c.l.b16 %v446
        %v1132 = vunpack.c.h.b16 %v446
        %v1133 = vunpack.c.l.b16 %v447
        %v1134 = vunpack.c.h.b16 %v447
        %v1135 = vunpack.c.l.b16 %v448
        %v1136 = vunpack.c.h.b16 %v448
        %v1137 = vunpack.c.l.b16 %v449
        %v1138 = vunpack.c.h.b16 %v449
        %v1139 = vunpack.c.l.b16 %v450
        %v1140 = vunpack.c.h.b16 %v450
        %v1141 = vunpack.c.l.b16 %v451
        %v1142 = vunpack.c.h.b16 %v451
        %v1143 = vunpack.c.l.b16 %v452
        %v1144 = vunpack.c.h.b16 %v452
        %v1145 = vunpack.c.l.b16 %v453
        %v1146 = vunpack.c.h.b16 %v453
        %v1147 = vunpack.c.l.b16 %v454
        %v1148 = vunpack.c.h.b16 %v454
        %v1149 = vunpack.c.l.b16 %v455
        %v1150 = vunpack.c.h.b16 %v455
        %v1151 = vunpack.c.l.b16 %v456
        %v1152 = vunpack.c.h.b16 %v456
        %v1153 = vunpack.c.l.b16 %v457
        %v1154 = vunpack.c.h.b16 %v457
        %v1155 = vunpack.c.l.b16 %v458
        %v1156 = vunpack.c.h.b16 %v458
        %v1157 = vunpack.c.l.b16 %v459
        %v1158 = vunpack.c.h.b16 %v459
        %v1159 = vunpack.c.l.b16 %v460
        %v1160 = vunpack.c.h.b16 %v460
        %v1161 = vunpack.c.l.b16 %v461
        %v1162 = vunpack.c.h.b16 %v461
        %v1163 = vunpack.c.l.b16 %v462
        %v1164 = vunpack.c.h.b16 %v462
        %v1165 = vunpack.c.l.b16 %v463
        %v1166 = vunpack.c.h.b16 %v463
        %v1167 = vunpack.c.l.b16 %v464
        %v1168 = vunpack.c.h.b16 %v464
        %v1169 = vunpack.c.l.b16 %v465
        %v1170 = vunpack.c.h.b16 %v465
        %v1171 = vunpack.c.l.b16 %v466
        %v1172 = vunpack.c.h.b16 %v466
        %v1173 = vunpack.c.l.b16 %v467
        %v1174 = vunpack.c.h.b16 %v467
        %v1175 = vunpack.c.l.b16 %v468
        %v1176 = vunpack.c.h.b16 %v468
        %v1177 = vunpack.c.l.b16 %v469
        %v1178 = vunpack.c.h.b16 %v469
        %v1179 = vunpack.c.l.b16 %v470
        %v1180 = vunpack.c.h.b16 %v470
        %v1181 = vunpack.c.l.b16 %v471
        %v1182 = vunpack.c.h.b16 %v471
        %v1183 = vunpack.c.l.b16 %v472
        %v1184 = vunpack.c.h.b16 %v472
        %v1185 = vunpack.c.l.b16 %v473
        %v1186 = vunpack.c.h.b16 %v473
        %v1187 = vunpack.c.l.b16 %v474
        %v1188 = vunpack.c.h.b16 %v474
        %v1189 = vunpack.c.l.b16 %v475
        %v1190 = vunpack.c.h.b16 %v475
        %v1191 = vunpack.c.l.b16 %v476
        %v1192 = vunpack.c.h.b16 %v476
        %v1193 = vunpack.c.l.b16 %v477
        %v1194 = vunpack.c.h.b16 %v477
        %v1195 = vunpack.c.l.b16 %v478
        %v1196 = vunpack.c.h.b16 %v478
        %v1197 = vunpack.c.l.b16 %v479
        %v1198 = vunpack.c.h.b16 %v479
        %v1199 = vunpack.c.l.b16 %v480
        %v1200 = vunpack.c.h.b16 %v480
        %v1201 = vunpack.c.l.b16 %v481
        %v1202 = vunpack.c.h.b16 %v481
        %v1203 = vunpack.c.l.b16 %v482
        %v1204 = vunpack.c.h.b16 %v482
        %v1205 = vunpack.c.l.b16 %v483
        %v1206 = vunpack.c.h.b16 %v483
        %v1207 = vunpack.c.l.b16 %v484
        %v1208 = vunpack.c.h.b16 %v484
        %v1209 = vunpack.c.l.b16 %v485
        %v1210 = vunpack.c.h.b16 %v485
        %v1211 = vunpack.c.l.b16 %v486
        %v1212 = vunpack.c.h.b16 %v486
        %v1213 = vunpack.c.l.b16 %v487
        %v1214 = vunpack.c.h.b16 %v487
        %v1215 = vunpack.c.l.b16 %v488
        %v1216 = vunpack.c.h.b16 %v488
        %v1217 = vunpack.c.l.b16 %v489
        %v1218 = vunpack.c.h.b16 %v489
        %v1219 = vunpack.c.l.b16 %v490
        %v1220 = vunpack.c.h.b16 %v490
        %v1221 = vunpack.c.l.b16 %v491
        %v1222 = vunpack.c.h.b16 %v491
        %v1223 = vunpack.c.l.b16 %v492
        %v1224 = vunpack.c.h.b16 %v492
        %v1225 = vunpack.c.l.b16 %v493
        %v1226 = vunpack.c.h.b16 %v493
        %v1227 = vunpack.c.l.b16 %v494
        %v1228 = vunpack.c.h.b16 %v494
        %v1229 = vunpack.c.l.b16 %v495
        %v1230 = vunpack.c.h.b16 %v495
        %v1231 = vunpack.c.l.b16 %v496
        %v1232 = vunpack.c.h.b16 %v496
        %v1233 = vunpack.c.l.b16 %v497
        %v1234 = vunpack.c.h.b16 %v497
        %v1235 = vunpack.c.l.b16 %v498
        %v1236 = vunpack.c.h.b16 %v498
        %v1237 = vunpack.c.l.b16 %v499
        %v1238 = vunpack.c.h.b16 %v499
        %v1239 = vunpack.c.l.b16 %v500
        %v1240 = vunpack.c.h.b16 %v500
        %v1241 = vunpack.c.l.b16 %v501
        %v1242 = vunpack.c.h.b16 %v501
        %v1243 = vunpack.c.l.b16 %v502
        %v1244 = vunpack.c.h.b16 %v502
        %v1245 = vunpack.c.l.b16 %v503
        %v1246 = vunpack.c.h.b16 %v503
        %v1247 = vunpack.c.l.b16 %v504
        %v1248 = vunpack.c.h.b16 %v504
        %v1249 = vunpack.c.l.b16 %v505
        %v1250 = vunpack.c.h.b16 %v505
        %v1251 = vunpack.c.l.b16 %v506
        %v1252 = vunpack.c.h.b16 %v506
        %v1253 = vunpack.c.l.b16 %v507
        %v1254 = vunpack.c.h.b16 %v507
        %v1255 = vunpack.c.l.b16 %v508
        %v1256 = vunpack.c.h.b16 %v508
        %v1257 = vunpack.c.l.b16 %v509
        %v1258 = vunpack.c.h.b16 %v509
        %v1259 = vunpack.c.l.b16 %v510
        %v1260 = vunpack.c.h.b16 %v510
        %v1261 = vunpack.c.l.b16 %v511
        %v1262 = vunpack.c.h.b16 %v511
        %v1263 = vunpack.c.l.b16 %v512
        %v1264 = vunpack.c.h.b16 %v512
        %v1265 = vunpack.c.l.b16 %v513
        %v1266 = vunpack.c.h.b16 %v513
        %v1267 = vunpack.c.l.b16 %v514
        %v1268 = vunpack.c.h.b16 %v514
        %v1269 = vunpack.c.l.b16 %v515
        %v1270 = vunpack.c.h.b16 %v515
        %v1271 = vunpack.c.l.b16 %v516
        %v1272 = vunpack.c.h.b16 %v516
        %v1273 = vunpack.c.l.b16 %v517
        %v1274 = vunpack.c.h.b16 %v517
        %v1275 = vunpack.c.l.b16 %v518
        %v1276 = vunpack.c.h.b16 %v518
        %v1277 = vunpack.c.l.b16 %v519
        %v1278 = vunpack.c.h.b16 %v519
        %v1279 = vunpack.c.l.b16 %v520
        %v1280 = vunpack.c.h.b16 %v520
        %v1281 = vunpack.c.l.b16 %v521
        %v1282 = vunpack.c.h.b16 %v521
        %v1283 = vunpack.c.l.b16 %v522
        %v1284 = vunpack.c.h.b16 %v522
        %v1285 = vunpack.c.l.b16 %v523
        %v1286 = vunpack.c.h.b16 %v523
        %v1287 = vunpack.c.l.b16 %v524
        %v1288 = vunpack.c.h.b16 %v524
        %v1289 = vunpack.c.l.b16 %v525
        %v1290 = vunpack.c.h.b16 %v525
        %v1291 = vunpack.c.l.b16 %v526
        %v1292 = vunpack.c.h.b16 %v526
        %v1293 = vunpack.c.l.b16 %v527
        %v1294 = vunpack.c.h.b16 %v527
        %v1295 = vunpack.c.l.b16 %v528
        %v1296 = vunpack.c.h.b16 %v528
        %v1297 = vunpack.c.l.b16 %v529
        %v1298 = vunpack.c.h.b16 %v529
        %v1299 = vunpack.c.l.b16 %v530
        %v1300 = vunpack.c.h.b16 %v530
        %v1301 = vunpack.c.l.b16 %v531
        %v1302 = vunpack.c.h.b16 %v531
        %v1303 = vunpack.c.l.b16 %v532
        %v1304 = vunpack.c.h.b16 %v532
        %v1305 = vunpack.c.l.b16 %v533
        %v1306 = vunpack.c.h.b16 %v533
        %v1307 = vunpack.c.l.b16 %v534
        %v1308 = vunpack.c.h.b16 %v534
        %v1309 = vunpack.c.l.b16 %v535
        %v1310 = vunpack.c.h.b16 %v535
        %v1311 = vunpack.c.l.b16 %v536
        %v1312 = vunpack.c.h.b16 %v536
        %v1313 = vunpack.c.l.b16 %v537
        %v1314 = vunpack.c.h.b16 %v537
        %v1315 = vunpack.c.l.b16 %v538
        %v1316 = vunpack.c.h.b16 %v538
        %v1317 = vunpack.c.l.b16 %v539
        %v1318 = vunpack.c.h.b16 %v539
        %v1319 = vunpack.c.l.b16 %v540
        %v1320 = vunpack.c.h.b16 %v540
        %v1321 = vunpack.c.l.b16 %v541
        %v1322 = vunpack.c.h.b16 %v541
        %v1323 = vunpack.c.l.b16 %v542
        %v1324 = vunpack.c.h.b16 %v542
        %v1325 = vunpack.c.l.b16 %v543
        %v1326 = vunpack.c.h.b16 %v543
        %v1327 = vunpack.c.l.b16 %v544
        %v1328 = vunpack.c.h.b16 %v544
        %v1329 = vunpack.c.l.b16 %v545
        %v1330 = vunpack.c.h.b16 %v545
        %v1331 = vunpack.c.l.b16 %v546
        %v1332 = vunpack.c.h.b16 %v546
        %v1333 = vunpack.c.l.b16 %v547
        %v1334 = vunpack.c.h.b16 %v547
        %v1335 = vunpack.c.l.b16 %v548
        %v1336 = vunpack.c.h.b16 %v548
        %v1337 = vunpack.c.l.b16 %v549
        %v1338 = vunpack.c.h.b16 %v549
        %v1339 = vunpack.c.l.b16 %v550
        %v1340 = vunpack.c.h.b16 %v550
        %v1341 = vunpack.c.l.b16 %v551
        %v1342 = vunpack.c.h.b16 %v551
        %v1343 = vunpack.c.l.b16 %v552
        %v1344 = vunpack.c.h.b16 %v552
        %v1345 = vunpack.c.l.b16 %v553
        %v1346 = vunpack.c.h.b16 %v553
        %v1347 = vunpack.c.l.b16 %v554
        %v1348 = vunpack.c.h.b16 %v554
        %v1349 = vunpack.c.l.b16 %v555
        %v1350 = vunpack.c.h.b16 %v555
        %v1351 = vunpack.c.l.b16 %v556
        %v1352 = vunpack.c.h.b16 %v556
        %v1353 = vunpack.c.l.b16 %v557
        %v1354 = vunpack.c.h.b16 %v557
        %v1355 = vunpack.c.l.b16 %v558
        %v1356 = vunpack.c.h.b16 %v558
        %v1357 = vunpack.c.l.b16 %v559
        %v1358 = vunpack.c.h.b16 %v559
        %v1359 = vunpack.c.l.b16 %v560
        %v1360 = vunpack.c.h.b16 %v560
        %v1361 = vunpack.c.l.b16 %v561
        %v1362 = vunpack.c.h.b16 %v561
        %v1363 = vunpack.c.l.b16 %v562
        %v1364 = vunpack.c.h.b16 %v562
        %v1365 = vunpack.c.l.b16 %v563
        %v1366 = vunpack.c.h.b16 %v563
        %v1367 = vunpack.c.l.b16 %v564
        %v1368 = vunpack.c.h.b16 %v564
        %v1369 = vunpack.c.l.b16 %v565
        %v1370 = vunpack.c.h.b16 %v565
        %v1371 = vunpack.c.l.b16 %v566
        %v1372 = vunpack.c.h.b16 %v566
        %v1373 = vunpack.c.l.b16 %v567
        %v1374 = vunpack.c.h.b16 %v567
        %v1375 = vunpack.c.l.b16 %v568
        %v1376 = vunpack.c.h.b16 %v568
        %v1377 = vunpack.c.l.b16 %v569
        %v1378 = vunpack.c.h.b16 %v569
        %v1379 = vunpack.c.l.b16 %v570
        %v1380 = vunpack.c.h.b16 %v570
        %v1381 = vunpack.c.l.b16 %v571
        %v1382 = vunpack.c.h.b16 %v571
        %v1383 = vpack.c.b16 %v887, %v871
        %v1384 = vpack.c.b16 %v888, %v872
        %v1385 = vpack.c.b16 %v889, %v873
        %v1386 = vpack.c.b16 %v890, %v874
        %v1387 = vpack.c.b16 %v891, %v875
        %v1388 = vpack.c.b16 %v892, %v876
        %v1389 = vpack.c.b16 %v893, %v877
        %v1390 = vpack.c.b16 %v894, %v878
        %v1391 = vpack.c.b16 %v895, %v879
        %v1392 = vpack.c.b16 %v896, %v880
        %v1393 = vpack.c.b16 %v897, %v881
        %v1394 = vpack.c.b16 %v898, %v882
        %v1395 = vpack.c.b16 %v899, %v883
        %v1396 = vpack.c.b16 %v900, %v884
        %v1397 = vpack.c.b16 %v901, %v885
        %v1398 = vpack.c.b16 %v902, %v886
        %v1399 = vpack.c.b16 %v919, %v903
        %v1400 = vpack.c.b16 %v920, %v904
        %v1401 = vpack.c.b16 %v921, %v905
        %v1402 = vpack.c.b16 %v922, %v906
        %v1403 = vpack.c.b16 %v923, %v907
        %v1404 = vpack.c.b16 %v924, %v908
        %v1405 = vpack.c.b16 %v925, %v909
        %v1406 = vpack.c.b16 %v926, %v910
        %v1407 = vpack.c.b16 %v927, %v911
        %v1408 = vpack.c.b16 %v928, %v912
        %v1409 = vpack.c.b16 %v929, %v913
        %v1410 = vpack.c.b16 %v930, %v914
        %v1411 = vpack.c.b16 %v931, %v915
        %v1412 = vpack.c.b16 %v932, %v916
        %v1413 = vpack.c.b16 %v933, %v917
        %v1414 = vpack.c.b16 %v934, %v918
        %v1415 = vpack.c.b16 %v951, %v935
        %v1416 = vpack.c.b16 %v952, %v936
        %v1417 = vpack.c.b16 %v953, %v937
        %v1418 = vpack.c.b16 %v954, %v938
        %v1419 = vpack.c.b16 %v955, %v939
        %v1420 = vpack.c.b16 %v956, %v940
        %v1421 = vpack.c.b16 %v957, %v941
        %v1422 = vpack.c.b16 %v958, %v942
        %v1423 = vpack.c.b16 %v959, %v943
        %v1424 = vpack.c.b16 %v960, %v944
        %v1425 = vpack.c.b16 %v961, %v945
        %v1426 = vpack.c.b16 %v962, %v946
        %v1427 = vpack.c.b16 %v963, %v947
        %v1428 = vpack.c.b16 %v964, %v948
        %v1429 = vpack.c.b16 %v965, %v949
        %v1430 = vpack.c.b16 %v966, %v950
        %v1431 = vpack.c.b16 %v983, %v967
        %v1432 = vpack.c.b16 %v984, %v968
        %v1433 = vpack.c.b16 %v985, %v969
        %v1434 = vpack.c.b16 %v986, %v970
        %v1435 = vpack.c.b16 %v987, %v971
        %v1436 = vpack.c.b16 %v988, %v972
        %v1437 = vpack.c.b16 %v989, %v973
        %v1438 = vpack.c.b16 %v990, %v974
        %v1439 = vpack.c.b16 %v991, %v975
        %v1440 = vpack.c.b16 %v992, %v976
        %v1441 = vpack.c.b16 %v993, %v977
        %v1442 = vpack.c.b16 %v994, %v978
        %v1443 = vpack.c.b16 %v995, %v979
        %v1444 = vpack.c.b16 %v996, %v980
        %v1445 = vpack.c.b16 %v997, %v981
        %v1446 = vpack.c.b16 %v998, %v982
        %v1447 = vpack.c.b16 %v1015, %v999
        %v1448 = vpack.c.b16 %v1016, %v1000
        %v1449 = vpack.c.b16 %v1017, %v1001
        %v1450 = vpack.c.b16 %v1018, %v1002
        %v1451 = vpack.c.b16 %v1019, %v1003
        %v1452 = vpack.c.b16 %v1020, %v1004
        %v1453 = vpack.c.b16 %v1021, %v1005
        %v1454 = vpack.c.b16 %v1022, %v1006
        %v1455 = vpack.c.b16 %v1023, %v1007
        %v1456 = vpack.c.b16 %v1024, %v1008
        %v1457 = vpack.c.b16 %v1025, %v1009
        %v1458 = vpack.c.b16 %v1026, %v1010
        %v1459 = vpack.c.b16 %v1027, %v1011
        %v1460 = vpack.c.b16 %v1028, %v1012
        %v1461 = vpack.c.b16 %v1029, %v1013
        %v1462 = vpack.c.b16 %v1030, %v1014
        %v1463 = vpack.c.b16 %v1047, %v1031
        %v1464 = vpack.c.b16 %v1048, %v1032
        %v1465 = vpack.c.b16 %v1049, %v1033
        %v1466 = vpack.c.b16 %v1050, %v1034
        %v1467 = vpack.c.b16 %v1051, %v1035
        %v1468 = vpack.c.b16 %v1052, %v1036
        %v1469 = vpack.c.b16 %v1053, %v1037
        %v1470 = vpack.c.b16 %v1054, %v1038
        %v1471 = vpack.c.b16 %v1055, %v1039
        %v1472 = vpack.c.b16 %v1056, %v1040
        %v1473 = vpack.c.b16 %v1057, %v1041
        %v1474 = vpack.c.b16 %v1058, %v1042
        %v1475 = vpack.c.b16 %v1059, %v1043
        %v1476 = vpack.c.b16 %v1060, %v1044
        %v1477 = vpack.c.b16 %v1061, %v1045
        %v1478 = vpack.c.b16 %v1062, %v1046
        %v1479 = vpack.c.b16 %v1079, %v1063
        %v1480 = vpack.c.b16 %v1080, %v1064
        %v1481 = vpack.c.b16 %v1081, %v1065
        %v1482 = vpack.c.b16 %v1082, %v1066
        %v1483 = vpack.c.b16 %v1083, %v1067
        %v1484 = vpack.c.b16 %v1084, %v1068
        %v1485 = vpack.c.b16 %v1085, %v1069
        %v1486 = vpack.c.b16 %v1086, %v1070
        %v1487 = vpack.c.b16 %v1087, %v1071
        %v1488 = vpack.c.b16 %v1088, %v1072
        %v1489 = vpack.c.b16 %v1089, %v1073
        %v1490 = vpack.c.b16 %v1090, %v1074
        %v1491 = vpack.c.b16 %v1091, %v1075
        %v1492 = vpack.c.b16 %v1092, %v1076
        %v1493 = vpack.c.b16 %v1093, %v1077
        %v1494 = vpack.c.b16 %v1094, %v1078
        %v1495 = vpack.c.b16 %v1111, %v1095
        %v1496 = vpack.c.b16 %v1112, %v1096
        %v1497 = vpack.c.b16 %v1113, %v1097
        %v1498 = vpack.c.b16 %v1114, %v1098
        %v1499 = vpack.c.b16 %v1115, %v1099
        %v1500 = vpack.c.b16 %v1116, %v1100
        %v1501 = vpack.c.b16 %v1117, %v1101
        %v1502 = vpack.c.b16 %v1118, %v1102
        %v1503 = vpack.c.b16 %v1119, %v1103
        %v1504 = vpack.c.b16 %v1120, %v1104
        %v1505 = vpack.c.b16 %v1121, %v1105
        %v1506 = vpack.c.b16 %v1122, %v1106
        %v1507 = vpack.c.b16 %v1123, %v1107
        %v1508 = vpack.c.b16 %v1124, %v1108
        %v1509 = vpack.c.b16 %v1125, %v1109
        %v1510 = vpack.c.b16 %v1126, %v1110
        %v1511 = vpack.c.b16 %v1143, %v1127
        %v1512 = vpack.c.b16 %v1144, %v1128
        %v1513 = vpack.c.b16 %v1145, %v1129
        %v1514 = vpack.c.b16 %v1146, %v1130
        %v1515 = vpack.c.b16 %v1147, %v1131
        %v1516 = vpack.c.b16 %v1148, %v1132
        %v1517 = vpack.c.b16 %v1149, %v1133
        %v1518 = vpack.c.b16 %v1150, %v1134
        %v1519 = vpack.c.b16 %v1151, %v1135
        %v1520 = vpack.c.b16 %v1152, %v1136
        %v1521 = vpack.c.b16 %v1153, %v1137
        %v1522 = vpack.c.b16 %v1154, %v1138
        %v1523 = vpack.c.b16 %v1155, %v1139
        %v1524 = vpack.c.b16 %v1156, %v1140
        %v1525 = vpack.c.b16 %v1157, %v1141
        %v1526 = vpack.c.b16 %v1158, %v1142
        %v1527 = vpack.c.b16 %v1175, %v1159
        %v1528 = vpack.c.b16 %v1176, %v1160
        %v1529 = vpack.c.b16 %v1177, %v1161
        %v1530 = vpack.c.b16 %v1178, %v1162
        %v1531 = vpack.c.b16 %v1179, %v1163
        %v1532 = vpack.c.b16 %v1180, %v1164
        %v1533 = vpack.c.b16 %v1181, %v1165
        %v1534 = vpack.c.b16 %v1182, %v1166
        %v1535 = vpack.c.b16 %v1183, %v1167
        %v1536 = vpack.c.b16 %v1184, %v1168
        %v1537 = vpack.c.b16 %v1185, %v1169
        %v1538 = vpack.c.b16 %v1186, %v1170
        %v1539 = vpack.c.b16 %v1187, %v1171
        %v1540 = vpack.c.b16 %v1188, %v1172
        %v1541 = vpack.c.b16 %v1189, %v1173
        %v1542 = vpack.c.b16 %v1190, %v1174
        %v1543 = vpack.c.b16 %v1207, %v1191
        %v1544 = vpack.c.b16 %v1208, %v1192
        %v1545 = vpack.c.b16 %v1209, %v1193
        %v1546 = vpack.c.b16 %v1210, %v1194
        %v1547 = vpack.c.b16 %v1211, %v1195
        %v1548 = vpack.c.b16 %v1212, %v1196
        %v1549 = vpack.c.b16 %v1213, %v1197
        %v1550 = vpack.c.b16 %v1214, %v1198
        %v1551 = vpack.c.b16 %v1215, %v1199
        %v1552 = vpack.c.b16 %v1216, %v1200
        %v1553 = vpack.c.b16 %v1217, %v1201
        %v1554 = vpack.c.b16 %v1218, %v1202
        %v1555 = vpack.c.b16 %v1219, %v1203
        %v1556 = vpack.c.b16 %v1220, %v1204
        %v1557 = vpack.c.b16 %v1221, %v1205
        %v1558 = vpack.c.b16 %v1222, %v1206
        %v1559 = vpack.c.b16 %v1239, %v1223
        %v1560 = vpack.c.b16 %v1240, %v1224
        %v1561 = vpack.c.b16 %v1241, %v1225
        %v1562 = vpack.c.b16 %v1242, %v1226
        %v1563 = vpack.c.b16 %v1243, %v1227
        %v1564 = vpack.c.b16 %v1244, %v1228
        %v1565 = vpack.c.b16 %v1245, %v1229
        %v1566 = vpack.c.b16 %v1246, %v1230
        %v1567 = vpack.c.b16 %v1247, %v1231
        %v1568 = vpack.c.b16 %v1248, %v1232
        %v1569 = vpack.c.b16 %v1249, %v1233
        %v1570 = vpack.c.b16 %v1250, %v1234
        %v1571 = vpack.c.b16 %v1251, %v1235
        %v1572 = vpack.c.b16 %v1252, %v1236
        %v1573 = vpack.c.b16 %v1253, %v1237
        %v1574 = vpack.c.b16 %v1254, %v1238
        %v1575 = vpack.c.b16 %v1271, %v1255
        %v1576 = vpack.c.b16 %v1272, %v1256
        %v1577 = vpack.c.b16 %v1273, %v1257
        %v1578 = vpack.c.b16 %v1274, %v1258
        %v1579 = vpack.c.b16 %v1275, %v1259
        %v1580 = vpack.c.b16 %v1276, %v1260
        %v1581 = vpack.c.b16 %v1277, %v1261
        %v1582 = vpack.c.b16 %v1278, %v1262
        %v1583 = vpack.c.b16 %v1279, %v1263
        %v1584 = vpack.c.b16 %v1280, %v1264
        %v1585 = vpack.c.b16 %v1281, %v1265
        %v1586 = vpack.c.b16 %v1282, %v1266
        %v1587 = vpack.c.b16 %v1283, %v1267
        %v1588 = vpack.c.b16 %v1284, %v1268
        %v1589 = vpack.c.b16 %v1285, %v1269
        %v1590 = vpack.c.b16 %v1286, %v1270
        %v1591 = vpack.c.b16 %v1303, %v1287
        %v1592 = vpack.c.b16 %v1304, %v1288
        %v1593 = vpack.c.b16 %v1305, %v1289
        %v1594 = vpack.c.b16 %v1306, %v1290
        %v1595 = vpack.c.b16 %v1307, %v1291
        %v1596 = vpack.c.b16 %v1308, %v1292
        %v1597 = vpack.c.b16 %v1309, %v1293
        %v1598 = vpack.c.b16 %v1310, %v1294
        %v1599 = vpack.c.b16 %v1311, %v1295
        %v1600 = vpack.c.b16 %v1312, %v1296
        %v1601 = vpack.c.b16 %v1313, %v1297
        %v1602 = vpack.c.b16 %v1314, %v1298
        %v1603 = vpack.c.b16 %v1315, %v1299
        %v1604 = vpack.c.b16 %v1316, %v1300
        %v1605 = vpack.c.b16 %v1317, %v1301
        %v1606 = vpack.c.b16 %v1318, %v1302
        %v1607 = vpack.c.b16 %v1335, %v1319
        %v1608 = vpack.c.b16 %v1336, %v1320
        %v1609 = vpack.c.b16 %v1337, %v1321
        %v1610 = vpack.c.b16 %v1338, %v1322
        %v1611 = vpack.c.b16 %v1339, %v1323
        %v1612 = vpack.c.b16 %v1340, %v1324
        %v1613 = vpack.c.b16 %v1341, %v1325
        %v1614 = vpack.c.b16 %v1342, %v1326
        %v1615 = vpack.c.b16 %v1343, %v1327
        %v1616 = vpack.c.b16 %v1344, %v1328
        %v1617 = vpack.c.b16 %v1345, %v1329
        %v1618 = vpack.c.b16 %v1346, %v1330
        %v1619 = vpack.c.b16 %v1347, %v1331
        %v1620 = vpack.c.b16 %v1348, %v1332
        %v1621 = vpack.c.b16 %v1349, %v1333
        %v1622 = vpack.c.b16 %v1350, %v1334
        %v1623 = vpack.c.b16 %v1367, %v1351
        %v1624 = vpack.c.b16 %v1368, %v1352
        %v1625 = vpack.c.b16 %v1369, %v1353
        %v1626 = vpack.c.b16 %v1370, %v1354
        %v1627 = vpack.c.b16 %v1371, %v1355
        %v1628 = vpack.c.b16 %v1372, %v1356
        %v1629 = vpack.c.b16 %v1373, %v1357
        %v1630 = vpack.c.b16 %v1374, %v1358
        %v1631 = vpack.c.b16 %v1375, %v1359
        %v1632 = vpack.c.b16 %v1376, %v1360
        %v1633 = vpack.c.b16 %v1377, %v1361
        %v1634 = vpack.c.b16 %v1378, %v1362
        %v1635 = vpack.c.b16 %v1379, %v1363
        %v1636 = vpack.c.b16 %v1380, %v1364
        %v1637 = vpack.c.b16 %v1381, %v1365
        %v1638 = vpack.c.b16 %v1382, %v1366
        %1895 = vmatpush.bf16.msra.mxu0 %v1495
        %1896 = vmatpush.bf16.msra.mxu0 %v1479
        %1897 = vmatpush.bf16.msra.mxu0 %v1463
        %1898 = vmatpush.bf16.msra.mxu0 %v1447
        %1899 = vmatpush.bf16.msra.mxu0 %v1431
        %1900 = vmatpush.bf16.msra.mxu0 %v1415
        %1901 = vmatpush.bf16.msra.mxu0 %v1399
        %1902 = vmatpush.bf16.msra.mxu0 %v1383
        %1903 = vmatmul.bf16.gmra.mxu0 %v611
        %v1904 = vpop.f32.mrf.mxu0
        %v1905 = vadd.f32 %v576, %v1904
        %v1906 = vpop.f32.mrf.mxu0
        %1907 = vdwg.mxu0
        %1908 = vmatpush.bf16.msra.mxu0 %v1623
        %1909 = vmatpush.bf16.msra.mxu0 %v1607
        %1910 = vmatpush.bf16.msra.mxu0 %v1591
        %1911 = vmatpush.bf16.msra.mxu0 %v1575
        %1912 = vmatpush.bf16.msra.mxu0 %v1559
        %1913 = vmatpush.bf16.msra.mxu0 %v1543
        %1914 = vmatpush.bf16.msra.mxu0 %v1527
        %1915 = vmatpush.bf16.msra.mxu0 %v1511
        %1916 = vmatmul.bf16.gmra.mxu0 %v612
        %v1917 = vpop.f32.mrf.mxu0
        %v1918 = vadd.f32 %v1905, %v1917
        %v1919 = vpop.f32.mrf.mxu0
        %1920 = vdwg.mxu0
        %1921 = vmatpush.bf16.msra.mxu0 %v1496
        %1922 = vmatpush.bf16.msra.mxu0 %v1480
        %1923 = vmatpush.bf16.msra.mxu0 %v1464
        %1924 = vmatpush.bf16.msra.mxu0 %v1448
        %1925 = vmatpush.bf16.msra.mxu0 %v1432
        %1926 = vmatpush.bf16.msra.mxu0 %v1416
        %1927 = vmatpush.bf16.msra.mxu0 %v1400
        %1928 = vmatpush.bf16.msra.mxu0 %v1384
        %1929 = vmatmul.bf16.gmra.mxu0 %v611
        %v1930 = vpop.f32.mrf.mxu0
        %v1931 = vadd.f32 %v577, %v1930
        %v1932 = vpop.f32.mrf.mxu0
        %1933 = vdwg.mxu0
        %1934 = vmatpush.bf16.msra.mxu0 %v1624
        %1935 = vmatpush.bf16.msra.mxu0 %v1608
        %1936 = vmatpush.bf16.msra.mxu0 %v1592
        %1937 = vmatpush.bf16.msra.mxu0 %v1576
        %1938 = vmatpush.bf16.msra.mxu0 %v1560
        %1939 = vmatpush.bf16.msra.mxu0 %v1544
        %1940 = vmatpush.bf16.msra.mxu0 %v1528
        %1941 = vmatpush.bf16.msra.mxu0 %v1512
        %1942 = vmatmul.bf16.gmra.mxu0 %v612
        %v1943 = vpop.f32.mrf.mxu0
        %v1944 = vadd.f32 %v1931, %v1943
        %v1945 = vpop.f32.mrf.mxu0
        %1946 = vdwg.mxu0
        %1947 = vmatpush.bf16.msra.mxu0 %v1497
        %1948 = vmatpush.bf16.msra.mxu0 %v1481
        %1949 = vmatpush.bf16.msra.mxu0 %v1465
        %1950 = vmatpush.bf16.msra.mxu0 %v1449
        %1951 = vmatpush.bf16.msra.mxu0 %v1433
        %1952 = vmatpush.bf16.msra.mxu0 %v1417
        %1953 = vmatpush.bf16.msra.mxu0 %v1401
        %1954 = vmatpush.bf16.msra.mxu0 %v1385
        %1955 = vmatmul.bf16.gmra.mxu0 %v611
        %v1956 = vpop.f32.mrf.mxu0
        %v1957 = vadd.f32 %v578, %v1956
        %v1958 = vpop.f32.mrf.mxu0
        %1959 = vdwg.mxu0
        %1960 = vmatpush.bf16.msra.mxu0 %v1625
        %1961 = vmatpush.bf16.msra.mxu0 %v1609
        %1962 = vmatpush.bf16.msra.mxu0 %v1593
        %1963 = vmatpush.bf16.msra.mxu0 %v1577
        %1964 = vmatpush.bf16.msra.mxu0 %v1561
        %1965 = vmatpush.bf16.msra.mxu0 %v1545
        %1966 = vmatpush.bf16.msra.mxu0 %v1529
        %1967 = vmatpush.bf16.msra.mxu0 %v1513
        %1968 = vmatmul.bf16.gmra.mxu0 %v612
        %v1969 = vpop.f32.mrf.mxu0
        %v1970 = vadd.f32 %v1957, %v1969
        %v1971 = vpop.f32.mrf.mxu0
        %1972 = vdwg.mxu0
        %1973 = vmatpush.bf16.msra.mxu0 %v1498
        %1974 = vmatpush.bf16.msra.mxu0 %v1482
        %1975 = vmatpush.bf16.msra.mxu0 %v1466
        %1976 = vmatpush.bf16.msra.mxu0 %v1450
        %1977 = vmatpush.bf16.msra.mxu0 %v1434
        %1978 = vmatpush.bf16.msra.mxu0 %v1418
        %1979 = vmatpush.bf16.msra.mxu0 %v1402
        %1980 = vmatpush.bf16.msra.mxu0 %v1386
        %1981 = vmatmul.bf16.gmra.mxu0 %v611
        %v1982 = vpop.f32.mrf.mxu0
        %v1983 = vadd.f32 %v579, %v1982
        %v1984 = vpop.f32.mrf.mxu0
        %1985 = vdwg.mxu0
        %1986 = vmatpush.bf16.msra.mxu0 %v1626
        %1987 = vmatpush.bf16.msra.mxu0 %v1610
        %1988 = vmatpush.bf16.msra.mxu0 %v1594
        %1989 = vmatpush.bf16.msra.mxu0 %v1578
        %1990 = vmatpush.bf16.msra.mxu0 %v1562
        %1991 = vmatpush.bf16.msra.mxu0 %v1546
        %1992 = vmatpush.bf16.msra.mxu0 %v1530
        %1993 = vmatpush.bf16.msra.mxu0 %v1514
        %1994 = vmatmul.bf16.gmra.mxu0 %v612
        %v1995 = vpop.f32.mrf.mxu0
        %v1996 = vadd.f32 %v1983, %v1995
        %v1997 = vpop.f32.mrf.mxu0
        %1998 = vdwg.mxu0
        %1999 = vmatpush.bf16.msra.mxu0 %v1499
        %2000 = vmatpush.bf16.msra.mxu0 %v1483
        %2001 = vmatpush.bf16.msra.mxu0 %v1467
        %2002 = vmatpush.bf16.msra.mxu0 %v1451
        %2003 = vmatpush.bf16.msra.mxu0 %v1435
        %2004 = vmatpush.bf16.msra.mxu0 %v1419
        %2005 = vmatpush.bf16.msra.mxu0 %v1403
        %2006 = vmatpush.bf16.msra.mxu0 %v1387
        %2007 = vmatmul.bf16.gmra.mxu0 %v611
        %v2008 = vpop.f32.mrf.mxu0
        %v2009 = vadd.f32 %v580, %v2008
        %v2010 = vpop.f32.mrf.mxu0
        %2011 = vdwg.mxu0
        %2012 = vmatpush.bf16.msra.mxu0 %v1627
        %2013 = vmatpush.bf16.msra.mxu0 %v1611
        %2014 = vmatpush.bf16.msra.mxu0 %v1595
        %2015 = vmatpush.bf16.msra.mxu0 %v1579
        %2016 = vmatpush.bf16.msra.mxu0 %v1563
        %2017 = vmatpush.bf16.msra.mxu0 %v1547
        %2018 = vmatpush.bf16.msra.mxu0 %v1531
        %2019 = vmatpush.bf16.msra.mxu0 %v1515
        %2020 = vmatmul.bf16.gmra.mxu0 %v612
        %v2021 = vpop.f32.mrf.mxu0
        %v2022 = vadd.f32 %v2009, %v2021
        %v2023 = vpop.f32.mrf.mxu0
        %2024 = vdwg.mxu0
        %2025 = vmatpush.bf16.msra.mxu0 %v1500
        %2026 = vmatpush.bf16.msra.mxu0 %v1484
        %2027 = vmatpush.bf16.msra.mxu0 %v1468
        %2028 = vmatpush.bf16.msra.mxu0 %v1452
        %2029 = vmatpush.bf16.msra.mxu0 %v1436
        %2030 = vmatpush.bf16.msra.mxu0 %v1420
        %2031 = vmatpush.bf16.msra.mxu0 %v1404
        %2032 = vmatpush.bf16.msra.mxu0 %v1388
        %2033 = vmatmul.bf16.gmra.mxu0 %v611
        %v2034 = vpop.f32.mrf.mxu0
        %v2035 = vadd.f32 %v581, %v2034
        %v2036 = vpop.f32.mrf.mxu0
        %2037 = vdwg.mxu0
        %2038 = vmatpush.bf16.msra.mxu0 %v1628
        %2039 = vmatpush.bf16.msra.mxu0 %v1612
        %2040 = vmatpush.bf16.msra.mxu0 %v1596
        %2041 = vmatpush.bf16.msra.mxu0 %v1580
        %2042 = vmatpush.bf16.msra.mxu0 %v1564
        %2043 = vmatpush.bf16.msra.mxu0 %v1548
        %2044 = vmatpush.bf16.msra.mxu0 %v1532
        %2045 = vmatpush.bf16.msra.mxu0 %v1516
        %2046 = vmatmul.bf16.gmra.mxu0 %v612
        %v2047 = vpop.f32.mrf.mxu0
        %v2048 = vadd.f32 %v2035, %v2047
        %v2049 = vpop.f32.mrf.mxu0
        %2050 = vdwg.mxu0
        %2051 = vmatpush.bf16.msra.mxu0 %v1501
        %2052 = vmatpush.bf16.msra.mxu0 %v1485
        %2053 = vmatpush.bf16.msra.mxu0 %v1469
        %2054 = vmatpush.bf16.msra.mxu0 %v1453
        %2055 = vmatpush.bf16.msra.mxu0 %v1437
        %2056 = vmatpush.bf16.msra.mxu0 %v1421
        %2057 = vmatpush.bf16.msra.mxu0 %v1405
        %2058 = vmatpush.bf16.msra.mxu0 %v1389
        %2059 = vmatmul.bf16.gmra.mxu0 %v611
        %v2060 = vpop.f32.mrf.mxu0
        %v2061 = vadd.f32 %v582, %v2060
        %v2062 = vpop.f32.mrf.mxu0
        %2063 = vdwg.mxu0
        %2064 = vmatpush.bf16.msra.mxu0 %v1629
        %2065 = vmatpush.bf16.msra.mxu0 %v1613
        %2066 = vmatpush.bf16.msra.mxu0 %v1597
        %2067 = vmatpush.bf16.msra.mxu0 %v1581
        %2068 = vmatpush.bf16.msra.mxu0 %v1565
        %2069 = vmatpush.bf16.msra.mxu0 %v1549
        %2070 = vmatpush.bf16.msra.mxu0 %v1533
        %2071 = vmatpush.bf16.msra.mxu0 %v1517
        %2072 = vmatmul.bf16.gmra.mxu0 %v612
        %v2073 = vpop.f32.mrf.mxu0
        %v2074 = vadd.f32 %v2061, %v2073
        %v2075 = vpop.f32.mrf.mxu0
        %2076 = vdwg.mxu0
        %2077 = vmatpush.bf16.msra.mxu0 %v1502
        %2078 = vmatpush.bf16.msra.mxu0 %v1486
        %2079 = vmatpush.bf16.msra.mxu0 %v1470
        %2080 = vmatpush.bf16.msra.mxu0 %v1454
        %2081 = vmatpush.bf16.msra.mxu0 %v1438
        %2082 = vmatpush.bf16.msra.mxu0 %v1422
        %2083 = vmatpush.bf16.msra.mxu0 %v1406
        %2084 = vmatpush.bf16.msra.mxu0 %v1390
        %2085 = vmatmul.bf16.gmra.mxu0 %v611
        %v2086 = vpop.f32.mrf.mxu0
        %v2087 = vadd.f32 %v583, %v2086
        %v2088 = vpop.f32.mrf.mxu0
        %2089 = vdwg.mxu0
        %2090 = vmatpush.bf16.msra.mxu0 %v1630
        %2091 = vmatpush.bf16.msra.mxu0 %v1614
        %2092 = vmatpush.bf16.msra.mxu0 %v1598
        %2093 = vmatpush.bf16.msra.mxu0 %v1582
        %2094 = vmatpush.bf16.msra.mxu0 %v1566
        %2095 = vmatpush.bf16.msra.mxu0 %v1550
        %2096 = vmatpush.bf16.msra.mxu0 %v1534
        %2097 = vmatpush.bf16.msra.mxu0 %v1518
        %2098 = vmatmul.bf16.gmra.mxu0 %v612
        %v2099 = vpop.f32.mrf.mxu0
        %v2100 = vadd.f32 %v2087, %v2099
        %v2101 = vpop.f32.mrf.mxu0
        %2102 = vdwg.mxu0
        %2103 = vmatpush.bf16.msra.mxu0 %v1503
        %2104 = vmatpush.bf16.msra.mxu0 %v1487
        %2105 = vmatpush.bf16.msra.mxu0 %v1471
        %2106 = vmatpush.bf16.msra.mxu0 %v1455
        %2107 = vmatpush.bf16.msra.mxu0 %v1439
        %2108 = vmatpush.bf16.msra.mxu0 %v1423
        %2109 = vmatpush.bf16.msra.mxu0 %v1407
        %2110 = vmatpush.bf16.msra.mxu0 %v1391
        %2111 = vmatmul.bf16.gmra.mxu0 %v611
        %v2112 = vpop.f32.mrf.mxu0
        %v2113 = vadd.f32 %v584, %v2112
        %v2114 = vpop.f32.mrf.mxu0
        %2115 = vdwg.mxu0
        %2116 = vmatpush.bf16.msra.mxu0 %v1631
        %2117 = vmatpush.bf16.msra.mxu0 %v1615
        %2118 = vmatpush.bf16.msra.mxu0 %v1599
        %2119 = vmatpush.bf16.msra.mxu0 %v1583
        %2120 = vmatpush.bf16.msra.mxu0 %v1567
        %2121 = vmatpush.bf16.msra.mxu0 %v1551
        %2122 = vmatpush.bf16.msra.mxu0 %v1535
        %2123 = vmatpush.bf16.msra.mxu0 %v1519
        %2124 = vmatmul.bf16.gmra.mxu0 %v612
        %v2125 = vpop.f32.mrf.mxu0
        %v2126 = vadd.f32 %v2113, %v2125
        %v2127 = vpop.f32.mrf.mxu0
        %2128 = vdwg.mxu0
        %2129 = vmatpush.bf16.msra.mxu0 %v1504
        %2130 = vmatpush.bf16.msra.mxu0 %v1488
        %2131 = vmatpush.bf16.msra.mxu0 %v1472
        %2132 = vmatpush.bf16.msra.mxu0 %v1456
        %2133 = vmatpush.bf16.msra.mxu0 %v1440
        %2134 = vmatpush.bf16.msra.mxu0 %v1424
        %2135 = vmatpush.bf16.msra.mxu0 %v1408
        %2136 = vmatpush.bf16.msra.mxu0 %v1392
        %2137 = vmatmul.bf16.gmra.mxu0 %v611
        %v2138 = vpop.f32.mrf.mxu0
        %v2139 = vadd.f32 %v585, %v2138
        %v2140 = vpop.f32.mrf.mxu0
        %2141 = vdwg.mxu0
        %2142 = vmatpush.bf16.msra.mxu0 %v1632
        %2143 = vmatpush.bf16.msra.mxu0 %v1616
        %2144 = vmatpush.bf16.msra.mxu0 %v1600
        %2145 = vmatpush.bf16.msra.mxu0 %v1584
        %2146 = vmatpush.bf16.msra.mxu0 %v1568
        %2147 = vmatpush.bf16.msra.mxu0 %v1552
        %2148 = vmatpush.bf16.msra.mxu0 %v1536
        %2149 = vmatpush.bf16.msra.mxu0 %v1520
        %2150 = vmatmul.bf16.gmra.mxu0 %v612
        %v2151 = vpop.f32.mrf.mxu0
        %v2152 = vadd.f32 %v2139, %v2151
        %v2153 = vpop.f32.mrf.mxu0
        %2154 = vdwg.mxu0
        %2155 = vmatpush.bf16.msra.mxu0 %v1505
        %2156 = vmatpush.bf16.msra.mxu0 %v1489
        %2157 = vmatpush.bf16.msra.mxu0 %v1473
        %2158 = vmatpush.bf16.msra.mxu0 %v1457
        %2159 = vmatpush.bf16.msra.mxu0 %v1441
        %2160 = vmatpush.bf16.msra.mxu0 %v1425
        %2161 = vmatpush.bf16.msra.mxu0 %v1409
        %2162 = vmatpush.bf16.msra.mxu0 %v1393
        %2163 = vmatmul.bf16.gmra.mxu0 %v611
        %v2164 = vpop.f32.mrf.mxu0
        %v2165 = vadd.f32 %v586, %v2164
        %v2166 = vpop.f32.mrf.mxu0
        %2167 = vdwg.mxu0
        %2168 = vmatpush.bf16.msra.mxu0 %v1633
        %2169 = vmatpush.bf16.msra.mxu0 %v1617
        %2170 = vmatpush.bf16.msra.mxu0 %v1601
        %2171 = vmatpush.bf16.msra.mxu0 %v1585
        %2172 = vmatpush.bf16.msra.mxu0 %v1569
        %2173 = vmatpush.bf16.msra.mxu0 %v1553
        %2174 = vmatpush.bf16.msra.mxu0 %v1537
        %2175 = vmatpush.bf16.msra.mxu0 %v1521
        %2176 = vmatmul.bf16.gmra.mxu0 %v612
        %v2177 = vpop.f32.mrf.mxu0
        %v2178 = vadd.f32 %v2165, %v2177
        %v2179 = vpop.f32.mrf.mxu0
        %2180 = vdwg.mxu0
        %2181 = vmatpush.bf16.msra.mxu0 %v1506
        %2182 = vmatpush.bf16.msra.mxu0 %v1490
        %2183 = vmatpush.bf16.msra.mxu0 %v1474
        %2184 = vmatpush.bf16.msra.mxu0 %v1458
        %2185 = vmatpush.bf16.msra.mxu0 %v1442
        %2186 = vmatpush.bf16.msra.mxu0 %v1426
        %2187 = vmatpush.bf16.msra.mxu0 %v1410
        %2188 = vmatpush.bf16.msra.mxu0 %v1394
        %2189 = vmatmul.bf16.gmra.mxu0 %v611
        %v2190 = vpop.f32.mrf.mxu0
        %v2191 = vadd.f32 %v587, %v2190
        %v2192 = vpop.f32.mrf.mxu0
        %2193 = vdwg.mxu0
        %2194 = vmatpush.bf16.msra.mxu0 %v1634
        %2195 = vmatpush.bf16.msra.mxu0 %v1618
        %2196 = vmatpush.bf16.msra.mxu0 %v1602
        %2197 = vmatpush.bf16.msra.mxu0 %v1586
        %2198 = vmatpush.bf16.msra.mxu0 %v1570
        %2199 = vmatpush.bf16.msra.mxu0 %v1554
        %2200 = vmatpush.bf16.msra.mxu0 %v1538
        %2201 = vmatpush.bf16.msra.mxu0 %v1522
        %2202 = vmatmul.bf16.gmra.mxu0 %v612
        %v2203 = vpop.f32.mrf.mxu0
        %v2204 = vadd.f32 %v2191, %v2203
        %v2205 = vpop.f32.mrf.mxu0
        %2206 = vdwg.mxu0
        %2207 = vmatpush.bf16.msra.mxu0 %v1507
        %2208 = vmatpush.bf16.msra.mxu0 %v1491
        %2209 = vmatpush.bf16.msra.mxu0 %v1475
        %2210 = vmatpush.bf16.msra.mxu0 %v1459
        %2211 = vmatpush.bf16.msra.mxu0 %v1443
        %2212 = vmatpush.bf16.msra.mxu0 %v1427
        %2213 = vmatpush.bf16.msra.mxu0 %v1411
        %2214 = vmatpush.bf16.msra.mxu0 %v1395
        %2215 = vmatmul.bf16.gmra.mxu0 %v611
        %v2216 = vpop.f32.mrf.mxu0
        %v2217 = vadd.f32 %v588, %v2216
        %v2218 = vpop.f32.mrf.mxu0
        %2219 = vdwg.mxu0
        %2220 = vmatpush.bf16.msra.mxu0 %v1635
        %2221 = vmatpush.bf16.msra.mxu0 %v1619
        %2222 = vmatpush.bf16.msra.mxu0 %v1603
        %2223 = vmatpush.bf16.msra.mxu0 %v1587
        %2224 = vmatpush.bf16.msra.mxu0 %v1571
        %2225 = vmatpush.bf16.msra.mxu0 %v1555
        %2226 = vmatpush.bf16.msra.mxu0 %v1539
        %2227 = vmatpush.bf16.msra.mxu0 %v1523
        %2228 = vmatmul.bf16.gmra.mxu0 %v612
        %v2229 = vpop.f32.mrf.mxu0
        %v2230 = vadd.f32 %v2217, %v2229
        %v2231 = vpop.f32.mrf.mxu0
        %2232 = vdwg.mxu0
        %2233 = vmatpush.bf16.msra.mxu0 %v1508
        %2234 = vmatpush.bf16.msra.mxu0 %v1492
        %2235 = vmatpush.bf16.msra.mxu0 %v1476
        %2236 = vmatpush.bf16.msra.mxu0 %v1460
        %2237 = vmatpush.bf16.msra.mxu0 %v1444
        %2238 = vmatpush.bf16.msra.mxu0 %v1428
        %2239 = vmatpush.bf16.msra.mxu0 %v1412
        %2240 = vmatpush.bf16.msra.mxu0 %v1396
        %2241 = vmatmul.bf16.gmra.mxu0 %v611
        %v2242 = vpop.f32.mrf.mxu0
        %v2243 = vadd.f32 %v589, %v2242
        %v2244 = vpop.f32.mrf.mxu0
        %2245 = vdwg.mxu0
        %2246 = vmatpush.bf16.msra.mxu0 %v1636
        %2247 = vmatpush.bf16.msra.mxu0 %v1620
        %2248 = vmatpush.bf16.msra.mxu0 %v1604
        %2249 = vmatpush.bf16.msra.mxu0 %v1588
        %2250 = vmatpush.bf16.msra.mxu0 %v1572
        %2251 = vmatpush.bf16.msra.mxu0 %v1556
        %2252 = vmatpush.bf16.msra.mxu0 %v1540
        %2253 = vmatpush.bf16.msra.mxu0 %v1524
        %2254 = vmatmul.bf16.gmra.mxu0 %v612
        %v2255 = vpop.f32.mrf.mxu0
        %v2256 = vadd.f32 %v2243, %v2255
        %v2257 = vpop.f32.mrf.mxu0
        %2258 = vdwg.mxu0
        %2259 = vmatpush.bf16.msra.mxu0 %v1509
        %2260 = vmatpush.bf16.msra.mxu0 %v1493
        %2261 = vmatpush.bf16.msra.mxu0 %v1477
        %2262 = vmatpush.bf16.msra.mxu0 %v1461
        %2263 = vmatpush.bf16.msra.mxu0 %v1445
        %2264 = vmatpush.bf16.msra.mxu0 %v1429
        %2265 = vmatpush.bf16.msra.mxu0 %v1413
        %2266 = vmatpush.bf16.msra.mxu0 %v1397
        %2267 = vmatmul.bf16.gmra.mxu0 %v611
        %v2268 = vpop.f32.mrf.mxu0
        %v2269 = vadd.f32 %v590, %v2268
        %v2270 = vpop.f32.mrf.mxu0
        %2271 = vdwg.mxu0
        %2272 = vmatpush.bf16.msra.mxu0 %v1637
        %2273 = vmatpush.bf16.msra.mxu0 %v1621
        %2274 = vmatpush.bf16.msra.mxu0 %v1605
        %2275 = vmatpush.bf16.msra.mxu0 %v1589
        %2276 = vmatpush.bf16.msra.mxu0 %v1573
        %2277 = vmatpush.bf16.msra.mxu0 %v1557
        %2278 = vmatpush.bf16.msra.mxu0 %v1541
        %2279 = vmatpush.bf16.msra.mxu0 %v1525
        %2280 = vmatmul.bf16.gmra.mxu0 %v612
        %v2281 = vpop.f32.mrf.mxu0
        %v2282 = vadd.f32 %v2269, %v2281
        %v2283 = vpop.f32.mrf.mxu0
        %2284 = vdwg.mxu0
        %2285 = vmatpush.bf16.msra.mxu0 %v1510
        %2286 = vmatpush.bf16.msra.mxu0 %v1494
        %2287 = vmatpush.bf16.msra.mxu0 %v1478
        %2288 = vmatpush.bf16.msra.mxu0 %v1462
        %2289 = vmatpush.bf16.msra.mxu0 %v1446
        %2290 = vmatpush.bf16.msra.mxu0 %v1430
        %2291 = vmatpush.bf16.msra.mxu0 %v1414
        %2292 = vmatpush.bf16.msra.mxu0 %v1398
        %2293 = vmatmul.bf16.gmra.mxu0 %v611
        %v2294 = vpop.f32.mrf.mxu0
        %v2295 = vadd.f32 %v591, %v2294
        %v2296 = vpop.f32.mrf.mxu0
        %2297 = vdwg.mxu0
        %2298 = vmatpush.bf16.msra.mxu0 %v1638
        %2299 = vmatpush.bf16.msra.mxu0 %v1622
        %2300 = vmatpush.bf16.msra.mxu0 %v1606
        %2301 = vmatpush.bf16.msra.mxu0 %v1590
        %2302 = vmatpush.bf16.msra.mxu0 %v1574
        %2303 = vmatpush.bf16.msra.mxu0 %v1558
        %2304 = vmatpush.bf16.msra.mxu0 %v1542
        %2305 = vmatpush.bf16.msra.mxu0 %v1526
        %2306 = vmatmul.bf16.gmra.mxu0 %v612
        %v2307 = vpop.f32.mrf.mxu0
        %v2308 = vadd.f32 %v2295, %v2307
        %v2309 = vpop.f32.mrf.mxu0
        %2310 = vdwg.mxu0
        %v2311 = vmax.f32 %v1918, 0.0
        %v2312 = vmax.f32 %v1944, 0.0
        %v2313 = vmax.f32 %v1970, 0.0
        %v2314 = vmax.f32 %v1996, 0.0
        %v2315 = vmax.f32 %v2022, 0.0
        %v2316 = vmax.f32 %v2048, 0.0
        %v2317 = vmax.f32 %v2074, 0.0
        %v2318 = vmax.f32 %v2100, 0.0
        %v2319 = vmax.f32 %v2126, 0.0
        %v2320 = vmax.f32 %v2152, 0.0
        %v2321 = vmax.f32 %v2178, 0.0
        %v2322 = vmax.f32 %v2204, 0.0
        %v2323 = vmax.f32 %v2230, 0.0
        %v2324 = vmax.f32 %v2256, 0.0
        %v2325 = vmax.f32 %v2282, 0.0
        %v2326 = vmax.f32 %v2308, 0.0
        %v2327 = vpack.c.bf16 %v2311, %v2311
        %v2328 = vpack.c.bf16 %v2312, %v2312
        %v2329 = vpack.c.bf16 %v2313, %v2313
        %v2330 = vpack.c.bf16 %v2314, %v2314
        %v2331 = vpack.c.bf16 %v2315, %v2315
        %v2332 = vpack.c.bf16 %v2316, %v2316
        %v2333 = vpack.c.bf16 %v2317, %v2317
        %v2334 = vpack.c.bf16 %v2318, %v2318
        %v2335 = vpack.c.bf16 %v2319, %v2319
        %v2336 = vpack.c.bf16 %v2320, %v2320
        %v2337 = vpack.c.bf16 %v2321, %v2321
        %v2338 = vpack.c.bf16 %v2322, %v2322
        %v2339 = vpack.c.bf16 %v2323, %v2323
        %v2340 = vpack.c.bf16 %v2324, %v2324
        %v2341 = vpack.c.bf16 %v2325, %v2325
        %v2342 = vpack.c.bf16 %v2326, %v2326
        %v2343 = vld [vmem:[#allocation4] sm:$0xff]
        %v2344 = vld [vmem:[#allocation4 + $0x8] sm:$0xff]
        %v2345 = vld [vmem:[#allocation4 + $0x10] sm:$0xff]
        %v2346 = vld [vmem:[#allocation4 + $0x18] sm:$0xff]
        %v2347 = vld [vmem:[#allocation4 + $0x20] sm:$0xff]
        %v2348 = vld [vmem:[#allocation4 + $0x28] sm:$0xff]
        %v2349 = vld [vmem:[#allocation4 + $0x30] sm:$0xff]
        %v2350 = vld [vmem:[#allocation4 + $0x38] sm:$0xff]
        %v2351 = vld [vmem:[#allocation4 + $0x40] sm:$0xff]
        %v2352 = vld [vmem:[#allocation4 + $0x48] sm:$0xff]
        %v2353 = vld [vmem:[#allocation4 + $0x50] sm:$0xff]
        %v2354 = vld [vmem:[#allocation4 + $0x58] sm:$0xff]
        %v2355 = vld [vmem:[#allocation4 + $0x60] sm:$0xff]
        %v2356 = vld [vmem:[#allocation4 + $0x68] sm:$0xff]
        %v2357 = vld [vmem:[#allocation4 + $0x70] sm:$0xff]
        %v2358 = vld [vmem:[#allocation4 + $0x78] sm:$0xff]
        %v2359 = vld [vmem:[#allocation4 + $0x80] sm:$0xff]
        %v2360 = vld [vmem:[#allocation4 + $0x88] sm:$0xff]
        %v2361 = vld [vmem:[#allocation4 + $0x90] sm:$0xff]
        %v2362 = vld [vmem:[#allocation4 + $0x98] sm:$0xff]
        %v2363 = vld [vmem:[#allocation4 + $0xa0] sm:$0xff]
        %v2364 = vld [vmem:[#allocation4 + $0xa8] sm:$0xff]
        %v2365 = vld [vmem:[#allocation4 + $0xb0] sm:$0xff]
        %v2366 = vld [vmem:[#allocation4 + $0xb8] sm:$0xff]
        %v2367 = vld [vmem:[#allocation4 + $0xc0] sm:$0xff]
        %v2368 = vld [vmem:[#allocation4 + $0xc8] sm:$0xff]
        %v2369 = vld [vmem:[#allocation4 + $0xd0] sm:$0xff]
        %v2370 = vld [vmem:[#allocation4 + $0xd8] sm:$0xff]
        %v2371 = vld [vmem:[#allocation4 + $0xe0] sm:$0xff]
        %v2372 = vld [vmem:[#allocation4 + $0xe8] sm:$0xff]
        %v2373 = vld [vmem:[#allocation4 + $0xf0] sm:$0xff]
        %v2374 = vld [vmem:[#allocation4 + $0xf8] sm:$0xff]
        %v2375 = vld [vmem:[#allocation4 + $0x100] sm:$0xff]
        %v2376 = vld [vmem:[#allocation4 + $0x108] sm:$0xff]
        %v2377 = vld [vmem:[#allocation4 + $0x110] sm:$0xff]
        %v2378 = vld [vmem:[#allocation4 + $0x118] sm:$0xff]
        %v2379 = vld [vmem:[#allocation4 + $0x120] sm:$0xff]
        %v2380 = vld [vmem:[#allocation4 + $0x128] sm:$0xff]
        %v2381 = vld [vmem:[#allocation4 + $0x130] sm:$0xff]
        %v2382 = vld [vmem:[#allocation4 + $0x138] sm:$0xff]
        %v2383 = vld [vmem:[#allocation4 + $0x140] sm:$0xff]
        %v2384 = vld [vmem:[#allocation4 + $0x148] sm:$0xff]
        %v2385 = vld [vmem:[#allocation4 + $0x150] sm:$0xff]
        %v2386 = vld [vmem:[#allocation4 + $0x158] sm:$0xff]
        %v2387 = vld [vmem:[#allocation4 + $0x160] sm:$0xff]
        %v2388 = vld [vmem:[#allocation4 + $0x168] sm:$0xff]
        %v2389 = vld [vmem:[#allocation4 + $0x170] sm:$0xff]
        %v2390 = vld [vmem:[#allocation4 + $0x178] sm:$0xff]
        %v2391 = vld [vmem:[#allocation4 + $0x180] sm:$0xff]
        %v2392 = vld [vmem:[#allocation4 + $0x188] sm:$0xff]
        %v2393 = vld [vmem:[#allocation4 + $0x190] sm:$0xff]
        %v2394 = vld [vmem:[#allocation4 + $0x198] sm:$0xff]
        %v2395 = vld [vmem:[#allocation4 + $0x1a0] sm:$0xff]
        %v2396 = vld [vmem:[#allocation4 + $0x1a8] sm:$0xff]
        %v2397 = vld [vmem:[#allocation4 + $0x1b0] sm:$0xff]
        %v2398 = vld [vmem:[#allocation4 + $0x1b8] sm:$0xff]
        %v2399 = vld [vmem:[#allocation4 + $0x1c0] sm:$0xff]
        %v2400 = vld [vmem:[#allocation4 + $0x1c8] sm:$0xff]
        %v2401 = vld [vmem:[#allocation4 + $0x1d0] sm:$0xff]
        %v2402 = vld [vmem:[#allocation4 + $0x1d8] sm:$0xff]
        %v2403 = vld [vmem:[#allocation4 + $0x1e0] sm:$0xff]
        %v2404 = vld [vmem:[#allocation4 + $0x1e8] sm:$0xff]
        %v2405 = vld [vmem:[#allocation4 + $0x1f0] sm:$0xff]
        %v2406 = vld [vmem:[#allocation4 + $0x1f8] sm:$0xff]
        %v2407 = vld [vmem:[#allocation4 + $0x200] sm:$0xff]
        %v2408 = vld [vmem:[#allocation4 + $0x208] sm:$0xff]
        %v2409 = vld [vmem:[#allocation4 + $0x210] sm:$0xff]
        %v2410 = vld [vmem:[#allocation4 + $0x218] sm:$0xff]
        %v2411 = vld [vmem:[#allocation4 + $0x220] sm:$0xff]
        %v2412 = vld [vmem:[#allocation4 + $0x228] sm:$0xff]
        %v2413 = vld [vmem:[#allocation4 + $0x230] sm:$0xff]
        %v2414 = vld [vmem:[#allocation4 + $0x238] sm:$0xff]
        %v2415 = vld [vmem:[#allocation4 + $0x240] sm:$0xff]
        %v2416 = vld [vmem:[#allocation4 + $0x248] sm:$0xff]
        %v2417 = vld [vmem:[#allocation4 + $0x250] sm:$0xff]
        %v2418 = vld [vmem:[#allocation4 + $0x258] sm:$0xff]
        %v2419 = vld [vmem:[#allocation4 + $0x260] sm:$0xff]
        %v2420 = vld [vmem:[#allocation4 + $0x268] sm:$0xff]
        %v2421 = vld [vmem:[#allocation4 + $0x270] sm:$0xff]
        %v2422 = vld [vmem:[#allocation4 + $0x278] sm:$0xff]
        %v2423 = vld [vmem:[#allocation4 + $0x280] sm:$0xff]
        %v2424 = vld [vmem:[#allocation4 + $0x288] sm:$0xff]
        %v2425 = vld [vmem:[#allocation4 + $0x290] sm:$0xff]
        %v2426 = vld [vmem:[#allocation4 + $0x298] sm:$0xff]
        %v2427 = vld [vmem:[#allocation4 + $0x2a0] sm:$0xff]
        %v2428 = vld [vmem:[#allocation4 + $0x2a8] sm:$0xff]
        %v2429 = vld [vmem:[#allocation4 + $0x2b0] sm:$0xff]
        %v2430 = vld [vmem:[#allocation4 + $0x2b8] sm:$0xff]
        %v2431 = vld [vmem:[#allocation4 + $0x2c0] sm:$0xff]
        %v2432 = vld [vmem:[#allocation4 + $0x2c8] sm:$0xff]
        %v2433 = vld [vmem:[#allocation4 + $0x2d0] sm:$0xff]
        %v2434 = vld [vmem:[#allocation4 + $0x2d8] sm:$0xff]
        %v2435 = vld [vmem:[#allocation4 + $0x2e0] sm:$0xff]
        %v2436 = vld [vmem:[#allocation4 + $0x2e8] sm:$0xff]
        %v2437 = vld [vmem:[#allocation4 + $0x2f0] sm:$0xff]
        %v2438 = vld [vmem:[#allocation4 + $0x2f8] sm:$0xff]
        %v2439 = vld [vmem:[#allocation4 + $0x300] sm:$0xff]
        %v2440 = vld [vmem:[#allocation4 + $0x308] sm:$0xff]
        %v2441 = vld [vmem:[#allocation4 + $0x310] sm:$0xff]
        %v2442 = vld [vmem:[#allocation4 + $0x318] sm:$0xff]
        %v2443 = vld [vmem:[#allocation4 + $0x320] sm:$0xff]
        %v2444 = vld [vmem:[#allocation4 + $0x328] sm:$0xff]
        %v2445 = vld [vmem:[#allocation4 + $0x330] sm:$0xff]
        %v2446 = vld [vmem:[#allocation4 + $0x338] sm:$0xff]
        %v2447 = vld [vmem:[#allocation4 + $0x340] sm:$0xff]
        %v2448 = vld [vmem:[#allocation4 + $0x348] sm:$0xff]
        %v2449 = vld [vmem:[#allocation4 + $0x350] sm:$0xff]
        %v2450 = vld [vmem:[#allocation4 + $0x358] sm:$0xff]
        %v2451 = vld [vmem:[#allocation4 + $0x360] sm:$0xff]
        %v2452 = vld [vmem:[#allocation4 + $0x368] sm:$0xff]
        %v2453 = vld [vmem:[#allocation4 + $0x370] sm:$0xff]
        %v2454 = vld [vmem:[#allocation4 + $0x378] sm:$0xff]
        %v2455 = vld [vmem:[#allocation4 + $0x380] sm:$0xff]
        %v2456 = vld [vmem:[#allocation4 + $0x388] sm:$0xff]
        %v2457 = vld [vmem:[#allocation4 + $0x390] sm:$0xff]
        %v2458 = vld [vmem:[#allocation4 + $0x398] sm:$0xff]
        %v2459 = vld [vmem:[#allocation4 + $0x3a0] sm:$0xff]
        %v2460 = vld [vmem:[#allocation4 + $0x3a8] sm:$0xff]
        %v2461 = vld [vmem:[#allocation4 + $0x3b0] sm:$0xff]
        %v2462 = vld [vmem:[#allocation4 + $0x3b8] sm:$0xff]
        %v2463 = vld [vmem:[#allocation4 + $0x3c0] sm:$0xff]
        %v2464 = vld [vmem:[#allocation4 + $0x3c8] sm:$0xff]
        %v2465 = vld [vmem:[#allocation4 + $0x3d0] sm:$0xff]
        %v2466 = vld [vmem:[#allocation4 + $0x3d8] sm:$0xff]
        %v2467 = vld [vmem:[#allocation4 + $0x3e0] sm:$0xff]
        %v2468 = vld [vmem:[#allocation4 + $0x3e8] sm:$0xff]
        %v2469 = vld [vmem:[#allocation4 + $0x3f0] sm:$0xff]
        %v2470 = vld [vmem:[#allocation4 + $0x3f8] sm:$0xff]
        %v2471 = vld [vmem:[#allocation4 + $0x400] sm:$0xff]
        %v2472 = vld [vmem:[#allocation4 + $0x408] sm:$0xff]
        %v2473 = vld [vmem:[#allocation4 + $0x410] sm:$0xff]
        %v2474 = vld [vmem:[#allocation4 + $0x418] sm:$0xff]
        %v2475 = vld [vmem:[#allocation4 + $0x420] sm:$0xff]
        %v2476 = vld [vmem:[#allocation4 + $0x428] sm:$0xff]
        %v2477 = vld [vmem:[#allocation4 + $0x430] sm:$0xff]
        %v2478 = vld [vmem:[#allocation4 + $0x438] sm:$0xff]
        %v2479 = vld [vmem:[#allocation4 + $0x440] sm:$0xff]
        %v2480 = vld [vmem:[#allocation4 + $0x448] sm:$0xff]
        %v2481 = vld [vmem:[#allocation4 + $0x450] sm:$0xff]
        %v2482 = vld [vmem:[#allocation4 + $0x458] sm:$0xff]
        %v2483 = vld [vmem:[#allocation4 + $0x460] sm:$0xff]
        %v2484 = vld [vmem:[#allocation4 + $0x468] sm:$0xff]
        %v2485 = vld [vmem:[#allocation4 + $0x470] sm:$0xff]
        %v2486 = vld [vmem:[#allocation4 + $0x478] sm:$0xff]
        %v2487 = vld [vmem:[#allocation4 + $0x480] sm:$0xff]
        %v2488 = vld [vmem:[#allocation4 + $0x488] sm:$0xff]
        %v2489 = vld [vmem:[#allocation4 + $0x490] sm:$0xff]
        %v2490 = vld [vmem:[#allocation4 + $0x498] sm:$0xff]
        %v2491 = vld [vmem:[#allocation4 + $0x4a0] sm:$0xff]
        %v2492 = vld [vmem:[#allocation4 + $0x4a8] sm:$0xff]
        %v2493 = vld [vmem:[#allocation4 + $0x4b0] sm:$0xff]
        %v2494 = vld [vmem:[#allocation4 + $0x4b8] sm:$0xff]
        %v2495 = vld [vmem:[#allocation4 + $0x4c0] sm:$0xff]
        %v2496 = vld [vmem:[#allocation4 + $0x4c8] sm:$0xff]
        %v2497 = vld [vmem:[#allocation4 + $0x4d0] sm:$0xff]
        %v2498 = vld [vmem:[#allocation4 + $0x4d8] sm:$0xff]
        %v2499 = vld [vmem:[#allocation4 + $0x4e0] sm:$0xff]
        %v2500 = vld [vmem:[#allocation4 + $0x4e8] sm:$0xff]
        %v2501 = vld [vmem:[#allocation4 + $0x4f0] sm:$0xff]
        %v2502 = vld [vmem:[#allocation4 + $0x4f8] sm:$0xff]
        %v2503 = vld [vmem:[#allocation4 + $0x500] sm:$0xff]
        %v2504 = vld [vmem:[#allocation4 + $0x508] sm:$0xff]
        %v2505 = vld [vmem:[#allocation4 + $0x510] sm:$0xff]
        %v2506 = vld [vmem:[#allocation4 + $0x518] sm:$0xff]
        %v2507 = vld [vmem:[#allocation4 + $0x520] sm:$0xff]
        %v2508 = vld [vmem:[#allocation4 + $0x528] sm:$0xff]
        %v2509 = vld [vmem:[#allocation4 + $0x530] sm:$0xff]
        %v2510 = vld [vmem:[#allocation4 + $0x538] sm:$0xff]
        %v2511 = vld [vmem:[#allocation4 + $0x540] sm:$0xff]
        %v2512 = vld [vmem:[#allocation4 + $0x548] sm:$0xff]
        %v2513 = vld [vmem:[#allocation4 + $0x550] sm:$0xff]
        %v2514 = vld [vmem:[#allocation4 + $0x558] sm:$0xff]
        %v2515 = vld [vmem:[#allocation4 + $0x560] sm:$0xff]
        %v2516 = vld [vmem:[#allocation4 + $0x568] sm:$0xff]
        %v2517 = vld [vmem:[#allocation4 + $0x570] sm:$0xff]
        %v2518 = vld [vmem:[#allocation4 + $0x578] sm:$0xff]
        %v2519 = vld [vmem:[#allocation4 + $0x580] sm:$0xff]
        %v2520 = vld [vmem:[#allocation4 + $0x588] sm:$0xff]
        %v2521 = vld [vmem:[#allocation4 + $0x590] sm:$0xff]
        %v2522 = vld [vmem:[#allocation4 + $0x598] sm:$0xff]
        %v2523 = vld [vmem:[#allocation4 + $0x5a0] sm:$0xff]
        %v2524 = vld [vmem:[#allocation4 + $0x5a8] sm:$0xff]
        %v2525 = vld [vmem:[#allocation4 + $0x5b0] sm:$0xff]
        %v2526 = vld [vmem:[#allocation4 + $0x5b8] sm:$0xff]
        %v2527 = vld [vmem:[#allocation4 + $0x5c0] sm:$0xff]
        %v2528 = vld [vmem:[#allocation4 + $0x5c8] sm:$0xff]
        %v2529 = vld [vmem:[#allocation4 + $0x5d0] sm:$0xff]
        %v2530 = vld [vmem:[#allocation4 + $0x5d8] sm:$0xff]
        %v2531 = vld [vmem:[#allocation4 + $0x5e0] sm:$0xff]
        %v2532 = vld [vmem:[#allocation4 + $0x5e8] sm:$0xff]
        %v2533 = vld [vmem:[#allocation4 + $0x5f0] sm:$0xff]
        %v2534 = vld [vmem:[#allocation4 + $0x5f8] sm:$0xff]
        %v2535 = vld [vmem:[#allocation4 + $0x600] sm:$0xff]
        %v2536 = vld [vmem:[#allocation4 + $0x608] sm:$0xff]
        %v2537 = vld [vmem:[#allocation4 + $0x610] sm:$0xff]
        %v2538 = vld [vmem:[#allocation4 + $0x618] sm:$0xff]
        %v2539 = vld [vmem:[#allocation4 + $0x620] sm:$0xff]
        %v2540 = vld [vmem:[#allocation4 + $0x628] sm:$0xff]
        %v2541 = vld [vmem:[#allocation4 + $0x630] sm:$0xff]
        %v2542 = vld [vmem:[#allocation4 + $0x638] sm:$0xff]
        %v2543 = vld [vmem:[#allocation4 + $0x640] sm:$0xff]
        %v2544 = vld [vmem:[#allocation4 + $0x648] sm:$0xff]
        %v2545 = vld [vmem:[#allocation4 + $0x650] sm:$0xff]
        %v2546 = vld [vmem:[#allocation4 + $0x658] sm:$0xff]
        %v2547 = vld [vmem:[#allocation4 + $0x660] sm:$0xff]
        %v2548 = vld [vmem:[#allocation4 + $0x668] sm:$0xff]
        %v2549 = vld [vmem:[#allocation4 + $0x670] sm:$0xff]
        %v2550 = vld [vmem:[#allocation4 + $0x678] sm:$0xff]
        %v2551 = vld [vmem:[#allocation4 + $0x680] sm:$0xff]
        %v2552 = vld [vmem:[#allocation4 + $0x688] sm:$0xff]
        %v2553 = vld [vmem:[#allocation4 + $0x690] sm:$0xff]
        %v2554 = vld [vmem:[#allocation4 + $0x698] sm:$0xff]
        %v2555 = vld [vmem:[#allocation4 + $0x6a0] sm:$0xff]
        %v2556 = vld [vmem:[#allocation4 + $0x6a8] sm:$0xff]
        %v2557 = vld [vmem:[#allocation4 + $0x6b0] sm:$0xff]
        %v2558 = vld [vmem:[#allocation4 + $0x6b8] sm:$0xff]
        %v2559 = vld [vmem:[#allocation4 + $0x6c0] sm:$0xff]
        %v2560 = vld [vmem:[#allocation4 + $0x6c8] sm:$0xff]
        %v2561 = vld [vmem:[#allocation4 + $0x6d0] sm:$0xff]
        %v2562 = vld [vmem:[#allocation4 + $0x6d8] sm:$0xff]
        %v2563 = vld [vmem:[#allocation4 + $0x6e0] sm:$0xff]
        %v2564 = vld [vmem:[#allocation4 + $0x6e8] sm:$0xff]
        %v2565 = vld [vmem:[#allocation4 + $0x6f0] sm:$0xff]
        %v2566 = vld [vmem:[#allocation4 + $0x6f8] sm:$0xff]
        %v2567 = vld [vmem:[#allocation4 + $0x700] sm:$0xff]
        %v2568 = vld [vmem:[#allocation4 + $0x708] sm:$0xff]
        %v2569 = vld [vmem:[#allocation4 + $0x710] sm:$0xff]
        %v2570 = vld [vmem:[#allocation4 + $0x718] sm:$0xff]
        %v2571 = vld [vmem:[#allocation4 + $0x720] sm:$0xff]
        %v2572 = vld [vmem:[#allocation4 + $0x728] sm:$0xff]
        %v2573 = vld [vmem:[#allocation4 + $0x730] sm:$0xff]
        %v2574 = vld [vmem:[#allocation4 + $0x738] sm:$0xff]
        %v2575 = vld [vmem:[#allocation4 + $0x740] sm:$0xff]
        %v2576 = vld [vmem:[#allocation4 + $0x748] sm:$0xff]
        %v2577 = vld [vmem:[#allocation4 + $0x750] sm:$0xff]
        %v2578 = vld [vmem:[#allocation4 + $0x758] sm:$0xff]
        %v2579 = vld [vmem:[#allocation4 + $0x760] sm:$0xff]
        %v2580 = vld [vmem:[#allocation4 + $0x768] sm:$0xff]
        %v2581 = vld [vmem:[#allocation4 + $0x770] sm:$0xff]
        %v2582 = vld [vmem:[#allocation4 + $0x778] sm:$0xff]
        %v2583 = vld [vmem:[#allocation4 + $0x780] sm:$0xff]
        %v2584 = vld [vmem:[#allocation4 + $0x788] sm:$0xff]
        %v2585 = vld [vmem:[#allocation4 + $0x790] sm:$0xff]
        %v2586 = vld [vmem:[#allocation4 + $0x798] sm:$0xff]
        %v2587 = vld [vmem:[#allocation4 + $0x7a0] sm:$0xff]
        %v2588 = vld [vmem:[#allocation4 + $0x7a8] sm:$0xff]
        %v2589 = vld [vmem:[#allocation4 + $0x7b0] sm:$0xff]
        %v2590 = vld [vmem:[#allocation4 + $0x7b8] sm:$0xff]
        %v2591 = vld [vmem:[#allocation4 + $0x7c0] sm:$0xff]
        %v2592 = vld [vmem:[#allocation4 + $0x7c8] sm:$0xff]
        %v2593 = vld [vmem:[#allocation4 + $0x7d0] sm:$0xff]
        %v2594 = vld [vmem:[#allocation4 + $0x7d8] sm:$0xff]
        %v2595 = vld [vmem:[#allocation4 + $0x7e0] sm:$0xff]
        %v2596 = vld [vmem:[#allocation4 + $0x7e8] sm:$0xff]
        %v2597 = vld [vmem:[#allocation4 + $0x7f0] sm:$0xff]
        %v2598 = vld [vmem:[#allocation4 + $0x7f8] sm:$0xff]
        %v2599 = vld [vmem:[%s4] sm:$0x3]
        %v2601 = vperm.slane %v2599, 0
        %v2602 = vperm.slane %v2599, 1
        %v2861 = vunpack.c.l.b16 %v2343
        %v2862 = vunpack.c.h.b16 %v2343
        %v2863 = vunpack.c.l.b16 %v2344
        %v2864 = vunpack.c.h.b16 %v2344
        %v2865 = vunpack.c.l.b16 %v2345
        %v2866 = vunpack.c.h.b16 %v2345
        %v2867 = vunpack.c.l.b16 %v2346
        %v2868 = vunpack.c.h.b16 %v2346
        %v2869 = vunpack.c.l.b16 %v2347
        %v2870 = vunpack.c.h.b16 %v2347
        %v2871 = vunpack.c.l.b16 %v2348
        %v2872 = vunpack.c.h.b16 %v2348
        %v2873 = vunpack.c.l.b16 %v2349
        %v2874 = vunpack.c.h.b16 %v2349
        %v2875 = vunpack.c.l.b16 %v2350
        %v2876 = vunpack.c.h.b16 %v2350
        %v2877 = vunpack.c.l.b16 %v2351
        %v2878 = vunpack.c.h.b16 %v2351
        %v2879 = vunpack.c.l.b16 %v2352
        %v2880 = vunpack.c.h.b16 %v2352
        %v2881 = vunpack.c.l.b16 %v2353
        %v2882 = vunpack.c.h.b16 %v2353
        %v2883 = vunpack.c.l.b16 %v2354
        %v2884 = vunpack.c.h.b16 %v2354
        %v2885 = vunpack.c.l.b16 %v2355
        %v2886 = vunpack.c.h.b16 %v2355
        %v2887 = vunpack.c.l.b16 %v2356
        %v2888 = vunpack.c.h.b16 %v2356
        %v2889 = vunpack.c.l.b16 %v2357
        %v2890 = vunpack.c.h.b16 %v2357
        %v2891 = vunpack.c.l.b16 %v2358
        %v2892 = vunpack.c.h.b16 %v2358
        %v2893 = vunpack.c.l.b16 %v2359
        %v2894 = vunpack.c.h.b16 %v2359
        %v2895 = vunpack.c.l.b16 %v2360
        %v2896 = vunpack.c.h.b16 %v2360
        %v2897 = vunpack.c.l.b16 %v2361
        %v2898 = vunpack.c.h.b16 %v2361
        %v2899 = vunpack.c.l.b16 %v2362
        %v2900 = vunpack.c.h.b16 %v2362
        %v2901 = vunpack.c.l.b16 %v2363
        %v2902 = vunpack.c.h.b16 %v2363
        %v2903 = vunpack.c.l.b16 %v2364
        %v2904 = vunpack.c.h.b16 %v2364
        %v2905 = vunpack.c.l.b16 %v2365
        %v2906 = vunpack.c.h.b16 %v2365
        %v2907 = vunpack.c.l.b16 %v2366
        %v2908 = vunpack.c.h.b16 %v2366
        %v2909 = vunpack.c.l.b16 %v2367
        %v2910 = vunpack.c.h.b16 %v2367
        %v2911 = vunpack.c.l.b16 %v2368
        %v2912 = vunpack.c.h.b16 %v2368
        %v2913 = vunpack.c.l.b16 %v2369
        %v2914 = vunpack.c.h.b16 %v2369
        %v2915 = vunpack.c.l.b16 %v2370
        %v2916 = vunpack.c.h.b16 %v2370
        %v2917 = vunpack.c.l.b16 %v2371
        %v2918 = vunpack.c.h.b16 %v2371
        %v2919 = vunpack.c.l.b16 %v2372
        %v2920 = vunpack.c.h.b16 %v2372
        %v2921 = vunpack.c.l.b16 %v2373
        %v2922 = vunpack.c.h.b16 %v2373
        %v2923 = vunpack.c.l.b16 %v2374
        %v2924 = vunpack.c.h.b16 %v2374
        %v2925 = vunpack.c.l.b16 %v2375
        %v2926 = vunpack.c.h.b16 %v2375
        %v2927 = vunpack.c.l.b16 %v2376
        %v2928 = vunpack.c.h.b16 %v2376
        %v2929 = vunpack.c.l.b16 %v2377
        %v2930 = vunpack.c.h.b16 %v2377
        %v2931 = vunpack.c.l.b16 %v2378
        %v2932 = vunpack.c.h.b16 %v2378
        %v2933 = vunpack.c.l.b16 %v2379
        %v2934 = vunpack.c.h.b16 %v2379
        %v2935 = vunpack.c.l.b16 %v2380
        %v2936 = vunpack.c.h.b16 %v2380
        %v2937 = vunpack.c.l.b16 %v2381
        %v2938 = vunpack.c.h.b16 %v2381
        %v2939 = vunpack.c.l.b16 %v2382
        %v2940 = vunpack.c.h.b16 %v2382
        %v2941 = vunpack.c.l.b16 %v2383
        %v2942 = vunpack.c.h.b16 %v2383
        %v2943 = vunpack.c.l.b16 %v2384
        %v2944 = vunpack.c.h.b16 %v2384
        %v2945 = vunpack.c.l.b16 %v2385
        %v2946 = vunpack.c.h.b16 %v2385
        %v2947 = vunpack.c.l.b16 %v2386
        %v2948 = vunpack.c.h.b16 %v2386
        %v2949 = vunpack.c.l.b16 %v2387
        %v2950 = vunpack.c.h.b16 %v2387
        %v2951 = vunpack.c.l.b16 %v2388
        %v2952 = vunpack.c.h.b16 %v2388
        %v2953 = vunpack.c.l.b16 %v2389
        %v2954 = vunpack.c.h.b16 %v2389
        %v2955 = vunpack.c.l.b16 %v2390
        %v2956 = vunpack.c.h.b16 %v2390
        %v2957 = vunpack.c.l.b16 %v2391
        %v2958 = vunpack.c.h.b16 %v2391
        %v2959 = vunpack.c.l.b16 %v2392
        %v2960 = vunpack.c.h.b16 %v2392
        %v2961 = vunpack.c.l.b16 %v2393
        %v2962 = vunpack.c.h.b16 %v2393
        %v2963 = vunpack.c.l.b16 %v2394
        %v2964 = vunpack.c.h.b16 %v2394
        %v2965 = vunpack.c.l.b16 %v2395
        %v2966 = vunpack.c.h.b16 %v2395
        %v2967 = vunpack.c.l.b16 %v2396
        %v2968 = vunpack.c.h.b16 %v2396
        %v2969 = vunpack.c.l.b16 %v2397
        %v2970 = vunpack.c.h.b16 %v2397
        %v2971 = vunpack.c.l.b16 %v2398
        %v2972 = vunpack.c.h.b16 %v2398
        %v2973 = vunpack.c.l.b16 %v2399
        %v2974 = vunpack.c.h.b16 %v2399
        %v2975 = vunpack.c.l.b16 %v2400
        %v2976 = vunpack.c.h.b16 %v2400
        %v2977 = vunpack.c.l.b16 %v2401
        %v2978 = vunpack.c.h.b16 %v2401
        %v2979 = vunpack.c.l.b16 %v2402
        %v2980 = vunpack.c.h.b16 %v2402
        %v2981 = vunpack.c.l.b16 %v2403
        %v2982 = vunpack.c.h.b16 %v2403
        %v2983 = vunpack.c.l.b16 %v2404
        %v2984 = vunpack.c.h.b16 %v2404
        %v2985 = vunpack.c.l.b16 %v2405
        %v2986 = vunpack.c.h.b16 %v2405
        %v2987 = vunpack.c.l.b16 %v2406
        %v2988 = vunpack.c.h.b16 %v2406
        %v2989 = vunpack.c.l.b16 %v2407
        %v2990 = vunpack.c.h.b16 %v2407
        %v2991 = vunpack.c.l.b16 %v2408
        %v2992 = vunpack.c.h.b16 %v2408
        %v2993 = vunpack.c.l.b16 %v2409
        %v2994 = vunpack.c.h.b16 %v2409
        %v2995 = vunpack.c.l.b16 %v2410
        %v2996 = vunpack.c.h.b16 %v2410
        %v2997 = vunpack.c.l.b16 %v2411
        %v2998 = vunpack.c.h.b16 %v2411
        %v2999 = vunpack.c.l.b16 %v2412
        %v3000 = vunpack.c.h.b16 %v2412
        %v3001 = vunpack.c.l.b16 %v2413
        %v3002 = vunpack.c.h.b16 %v2413
        %v3003 = vunpack.c.l.b16 %v2414
        %v3004 = vunpack.c.h.b16 %v2414
        %v3005 = vunpack.c.l.b16 %v2415
        %v3006 = vunpack.c.h.b16 %v2415
        %v3007 = vunpack.c.l.b16 %v2416
        %v3008 = vunpack.c.h.b16 %v2416
        %v3009 = vunpack.c.l.b16 %v2417
        %v3010 = vunpack.c.h.b16 %v2417
        %v3011 = vunpack.c.l.b16 %v2418
        %v3012 = vunpack.c.h.b16 %v2418
        %v3013 = vunpack.c.l.b16 %v2419
        %v3014 = vunpack.c.h.b16 %v2419
        %v3015 = vunpack.c.l.b16 %v2420
        %v3016 = vunpack.c.h.b16 %v2420
        %v3017 = vunpack.c.l.b16 %v2421
        %v3018 = vunpack.c.h.b16 %v2421
        %v3019 = vunpack.c.l.b16 %v2422
        %v3020 = vunpack.c.h.b16 %v2422
        %v3021 = vunpack.c.l.b16 %v2423
        %v3022 = vunpack.c.h.b16 %v2423
        %v3023 = vunpack.c.l.b16 %v2424
        %v3024 = vunpack.c.h.b16 %v2424
        %v3025 = vunpack.c.l.b16 %v2425
        %v3026 = vunpack.c.h.b16 %v2425
        %v3027 = vunpack.c.l.b16 %v2426
        %v3028 = vunpack.c.h.b16 %v2426
        %v3029 = vunpack.c.l.b16 %v2427
        %v3030 = vunpack.c.h.b16 %v2427
        %v3031 = vunpack.c.l.b16 %v2428
        %v3032 = vunpack.c.h.b16 %v2428
        %v3033 = vunpack.c.l.b16 %v2429
        %v3034 = vunpack.c.h.b16 %v2429
        %v3035 = vunpack.c.l.b16 %v2430
        %v3036 = vunpack.c.h.b16 %v2430
        %v3037 = vunpack.c.l.b16 %v2431
        %v3038 = vunpack.c.h.b16 %v2431
        %v3039 = vunpack.c.l.b16 %v2432
        %v3040 = vunpack.c.h.b16 %v2432
        %v3041 = vunpack.c.l.b16 %v2433
        %v3042 = vunpack.c.h.b16 %v2433
        %v3043 = vunpack.c.l.b16 %v2434
        %v3044 = vunpack.c.h.b16 %v2434
        %v3045 = vunpack.c.l.b16 %v2435
        %v3046 = vunpack.c.h.b16 %v2435
        %v3047 = vunpack.c.l.b16 %v2436
        %v3048 = vunpack.c.h.b16 %v2436
        %v3049 = vunpack.c.l.b16 %v2437
        %v3050 = vunpack.c.h.b16 %v2437
        %v3051 = vunpack.c.l.b16 %v2438
        %v3052 = vunpack.c.h.b16 %v2438
        %v3053 = vunpack.c.l.b16 %v2439
        %v3054 = vunpack.c.h.b16 %v2439
        %v3055 = vunpack.c.l.b16 %v2440
        %v3056 = vunpack.c.h.b16 %v2440
        %v3057 = vunpack.c.l.b16 %v2441
        %v3058 = vunpack.c.h.b16 %v2441
        %v3059 = vunpack.c.l.b16 %v2442
        %v3060 = vunpack.c.h.b16 %v2442
        %v3061 = vunpack.c.l.b16 %v2443
        %v3062 = vunpack.c.h.b16 %v2443
        %v3063 = vunpack.c.l.b16 %v2444
        %v3064 = vunpack.c.h.b16 %v2444
        %v3065 = vunpack.c.l.b16 %v2445
        %v3066 = vunpack.c.h.b16 %v2445
        %v3067 = vunpack.c.l.b16 %v2446
        %v3068 = vunpack.c.h.b16 %v2446
        %v3069 = vunpack.c.l.b16 %v2447
        %v3070 = vunpack.c.h.b16 %v2447
        %v3071 = vunpack.c.l.b16 %v2448
        %v3072 = vunpack.c.h.b16 %v2448
        %v3073 = vunpack.c.l.b16 %v2449
        %v3074 = vunpack.c.h.b16 %v2449
        %v3075 = vunpack.c.l.b16 %v2450
        %v3076 = vunpack.c.h.b16 %v2450
        %v3077 = vunpack.c.l.b16 %v2451
        %v3078 = vunpack.c.h.b16 %v2451
        %v3079 = vunpack.c.l.b16 %v2452
        %v3080 = vunpack.c.h.b16 %v2452
        %v3081 = vunpack.c.l.b16 %v2453
        %v3082 = vunpack.c.h.b16 %v2453
        %v3083 = vunpack.c.l.b16 %v2454
        %v3084 = vunpack.c.h.b16 %v2454
        %v3085 = vunpack.c.l.b16 %v2455
        %v3086 = vunpack.c.h.b16 %v2455
        %v3087 = vunpack.c.l.b16 %v2456
        %v3088 = vunpack.c.h.b16 %v2456
        %v3089 = vunpack.c.l.b16 %v2457
        %v3090 = vunpack.c.h.b16 %v2457
        %v3091 = vunpack.c.l.b16 %v2458
        %v3092 = vunpack.c.h.b16 %v2458
        %v3093 = vunpack.c.l.b16 %v2459
        %v3094 = vunpack.c.h.b16 %v2459
        %v3095 = vunpack.c.l.b16 %v2460
        %v3096 = vunpack.c.h.b16 %v2460
        %v3097 = vunpack.c.l.b16 %v2461
        %v3098 = vunpack.c.h.b16 %v2461
        %v3099 = vunpack.c.l.b16 %v2462
        %v3100 = vunpack.c.h.b16 %v2462
        %v3101 = vunpack.c.l.b16 %v2463
        %v3102 = vunpack.c.h.b16 %v2463
        %v3103 = vunpack.c.l.b16 %v2464
        %v3104 = vunpack.c.h.b16 %v2464
        %v3105 = vunpack.c.l.b16 %v2465
        %v3106 = vunpack.c.h.b16 %v2465
        %v3107 = vunpack.c.l.b16 %v2466
        %v3108 = vunpack.c.h.b16 %v2466
        %v3109 = vunpack.c.l.b16 %v2467
        %v3110 = vunpack.c.h.b16 %v2467
        %v3111 = vunpack.c.l.b16 %v2468
        %v3112 = vunpack.c.h.b16 %v2468
        %v3113 = vunpack.c.l.b16 %v2469
        %v3114 = vunpack.c.h.b16 %v2469
        %v3115 = vunpack.c.l.b16 %v2470
        %v3116 = vunpack.c.h.b16 %v2470
        %v3117 = vunpack.c.l.b16 %v2471
        %v3118 = vunpack.c.h.b16 %v2471
        %v3119 = vunpack.c.l.b16 %v2472
        %v3120 = vunpack.c.h.b16 %v2472
        %v3121 = vunpack.c.l.b16 %v2473
        %v3122 = vunpack.c.h.b16 %v2473
        %v3123 = vunpack.c.l.b16 %v2474
        %v3124 = vunpack.c.h.b16 %v2474
        %v3125 = vunpack.c.l.b16 %v2475
        %v3126 = vunpack.c.h.b16 %v2475
        %v3127 = vunpack.c.l.b16 %v2476
        %v3128 = vunpack.c.h.b16 %v2476
        %v3129 = vunpack.c.l.b16 %v2477
        %v3130 = vunpack.c.h.b16 %v2477
        %v3131 = vunpack.c.l.b16 %v2478
        %v3132 = vunpack.c.h.b16 %v2478
        %v3133 = vunpack.c.l.b16 %v2479
        %v3134 = vunpack.c.h.b16 %v2479
        %v3135 = vunpack.c.l.b16 %v2480
        %v3136 = vunpack.c.h.b16 %v2480
        %v3137 = vunpack.c.l.b16 %v2481
        %v3138 = vunpack.c.h.b16 %v2481
        %v3139 = vunpack.c.l.b16 %v2482
        %v3140 = vunpack.c.h.b16 %v2482
        %v3141 = vunpack.c.l.b16 %v2483
        %v3142 = vunpack.c.h.b16 %v2483
        %v3143 = vunpack.c.l.b16 %v2484
        %v3144 = vunpack.c.h.b16 %v2484
        %v3145 = vunpack.c.l.b16 %v2485
        %v3146 = vunpack.c.h.b16 %v2485
        %v3147 = vunpack.c.l.b16 %v2486
        %v3148 = vunpack.c.h.b16 %v2486
        %v3149 = vunpack.c.l.b16 %v2487
        %v3150 = vunpack.c.h.b16 %v2487
        %v3151 = vunpack.c.l.b16 %v2488
        %v3152 = vunpack.c.h.b16 %v2488
        %v3153 = vunpack.c.l.b16 %v2489
        %v3154 = vunpack.c.h.b16 %v2489
        %v3155 = vunpack.c.l.b16 %v2490
        %v3156 = vunpack.c.h.b16 %v2490
        %v3157 = vunpack.c.l.b16 %v2491
        %v3158 = vunpack.c.h.b16 %v2491
        %v3159 = vunpack.c.l.b16 %v2492
        %v3160 = vunpack.c.h.b16 %v2492
        %v3161 = vunpack.c.l.b16 %v2493
        %v3162 = vunpack.c.h.b16 %v2493
        %v3163 = vunpack.c.l.b16 %v2494
        %v3164 = vunpack.c.h.b16 %v2494
        %v3165 = vunpack.c.l.b16 %v2495
        %v3166 = vunpack.c.h.b16 %v2495
        %v3167 = vunpack.c.l.b16 %v2496
        %v3168 = vunpack.c.h.b16 %v2496
        %v3169 = vunpack.c.l.b16 %v2497
        %v3170 = vunpack.c.h.b16 %v2497
        %v3171 = vunpack.c.l.b16 %v2498
        %v3172 = vunpack.c.h.b16 %v2498
        %v3173 = vunpack.c.l.b16 %v2499
        %v3174 = vunpack.c.h.b16 %v2499
        %v3175 = vunpack.c.l.b16 %v2500
        %v3176 = vunpack.c.h.b16 %v2500
        %v3177 = vunpack.c.l.b16 %v2501
        %v3178 = vunpack.c.h.b16 %v2501
        %v3179 = vunpack.c.l.b16 %v2502
        %v3180 = vunpack.c.h.b16 %v2502
        %v3181 = vunpack.c.l.b16 %v2503
        %v3182 = vunpack.c.h.b16 %v2503
        %v3183 = vunpack.c.l.b16 %v2504
        %v3184 = vunpack.c.h.b16 %v2504
        %v3185 = vunpack.c.l.b16 %v2505
        %v3186 = vunpack.c.h.b16 %v2505
        %v3187 = vunpack.c.l.b16 %v2506
        %v3188 = vunpack.c.h.b16 %v2506
        %v3189 = vunpack.c.l.b16 %v2507
        %v3190 = vunpack.c.h.b16 %v2507
        %v3191 = vunpack.c.l.b16 %v2508
        %v3192 = vunpack.c.h.b16 %v2508
        %v3193 = vunpack.c.l.b16 %v2509
        %v3194 = vunpack.c.h.b16 %v2509
        %v3195 = vunpack.c.l.b16 %v2510
        %v3196 = vunpack.c.h.b16 %v2510
        %v3197 = vunpack.c.l.b16 %v2511
        %v3198 = vunpack.c.h.b16 %v2511
        %v3199 = vunpack.c.l.b16 %v2512
        %v3200 = vunpack.c.h.b16 %v2512
        %v3201 = vunpack.c.l.b16 %v2513
        %v3202 = vunpack.c.h.b16 %v2513
        %v3203 = vunpack.c.l.b16 %v2514
        %v3204 = vunpack.c.h.b16 %v2514
        %v3205 = vunpack.c.l.b16 %v2515
        %v3206 = vunpack.c.h.b16 %v2515
        %v3207 = vunpack.c.l.b16 %v2516
        %v3208 = vunpack.c.h.b16 %v2516
        %v3209 = vunpack.c.l.b16 %v2517
        %v3210 = vunpack.c.h.b16 %v2517
        %v3211 = vunpack.c.l.b16 %v2518
        %v3212 = vunpack.c.h.b16 %v2518
        %v3213 = vunpack.c.l.b16 %v2519
        %v3214 = vunpack.c.h.b16 %v2519
        %v3215 = vunpack.c.l.b16 %v2520
        %v3216 = vunpack.c.h.b16 %v2520
        %v3217 = vunpack.c.l.b16 %v2521
        %v3218 = vunpack.c.h.b16 %v2521
        %v3219 = vunpack.c.l.b16 %v2522
        %v3220 = vunpack.c.h.b16 %v2522
        %v3221 = vunpack.c.l.b16 %v2523
        %v3222 = vunpack.c.h.b16 %v2523
        %v3223 = vunpack.c.l.b16 %v2524
        %v3224 = vunpack.c.h.b16 %v2524
        %v3225 = vunpack.c.l.b16 %v2525
        %v3226 = vunpack.c.h.b16 %v2525
        %v3227 = vunpack.c.l.b16 %v2526
        %v3228 = vunpack.c.h.b16 %v2526
        %v3229 = vunpack.c.l.b16 %v2527
        %v3230 = vunpack.c.h.b16 %v2527
        %v3231 = vunpack.c.l.b16 %v2528
        %v3232 = vunpack.c.h.b16 %v2528
        %v3233 = vunpack.c.l.b16 %v2529
        %v3234 = vunpack.c.h.b16 %v2529
        %v3235 = vunpack.c.l.b16 %v2530
        %v3236 = vunpack.c.h.b16 %v2530
        %v3237 = vunpack.c.l.b16 %v2531
        %v3238 = vunpack.c.h.b16 %v2531
        %v3239 = vunpack.c.l.b16 %v2532
        %v3240 = vunpack.c.h.b16 %v2532
        %v3241 = vunpack.c.l.b16 %v2533
        %v3242 = vunpack.c.h.b16 %v2533
        %v3243 = vunpack.c.l.b16 %v2534
        %v3244 = vunpack.c.h.b16 %v2534
        %v3245 = vunpack.c.l.b16 %v2535
        %v3246 = vunpack.c.h.b16 %v2535
        %v3247 = vunpack.c.l.b16 %v2536
        %v3248 = vunpack.c.h.b16 %v2536
        %v3249 = vunpack.c.l.b16 %v2537
        %v3250 = vunpack.c.h.b16 %v2537
        %v3251 = vunpack.c.l.b16 %v2538
        %v3252 = vunpack.c.h.b16 %v2538
        %v3253 = vunpack.c.l.b16 %v2539
        %v3254 = vunpack.c.h.b16 %v2539
        %v3255 = vunpack.c.l.b16 %v2540
        %v3256 = vunpack.c.h.b16 %v2540
        %v3257 = vunpack.c.l.b16 %v2541
        %v3258 = vunpack.c.h.b16 %v2541
        %v3259 = vunpack.c.l.b16 %v2542
        %v3260 = vunpack.c.h.b16 %v2542
        %v3261 = vunpack.c.l.b16 %v2543
        %v3262 = vunpack.c.h.b16 %v2543
        %v3263 = vunpack.c.l.b16 %v2544
        %v3264 = vunpack.c.h.b16 %v2544
        %v3265 = vunpack.c.l.b16 %v2545
        %v3266 = vunpack.c.h.b16 %v2545
        %v3267 = vunpack.c.l.b16 %v2546
        %v3268 = vunpack.c.h.b16 %v2546
        %v3269 = vunpack.c.l.b16 %v2547
        %v3270 = vunpack.c.h.b16 %v2547
        %v3271 = vunpack.c.l.b16 %v2548
        %v3272 = vunpack.c.h.b16 %v2548
        %v3273 = vunpack.c.l.b16 %v2549
        %v3274 = vunpack.c.h.b16 %v2549
        %v3275 = vunpack.c.l.b16 %v2550
        %v3276 = vunpack.c.h.b16 %v2550
        %v3277 = vunpack.c.l.b16 %v2551
        %v3278 = vunpack.c.h.b16 %v2551
        %v3279 = vunpack.c.l.b16 %v2552
        %v3280 = vunpack.c.h.b16 %v2552
        %v3281 = vunpack.c.l.b16 %v2553
        %v3282 = vunpack.c.h.b16 %v2553
        %v3283 = vunpack.c.l.b16 %v2554
        %v3284 = vunpack.c.h.b16 %v2554
        %v3285 = vunpack.c.l.b16 %v2555
        %v3286 = vunpack.c.h.b16 %v2555
        %v3287 = vunpack.c.l.b16 %v2556
        %v3288 = vunpack.c.h.b16 %v2556
        %v3289 = vunpack.c.l.b16 %v2557
        %v3290 = vunpack.c.h.b16 %v2557
        %v3291 = vunpack.c.l.b16 %v2558
        %v3292 = vunpack.c.h.b16 %v2558
        %v3293 = vunpack.c.l.b16 %v2559
        %v3294 = vunpack.c.h.b16 %v2559
        %v3295 = vunpack.c.l.b16 %v2560
        %v3296 = vunpack.c.h.b16 %v2560
        %v3297 = vunpack.c.l.b16 %v2561
        %v3298 = vunpack.c.h.b16 %v2561
        %v3299 = vunpack.c.l.b16 %v2562
        %v3300 = vunpack.c.h.b16 %v2562
        %v3301 = vunpack.c.l.b16 %v2563
        %v3302 = vunpack.c.h.b16 %v2563
        %v3303 = vunpack.c.l.b16 %v2564
        %v3304 = vunpack.c.h.b16 %v2564
        %v3305 = vunpack.c.l.b16 %v2565
        %v3306 = vunpack.c.h.b16 %v2565
        %v3307 = vunpack.c.l.b16 %v2566
        %v3308 = vunpack.c.h.b16 %v2566
        %v3309 = vunpack.c.l.b16 %v2567
        %v3310 = vunpack.c.h.b16 %v2567
        %v3311 = vunpack.c.l.b16 %v2568
        %v3312 = vunpack.c.h.b16 %v2568
        %v3313 = vunpack.c.l.b16 %v2569
        %v3314 = vunpack.c.h.b16 %v2569
        %v3315 = vunpack.c.l.b16 %v2570
        %v3316 = vunpack.c.h.b16 %v2570
        %v3317 = vunpack.c.l.b16 %v2571
        %v3318 = vunpack.c.h.b16 %v2571
        %v3319 = vunpack.c.l.b16 %v2572
        %v3320 = vunpack.c.h.b16 %v2572
        %v3321 = vunpack.c.l.b16 %v2573
        %v3322 = vunpack.c.h.b16 %v2573
        %v3323 = vunpack.c.l.b16 %v2574
        %v3324 = vunpack.c.h.b16 %v2574
        %v3325 = vunpack.c.l.b16 %v2575
        %v3326 = vunpack.c.h.b16 %v2575
        %v3327 = vunpack.c.l.b16 %v2576
        %v3328 = vunpack.c.h.b16 %v2576
        %v3329 = vunpack.c.l.b16 %v2577
        %v3330 = vunpack.c.h.b16 %v2577
        %v3331 = vunpack.c.l.b16 %v2578
        %v3332 = vunpack.c.h.b16 %v2578
        %v3333 = vunpack.c.l.b16 %v2579
        %v3334 = vunpack.c.h.b16 %v2579
        %v3335 = vunpack.c.l.b16 %v2580
        %v3336 = vunpack.c.h.b16 %v2580
        %v3337 = vunpack.c.l.b16 %v2581
        %v3338 = vunpack.c.h.b16 %v2581
        %v3339 = vunpack.c.l.b16 %v2582
        %v3340 = vunpack.c.h.b16 %v2582
        %v3341 = vunpack.c.l.b16 %v2583
        %v3342 = vunpack.c.h.b16 %v2583
        %v3343 = vunpack.c.l.b16 %v2584
        %v3344 = vunpack.c.h.b16 %v2584
        %v3345 = vunpack.c.l.b16 %v2585
        %v3346 = vunpack.c.h.b16 %v2585
        %v3347 = vunpack.c.l.b16 %v2586
        %v3348 = vunpack.c.h.b16 %v2586
        %v3349 = vunpack.c.l.b16 %v2587
        %v3350 = vunpack.c.h.b16 %v2587
        %v3351 = vunpack.c.l.b16 %v2588
        %v3352 = vunpack.c.h.b16 %v2588
        %v3353 = vunpack.c.l.b16 %v2589
        %v3354 = vunpack.c.h.b16 %v2589
        %v3355 = vunpack.c.l.b16 %v2590
        %v3356 = vunpack.c.h.b16 %v2590
        %v3357 = vunpack.c.l.b16 %v2591
        %v3358 = vunpack.c.h.b16 %v2591
        %v3359 = vunpack.c.l.b16 %v2592
        %v3360 = vunpack.c.h.b16 %v2592
        %v3361 = vunpack.c.l.b16 %v2593
        %v3362 = vunpack.c.h.b16 %v2593
        %v3363 = vunpack.c.l.b16 %v2594
        %v3364 = vunpack.c.h.b16 %v2594
        %v3365 = vunpack.c.l.b16 %v2595
        %v3366 = vunpack.c.h.b16 %v2595
        %v3367 = vunpack.c.l.b16 %v2596
        %v3368 = vunpack.c.h.b16 %v2596
        %v3369 = vunpack.c.l.b16 %v2597
        %v3370 = vunpack.c.h.b16 %v2597
        %v3371 = vunpack.c.l.b16 %v2598
        %v3372 = vunpack.c.h.b16 %v2598
        %v3373 = vpack.c.b16 %v2863, %v2861
        %v3374 = vpack.c.b16 %v2864, %v2862
        %v3375 = vpack.c.b16 %v2867, %v2865
        %v3376 = vpack.c.b16 %v2868, %v2866
        %v3377 = vpack.c.b16 %v2871, %v2869
        %v3378 = vpack.c.b16 %v2872, %v2870
        %v3379 = vpack.c.b16 %v2875, %v2873
        %v3380 = vpack.c.b16 %v2876, %v2874
        %v3381 = vpack.c.b16 %v2879, %v2877
        %v3382 = vpack.c.b16 %v2880, %v2878
        %v3383 = vpack.c.b16 %v2883, %v2881
        %v3384 = vpack.c.b16 %v2884, %v2882
        %v3385 = vpack.c.b16 %v2887, %v2885
        %v3386 = vpack.c.b16 %v2888, %v2886
        %v3387 = vpack.c.b16 %v2891, %v2889
        %v3388 = vpack.c.b16 %v2892, %v2890
        %v3389 = vpack.c.b16 %v2895, %v2893
        %v3390 = vpack.c.b16 %v2896, %v2894
        %v3391 = vpack.c.b16 %v2899, %v2897
        %v3392 = vpack.c.b16 %v2900, %v2898
        %v3393 = vpack.c.b16 %v2903, %v2901
        %v3394 = vpack.c.b16 %v2904, %v2902
        %v3395 = vpack.c.b16 %v2907, %v2905
        %v3396 = vpack.c.b16 %v2908, %v2906
        %v3397 = vpack.c.b16 %v2911, %v2909
        %v3398 = vpack.c.b16 %v2912, %v2910
        %v3399 = vpack.c.b16 %v2915, %v2913
        %v3400 = vpack.c.b16 %v2916, %v2914
        %v3401 = vpack.c.b16 %v2919, %v2917
        %v3402 = vpack.c.b16 %v2920, %v2918
        %v3403 = vpack.c.b16 %v2923, %v2921
        %v3404 = vpack.c.b16 %v2924, %v2922
        %v3405 = vpack.c.b16 %v2927, %v2925
        %v3406 = vpack.c.b16 %v2928, %v2926
        %v3407 = vpack.c.b16 %v2931, %v2929
        %v3408 = vpack.c.b16 %v2932, %v2930
        %v3409 = vpack.c.b16 %v2935, %v2933
        %v3410 = vpack.c.b16 %v2936, %v2934
        %v3411 = vpack.c.b16 %v2939, %v2937
        %v3412 = vpack.c.b16 %v2940, %v2938
        %v3413 = vpack.c.b16 %v2943, %v2941
        %v3414 = vpack.c.b16 %v2944, %v2942
        %v3415 = vpack.c.b16 %v2947, %v2945
        %v3416 = vpack.c.b16 %v2948, %v2946
        %v3417 = vpack.c.b16 %v2951, %v2949
        %v3418 = vpack.c.b16 %v2952, %v2950
        %v3419 = vpack.c.b16 %v2955, %v2953
        %v3420 = vpack.c.b16 %v2956, %v2954
        %v3421 = vpack.c.b16 %v2959, %v2957
        %v3422 = vpack.c.b16 %v2960, %v2958
        %v3423 = vpack.c.b16 %v2963, %v2961
        %v3424 = vpack.c.b16 %v2964, %v2962
        %v3425 = vpack.c.b16 %v2967, %v2965
        %v3426 = vpack.c.b16 %v2968, %v2966
        %v3427 = vpack.c.b16 %v2971, %v2969
        %v3428 = vpack.c.b16 %v2972, %v2970
        %v3429 = vpack.c.b16 %v2975, %v2973
        %v3430 = vpack.c.b16 %v2976, %v2974
        %v3431 = vpack.c.b16 %v2979, %v2977
        %v3432 = vpack.c.b16 %v2980, %v2978
        %v3433 = vpack.c.b16 %v2983, %v2981
        %v3434 = vpack.c.b16 %v2984, %v2982
        %v3435 = vpack.c.b16 %v2987, %v2985
        %v3436 = vpack.c.b16 %v2988, %v2986
        %v3437 = vpack.c.b16 %v2991, %v2989
        %v3438 = vpack.c.b16 %v2992, %v2990
        %v3439 = vpack.c.b16 %v2995, %v2993
        %v3440 = vpack.c.b16 %v2996, %v2994
        %v3441 = vpack.c.b16 %v2999, %v2997
        %v3442 = vpack.c.b16 %v3000, %v2998
        %v3443 = vpack.c.b16 %v3003, %v3001
        %v3444 = vpack.c.b16 %v3004, %v3002
        %v3445 = vpack.c.b16 %v3007, %v3005
        %v3446 = vpack.c.b16 %v3008, %v3006
        %v3447 = vpack.c.b16 %v3011, %v3009
        %v3448 = vpack.c.b16 %v3012, %v3010
        %v3449 = vpack.c.b16 %v3015, %v3013
        %v3450 = vpack.c.b16 %v3016, %v3014
        %v3451 = vpack.c.b16 %v3019, %v3017
        %v3452 = vpack.c.b16 %v3020, %v3018
        %v3453 = vpack.c.b16 %v3023, %v3021
        %v3454 = vpack.c.b16 %v3024, %v3022
        %v3455 = vpack.c.b16 %v3027, %v3025
        %v3456 = vpack.c.b16 %v3028, %v3026
        %v3457 = vpack.c.b16 %v3031, %v3029
        %v3458 = vpack.c.b16 %v3032, %v3030
        %v3459 = vpack.c.b16 %v3035, %v3033
        %v3460 = vpack.c.b16 %v3036, %v3034
        %v3461 = vpack.c.b16 %v3039, %v3037
        %v3462 = vpack.c.b16 %v3040, %v3038
        %v3463 = vpack.c.b16 %v3043, %v3041
        %v3464 = vpack.c.b16 %v3044, %v3042
        %v3465 = vpack.c.b16 %v3047, %v3045
        %v3466 = vpack.c.b16 %v3048, %v3046
        %v3467 = vpack.c.b16 %v3051, %v3049
        %v3468 = vpack.c.b16 %v3052, %v3050
        %v3469 = vpack.c.b16 %v3055, %v3053
        %v3470 = vpack.c.b16 %v3056, %v3054
        %v3471 = vpack.c.b16 %v3059, %v3057
        %v3472 = vpack.c.b16 %v3060, %v3058
        %v3473 = vpack.c.b16 %v3063, %v3061
        %v3474 = vpack.c.b16 %v3064, %v3062
        %v3475 = vpack.c.b16 %v3067, %v3065
        %v3476 = vpack.c.b16 %v3068, %v3066
        %v3477 = vpack.c.b16 %v3071, %v3069
        %v3478 = vpack.c.b16 %v3072, %v3070
        %v3479 = vpack.c.b16 %v3075, %v3073
        %v3480 = vpack.c.b16 %v3076, %v3074
        %v3481 = vpack.c.b16 %v3079, %v3077
        %v3482 = vpack.c.b16 %v3080, %v3078
        %v3483 = vpack.c.b16 %v3083, %v3081
        %v3484 = vpack.c.b16 %v3084, %v3082
        %v3485 = vpack.c.b16 %v3087, %v3085
        %v3486 = vpack.c.b16 %v3088, %v3086
        %v3487 = vpack.c.b16 %v3091, %v3089
        %v3488 = vpack.c.b16 %v3092, %v3090
        %v3489 = vpack.c.b16 %v3095, %v3093
        %v3490 = vpack.c.b16 %v3096, %v3094
        %v3491 = vpack.c.b16 %v3099, %v3097
        %v3492 = vpack.c.b16 %v3100, %v3098
        %v3493 = vpack.c.b16 %v3103, %v3101
        %v3494 = vpack.c.b16 %v3104, %v3102
        %v3495 = vpack.c.b16 %v3107, %v3105
        %v3496 = vpack.c.b16 %v3108, %v3106
        %v3497 = vpack.c.b16 %v3111, %v3109
        %v3498 = vpack.c.b16 %v3112, %v3110
        %v3499 = vpack.c.b16 %v3115, %v3113
        %v3500 = vpack.c.b16 %v3116, %v3114
        %v3501 = vpack.c.b16 %v3119, %v3117
        %v3502 = vpack.c.b16 %v3120, %v3118
        %v3503 = vpack.c.b16 %v3123, %v3121
        %v3504 = vpack.c.b16 %v3124, %v3122
        %v3505 = vpack.c.b16 %v3127, %v3125
        %v3506 = vpack.c.b16 %v3128, %v3126
        %v3507 = vpack.c.b16 %v3131, %v3129
        %v3508 = vpack.c.b16 %v3132, %v3130
        %v3509 = vpack.c.b16 %v3135, %v3133
        %v3510 = vpack.c.b16 %v3136, %v3134
        %v3511 = vpack.c.b16 %v3139, %v3137
        %v3512 = vpack.c.b16 %v3140, %v3138
        %v3513 = vpack.c.b16 %v3143, %v3141
        %v3514 = vpack.c.b16 %v3144, %v3142
        %v3515 = vpack.c.b16 %v3147, %v3145
        %v3516 = vpack.c.b16 %v3148, %v3146
        %v3517 = vpack.c.b16 %v3151, %v3149
        %v3518 = vpack.c.b16 %v3152, %v3150
        %v3519 = vpack.c.b16 %v3155, %v3153
        %v3520 = vpack.c.b16 %v3156, %v3154
        %v3521 = vpack.c.b16 %v3159, %v3157
        %v3522 = vpack.c.b16 %v3160, %v3158
        %v3523 = vpack.c.b16 %v3163, %v3161
        %v3524 = vpack.c.b16 %v3164, %v3162
        %v3525 = vpack.c.b16 %v3167, %v3165
        %v3526 = vpack.c.b16 %v3168, %v3166
        %v3527 = vpack.c.b16 %v3171, %v3169
        %v3528 = vpack.c.b16 %v3172, %v3170
        %v3529 = vpack.c.b16 %v3175, %v3173
        %v3530 = vpack.c.b16 %v3176, %v3174
        %v3531 = vpack.c.b16 %v3179, %v3177
        %v3532 = vpack.c.b16 %v3180, %v3178
        %v3533 = vpack.c.b16 %v3183, %v3181
        %v3534 = vpack.c.b16 %v3184, %v3182
        %v3535 = vpack.c.b16 %v3187, %v3185
        %v3536 = vpack.c.b16 %v3188, %v3186
        %v3537 = vpack.c.b16 %v3191, %v3189
        %v3538 = vpack.c.b16 %v3192, %v3190
        %v3539 = vpack.c.b16 %v3195, %v3193
        %v3540 = vpack.c.b16 %v3196, %v3194
        %v3541 = vpack.c.b16 %v3199, %v3197
        %v3542 = vpack.c.b16 %v3200, %v3198
        %v3543 = vpack.c.b16 %v3203, %v3201
        %v3544 = vpack.c.b16 %v3204, %v3202
        %v3545 = vpack.c.b16 %v3207, %v3205
        %v3546 = vpack.c.b16 %v3208, %v3206
        %v3547 = vpack.c.b16 %v3211, %v3209
        %v3548 = vpack.c.b16 %v3212, %v3210
        %v3549 = vpack.c.b16 %v3215, %v3213
        %v3550 = vpack.c.b16 %v3216, %v3214
        %v3551 = vpack.c.b16 %v3219, %v3217
        %v3552 = vpack.c.b16 %v3220, %v3218
        %v3553 = vpack.c.b16 %v3223, %v3221
        %v3554 = vpack.c.b16 %v3224, %v3222
        %v3555 = vpack.c.b16 %v3227, %v3225
        %v3556 = vpack.c.b16 %v3228, %v3226
        %v3557 = vpack.c.b16 %v3231, %v3229
        %v3558 = vpack.c.b16 %v3232, %v3230
        %v3559 = vpack.c.b16 %v3235, %v3233
        %v3560 = vpack.c.b16 %v3236, %v3234
        %v3561 = vpack.c.b16 %v3239, %v3237
        %v3562 = vpack.c.b16 %v3240, %v3238
        %v3563 = vpack.c.b16 %v3243, %v3241
        %v3564 = vpack.c.b16 %v3244, %v3242
        %v3565 = vpack.c.b16 %v3247, %v3245
        %v3566 = vpack.c.b16 %v3248, %v3246
        %v3567 = vpack.c.b16 %v3251, %v3249
        %v3568 = vpack.c.b16 %v3252, %v3250
        %v3569 = vpack.c.b16 %v3255, %v3253
        %v3570 = vpack.c.b16 %v3256, %v3254
        %v3571 = vpack.c.b16 %v3259, %v3257
        %v3572 = vpack.c.b16 %v3260, %v3258
        %v3573 = vpack.c.b16 %v3263, %v3261
        %v3574 = vpack.c.b16 %v3264, %v3262
        %v3575 = vpack.c.b16 %v3267, %v3265
        %v3576 = vpack.c.b16 %v3268, %v3266
        %v3577 = vpack.c.b16 %v3271, %v3269
        %v3578 = vpack.c.b16 %v3272, %v3270
        %v3579 = vpack.c.b16 %v3275, %v3273
        %v3580 = vpack.c.b16 %v3276, %v3274
        %v3581 = vpack.c.b16 %v3279, %v3277
        %v3582 = vpack.c.b16 %v3280, %v3278
        %v3583 = vpack.c.b16 %v3283, %v3281
        %v3584 = vpack.c.b16 %v3284, %v3282
        %v3585 = vpack.c.b16 %v3287, %v3285
        %v3586 = vpack.c.b16 %v3288, %v3286
        %v3587 = vpack.c.b16 %v3291, %v3289
        %v3588 = vpack.c.b16 %v3292, %v3290
        %v3589 = vpack.c.b16 %v3295, %v3293
        %v3590 = vpack.c.b16 %v3296, %v3294
        %v3591 = vpack.c.b16 %v3299, %v3297
        %v3592 = vpack.c.b16 %v3300, %v3298
        %v3593 = vpack.c.b16 %v3303, %v3301
        %v3594 = vpack.c.b16 %v3304, %v3302
        %v3595 = vpack.c.b16 %v3307, %v3305
        %v3596 = vpack.c.b16 %v3308, %v3306
        %v3597 = vpack.c.b16 %v3311, %v3309
        %v3598 = vpack.c.b16 %v3312, %v3310
        %v3599 = vpack.c.b16 %v3315, %v3313
        %v3600 = vpack.c.b16 %v3316, %v3314
        %v3601 = vpack.c.b16 %v3319, %v3317
        %v3602 = vpack.c.b16 %v3320, %v3318
        %v3603 = vpack.c.b16 %v3323, %v3321
        %v3604 = vpack.c.b16 %v3324, %v3322
        %v3605 = vpack.c.b16 %v3327, %v3325
        %v3606 = vpack.c.b16 %v3328, %v3326
        %v3607 = vpack.c.b16 %v3331, %v3329
        %v3608 = vpack.c.b16 %v3332, %v3330
        %v3609 = vpack.c.b16 %v3335, %v3333
        %v3610 = vpack.c.b16 %v3336, %v3334
        %v3611 = vpack.c.b16 %v3339, %v3337
        %v3612 = vpack.c.b16 %v3340, %v3338
        %v3613 = vpack.c.b16 %v3343, %v3341
        %v3614 = vpack.c.b16 %v3344, %v3342
        %v3615 = vpack.c.b16 %v3347, %v3345
        %v3616 = vpack.c.b16 %v3348, %v3346
        %v3617 = vpack.c.b16 %v3351, %v3349
        %v3618 = vpack.c.b16 %v3352, %v3350
        %v3619 = vpack.c.b16 %v3355, %v3353
        %v3620 = vpack.c.b16 %v3356, %v3354
        %v3621 = vpack.c.b16 %v3359, %v3357
        %v3622 = vpack.c.b16 %v3360, %v3358
        %v3623 = vpack.c.b16 %v3363, %v3361
        %v3624 = vpack.c.b16 %v3364, %v3362
        %v3625 = vpack.c.b16 %v3367, %v3365
        %v3626 = vpack.c.b16 %v3368, %v3366
        %v3627 = vpack.c.b16 %v3371, %v3369
        %v3628 = vpack.c.b16 %v3372, %v3370
        %3885 = vmatpush.bf16.msra.mxu0 %v3387
        %3886 = vmatpush.bf16.msra.mxu0 %v3385
        %3887 = vmatpush.bf16.msra.mxu0 %v3383
        %3888 = vmatpush.bf16.msra.mxu0 %v3381
        %3889 = vmatpush.bf16.msra.mxu0 %v3379
        %3890 = vmatpush.bf16.msra.mxu0 %v3377
        %3891 = vmatpush.bf16.msra.mxu0 %v3375
        %3892 = vmatpush.bf16.msra.mxu0 %v3373
        %3893 = vmatmul.bf16.gmra.mxu0 %v2327
        %v3894 = vpop.f32.mrf.mxu0
        %v3895 = vadd.f32 %v2601, %v3894
        %v3896 = vpop.f32.mrf.mxu0
        %3897 = vdwg.mxu0
        %3898 = vmatpush.bf16.msra.mxu0 %v3403
        %3899 = vmatpush.bf16.msra.mxu0 %v3401
        %3900 = vmatpush.bf16.msra.mxu0 %v3399
        %3901 = vmatpush.bf16.msra.mxu0 %v3397
        %3902 = vmatpush.bf16.msra.mxu0 %v3395
        %3903 = vmatpush.bf16.msra.mxu0 %v3393
        %3904 = vmatpush.bf16.msra.mxu0 %v3391
        %3905 = vmatpush.bf16.msra.mxu0 %v3389
        %3906 = vmatmul.bf16.gmra.mxu0 %v2328
        %v3907 = vpop.f32.mrf.mxu0
        %v3908 = vadd.f32 %v3895, %v3907
        %v3909 = vpop.f32.mrf.mxu0
        %3910 = vdwg.mxu0
        %3911 = vmatpush.bf16.msra.mxu0 %v3419
        %3912 = vmatpush.bf16.msra.mxu0 %v3417
        %3913 = vmatpush.bf16.msra.mxu0 %v3415
        %3914 = vmatpush.bf16.msra.mxu0 %v3413
        %3915 = vmatpush.bf16.msra.mxu0 %v3411
        %3916 = vmatpush.bf16.msra.mxu0 %v3409
        %3917 = vmatpush.bf16.msra.mxu0 %v3407
        %3918 = vmatpush.bf16.msra.mxu0 %v3405
        %3919 = vmatmul.bf16.gmra.mxu0 %v2329
        %v3920 = vpop.f32.mrf.mxu0
        %v3921 = vadd.f32 %v3908, %v3920
        %v3922 = vpop.f32.mrf.mxu0
        %3923 = vdwg.mxu0
        %3924 = vmatpush.bf16.msra.mxu0 %v3435
        %3925 = vmatpush.bf16.msra.mxu0 %v3433
        %3926 = vmatpush.bf16.msra.mxu0 %v3431
        %3927 = vmatpush.bf16.msra.mxu0 %v3429
        %3928 = vmatpush.bf16.msra.mxu0 %v3427
        %3929 = vmatpush.bf16.msra.mxu0 %v3425
        %3930 = vmatpush.bf16.msra.mxu0 %v3423
        %3931 = vmatpush.bf16.msra.mxu0 %v3421
        %3932 = vmatmul.bf16.gmra.mxu0 %v2330
        %v3933 = vpop.f32.mrf.mxu0
        %v3934 = vadd.f32 %v3921, %v3933
        %v3935 = vpop.f32.mrf.mxu0
        %3936 = vdwg.mxu0
        %3937 = vmatpush.bf16.msra.mxu0 %v3451
        %3938 = vmatpush.bf16.msra.mxu0 %v3449
        %3939 = vmatpush.bf16.msra.mxu0 %v3447
        %3940 = vmatpush.bf16.msra.mxu0 %v3445
        %3941 = vmatpush.bf16.msra.mxu0 %v3443
        %3942 = vmatpush.bf16.msra.mxu0 %v3441
        %3943 = vmatpush.bf16.msra.mxu0 %v3439
        %3944 = vmatpush.bf16.msra.mxu0 %v3437
        %3945 = vmatmul.bf16.gmra.mxu0 %v2331
        %v3946 = vpop.f32.mrf.mxu0
        %v3947 = vadd.f32 %v3934, %v3946
        %v3948 = vpop.f32.mrf.mxu0
        %3949 = vdwg.mxu0
        %3950 = vmatpush.bf16.msra.mxu0 %v3467
        %3951 = vmatpush.bf16.msra.mxu0 %v3465
        %3952 = vmatpush.bf16.msra.mxu0 %v3463
        %3953 = vmatpush.bf16.msra.mxu0 %v3461
        %3954 = vmatpush.bf16.msra.mxu0 %v3459
        %3955 = vmatpush.bf16.msra.mxu0 %v3457
        %3956 = vmatpush.bf16.msra.mxu0 %v3455
        %3957 = vmatpush.bf16.msra.mxu0 %v3453
        %3958 = vmatmul.bf16.gmra.mxu0 %v2332
        %v3959 = vpop.f32.mrf.mxu0
        %v3960 = vadd.f32 %v3947, %v3959
        %v3961 = vpop.f32.mrf.mxu0
        %3962 = vdwg.mxu0
        %3963 = vmatpush.bf16.msra.mxu0 %v3483
        %3964 = vmatpush.bf16.msra.mxu0 %v3481
        %3965 = vmatpush.bf16.msra.mxu0 %v3479
        %3966 = vmatpush.bf16.msra.mxu0 %v3477
        %3967 = vmatpush.bf16.msra.mxu0 %v3475
        %3968 = vmatpush.bf16.msra.mxu0 %v3473
        %3969 = vmatpush.bf16.msra.mxu0 %v3471
        %3970 = vmatpush.bf16.msra.mxu0 %v3469
        %3971 = vmatmul.bf16.gmra.mxu0 %v2333
        %v3972 = vpop.f32.mrf.mxu0
        %v3973 = vadd.f32 %v3960, %v3972
        %v3974 = vpop.f32.mrf.mxu0
        %3975 = vdwg.mxu0
        %3976 = vmatpush.bf16.msra.mxu0 %v3499
        %3977 = vmatpush.bf16.msra.mxu0 %v3497
        %3978 = vmatpush.bf16.msra.mxu0 %v3495
        %3979 = vmatpush.bf16.msra.mxu0 %v3493
        %3980 = vmatpush.bf16.msra.mxu0 %v3491
        %3981 = vmatpush.bf16.msra.mxu0 %v3489
        %3982 = vmatpush.bf16.msra.mxu0 %v3487
        %3983 = vmatpush.bf16.msra.mxu0 %v3485
        %3984 = vmatmul.bf16.gmra.mxu0 %v2334
        %v3985 = vpop.f32.mrf.mxu0
        %v3986 = vadd.f32 %v3973, %v3985
        %v3987 = vpop.f32.mrf.mxu0
        %3988 = vdwg.mxu0
        %3989 = vmatpush.bf16.msra.mxu0 %v3515
        %3990 = vmatpush.bf16.msra.mxu0 %v3513
        %3991 = vmatpush.bf16.msra.mxu0 %v3511
        %3992 = vmatpush.bf16.msra.mxu0 %v3509
        %3993 = vmatpush.bf16.msra.mxu0 %v3507
        %3994 = vmatpush.bf16.msra.mxu0 %v3505
        %3995 = vmatpush.bf16.msra.mxu0 %v3503
        %3996 = vmatpush.bf16.msra.mxu0 %v3501
        %3997 = vmatmul.bf16.gmra.mxu0 %v2335
        %v3998 = vpop.f32.mrf.mxu0
        %v3999 = vadd.f32 %v3986, %v3998
        %v4000 = vpop.f32.mrf.mxu0
        %4001 = vdwg.mxu0
        %4002 = vmatpush.bf16.msra.mxu0 %v3531
        %4003 = vmatpush.bf16.msra.mxu0 %v3529
        %4004 = vmatpush.bf16.msra.mxu0 %v3527
        %4005 = vmatpush.bf16.msra.mxu0 %v3525
        %4006 = vmatpush.bf16.msra.mxu0 %v3523
        %4007 = vmatpush.bf16.msra.mxu0 %v3521
        %4008 = vmatpush.bf16.msra.mxu0 %v3519
        %4009 = vmatpush.bf16.msra.mxu0 %v3517
        %4010 = vmatmul.bf16.gmra.mxu0 %v2336
        %v4011 = vpop.f32.mrf.mxu0
        %v4012 = vadd.f32 %v3999, %v4011
        %v4013 = vpop.f32.mrf.mxu0
        %4014 = vdwg.mxu0
        %4015 = vmatpush.bf16.msra.mxu0 %v3547
        %4016 = vmatpush.bf16.msra.mxu0 %v3545
        %4017 = vmatpush.bf16.msra.mxu0 %v3543
        %4018 = vmatpush.bf16.msra.mxu0 %v3541
        %4019 = vmatpush.bf16.msra.mxu0 %v3539
        %4020 = vmatpush.bf16.msra.mxu0 %v3537
        %4021 = vmatpush.bf16.msra.mxu0 %v3535
        %4022 = vmatpush.bf16.msra.mxu0 %v3533
        %4023 = vmatmul.bf16.gmra.mxu0 %v2337
        %v4024 = vpop.f32.mrf.mxu0
        %v4025 = vadd.f32 %v4012, %v4024
        %v4026 = vpop.f32.mrf.mxu0
        %4027 = vdwg.mxu0
        %4028 = vmatpush.bf16.msra.mxu0 %v3563
        %4029 = vmatpush.bf16.msra.mxu0 %v3561
        %4030 = vmatpush.bf16.msra.mxu0 %v3559
        %4031 = vmatpush.bf16.msra.mxu0 %v3557
        %4032 = vmatpush.bf16.msra.mxu0 %v3555
        %4033 = vmatpush.bf16.msra.mxu0 %v3553
        %4034 = vmatpush.bf16.msra.mxu0 %v3551
        %4035 = vmatpush.bf16.msra.mxu0 %v3549
        %4036 = vmatmul.bf16.gmra.mxu0 %v2338
        %v4037 = vpop.f32.mrf.mxu0
        %v4038 = vadd.f32 %v4025, %v4037
        %v4039 = vpop.f32.mrf.mxu0
        %4040 = vdwg.mxu0
        %4041 = vmatpush.bf16.msra.mxu0 %v3579
        %4042 = vmatpush.bf16.msra.mxu0 %v3577
        %4043 = vmatpush.bf16.msra.mxu0 %v3575
        %4044 = vmatpush.bf16.msra.mxu0 %v3573
        %4045 = vmatpush.bf16.msra.mxu0 %v3571
        %4046 = vmatpush.bf16.msra.mxu0 %v3569
        %4047 = vmatpush.bf16.msra.mxu0 %v3567
        %4048 = vmatpush.bf16.msra.mxu0 %v3565
        %4049 = vmatmul.bf16.gmra.mxu0 %v2339
        %v4050 = vpop.f32.mrf.mxu0
        %v4051 = vadd.f32 %v4038, %v4050
        %v4052 = vpop.f32.mrf.mxu0
        %4053 = vdwg.mxu0
        %4054 = vmatpush.bf16.msra.mxu0 %v3595
        %4055 = vmatpush.bf16.msra.mxu0 %v3593
        %4056 = vmatpush.bf16.msra.mxu0 %v3591
        %4057 = vmatpush.bf16.msra.mxu0 %v3589
        %4058 = vmatpush.bf16.msra.mxu0 %v3587
        %4059 = vmatpush.bf16.msra.mxu0 %v3585
        %4060 = vmatpush.bf16.msra.mxu0 %v3583
        %4061 = vmatpush.bf16.msra.mxu0 %v3581
        %4062 = vmatmul.bf16.gmra.mxu0 %v2340
        %v4063 = vpop.f32.mrf.mxu0
        %v4064 = vadd.f32 %v4051, %v4063
        %v4065 = vpop.f32.mrf.mxu0
        %4066 = vdwg.mxu0
        %4067 = vmatpush.bf16.msra.mxu0 %v3611
        %4068 = vmatpush.bf16.msra.mxu0 %v3609
        %4069 = vmatpush.bf16.msra.mxu0 %v3607
        %4070 = vmatpush.bf16.msra.mxu0 %v3605
        %4071 = vmatpush.bf16.msra.mxu0 %v3603
        %4072 = vmatpush.bf16.msra.mxu0 %v3601
        %4073 = vmatpush.bf16.msra.mxu0 %v3599
        %4074 = vmatpush.bf16.msra.mxu0 %v3597
        %4075 = vmatmul.bf16.gmra.mxu0 %v2341
        %v4076 = vpop.f32.mrf.mxu0
        %v4077 = vadd.f32 %v4064, %v4076
        %v4078 = vpop.f32.mrf.mxu0
        %4079 = vdwg.mxu0
        %4080 = vmatpush.bf16.msra.mxu0 %v3627
        %4081 = vmatpush.bf16.msra.mxu0 %v3625
        %4082 = vmatpush.bf16.msra.mxu0 %v3623
        %4083 = vmatpush.bf16.msra.mxu0 %v3621
        %4084 = vmatpush.bf16.msra.mxu0 %v3619
        %4085 = vmatpush.bf16.msra.mxu0 %v3617
        %4086 = vmatpush.bf16.msra.mxu0 %v3615
        %4087 = vmatpush.bf16.msra.mxu0 %v3613
        %4088 = vmatmul.bf16.gmra.mxu0 %v2342
        %v4089 = vpop.f32.mrf.mxu0
        %v4090 = vadd.f32 %v4077, %v4089
        %v4091 = vpop.f32.mrf.mxu0
        %4092 = vdwg.mxu0
        %4093 = vmatpush.bf16.msra.mxu0 %v3388
        %4094 = vmatpush.bf16.msra.mxu0 %v3386
        %4095 = vmatpush.bf16.msra.mxu0 %v3384
        %4096 = vmatpush.bf16.msra.mxu0 %v3382
        %4097 = vmatpush.bf16.msra.mxu0 %v3380
        %4098 = vmatpush.bf16.msra.mxu0 %v3378
        %4099 = vmatpush.bf16.msra.mxu0 %v3376
        %4100 = vmatpush.bf16.msra.mxu0 %v3374
        %4101 = vmatmul.bf16.gmra.mxu0 %v2327
        %v4102 = vpop.f32.mrf.mxu0
        %v4103 = vadd.f32 %v2602, %v4102
        %v4104 = vpop.f32.mrf.mxu0
        %4105 = vdwg.mxu0
        %4106 = vmatpush.bf16.msra.mxu0 %v3404
        %4107 = vmatpush.bf16.msra.mxu0 %v3402
        %4108 = vmatpush.bf16.msra.mxu0 %v3400
        %4109 = vmatpush.bf16.msra.mxu0 %v3398
        %4110 = vmatpush.bf16.msra.mxu0 %v3396
        %4111 = vmatpush.bf16.msra.mxu0 %v3394
        %4112 = vmatpush.bf16.msra.mxu0 %v3392
        %4113 = vmatpush.bf16.msra.mxu0 %v3390
        %4114 = vmatmul.bf16.gmra.mxu0 %v2328
        %v4115 = vpop.f32.mrf.mxu0
        %v4116 = vadd.f32 %v4103, %v4115
        %v4117 = vpop.f32.mrf.mxu0
        %4118 = vdwg.mxu0
        %4119 = vmatpush.bf16.msra.mxu0 %v3420
        %4120 = vmatpush.bf16.msra.mxu0 %v3418
        %4121 = vmatpush.bf16.msra.mxu0 %v3416
        %4122 = vmatpush.bf16.msra.mxu0 %v3414
        %4123 = vmatpush.bf16.msra.mxu0 %v3412
        %4124 = vmatpush.bf16.msra.mxu0 %v3410
        %4125 = vmatpush.bf16.msra.mxu0 %v3408
        %4126 = vmatpush.bf16.msra.mxu0 %v3406
        %4127 = vmatmul.bf16.gmra.mxu0 %v2329
        %v4128 = vpop.f32.mrf.mxu0
        %v4129 = vadd.f32 %v4116, %v4128
        %v4130 = vpop.f32.mrf.mxu0
        %4131 = vdwg.mxu0
        %4132 = vmatpush.bf16.msra.mxu0 %v3436
        %4133 = vmatpush.bf16.msra.mxu0 %v3434
        %4134 = vmatpush.bf16.msra.mxu0 %v3432
        %4135 = vmatpush.bf16.msra.mxu0 %v3430
        %4136 = vmatpush.bf16.msra.mxu0 %v3428
        %4137 = vmatpush.bf16.msra.mxu0 %v3426
        %4138 = vmatpush.bf16.msra.mxu0 %v3424
        %4139 = vmatpush.bf16.msra.mxu0 %v3422
        %4140 = vmatmul.bf16.gmra.mxu0 %v2330
        %v4141 = vpop.f32.mrf.mxu0
        %v4142 = vadd.f32 %v4129, %v4141
        %v4143 = vpop.f32.mrf.mxu0
        %4144 = vdwg.mxu0
        %4145 = vmatpush.bf16.msra.mxu0 %v3452
        %4146 = vmatpush.bf16.msra.mxu0 %v3450
        %4147 = vmatpush.bf16.msra.mxu0 %v3448
        %4148 = vmatpush.bf16.msra.mxu0 %v3446
        %4149 = vmatpush.bf16.msra.mxu0 %v3444
        %4150 = vmatpush.bf16.msra.mxu0 %v3442
        %4151 = vmatpush.bf16.msra.mxu0 %v3440
        %4152 = vmatpush.bf16.msra.mxu0 %v3438
        %4153 = vmatmul.bf16.gmra.mxu0 %v2331
        %v4154 = vpop.f32.mrf.mxu0
        %v4155 = vadd.f32 %v4142, %v4154
        %v4156 = vpop.f32.mrf.mxu0
        %4157 = vdwg.mxu0
        %4158 = vmatpush.bf16.msra.mxu0 %v3468
        %4159 = vmatpush.bf16.msra.mxu0 %v3466
        %4160 = vmatpush.bf16.msra.mxu0 %v3464
        %4161 = vmatpush.bf16.msra.mxu0 %v3462
        %4162 = vmatpush.bf16.msra.mxu0 %v3460
        %4163 = vmatpush.bf16.msra.mxu0 %v3458
        %4164 = vmatpush.bf16.msra.mxu0 %v3456
        %4165 = vmatpush.bf16.msra.mxu0 %v3454
        %4166 = vmatmul.bf16.gmra.mxu0 %v2332
        %v4167 = vpop.f32.mrf.mxu0
        %v4168 = vadd.f32 %v4155, %v4167
        %v4169 = vpop.f32.mrf.mxu0
        %4170 = vdwg.mxu0
        %4171 = vmatpush.bf16.msra.mxu0 %v3484
        %4172 = vmatpush.bf16.msra.mxu0 %v3482
        %4173 = vmatpush.bf16.msra.mxu0 %v3480
        %4174 = vmatpush.bf16.msra.mxu0 %v3478
        %4175 = vmatpush.bf16.msra.mxu0 %v3476
        %4176 = vmatpush.bf16.msra.mxu0 %v3474
        %4177 = vmatpush.bf16.msra.mxu0 %v3472
        %4178 = vmatpush.bf16.msra.mxu0 %v3470
        %4179 = vmatmul.bf16.gmra.mxu0 %v2333
        %v4180 = vpop.f32.mrf.mxu0
        %v4181 = vadd.f32 %v4168, %v4180
        %v4182 = vpop.f32.mrf.mxu0
        %4183 = vdwg.mxu0
        %4184 = vmatpush.bf16.msra.mxu0 %v3500
        %4185 = vmatpush.bf16.msra.mxu0 %v3498
        %4186 = vmatpush.bf16.msra.mxu0 %v3496
        %4187 = vmatpush.bf16.msra.mxu0 %v3494
        %4188 = vmatpush.bf16.msra.mxu0 %v3492
        %4189 = vmatpush.bf16.msra.mxu0 %v3490
        %4190 = vmatpush.bf16.msra.mxu0 %v3488
        %4191 = vmatpush.bf16.msra.mxu0 %v3486
        %4192 = vmatmul.bf16.gmra.mxu0 %v2334
        %v4193 = vpop.f32.mrf.mxu0
        %v4194 = vadd.f32 %v4181, %v4193
        %v4195 = vpop.f32.mrf.mxu0
        %4196 = vdwg.mxu0
        %4197 = vmatpush.bf16.msra.mxu0 %v3516
        %4198 = vmatpush.bf16.msra.mxu0 %v3514
        %4199 = vmatpush.bf16.msra.mxu0 %v3512
        %4200 = vmatpush.bf16.msra.mxu0 %v3510
        %4201 = vmatpush.bf16.msra.mxu0 %v3508
        %4202 = vmatpush.bf16.msra.mxu0 %v3506
        %4203 = vmatpush.bf16.msra.mxu0 %v3504
        %4204 = vmatpush.bf16.msra.mxu0 %v3502
        %4205 = vmatmul.bf16.gmra.mxu0 %v2335
        %v4206 = vpop.f32.mrf.mxu0
        %v4207 = vadd.f32 %v4194, %v4206
        %v4208 = vpop.f32.mrf.mxu0
        %4209 = vdwg.mxu0
        %4210 = vmatpush.bf16.msra.mxu0 %v3532
        %4211 = vmatpush.bf16.msra.mxu0 %v3530
        %4212 = vmatpush.bf16.msra.mxu0 %v3528
        %4213 = vmatpush.bf16.msra.mxu0 %v3526
        %4214 = vmatpush.bf16.msra.mxu0 %v3524
        %4215 = vmatpush.bf16.msra.mxu0 %v3522
        %4216 = vmatpush.bf16.msra.mxu0 %v3520
        %4217 = vmatpush.bf16.msra.mxu0 %v3518
        %4218 = vmatmul.bf16.gmra.mxu0 %v2336
        %v4219 = vpop.f32.mrf.mxu0
        %v4220 = vadd.f32 %v4207, %v4219
        %v4221 = vpop.f32.mrf.mxu0
        %4222 = vdwg.mxu0
        %4223 = vmatpush.bf16.msra.mxu0 %v3548
        %4224 = vmatpush.bf16.msra.mxu0 %v3546
        %4225 = vmatpush.bf16.msra.mxu0 %v3544
        %4226 = vmatpush.bf16.msra.mxu0 %v3542
        %4227 = vmatpush.bf16.msra.mxu0 %v3540
        %4228 = vmatpush.bf16.msra.mxu0 %v3538
        %4229 = vmatpush.bf16.msra.mxu0 %v3536
        %4230 = vmatpush.bf16.msra.mxu0 %v3534
        %4231 = vmatmul.bf16.gmra.mxu0 %v2337
        %v4232 = vpop.f32.mrf.mxu0
        %v4233 = vadd.f32 %v4220, %v4232
        %v4234 = vpop.f32.mrf.mxu0
        %4235 = vdwg.mxu0
        %4236 = vmatpush.bf16.msra.mxu0 %v3564
        %4237 = vmatpush.bf16.msra.mxu0 %v3562
        %4238 = vmatpush.bf16.msra.mxu0 %v3560
        %4239 = vmatpush.bf16.msra.mxu0 %v3558
        %4240 = vmatpush.bf16.msra.mxu0 %v3556
        %4241 = vmatpush.bf16.msra.mxu0 %v3554
        %4242 = vmatpush.bf16.msra.mxu0 %v3552
        %4243 = vmatpush.bf16.msra.mxu0 %v3550
        %4244 = vmatmul.bf16.gmra.mxu0 %v2338
        %v4245 = vpop.f32.mrf.mxu0
        %v4246 = vadd.f32 %v4233, %v4245
        %v4247 = vpop.f32.mrf.mxu0
        %4248 = vdwg.mxu0
        %4249 = vmatpush.bf16.msra.mxu0 %v3580
        %4250 = vmatpush.bf16.msra.mxu0 %v3578
        %4251 = vmatpush.bf16.msra.mxu0 %v3576
        %4252 = vmatpush.bf16.msra.mxu0 %v3574
        %4253 = vmatpush.bf16.msra.mxu0 %v3572
        %4254 = vmatpush.bf16.msra.mxu0 %v3570
        %4255 = vmatpush.bf16.msra.mxu0 %v3568
        %4256 = vmatpush.bf16.msra.mxu0 %v3566
        %4257 = vmatmul.bf16.gmra.mxu0 %v2339
        %v4258 = vpop.f32.mrf.mxu0
        %v4259 = vadd.f32 %v4246, %v4258
        %v4260 = vpop.f32.mrf.mxu0
        %4261 = vdwg.mxu0
        %4262 = vmatpush.bf16.msra.mxu0 %v3596
        %4263 = vmatpush.bf16.msra.mxu0 %v3594
        %4264 = vmatpush.bf16.msra.mxu0 %v3592
        %4265 = vmatpush.bf16.msra.mxu0 %v3590
        %4266 = vmatpush.bf16.msra.mxu0 %v3588
        %4267 = vmatpush.bf16.msra.mxu0 %v3586
        %4268 = vmatpush.bf16.msra.mxu0 %v3584
        %4269 = vmatpush.bf16.msra.mxu0 %v3582
        %4270 = vmatmul.bf16.gmra.mxu0 %v2340
        %v4271 = vpop.f32.mrf.mxu0
        %v4272 = vadd.f32 %v4259, %v4271
        %v4273 = vpop.f32.mrf.mxu0
        %4274 = vdwg.mxu0
        %4275 = vmatpush.bf16.msra.mxu0 %v3612
        %4276 = vmatpush.bf16.msra.mxu0 %v3610
        %4277 = vmatpush.bf16.msra.mxu0 %v3608
        %4278 = vmatpush.bf16.msra.mxu0 %v3606
        %4279 = vmatpush.bf16.msra.mxu0 %v3604
        %4280 = vmatpush.bf16.msra.mxu0 %v3602
        %4281 = vmatpush.bf16.msra.mxu0 %v3600
        %4282 = vmatpush.bf16.msra.mxu0 %v3598
        %4283 = vmatmul.bf16.gmra.mxu0 %v2341
        %v4284 = vpop.f32.mrf.mxu0
        %v4285 = vadd.f32 %v4272, %v4284
        %v4286 = vpop.f32.mrf.mxu0
        %4287 = vdwg.mxu0
        %4288 = vmatpush.bf16.msra.mxu0 %v3628
        %4289 = vmatpush.bf16.msra.mxu0 %v3626
        %4290 = vmatpush.bf16.msra.mxu0 %v3624
        %4291 = vmatpush.bf16.msra.mxu0 %v3622
        %4292 = vmatpush.bf16.msra.mxu0 %v3620
        %4293 = vmatpush.bf16.msra.mxu0 %v3618
        %4294 = vmatpush.bf16.msra.mxu0 %v3616
        %4295 = vmatpush.bf16.msra.mxu0 %v3614
        %4296 = vmatmul.bf16.gmra.mxu0 %v2342
        %v4297 = vpop.f32.mrf.mxu0
        %v4298 = vadd.f32 %v4285, %v4297
        %v4299 = vpop.f32.mrf.mxu0
        %4300 = vdwg.mxu0
        %v4301 = vadd.f32 %v4090, %v314
        %v4302 = vadd.f32 %v4298, %v315
        %v4303 = vld [vmem:[%s5] sm:$0x3]
        %v4304 = vld [vmem:[%s6] sm:$0x3]
        %v4305 = vadd.f32 %v4301, %v4302
        %4306 = vadd.xlane.f32.xlu0 %v4305
        %v4307 = vpop.xlane.xlu0 %4306
        %v4308 = vrcp.pop 256.0
        %v4309 = vmul.f32 256.0, %v4308
        %v4310 = vsub.f32 1.0, %v4309
        %v4311 = vmul.f32 %v4308, %v4310
        %v4312 = vadd.f32 %v4308, %v4311
        %vm4313 = vweird.f32 %v4308
        %v4314 = vsel %vm4313, %v4308, %v4312
        %v4315 = vmul.f32 %v4307, %v4314
        %v4316 = vsub.f32 %v4301, %v4315
        %v4317 = vsub.f32 %v4302, %v4315
        %v4318 = vmul.f32 %v4316, %v4316
        %v4319 = vmul.f32 %v4317, %v4317
        %v4320 = vadd.f32 %v4318, %v4319
        %4321 = vadd.xlane.f32.xlu0 %v4320
        %v4322 = vpop.xlane.xlu0 %4321
        %v4323 = vmul.f32 %v4322, %v4314
        %v4324 = vadd.f32 %v4323, 1e-05
        %v4325 = vrsqrt.pop %v4324
        %v4326 = vmul.f32 %v4325, %v4324
        %v4327 = vmul.f32 %v4326, %v4325
        %v4328 = vmul.f32 0.5, %v4327
        %v4329 = vsub.f32 1.5, %v4328
        %v4330 = vmul.f32 %v4325, %v4329
        %vm4331 = vweird.f32 %v4324
        %vm4332 = vweird.f32 %v4325
        %vm4333 = vmor %vm4331, %vm4332
        %v4334 = vsel %vm4333, %v4325, %v4330
        %v4335 = vmul.f32 %v4316, %v4334
        %v4336 = vmul.f32 %v4317, %v4334
        %v4338 = vperm.slane %v4303, 0
        %v4339 = vperm.slane %v4303, 1
        %v4342 = vmul.f32 %v4335, %v4338
        %v4343 = vmul.f32 %v4336, %v4339
        %v4345 = vperm.slane %v4304, 0
        %v4346 = vperm.slane %v4304, 1
        %v4349 = vadd.f32 %v4342, %v4345
        %v4350 = vadd.f32 %v4343, %v4346
        %v4351 = vpack.c.bf16 %v4350, %v4349
        %4352 = vst [vmem:[%s312] sm:$0xff] %v4351
        %p4353 = scmp.lt.s32.totalorder %s20, 1
        %s4354 = scalar_select %p4353, %s20, 1
        %s4355 = smul.addr %s4354, 2
        %s4356 = smul.addr %s4355, 4
        %s4357 = scalar_lea.vmem %s7, %s4356
        // Predicated region
        $region57: #{text_decoder_forward.9} parent=47 // pred_check
          %p4358 = pneg %p190
        $region58: #{text_decoder_forward.9} parent=47 // pred_check_branch
          %4360 = sbr.rel (%p4358) target = $region60
        $region59: #{text_decoder_forward.9} parent=47 // pred_region
          _
        $region60: #{text_decoder_forward.9} parent=47 // pred_fallthru
          _
      $region48: #{text_decoder_forward.9} parent=5 // pred_fallthru
        _
      %p4361 = scmp.le.s32.totalorder 2, %s15
      // Predicated region
      $region61: #{text_decoder_forward.9} parent=5 // pred_check
        %p4362 = pneg %p4361
      $region62: #{text_decoder_forward.9} parent=5 // pred_check_branch
        %4364 = sbr.rel (%p4362) target = $region64
      $region63: #{text_decoder_forward.9} parent=5 // pred_region
        %s4365 = ssub.s32 %s15, 2
        // Predicated region
        $region65: #{text_decoder_forward.9} parent=63 // pred_check
          %p4366 = pneg %p196
        $region66: #{text_decoder_forward.9} parent=63 // pred_check_branch
          %4368 = sbr.rel (%p4366) target = $region68
        $region67: #{text_decoder_forward.9} parent=63 // pred_region
          %p4369 = scmp.lt.s32.totalorder %s21, 1
          %s4370 = scalar_select %p4369, %s21, 1
          %s4371 = smul.addr %s4370, 2
          %s4372 = smul.addr %s4371, 4
          %s4373 = scalar_lea.vmem %s7, %s4372
        $region68: #{text_decoder_forward.9} parent=63 // pred_fallthru
          _
      $region64: #{text_decoder_forward.9} parent=5 // pred_fallthru
        _
    $region6: #{text_decoder_forward.9} parent=1 // loop_footer
      %s19 = sadd.s32 1, %s15
    $region7: #{text_decoder_forward.9} parent=1 // loop_footer_branch
      %14 = sbr.rel target = $region3
    $region8: #{text_decoder_forward.9} parent=1 // loop_exit
      _
    %4374 = vsyncpa [#allocation3], 1
    %s4375 = scalar_lea.sflag [#allocation3], 1
    %4376 = vsyncpa %s4375, 1
    %4377 = vsyncpa [#allocation5], 1

</llo_original>
